<compile_context>
chip_gen: v7x
topology: tpu7x:2x2x1
jax: 0.10.0
libtpu: 0.0.40
codegen_flags: <defaults>
</compile_context>

<pallas_src>
import functools
import math

import jax
import jax.numpy as jnp
from jax.experimental import pallas as pl
from jax.experimental.pallas import tpu as pltpu


# bf16 MXU operands / bf16-stored weight matrices (f32 accumulation, f32 softmax & LayerNorm).
MATMUL_DTYPE = jnp.bfloat16
WEIGHT_DTYPE = jnp.bfloat16


# ----------------------------------------------------------------------------
# In-kernel math helpers
# ----------------------------------------------------------------------------

def _mm(a, b):
    """MXU matmul with f32 accumulation (operands cast to MATMUL_DTYPE)."""
    return jnp.dot(a.astype(MATMUL_DTYPE), b.astype(MATMUL_DTYPE),
                   preferred_element_type=jnp.float32)


def _ln(x, g, b, eps):
    """LayerNorm over the last dim, PyTorch semantics (biased variance), f32 math."""
    mean = jnp.mean(x, axis=-1, keepdims=True)
    var = jnp.mean(jnp.square(x - mean), axis=-1, keepdims=True)
    return (x - mean) * jax.lax.rsqrt(var + eps) * g + b


def _mha(q, k, v, wo, bo, add_mask, B, Lq, Lk, nhead):
    """Multi-head attention + output projection.

    q: (B*Lq, D); k, v: (B*Lk, D); wo: (D, D); bo: (1, D);
    add_mask: None or (B, 1, Lk) additive key-padding mask (0 / -1e9).

    Batched over B via one dot_general per head (no per-batch loop, no sublane concat);
    heads are a short static unrolled loop.  Scores / softmax / PV stay in f32.
    """
    D = q.shape[-1]
    hd = D // nhead
    scale = 1.0 / math.sqrt(hd)
    q3 = q.reshape(B, Lq, D)
    k3 = k.reshape(B, Lk, D)
    v3 = v.reshape(B, Lk, D)

    ctx_heads = []
    for h in range(nhead):
        sl = slice(h * hd, (h + 1) * hd)
        s = jax.lax.dot_general(
            q3[..., sl], k3[..., sl],
            dimension_numbers=(((2,), (2,)), ((0,), (0,))),
            preferred_element_type=jnp.float32) * scale          # (B, Lq, Lk)
        if add_mask is not None:
            s = s + add_mask                                     # (B, 1, Lk) broadcast
        s = s - jnp.max(s, axis=-1, keepdims=True)
        p = jnp.exp(s)
        p = p / jnp.sum(p, axis=-1, keepdims=True)               # exact divide (parity)
        ctx_heads.append(jax.lax.dot_general(
            p, v3[..., sl],
            dimension_numbers=(((2,), (1,)), ((0,), (0,))),
            preferred_element_type=jnp.float32))                 # (B, Lq, hd)

    ctx = jnp.concatenate(ctx_heads, axis=-1).reshape(B * Lq, D)  # lane concat of head outputs
    return _mm(ctx, wo) + bo                                      # full-D contraction -> MXU


# ----------------------------------------------------------------------------
# Fused layer-stack kernels (grid axis = layer index, activation resident in VMEM)
# ----------------------------------------------------------------------------

def _encoder_stack_kernel(src_ref, pos_ref, mask_ref,
                          wqk_ref, bqk_ref, wv_ref, bv_ref, wo_ref, bo_ref,
                          ln1g_ref, ln1b_ref,
                          w1_ref, b1_ref, w2_ref, b2_ref,
                          ln2g_ref, ln2b_ref,
                          out_ref, *, nhead, B, S, eps):
    l = pl.program_id(0)

    @pl.when(l == 0)
    def _():
        out_ref[...] = src_ref[...]          # layer-0 input; carried in out_ref afterwards

    D = out_ref.shape[-1]
    x = out_ref[...]                         # (B*S, D)
    pe = pos_ref[...]                        # (B*S, D)
    mask = mask_ref[...]                     # (B, 1, S) additive

    # fused Q/K projection on (x + pos); V projection on x
    qk = _mm(x + pe, wqk_ref[...]) + bqk_ref[...]                # (B*S, 2D)
    v = _mm(x, wv_ref[...]) + bv_ref[...]                        # (B*S, D)
    attn = _mha(qk[:, :D], qk[:, D:], v, wo_ref[...], bo_ref[...],
                mask, B, S, S, nhead)

    y = _ln(x + attn, ln1g_ref[...], ln1b_ref[...], eps)

    hdn = jnp.maximum(_mm(y, w1_ref[...]) + b1_ref[...], 0.0)    # relu
    f = _mm(hdn, w2_ref[...]) + b2_ref[...]
    out_ref[...] = _ln(y + f, ln2g_ref[...], ln2b_ref[...], eps).astype(out_ref.dtype)


def _decoder_stack_kernel(mem_ref, pos_ref, qpos_ref, mask_ref,
                          sa_wqk_ref, sa_bqk_ref, sa_wv_ref, sa_bv_ref,
                          sa_wo_ref, sa_bo_ref,
                          ln1g_ref, ln1b_ref,
                          ca_wq_ref, ca_bq_ref, ca_wk_ref, ca_bk_ref,
                          ca_wv_ref, ca_bv_ref, ca_wo_ref, ca_bo_ref,
                          ln2g_ref, ln2b_ref,
                          w1_ref, b1_ref, w2_ref, b2_ref,
                          ln3g_ref, ln3b_ref,
                          dng_ref, dnb_ref,
                          out_ref, *, nhead, B, Nq, S, eps):
    l = pl.program_id(0)
    last = pl.num_programs(0) - 1

    @pl.when(l == 0)
    def _():
        out_ref[...] = jnp.zeros(out_ref.shape, out_ref.dtype)   # tgt = zeros_like(query_embed)

    D = out_ref.shape[-1]
    t = out_ref[...]                        # (B*Nq, D)
    mem = mem_ref[...]                      # (B*S, D)
    pe = pos_ref[...]                       # (B*S, D)
    qp = qpos_ref[...]                      # (B*Nq, D)
    mask = mask_ref[...]                    # (B, 1, S)

    # --- self attention (no target mask) ---
    qk = _mm(t + qp, sa_wqk_ref[...]) + sa_bqk_ref[...]          # (B*Nq, 2D)
    v = _mm(t, sa_wv_ref[...]) + sa_bv_ref[...]
    attn = _mha(qk[:, :D], qk[:, D:], v, sa_wo_ref[...], sa_bo_ref[...],
                None, B, Nq, Nq, nhead)
    y = _ln(t + attn, ln1g_ref[...], ln1b_ref[...], eps)

    # --- cross attention over encoder memory (key padding mask) ---
    qc = _mm(y + qp, ca_wq_ref[...]) + ca_bq_ref[...]
    kc = _mm(mem + pe, ca_wk_ref[...]) + ca_bk_ref[...]
    vc = _mm(mem, ca_wv_ref[...]) + ca_bv_ref[...]
    attn2 = _mha(qc, kc, vc, ca_wo_ref[...], ca_bo_ref[...],
                 mask, B, Nq, S, nhead)
    y2 = _ln(y + attn2, ln2g_ref[...], ln2b_ref[...], eps)

    # --- FFN ---
    hdn = jnp.maximum(_mm(y2, w1_ref[...]) + b1_ref[...], 0.0)
    f = _mm(hdn, w2_ref[...]) + b2_ref[...]
    res = _ln(y2 + f, ln3g_ref[...], ln3b_ref[...], eps)

    @pl.when(l < last)
    def _():
        out_ref[...] = res.astype(out_ref.dtype)

    @pl.when(l == last)  # fuse the decoder's final LayerNorm into the last grid step
    def _():
        out_ref[...] = _ln(res, dng_ref[...], dnb_ref[...], eps).astype(out_ref.dtype)


# ----------------------------------------------------------------------------
# pallas_call wrappers (one launch per stack)
# ----------------------------------------------------------------------------

def _wspec(*dims):
    """BlockSpec for a layer-stacked weight: leading layer dim squeezed, indexed by grid step."""
    nd = len(dims)
    return pl.BlockSpec((None,) + dims, lambda l, _n=nd: (l,) + (0,) * _n)


def _aspec(shape):
    """BlockSpec for a layer-invariant operand (loaded once, resident across the stack)."""
    nd = len(shape)
    return pl.BlockSpec(shape, lambda l, _n=nd: (0,) * _n)


_COMPILER_PARAMS = pltpu.CompilerParams(
    dimension_semantics=("arbitrary",),          # layer axis carries state -> sequential
    vmem_limit_bytes=32 * 1024 * 1024,
)


def encoder_forward(src2, pos2, mask3, p, *, nhead, B, S):
    N, D = src2.shape
    F = p['w1'].shape[-1]
    L = p['wqk'].shape[0]

    operands = (src2, pos2, mask3,
                p['wqk'], p['bqk'], p['wv'], p['bv'], p['wo'], p['bo'],
                p['ln1g'], p['ln1b'],
                p['w1'], p['b1'], p['w2'], p['b2'],
                p['ln2g'], p['ln2b'])

    in_specs = [
        _aspec((N, D)), _aspec((N, D)), _aspec(mask3.shape),
        _wspec(D, 2 * D), _wspec(1, 2 * D),
        _wspec(D, D), _wspec(1, D),
        _wspec(D, D), _wspec(1, D),
        _wspec(1, D), _wspec(1, D),
        _wspec(D, F), _wspec(1, F),
        _wspec(F, D), _wspec(1, D),
        _wspec(1, D), _wspec(1, D),
    ]

    flops = L * (2 * N * D * 2 * D + 4 * N * D * D + 4 * B * S * S * D + 4 * N * D * F)
    transc = L * (nhead * B * S * S + 2 * N)
    bytes_acc = int(sum(int(a.size) * a.dtype.itemsize for a in operands) + N * D * 4)

    kern = functools.partial(_encoder_stack_kernel, nhead=nhead, B=B, S=S, eps=1e-5)
    return pl.pallas_call(
        kern,
        grid_spec=pltpu.PrefetchScalarGridSpec(
            num_scalar_prefetch=0, grid=(L,),
            in_specs=in_specs,
            out_specs=pl.BlockSpec((N, D), lambda l: (0, 0))),
        out_shape=jax.ShapeDtypeStruct((N, D), jnp.float32),
        compiler_params=_COMPILER_PARAMS,
        cost_estimate=pl.CostEstimate(flops=int(flops), transcendentals=int(transc),
                                      bytes_accessed=bytes_acc),
    )(*operands)


def decoder_forward(mem2, pos2, qpos2, mask3, p, dn_g, dn_b, *, nhead, B, Nq, S):
    Ns, D = mem2.shape
    Nt = qpos2.shape[0]
    F = p['w1'].shape[-1]
    L = p['sa_wqk'].shape[0]

    operands = (mem2, pos2, qpos2, mask3,
                p['sa_wqk'], p['sa_bqk'], p['sa_wv'], p['sa_bv'],
                p['sa_wo'], p['sa_bo'],
                p['ln1g'], p['ln1b'],
                p['ca_wq'], p['ca_bq'], p['ca_wk'], p['ca_bk'],
                p['ca_wv'], p['ca_bv'], p['ca_wo'], p['ca_bo'],
                p['ln2g'], p['ln2b'],
                p['w1'], p['b1'], p['w2'], p['b2'],
                p['ln3g'], p['ln3b'],
                dn_g, dn_b)

    in_specs = [
        _aspec((Ns, D)), _aspec((Ns, D)), _aspec((Nt, D)), _aspec(mask3.shape),
        _wspec(D, 2 * D), _wspec(1, 2 * D),
        _wspec(D, D), _wspec(1, D),
        _wspec(D, D), _wspec(1, D),
        _wspec(1, D), _wspec(1, D),
        _wspec(D, D), _wspec(1, D),
        _wspec(D, D), _wspec(1, D),
        _wspec(D, D), _wspec(1, D),
        _wspec(D, D), _wspec(1, D),
        _wspec(1, D), _wspec(1, D),
        _wspec(D, F), _wspec(1, F),
        _wspec(F, D), _wspec(1, D),
        _wspec(1, D), _wspec(1, D),
        _aspec((1, D)), _aspec((1, D)),
    ]

    flops = L * (2 * Nt * D * 2 * D + 8 * Nt * D * D + 4 * Ns * D * D
                 + 4 * B * Nq * Nq * D + 4 * B * Nq * S * D + 4 * Nt * D * F)
    transc = L * (nhead * B * (Nq * Nq + Nq * S) + 3 * Nt)
    bytes_acc = int(sum(int(a.size) * a.dtype.itemsize for a in operands) + Nt * D * 4)

    kern = functools.partial(_decoder_stack_kernel, nhead=nhead, B=B, Nq=Nq, S=S, eps=1e-5)
    return pl.pallas_call(
        kern,
        grid_spec=pltpu.PrefetchScalarGridSpec(
            num_scalar_prefetch=0, grid=(L,),
            in_specs=in_specs,
            out_specs=pl.BlockSpec((Nt, D), lambda l: (0, 0))),
        out_shape=jax.ShapeDtypeStruct((Nt, D), jnp.float32),
        compiler_params=_COMPILER_PARAMS,
        cost_estimate=pl.CostEstimate(flops=int(flops), transcendentals=int(transc),
                                      bytes_accessed=bytes_acc),
    )(*operands)


# ----------------------------------------------------------------------------
# Parameter init (xavier-uniform matrices stored in WEIGHT_DTYPE; biases / LN in f32)
# ----------------------------------------------------------------------------

def _xavier(key, shape):
    fan_in, fan_out = shape
    bound = math.sqrt(6.0 / (fan_in + fan_out))
    return jax.random.uniform(key, shape, jnp.float32, -bound, bound).astype(WEIGHT_DTYPE)


def _enc_layer_params(key, d, f):
    k = jax.random.split(key, 6)
    wq = _xavier(k[0], (d, d)).astype(jnp.float32)
    wk = _xavier(k[1], (d, d)).astype(jnp.float32)
    return dict(
        wqk=jnp.concatenate([wq, wk], axis=1).astype(WEIGHT_DTYPE),   # fused Q/K matmul
        bqk=jnp.zeros((1, 2 * d), jnp.float32),
        wv=_xavier(k[2], (d, d)), bv=jnp.zeros((1, d), jnp.float32),
        wo=_xavier(k[3], (d, d)), bo=jnp.zeros((1, d), jnp.float32),
        ln1g=jnp.ones((1, d), jnp.float32), ln1b=jnp.zeros((1, d), jnp.float32),
        w1=_xavier(k[4], (d, f)), b1=jnp.zeros((1, f), jnp.float32),
        w2=_xavier(k[5], (f, d)), b2=jnp.zeros((1, d), jnp.float32),
        ln2g=jnp.ones((1, d), jnp.float32), ln2b=jnp.zeros((1, d), jnp.float32),
    )


def _dec_layer_params(key, d, f):
    k = jax.random.split(key, 10)
    sa_wq = _xavier(k[0], (d, d)).astype(jnp.float32)
    sa_wk = _xavier(k[1], (d, d)).astype(jnp.float32)
    return dict(
        sa_wqk=jnp.concatenate([sa_wq, sa_wk], axis=1).astype(WEIGHT_DTYPE),
        sa_bqk=jnp.zeros((1, 2 * d), jnp.float32),
        sa_wv=_xavier(k[2], (d, d)), sa_bv=jnp.zeros((1, d), jnp.float32),
        sa_wo=_xavier(k[3], (d, d)), sa_bo=jnp.zeros((1, d), jnp.float32),
        ln1g=jnp.ones((1, d), jnp.float32), ln1b=jnp.zeros((1, d), jnp.float32),
        ca_wq=_xavier(k[4], (d, d)), ca_bq=jnp.zeros((1, d), jnp.float32),
        ca_wk=_xavier(k[5], (d, d)), ca_bk=jnp.zeros((1, d), jnp.float32),
        ca_wv=_xavier(k[6], (d, d)), ca_bv=jnp.zeros((1, d), jnp.float32),
        ca_wo=_xavier(k[7], (d, d)), ca_bo=jnp.zeros((1, d), jnp.float32),
        ln2g=jnp.ones((1, d), jnp.float32), ln2b=jnp.zeros((1, d), jnp.float32),
        w1=_xavier(k[8], (d, f)), b1=jnp.zeros((1, f), jnp.float32),
        w2=_xavier(k[9], (f, d)), b2=jnp.zeros((1, d), jnp.float32),
        ln3g=jnp.ones((1, d), jnp.float32), ln3b=jnp.zeros((1, d), jnp.float32),
    )


def init_transformer_params(key, d_model, dim_ff, n_enc, n_dec):
    keys = jax.random.split(key, n_enc + n_dec)
    enc = [_enc_layer_params(keys[i], d_model, dim_ff) for i in range(n_enc)]
    dec = [_dec_layer_params(keys[n_enc + i], d_model, dim_ff) for i in range(n_dec)]
    stack = lambda layers: jax.tree_util.tree_map(lambda *xs: jnp.stack(xs, axis=0), *layers)
    return dict(
        enc=stack(enc),
        dec=stack(dec),
        dec_norm_g=jnp.ones((1, d_model), jnp.float32),
        dec_norm_b=jnp.zeros((1, d_model), jnp.float32),
    )


# ----------------------------------------------------------------------------
# Full transformer forward (normalize_before=False / forward_post, matching module defaults)
# ----------------------------------------------------------------------------

def transformer_forward(params, src, mask, query_embed, pos_embed, nhead):
    """src: (bs, c, h, w); mask: (bs, h, w) bool (True = pad);
       query_embed: (nq, d); pos_embed: (bs, c, h, w)."""
    bs, c, h, w = src.shape
    S = h * w
    nq, d = query_embed.shape

    # boundary layout: NCHW -> 2-D (rows, d) slabs used throughout the Pallas path
    src2 = src.reshape(bs, c, S).transpose(0, 2, 1).reshape(bs * S, d)
    pos2 = pos_embed.reshape(bs, c, S).transpose(0, 2, 1).reshape(bs * S, d)
    qpos2 = jnp.broadcast_to(query_embed[None, :, :], (bs, nq, d)).reshape(bs * nq, d)

    key_pad = mask.reshape(bs, S)
    # finite large-negative additive mask (avoids -inf -> NaN if a row were fully padded)
    mask3 = jnp.where(key_pad, -1e9, 0.0).astype(jnp.float32)[:, None, :]   # (bs, 1, S)

    memory = encoder_forward(src2, pos2, mask3, params['enc'], nhead=nhead, B=bs, S=S)
    out = decoder_forward(memory, pos2, qpos2, mask3, params['dec'],
                          params['dec_norm_g'], params['dec_norm_b'],
                          nhead=nhead, B=bs, Nq=nq, S=S)

    hs = out.reshape(bs, nq, d)[None, :, :, :]                       # (1, bs, nq, d)
    memory_out = memory.reshape(bs, S, d).transpose(0, 2, 1).reshape(bs, c, h, w)
    return hs, memory_out


# ----------------------------------------------------------------------------
# Main
# ----------------------------------------------------------------------------

if __name__ == "__main__":
    d_model = 32
    nhead = 4
    num_encoder_layers = 2
    num_decoder_layers = 2
    dim_feedforward = 64
    bs, c, h, w = 2, d_model, 4, 4
    num_queries = 8

    key = jax.random.PRNGKey(0)
    kp, ks, kpos, kq = jax.random.split(key, 4)

    params = init_transformer_params(kp, d_model, dim_feedforward,
                                     num_encoder_layers, num_decoder_layers)

    src = jax.random.normal(ks, (bs, c, h, w), jnp.float32)
    pos_embed = jax.random.normal(kpos, (bs, c, h, w), jnp.float32)
    query_embed = jax.random.normal(kq, (num_queries, d_model), jnp.float32)
    # padding mask: batch 1 has its last spatial column padded
    mask = jnp.zeros((bs, h, w), jnp.bool_).at[1, :, -1].set(True)

    fwd = jax.jit(functools.partial(transformer_forward, nhead=nhead))
    hs, memory = fwd(params, src, mask, query_embed, pos_embed)
    hs = jax.block_until_ready(hs)
    memory = jax.block_until_ready(memory)

    assert hs.shape == (1, bs, num_queries, d_model), hs.shape
    assert memory.shape == (bs, c, h, w), memory.shape
    assert bool(jnp.all(jnp.isfinite(hs))) and bool(jnp.all(jnp.isfinite(memory)))
    print("KERNEL_OK")
</pallas_src>

<mosaic_0001>
module attributes {stable_mosaic.version = 11 : i64} {
  func.func @_encoder_stack_kernel(%arg0: i32, %arg1: memref<32x32xf32, #tpu.memory_space<vmem>>, %arg2: memref<32x32xf32, #tpu.memory_space<vmem>>, %arg3: memref<2x1x16xf32, #tpu.memory_space<vmem>>, %arg4: memref<1x32x64xbf16, #tpu.memory_space<vmem>>, %arg5: memref<1x1x64xf32, #tpu.memory_space<vmem>>, %arg6: memref<1x32x32xbf16, #tpu.memory_space<vmem>>, %arg7: memref<1x1x32xf32, #tpu.memory_space<vmem>>, %arg8: memref<1x32x32xbf16, #tpu.memory_space<vmem>>, %arg9: memref<1x1x32xf32, #tpu.memory_space<vmem>>, %arg10: memref<1x1x32xf32, #tpu.memory_space<vmem>>, %arg11: memref<1x1x32xf32, #tpu.memory_space<vmem>>, %arg12: memref<1x32x64xbf16, #tpu.memory_space<vmem>>, %arg13: memref<1x1x64xf32, #tpu.memory_space<vmem>>, %arg14: memref<1x64x32xbf16, #tpu.memory_space<vmem>>, %arg15: memref<1x1x32xf32, #tpu.memory_space<vmem>>, %arg16: memref<1x1x32xf32, #tpu.memory_space<vmem>>, %arg17: memref<1x1x32xf32, #tpu.memory_space<vmem>>, %arg18: memref<32x32xf32, #tpu.memory_space<vmem>>) attributes {dimension_semantics = [#tpu.dimension_semantics<arbitrary>], iteration_bounds = array<i64: 2>, scalar_prefetch = 0 : i64, scratch_operands = 0 : i64, tpu.core_type = #tpu.core_type<tc>, window_params = [{pipeline_mode = #tpu.pipeline_mode<synchronous>, transform_indices = @transform_0, window_bounds = array<i64: 32, 32>}, {pipeline_mode = #tpu.pipeline_mode<synchronous>, transform_indices = @transform_1, window_bounds = array<i64: 32, 32>}, {pipeline_mode = #tpu.pipeline_mode<synchronous>, transform_indices = @transform_2, window_bounds = array<i64: 2, 1, 16>}, {transform_indices = @transform_3, window_bounds = array<i64: 1, 32, 64>}, {transform_indices = @transform_4, window_bounds = array<i64: 1, 1, 64>}, {transform_indices = @transform_5, window_bounds = array<i64: 1, 32, 32>}, {transform_indices = @transform_6, window_bounds = array<i64: 1, 1, 32>}, {transform_indices = @transform_7, window_bounds = array<i64: 1, 32, 32>}, {transform_indices = @transform_8, window_bounds = array<i64: 1, 1, 32>}, {transform_indices = @transform_9, window_bounds = array<i64: 1, 1, 32>}, {transform_indices = @transform_10, window_bounds = array<i64: 1, 1, 32>}, {transform_indices = @transform_11, window_bounds = array<i64: 1, 32, 64>}, {transform_indices = @transform_12, window_bounds = array<i64: 1, 1, 64>}, {transform_indices = @transform_13, window_bounds = array<i64: 1, 64, 32>}, {transform_indices = @transform_14, window_bounds = array<i64: 1, 1, 32>}, {transform_indices = @transform_15, window_bounds = array<i64: 1, 1, 32>}, {transform_indices = @transform_16, window_bounds = array<i64: 1, 1, 32>}, {pipeline_mode = #tpu.pipeline_mode<synchronous>, transform_indices = @transform_17, window_bounds = array<i64: 32, 32>}]} {
    %c0_i32 = arith.constant 0 : i32
    %0 = arith.cmpi eq, %arg0, %c0_i32 : i32
    %1 = arith.extui %0 : i1 to i32
    %c0_i32_0 = arith.constant 0 : i32
    %2 = arith.cmpi ne, %1, %c0_i32_0 : i32
    scf.if %2 {
      %c0_86 = arith.constant 0 : index
      %c0_87 = arith.constant 0 : index
      %183 = vector.load %arg1[%c0_86, %c0_87] : memref<32x32xf32, #tpu.memory_space<vmem>>, vector<32x32xf32>
      %c0_88 = arith.constant 0 : index
      %c0_89 = arith.constant 0 : index
      %184 = vector.load %arg18[%c0_88, %c0_89] : memref<32x32xf32, #tpu.memory_space<vmem>>, vector<32x32xf32>
      tpu.vector_store %arg18[%c0_88, %c0_89], %183 {strides = array<i32>} : memref<32x32xf32, #tpu.memory_space<vmem>>, vector<32x32xf32>,
    } else {
    }
    %c0 = arith.constant 0 : index
    %c0_1 = arith.constant 0 : index
    %3 = vector.load %arg18[%c0, %c0_1] : memref<32x32xf32, #tpu.memory_space<vmem>>, vector<32x32xf32>
    %c0_2 = arith.constant 0 : index
    %c0_3 = arith.constant 0 : index
    %4 = vector.load %arg2[%c0_2, %c0_3] : memref<32x32xf32, #tpu.memory_space<vmem>>, vector<32x32xf32>
    %c0_4 = arith.constant 0 : index
    %c0_5 = arith.constant 0 : index
    %c0_6 = arith.constant 0 : index
    %5 = vector.load %arg3[%c0_4, %c0_5, %c0_6] : memref<2x1x16xf32, #tpu.memory_space<vmem>>, vector<2x1x16xf32>
    %6 = arith.addf %3, %4 : vector<32x32xf32>
    %c0_7 = arith.constant 0 : index
    %c0_8 = arith.constant 0 : index
    %c0_9 = arith.constant 0 : index
    %7 = vector.load %arg4[%c0_7, %c0_8, %c0_9] : memref<1x32x64xbf16, #tpu.memory_space<vmem>>, vector<1x32x64xbf16>
    %8 = vector.shape_cast %7 : vector<1x32x64xbf16> to vector<32x64xbf16>
    %9 = arith.truncf %6 : vector<32x32xf32> to vector<32x32xbf16>
    %cst = arith.constant dense<0.000000e+00> : vector<32x64xf32>
    %10 = tpu.matmul %9, %8, %cst {dimension_numbers = #tpu.dot_dimension_numbers<[1], [0], [0], [1], [0, 0, 1, 1], [], []>} : vector<32x32xbf16>, vector<32x64xbf16>, vector<32x64xf32> -> vector<32x64xf32>
    %c0_10 = arith.constant 0 : index
    %c0_11 = arith.constant 0 : index
    %c0_12 = arith.constant 0 : index
    %11 = vector.load %arg5[%c0_10, %c0_11, %c0_12] : memref<1x1x64xf32, #tpu.memory_space<vmem>>, vector<1x1x64xf32>
    %12 = vector.shape_cast %11 : vector<1x1x64xf32> to vector<1x64xf32>
    %13 = vector.broadcast %12 : vector<1x64xf32> to vector<32x64xf32>
    %14 = arith.addf %10, %13 : vector<32x64xf32>
    %c0_13 = arith.constant 0 : index
    %c0_14 = arith.constant 0 : index
    %c0_15 = arith.constant 0 : index
    %15 = vector.load %arg6[%c0_13, %c0_14, %c0_15] : memref<1x32x32xbf16, #tpu.memory_space<vmem>>, vector<1x32x32xbf16>
    %16 = vector.shape_cast %15 : vector<1x32x32xbf16> to vector<32x32xbf16>
    %17 = arith.truncf %3 : vector<32x32xf32> to vector<32x32xbf16>
    %cst_16 = arith.constant dense<0.000000e+00> : vector<32x32xf32>
    %18 = tpu.matmul %17, %16, %cst_16 {dimension_numbers = #tpu.dot_dimension_numbers<[1], [0], [0], [1], [0, 0, 1, 1], [], []>} : vector<32x32xbf16>, vector<32x32xbf16>, vector<32x32xf32> -> vector<32x32xf32>
    %c0_17 = arith.constant 0 : index
    %c0_18 = arith.constant 0 : index
    %c0_19 = arith.constant 0 : index
    %19 = vector.load %arg7[%c0_17, %c0_18, %c0_19] : memref<1x1x32xf32, #tpu.memory_space<vmem>>, vector<1x1x32xf32>
    %20 = vector.shape_cast %19 : vector<1x1x32xf32> to vector<1x32xf32>
    %21 = vector.broadcast %20 : vector<1x32xf32> to vector<32x32xf32>
    %22 = arith.addf %18, %21 : vector<32x32xf32>
    %23 = vector.extract_strided_slice %14 {offsets = [0, 0], sizes = [32, 32], strides = [1, 1]} : vector<32x64xf32> to vector<32x32xf32>
    %24 = vector.extract_strided_slice %14 {offsets = [0, 32], sizes = [32, 32], strides = [1, 1]} : vector<32x64xf32> to vector<32x32xf32>
    %c0_20 = arith.constant 0 : index
    %c0_21 = arith.constant 0 : index
    %c0_22 = arith.constant 0 : index
    %25 = vector.load %arg8[%c0_20, %c0_21, %c0_22] : memref<1x32x32xbf16, #tpu.memory_space<vmem>>, vector<1x32x32xbf16>
    %26 = vector.shape_cast %25 : vector<1x32x32xbf16> to vector<32x32xbf16>
    %c0_23 = arith.constant 0 : index
    %c0_24 = arith.constant 0 : index
    %c0_25 = arith.constant 0 : index
    %27 = vector.load %arg9[%c0_23, %c0_24, %c0_25] : memref<1x1x32xf32, #tpu.memory_space<vmem>>, vector<1x1x32xf32>
    %28 = vector.shape_cast %27 : vector<1x1x32xf32> to vector<1x32xf32>
    %29 = vector.shape_cast %23 : vector<32x32xf32> to vector<2x16x32xf32>
    %30 = vector.shape_cast %24 : vector<32x32xf32> to vector<2x16x32xf32>
    %31 = vector.shape_cast %22 : vector<32x32xf32> to vector<2x16x32xf32>
    %32 = vector.extract_strided_slice %29 {offsets = [0, 0, 0], sizes = [2, 16, 8], strides = [1, 1, 1]} : vector<2x16x32xf32> to vector<2x16x8xf32>
    %33 = vector.extract_strided_slice %30 {offsets = [0, 0, 0], sizes = [2, 16, 8], strides = [1, 1, 1]} : vector<2x16x32xf32> to vector<2x16x8xf32>
    %cst_26 = arith.constant dense<0.000000e+00> : vector<2x16x16xf32>
    %34 = tpu.matmul %32, %33, %cst_26 {dimension_numbers = #tpu.dot_dimension_numbers<[2], [2], [1], [1], [0, 0, 0, 1, 1, 1], [0], [0]>} : vector<2x16x8xf32>, vector<2x16x8xf32>, vector<2x16x16xf32> -> vector<2x16x16xf32>
    %cst_27 = arith.constant 0.353553385 : f32
    %35 = vector.broadcast %cst_27 : f32 to vector<2x16x16xf32>
    %36 = arith.mulf %34, %35 : vector<2x16x16xf32>
    %37 = vector.broadcast %5 : vector<2x1x16xf32> to vector<2x16x16xf32>
    %38 = arith.addf %36, %37 : vector<2x16x16xf32>
    %cst_28 = arith.constant dense<0xFF800000> : vector<2x16xf32>
    %39 = vector.multi_reduction <maximumf>, %38, %cst_28 [2] : vector<2x16x16xf32> to vector<2x16xf32>
    %40 = vector.shape_cast %39 : vector<2x16xf32> to vector<2x16x1xf32>
    %41 = vector.broadcast %40 : vector<2x16x1xf32> to vector<2x16x16xf32>
    %42 = arith.subf %38, %41 : vector<2x16x16xf32>
    %43 = math.exp %42 : vector<2x16x16xf32>
    %cst_29 = arith.constant dense<0.000000e+00> : vector<2x16xf32>
    %44 = vector.multi_reduction <add>, %43, %cst_29 [2] : vector<2x16x16xf32> to vector<2x16xf32>
    %45 = vector.shape_cast %44 : vector<2x16xf32> to vector<2x16x1xf32>
    %46 = vector.broadcast %45 : vector<2x16x1xf32> to vector<2x16x16xf32>
    %47 = arith.divf %43, %46 : vector<2x16x16xf32>
    %48 = vector.extract_strided_slice %31 {offsets = [0, 0, 0], sizes = [2, 16, 8], strides = [1, 1, 1]} : vector<2x16x32xf32> to vector<2x16x8xf32>
    %cst_30 = arith.constant dense<0.000000e+00> : vector<2x16x8xf32>
    %49 = tpu.matmul %47, %48, %cst_30 {dimension_numbers = #tpu.dot_dimension_numbers<[2], [1], [1], [2], [0, 0, 0, 1, 1, 2], [0], [0]>} : vector<2x16x16xf32>, vector<2x16x8xf32>, vector<2x16x8xf32> -> vector<2x16x8xf32>
    %50 = vector.extract_strided_slice %29 {offsets = [0, 0, 8], sizes = [2, 16, 8], strides = [1, 1, 1]} : vector<2x16x32xf32> to vector<2x16x8xf32>
    %51 = vector.extract_strided_slice %30 {offsets = [0, 0, 8], sizes = [2, 16, 8], strides = [1, 1, 1]} : vector<2x16x32xf32> to vector<2x16x8xf32>
    %cst_31 = arith.constant dense<0.000000e+00> : vector<2x16x16xf32>
    %52 = tpu.matmul %50, %51, %cst_31 {dimension_numbers = #tpu.dot_dimension_numbers<[2], [2], [1], [1], [0, 0, 0, 1, 1, 1], [0], [0]>} : vector<2x16x8xf32>, vector<2x16x8xf32>, vector<2x16x16xf32> -> vector<2x16x16xf32>
    %cst_32 = arith.constant 0.353553385 : f32
    %53 = vector.broadcast %cst_32 : f32 to vector<2x16x16xf32>
    %54 = arith.mulf %52, %53 : vector<2x16x16xf32>
    %55 = vector.broadcast %5 : vector<2x1x16xf32> to vector<2x16x16xf32>
    %56 = arith.addf %54, %55 : vector<2x16x16xf32>
    %cst_33 = arith.constant dense<0xFF800000> : vector<2x16xf32>
    %57 = vector.multi_reduction <maximumf>, %56, %cst_33 [2] : vector<2x16x16xf32> to vector<2x16xf32>
    %58 = vector.shape_cast %57 : vector<2x16xf32> to vector<2x16x1xf32>
    %59 = vector.broadcast %58 : vector<2x16x1xf32> to vector<2x16x16xf32>
    %60 = arith.subf %56, %59 : vector<2x16x16xf32>
    %61 = math.exp %60 : vector<2x16x16xf32>
    %cst_34 = arith.constant dense<0.000000e+00> : vector<2x16xf32>
    %62 = vector.multi_reduction <add>, %61, %cst_34 [2] : vector<2x16x16xf32> to vector<2x16xf32>
    %63 = vector.shape_cast %62 : vector<2x16xf32> to vector<2x16x1xf32>
    %64 = vector.broadcast %63 : vector<2x16x1xf32> to vector<2x16x16xf32>
    %65 = arith.divf %61, %64 : vector<2x16x16xf32>
    %66 = vector.extract_strided_slice %31 {offsets = [0, 0, 8], sizes = [2, 16, 8], strides = [1, 1, 1]} : vector<2x16x32xf32> to vector<2x16x8xf32>
    %cst_35 = arith.constant dense<0.000000e+00> : vector<2x16x8xf32>
    %67 = tpu.matmul %65, %66, %cst_35 {dimension_numbers = #tpu.dot_dimension_numbers<[2], [1], [1], [2], [0, 0, 0, 1, 1, 2], [0], [0]>} : vector<2x16x16xf32>, vector<2x16x8xf32>, vector<2x16x8xf32> -> vector<2x16x8xf32>
    %68 = vector.extract_strided_slice %29 {offsets = [0, 0, 16], sizes = [2, 16, 8], strides = [1, 1, 1]} : vector<2x16x32xf32> to vector<2x16x8xf32>
    %69 = vector.extract_strided_slice %30 {offsets = [0, 0, 16], sizes = [2, 16, 8], strides = [1, 1, 1]} : vector<2x16x32xf32> to vector<2x16x8xf32>
    %cst_36 = arith.constant dense<0.000000e+00> : vector<2x16x16xf32>
    %70 = tpu.matmul %68, %69, %cst_36 {dimension_numbers = #tpu.dot_dimension_numbers<[2], [2], [1], [1], [0, 0, 0, 1, 1, 1], [0], [0]>} : vector<2x16x8xf32>, vector<2x16x8xf32>, vector<2x16x16xf32> -> vector<2x16x16xf32>
    %cst_37 = arith.constant 0.353553385 : f32
    %71 = vector.broadcast %cst_37 : f32 to vector<2x16x16xf32>
    %72 = arith.mulf %70, %71 : vector<2x16x16xf32>
    %73 = vector.broadcast %5 : vector<2x1x16xf32> to vector<2x16x16xf32>
    %74 = arith.addf %72, %73 : vector<2x16x16xf32>
    %cst_38 = arith.constant dense<0xFF800000> : vector<2x16xf32>
    %75 = vector.multi_reduction <maximumf>, %74, %cst_38 [2] : vector<2x16x16xf32> to vector<2x16xf32>
    %76 = vector.shape_cast %75 : vector<2x16xf32> to vector<2x16x1xf32>
    %77 = vector.broadcast %76 : vector<2x16x1xf32> to vector<2x16x16xf32>
    %78 = arith.subf %74, %77 : vector<2x16x16xf32>
    %79 = math.exp %78 : vector<2x16x16xf32>
    %cst_39 = arith.constant dense<0.000000e+00> : vector<2x16xf32>
    %80 = vector.multi_reduction <add>, %79, %cst_39 [2] : vector<2x16x16xf32> to vector<2x16xf32>
    %81 = vector.shape_cast %80 : vector<2x16xf32> to vector<2x16x1xf32>
    %82 = vector.broadcast %81 : vector<2x16x1xf32> to vector<2x16x16xf32>
    %83 = arith.divf %79, %82 : vector<2x16x16xf32>
    %84 = vector.extract_strided_slice %31 {offsets = [0, 0, 16], sizes = [2, 16, 8], strides = [1, 1, 1]} : vector<2x16x32xf32> to vector<2x16x8xf32>
    %cst_40 = arith.constant dense<0.000000e+00> : vector<2x16x8xf32>
    %85 = tpu.matmul %83, %84, %cst_40 {dimension_numbers = #tpu.dot_dimension_numbers<[2], [1], [1], [2], [0, 0, 0, 1, 1, 2], [0], [0]>} : vector<2x16x16xf32>, vector<2x16x8xf32>, vector<2x16x8xf32> -> vector<2x16x8xf32>
    %86 = vector.extract_strided_slice %29 {offsets = [0, 0, 24], sizes = [2, 16, 8], strides = [1, 1, 1]} : vector<2x16x32xf32> to vector<2x16x8xf32>
    %87 = vector.extract_strided_slice %30 {offsets = [0, 0, 24], sizes = [2, 16, 8], strides = [1, 1, 1]} : vector<2x16x32xf32> to vector<2x16x8xf32>
    %cst_41 = arith.constant dense<0.000000e+00> : vector<2x16x16xf32>
    %88 = tpu.matmul %86, %87, %cst_41 {dimension_numbers = #tpu.dot_dimension_numbers<[2], [2], [1], [1], [0, 0, 0, 1, 1, 1], [0], [0]>} : vector<2x16x8xf32>, vector<2x16x8xf32>, vector<2x16x16xf32> -> vector<2x16x16xf32>
    %cst_42 = arith.constant 0.353553385 : f32
    %89 = vector.broadcast %cst_42 : f32 to vector<2x16x16xf32>
    %90 = arith.mulf %88, %89 : vector<2x16x16xf32>
    %91 = vector.broadcast %5 : vector<2x1x16xf32> to vector<2x16x16xf32>
    %92 = arith.addf %90, %91 : vector<2x16x16xf32>
    %cst_43 = arith.constant dense<0xFF800000> : vector<2x16xf32>
    %93 = vector.multi_reduction <maximumf>, %92, %cst_43 [2] : vector<2x16x16xf32> to vector<2x16xf32>
    %94 = vector.shape_cast %93 : vector<2x16xf32> to vector<2x16x1xf32>
    %95 = vector.broadcast %94 : vector<2x16x1xf32> to vector<2x16x16xf32>
    %96 = arith.subf %92, %95 : vector<2x16x16xf32>
    %97 = math.exp %96 : vector<2x16x16xf32>
    %cst_44 = arith.constant dense<0.000000e+00> : vector<2x16xf32>
    %98 = vector.multi_reduction <add>, %97, %cst_44 [2] : vector<2x16x16xf32> to vector<2x16xf32>
    %99 = vector.shape_cast %98 : vector<2x16xf32> to vector<2x16x1xf32>
    %100 = vector.broadcast %99 : vector<2x16x1xf32> to vector<2x16x16xf32>
    %101 = arith.divf %97, %100 : vector<2x16x16xf32>
    %102 = vector.extract_strided_slice %31 {offsets = [0, 0, 24], sizes = [2, 16, 8], strides = [1, 1, 1]} : vector<2x16x32xf32> to vector<2x16x8xf32>
    %cst_45 = arith.constant dense<0.000000e+00> : vector<2x16x8xf32>
    %103 = tpu.matmul %101, %102, %cst_45 {dimension_numbers = #tpu.dot_dimension_numbers<[2], [1], [1], [2], [0, 0, 0, 1, 1, 2], [0], [0]>} : vector<2x16x16xf32>, vector<2x16x8xf32>, vector<2x16x8xf32> -> vector<2x16x8xf32>
    %104 = tpu.concatenate %49, %67, %85, %103 in 2 : vector<2x16x8xf32>, vector<2x16x8xf32>, vector<2x16x8xf32>, vector<2x16x8xf32> -> vector<2x16x32xf32>
    %105 = vector.shape_cast %104 : vector<2x16x32xf32> to vector<32x32xf32>
    %106 = arith.truncf %105 : vector<32x32xf32> to vector<32x32xbf16>
    %cst_46 = arith.constant dense<0.000000e+00> : vector<32x32xf32>
    %107 = tpu.matmul %106, %26, %cst_46 {dimension_numbers = #tpu.dot_dimension_numbers<[1], [0], [0], [1], [0, 0, 1, 1], [], []>} : vector<32x32xbf16>, vector<32x32xbf16>, vector<32x32xf32> -> vector<32x32xf32>
    %108 = vector.broadcast %28 : vector<1x32xf32> to vector<32x32xf32>
    %109 = arith.addf %107, %108 : vector<32x32xf32>
    %110 = arith.addf %3, %109 : vector<32x32xf32>
    %c0_47 = arith.constant 0 : index
    %c0_48 = arith.constant 0 : index
    %c0_49 = arith.constant 0 : index
    %111 = vector.load %arg10[%c0_47, %c0_48, %c0_49] : memref<1x1x32xf32, #tpu.memory_space<vmem>>, vector<1x1x32xf32>
    %112 = vector.shape_cast %111 : vector<1x1x32xf32> to vector<1x32xf32>
    %c0_50 = arith.constant 0 : index
    %c0_51 = arith.constant 0 : index
    %c0_52 = arith.constant 0 : index
    %113 = vector.load %arg11[%c0_50, %c0_51, %c0_52] : memref<1x1x32xf32, #tpu.memory_space<vmem>>, vector<1x1x32xf32>
    %114 = vector.shape_cast %113 : vector<1x1x32xf32> to vector<1x32xf32>
    %cst_53 = arith.constant dense<0.000000e+00> : vector<32xf32>
    %115 = vector.multi_reduction <add>, %110, %cst_53 [1] : vector<32x32xf32> to vector<32xf32>
    %116 = vector.shape_cast %115 : vector<32xf32> to vector<32x1xf32>
    %cst_54 = arith.constant 3.200000e+01 : f32
    %117 = vector.broadcast %cst_54 : f32 to vector<32x1xf32>
    %118 = arith.divf %116, %117 : vector<32x1xf32>
    %119 = vector.broadcast %118 : vector<32x1xf32> to vector<32x32xf32>
    %120 = arith.subf %110, %119 : vector<32x32xf32>
    %121 = arith.mulf %120, %120 : vector<32x32xf32>
    %cst_55 = arith.constant dense<0.000000e+00> : vector<32xf32>
    %122 = vector.multi_reduction <add>, %121, %cst_55 [1] : vector<32x32xf32> to vector<32xf32>
    %123 = vector.shape_cast %122 : vector<32xf32> to vector<32x1xf32>
    %cst_56 = arith.constant 3.200000e+01 : f32
    %124 = vector.broadcast %cst_56 : f32 to vector<32x1xf32>
    %125 = arith.divf %123, %124 : vector<32x1xf32>
    %126 = vector.broadcast %118 : vector<32x1xf32> to vector<32x32xf32>
    %127 = arith.subf %110, %126 : vector<32x32xf32>
    %cst_57 = arith.constant 9.99999974E-6 : f32
    %128 = vector.broadcast %cst_57 : f32 to vector<32x1xf32>
    %129 = arith.addf %125, %128 : vector<32x1xf32>
    %130 = math.rsqrt %129 : vector<32x1xf32>
    %131 = vector.broadcast %130 : vector<32x1xf32> to vector<32x32xf32>
    %132 = arith.mulf %127, %131 : vector<32x32xf32>
    %133 = vector.broadcast %112 : vector<1x32xf32> to vector<32x32xf32>
    %134 = arith.mulf %132, %133 : vector<32x32xf32>
    %135 = vector.broadcast %114 : vector<1x32xf32> to vector<32x32xf32>
    %136 = arith.addf %134, %135 : vector<32x32xf32>
    %c0_58 = arith.constant 0 : index
    %c0_59 = arith.constant 0 : index
    %c0_60 = arith.constant 0 : index
    %137 = vector.load %arg12[%c0_58, %c0_59, %c0_60] : memref<1x32x64xbf16, #tpu.memory_space<vmem>>, vector<1x32x64xbf16>
    %138 = vector.shape_cast %137 : vector<1x32x64xbf16> to vector<32x64xbf16>
    %139 = arith.truncf %136 : vector<32x32xf32> to vector<32x32xbf16>
    %cst_61 = arith.constant dense<0.000000e+00> : vector<32x64xf32>
    %140 = tpu.matmul %139, %138, %cst_61 {dimension_numbers = #tpu.dot_dimension_numbers<[1], [0], [0], [1], [0, 0, 1, 1], [], []>} : vector<32x32xbf16>, vector<32x64xbf16>, vector<32x64xf32> -> vector<32x64xf32>
    %c0_62 = arith.constant 0 : index
    %c0_63 = arith.constant 0 : index
    %c0_64 = arith.constant 0 : index
    %141 = vector.load %arg13[%c0_62, %c0_63, %c0_64] : memref<1x1x64xf32, #tpu.memory_space<vmem>>, vector<1x1x64xf32>
    %142 = vector.shape_cast %141 : vector<1x1x64xf32> to vector<1x64xf32>
    %143 = vector.broadcast %142 : vector<1x64xf32> to vector<32x64xf32>
    %144 = arith.addf %140, %143 : vector<32x64xf32>
    %cst_65 = arith.constant 0.000000e+00 : f32
    %145 = vector.broadcast %cst_65 : f32 to vector<32x64xf32>
    %146 = arith.maximumf %144, %145 : vector<32x64xf32>
    %c0_66 = arith.constant 0 : index
    %c0_67 = arith.constant 0 : index
    %c0_68 = arith.constant 0 : index
    %147 = vector.load %arg14[%c0_66, %c0_67, %c0_68] : memref<1x64x32xbf16, #tpu.memory_space<vmem>>, vector<1x64x32xbf16>
    %148 = vector.shape_cast %147 : vector<1x64x32xbf16> to vector<64x32xbf16>
    %149 = arith.truncf %146 : vector<32x64xf32> to vector<32x64xbf16>
    %cst_69 = arith.constant dense<0.000000e+00> : vector<32x32xf32>
    %150 = tpu.matmul %149, %148, %cst_69 {dimension_numbers = #tpu.dot_dimension_numbers<[1], [0], [0], [1], [0, 0, 1, 1], [], []>} : vector<32x64xbf16>, vector<64x32xbf16>, vector<32x32xf32> -> vector<32x32xf32>
    %c0_70 = arith.constant 0 : index
    %c0_71 = arith.constant 0 : index
    %c0_72 = arith.constant 0 : index
    %151 = vector.load %arg15[%c0_70, %c0_71, %c0_72] : memref<1x1x32xf32, #tpu.memory_space<vmem>>, vector<1x1x32xf32>
    %152 = vector.shape_cast %151 : vector<1x1x32xf32> to vector<1x32xf32>
    %153 = vector.broadcast %152 : vector<1x32xf32> to vector<32x32xf32>
    %154 = arith.addf %150, %153 : vector<32x32xf32>
    %155 = arith.addf %136, %154 : vector<32x32xf32>
    %c0_73 = arith.constant 0 : index
    %c0_74 = arith.constant 0 : index
    %c0_75 = arith.constant 0 : index
    %156 = vector.load %arg16[%c0_73, %c0_74, %c0_75] : memref<1x1x32xf32, #tpu.memory_space<vmem>>, vector<1x1x32xf32>
    %157 = vector.shape_cast %156 : vector<1x1x32xf32> to vector<1x32xf32>
    %c0_76 = arith.constant 0 : index
    %c0_77 = arith.constant 0 : index
    %c0_78 = arith.constant 0 : index
    %158 = vector.load %arg17[%c0_76, %c0_77, %c0_78] : memref<1x1x32xf32, #tpu.memory_space<vmem>>, vector<1x1x32xf32>
    %159 = vector.shape_cast %158 : vector<1x1x32xf32> to vector<1x32xf32>
    %cst_79 = arith.constant dense<0.000000e+00> : vector<32xf32>
    %160 = vector.multi_reduction <add>, %155, %cst_79 [1] : vector<32x32xf32> to vector<32xf32>
    %161 = vector.shape_cast %160 : vector<32xf32> to vector<32x1xf32>
    %cst_80 = arith.constant 3.200000e+01 : f32
    %162 = vector.broadcast %cst_80 : f32 to vector<32x1xf32>
    %163 = arith.divf %161, %162 : vector<32x1xf32>
    %164 = vector.broadcast %163 : vector<32x1xf32> to vector<32x32xf32>
    %165 = arith.subf %155, %164 : vector<32x32xf32>
    %166 = arith.mulf %165, %165 : vector<32x32xf32>
    %cst_81 = arith.constant dense<0.000000e+00> : vector<32xf32>
    %167 = vector.multi_reduction <add>, %166, %cst_81 [1] : vector<32x32xf32> to vector<32xf32>
    %168 = vector.shape_cast %167 : vector<32xf32> to vector<32x1xf32>
    %cst_82 = arith.constant 3.200000e+01 : f32
    %169 = vector.broadcast %cst_82 : f32 to vector<32x1xf32>
    %170 = arith.divf %168, %169 : vector<32x1xf32>
    %171 = vector.broadcast %163 : vector<32x1xf32> to vector<32x32xf32>
    %172 = arith.subf %155, %171 : vector<32x32xf32>
    %cst_83 = arith.constant 9.99999974E-6 : f32
    %173 = vector.broadcast %cst_83 : f32 to vector<32x1xf32>
    %174 = arith.addf %170, %173 : vector<32x1xf32>
    %175 = math.rsqrt %174 : vector<32x1xf32>
    %176 = vector.broadcast %175 : vector<32x1xf32> to vector<32x32xf32>
    %177 = arith.mulf %172, %176 : vector<32x32xf32>
    %178 = vector.broadcast %157 : vector<1x32xf32> to vector<32x32xf32>
    %179 = arith.mulf %177, %178 : vector<32x32xf32>
    %180 = vector.broadcast %159 : vector<1x32xf32> to vector<32x32xf32>
    %181 = arith.addf %179, %180 : vector<32x32xf32>
    %c0_84 = arith.constant 0 : index
    %c0_85 = arith.constant 0 : index
    %182 = vector.load %arg18[%c0_84, %c0_85] : memref<32x32xf32, #tpu.memory_space<vmem>>, vector<32x32xf32>
    tpu.vector_store %arg18[%c0_84, %c0_85], %181 {strides = array<i32>} : memref<32x32xf32, #tpu.memory_space<vmem>>, vector<32x32xf32>,
    return
  }
  func.func @transform_0(%arg0: i32) -> (i32, i32) {
    %c0_i32 = arith.constant 0 : i32
    %c0_i32_0 = arith.constant 0 : i32
    %c0_i32_1 = arith.constant 0 : i32
    return %c0_i32, %c0_i32_0 : i32, i32
  }
  func.func @transform_1(%arg0: i32) -> (i32, i32) {
    %c0_i32 = arith.constant 0 : i32
    %c0_i32_0 = arith.constant 0 : i32
    %c0_i32_1 = arith.constant 0 : i32
    return %c0_i32, %c0_i32_0 : i32, i32
  }
  func.func @transform_2(%arg0: i32) -> (i32, i32, i32) {
    %c0_i32 = arith.constant 0 : i32
    %c0_i32_0 = arith.constant 0 : i32
    %c0_i32_1 = arith.constant 0 : i32
    %c0_i32_2 = arith.constant 0 : i32
    return %c0_i32, %c0_i32_0, %c0_i32_1 : i32, i32, i32
  }
  func.func @transform_3(%arg0: i32) -> (i32, i32, i32) {
    %c0_i32 = arith.constant 0 : i32
    %c0_i32_0 = arith.constant 0 : i32
    %c0_i32_1 = arith.constant 0 : i32
    return %arg0, %c0_i32, %c0_i32_0 : i32, i32, i32
  }
  func.func @transform_4(%arg0: i32) -> (i32, i32, i32) {
    %c0_i32 = arith.constant 0 : i32
    %c0_i32_0 = arith.constant 0 : i32
    %c0_i32_1 = arith.constant 0 : i32
    return %arg0, %c0_i32, %c0_i32_0 : i32, i32, i32
  }
  func.func @transform_5(%arg0: i32) -> (i32, i32, i32) {
    %c0_i32 = arith.constant 0 : i32
    %c0_i32_0 = arith.constant 0 : i32
    %c0_i32_1 = arith.constant 0 : i32
    return %arg0, %c0_i32, %c0_i32_0 : i32, i32, i32
  }
  func.func @transform_6(%arg0: i32) -> (i32, i32, i32) {
    %c0_i32 = arith.constant 0 : i32
    %c0_i32_0 = arith.constant 0 : i32
    %c0_i32_1 = arith.constant 0 : i32
    return %arg0, %c0_i32, %c0_i32_0 : i32, i32, i32
  }
  func.func @transform_7(%arg0: i32) -> (i32, i32, i32) {
    %c0_i32 = arith.constant 0 : i32
    %c0_i32_0 = arith.constant 0 : i32
    %c0_i32_1 = arith.constant 0 : i32
    return %arg0, %c0_i32, %c0_i32_0 : i32, i32, i32
  }
  func.func @transform_8(%arg0: i32) -> (i32, i32, i32) {
    %c0_i32 = arith.constant 0 : i32
    %c0_i32_0 = arith.constant 0 : i32
    %c0_i32_1 = arith.constant 0 : i32
    return %arg0, %c0_i32, %c0_i32_0 : i32, i32, i32
  }
  func.func @transform_9(%arg0: i32) -> (i32, i32, i32) {
    %c0_i32 = arith.constant 0 : i32
    %c0_i32_0 = arith.constant 0 : i32
    %c0_i32_1 = arith.constant 0 : i32
    return %arg0, %c0_i32, %c0_i32_0 : i32, i32, i32
  }
  func.func @transform_10(%arg0: i32) -> (i32, i32, i32) {
    %c0_i32 = arith.constant 0 : i32
    %c0_i32_0 = arith.constant 0 : i32
    %c0_i32_1 = arith.constant 0 : i32
    return %arg0, %c0_i32, %c0_i32_0 : i32, i32, i32
  }
  func.func @transform_11(%arg0: i32) -> (i32, i32, i32) {
    %c0_i32 = arith.constant 0 : i32
    %c0_i32_0 = arith.constant 0 : i32
    %c0_i32_1 = arith.constant 0 : i32
    return %arg0, %c0_i32, %c0_i32_0 : i32, i32, i32
  }
  func.func @transform_12(%arg0: i32) -> (i32, i32, i32) {
    %c0_i32 = arith.constant 0 : i32
    %c0_i32_0 = arith.constant 0 : i32
    %c0_i32_1 = arith.constant 0 : i32
    return %arg0, %c0_i32, %c0_i32_0 : i32, i32, i32
  }
  func.func @transform_13(%arg0: i32) -> (i32, i32, i32) {
    %c0_i32 = arith.constant 0 : i32
    %c0_i32_0 = arith.constant 0 : i32
    %c0_i32_1 = arith.constant 0 : i32
    return %arg0, %c0_i32, %c0_i32_0 : i32, i32, i32
  }
  func.func @transform_14(%arg0: i32) -> (i32, i32, i32) {
    %c0_i32 = arith.constant 0 : i32
    %c0_i32_0 = arith.constant 0 : i32
    %c0_i32_1 = arith.constant 0 : i32
    return %arg0, %c0_i32, %c0_i32_0 : i32, i32, i32
  }
  func.func @transform_15(%arg0: i32) -> (i32, i32, i32) {
    %c0_i32 = arith.constant 0 : i32
    %c0_i32_0 = arith.constant 0 : i32
    %c0_i32_1 = arith.constant 0 : i32
    return %arg0, %c0_i32, %c0_i32_0 : i32, i32, i32
  }
  func.func @transform_16(%arg0: i32) -> (i32, i32, i32) {
    %c0_i32 = arith.constant 0 : i32
    %c0_i32_0 = arith.constant 0 : i32
    %c0_i32_1 = arith.constant 0 : i32
    return %arg0, %c0_i32, %c0_i32_0 : i32, i32, i32
  }
  func.func @transform_17(%arg0: i32) -> (i32, i32) {
    %c0_i32 = arith.constant 0 : i32
    %c0_i32_0 = arith.constant 0 : i32
    %c0_i32_1 = arith.constant 0 : i32
    return %c0_i32, %c0_i32_0 : i32, i32
  }
}

module attributes {stable_mosaic.version = 11 : i64} {
  func.func @_decoder_stack_kernel(%arg0: i32, %arg1: memref<32x32xf32, #tpu.memory_space<vmem>>, %arg2: memref<32x32xf32, #tpu.memory_space<vmem>>, %arg3: memref<16x32xf32, #tpu.memory_space<vmem>>, %arg4: memref<2x1x16xf32, #tpu.memory_space<vmem>>, %arg5: memref<1x32x64xbf16, #tpu.memory_space<vmem>>, %arg6: memref<1x1x64xf32, #tpu.memory_space<vmem>>, %arg7: memref<1x32x32xbf16, #tpu.memory_space<vmem>>, %arg8: memref<1x1x32xf32, #tpu.memory_space<vmem>>, %arg9: memref<1x32x32xbf16, #tpu.memory_space<vmem>>, %arg10: memref<1x1x32xf32, #tpu.memory_space<vmem>>, %arg11: memref<1x1x32xf32, #tpu.memory_space<vmem>>, %arg12: memref<1x1x32xf32, #tpu.memory_space<vmem>>, %arg13: memref<1x32x32xbf16, #tpu.memory_space<vmem>>, %arg14: memref<1x1x32xf32, #tpu.memory_space<vmem>>, %arg15: memref<1x32x32xbf16, #tpu.memory_space<vmem>>, %arg16: memref<1x1x32xf32, #tpu.memory_space<vmem>>, %arg17: memref<1x32x32xbf16, #tpu.memory_space<vmem>>, %arg18: memref<1x1x32xf32, #tpu.memory_space<vmem>>, %arg19: memref<1x32x32xbf16, #tpu.memory_space<vmem>>, %arg20: memref<1x1x32xf32, #tpu.memory_space<vmem>>, %arg21: memref<1x1x32xf32, #tpu.memory_space<vmem>>, %arg22: memref<1x1x32xf32, #tpu.memory_space<vmem>>, %arg23: memref<1x32x64xbf16, #tpu.memory_space<vmem>>, %arg24: memref<1x1x64xf32, #tpu.memory_space<vmem>>, %arg25: memref<1x64x32xbf16, #tpu.memory_space<vmem>>, %arg26: memref<1x1x32xf32, #tpu.memory_space<vmem>>, %arg27: memref<1x1x32xf32, #tpu.memory_space<vmem>>, %arg28: memref<1x1x32xf32, #tpu.memory_space<vmem>>, %arg29: memref<1x32xf32, #tpu.memory_space<vmem>>, %arg30: memref<1x32xf32, #tpu.memory_space<vmem>>, %arg31: memref<16x32xf32, #tpu.memory_space<vmem>>) attributes {dimension_semantics = [#tpu.dimension_semantics<arbitrary>], iteration_bounds = array<i64: 2>, scalar_prefetch = 0 : i64, scratch_operands = 0 : i64, tpu.core_type = #tpu.core_type<tc>, window_params = [{pipeline_mode = #tpu.pipeline_mode<synchronous>, transform_indices = @transform_0, window_bounds = array<i64: 32, 32>}, {pipeline_mode = #tpu.pipeline_mode<synchronous>, transform_indices = @transform_1, window_bounds = array<i64: 32, 32>}, {pipeline_mode = #tpu.pipeline_mode<synchronous>, transform_indices = @transform_2, window_bounds = array<i64: 16, 32>}, {pipeline_mode = #tpu.pipeline_mode<synchronous>, transform_indices = @transform_3, window_bounds = array<i64: 2, 1, 16>}, {transform_indices = @transform_4, window_bounds = array<i64: 1, 32, 64>}, {transform_indices = @transform_5, window_bounds = array<i64: 1, 1, 64>}, {transform_indices = @transform_6, window_bounds = array<i64: 1, 32, 32>}, {transform_indices = @transform_7, window_bounds = array<i64: 1, 1, 32>}, {transform_indices = @transform_8, window_bounds = array<i64: 1, 32, 32>}, {transform_indices = @transform_9, window_bounds = array<i64: 1, 1, 32>}, {transform_indices = @transform_10, window_bounds = array<i64: 1, 1, 32>}, {transform_indices = @transform_11, window_bounds = array<i64: 1, 1, 32>}, {transform_indices = @transform_12, window_bounds = array<i64: 1, 32, 32>}, {transform_indices = @transform_13, window_bounds = array<i64: 1, 1, 32>}, {transform_indices = @transform_14, window_bounds = array<i64: 1, 32, 32>}, {transform_indices = @transform_15, window_bounds = array<i64: 1, 1, 32>}, {transform_indices = @transform_16, window_bounds = array<i64: 1, 32, 32>}, {transform_indices = @transform_17, window_bounds = array<i64: 1, 1, 32>}, {transform_indices = @transform_18, window_bounds = array<i64: 1, 32, 32>}, {transform_indices = @transform_19, window_bounds = array<i64: 1, 1, 32>}, {transform_indices = @transform_20, window_bounds = array<i64: 1, 1, 32>}, {transform_indices = @transform_21, window_bounds = array<i64: 1, 1, 32>}, {transform_indices = @transform_22, window_bounds = array<i64: 1, 32, 64>}, {transform_indices = @transform_23, window_bounds = array<i64: 1, 1, 64>}, {transform_indices = @transform_24, window_bounds = array<i64: 1, 64, 32>}, {transform_indices = @transform_25, window_bounds = array<i64: 1, 1, 32>}, {transform_indices = @transform_26, window_bounds = array<i64: 1, 1, 32>}, {transform_indices = @transform_27, window_bounds = array<i64: 1, 1, 32>}, {pipeline_mode = #tpu.pipeline_mode<synchronous>, transform_indices = @transform_28, window_bounds = array<i64: 1, 32>}, {pipeline_mode = #tpu.pipeline_mode<synchronous>, transform_indices = @transform_29, window_bounds = array<i64: 1, 32>}, {pipeline_mode = #tpu.pipeline_mode<synchronous>, transform_indices = @transform_30, window_bounds = array<i64: 16, 32>}]} {
    %c0_i32 = arith.constant 0 : i32
    %0 = arith.cmpi eq, %arg0, %c0_i32 : i32
    %1 = arith.extui %0 : i1 to i32
    %c0_i32_0 = arith.constant 0 : i32
    %2 = arith.cmpi ne, %1, %c0_i32_0 : i32
    scf.if %2 {
      %cst_150 = arith.constant 0.000000e+00 : f32
      %320 = vector.broadcast %cst_150 : f32 to vector<16x32xf32>
      %c0_151 = arith.constant 0 : index
      %c0_152 = arith.constant 0 : index
      %321 = vector.load %arg31[%c0_151, %c0_152] : memref<16x32xf32, #tpu.memory_space<vmem>>, vector<16x32xf32>
      tpu.vector_store %arg31[%c0_151, %c0_152], %320 {strides = array<i32>} : memref<16x32xf32, #tpu.memory_space<vmem>>, vector<16x32xf32>,
    } else {
    }
    %c0 = arith.constant 0 : index
    %c0_1 = arith.constant 0 : index
    %3 = vector.load %arg31[%c0, %c0_1] : memref<16x32xf32, #tpu.memory_space<vmem>>, vector<16x32xf32>
    %c0_2 = arith.constant 0 : index
    %c0_3 = arith.constant 0 : index
    %4 = vector.load %arg1[%c0_2, %c0_3] : memref<32x32xf32, #tpu.memory_space<vmem>>, vector<32x32xf32>
    %c0_4 = arith.constant 0 : index
    %c0_5 = arith.constant 0 : index
    %5 = vector.load %arg2[%c0_4, %c0_5] : memref<32x32xf32, #tpu.memory_space<vmem>>, vector<32x32xf32>
    %c0_6 = arith.constant 0 : index
    %c0_7 = arith.constant 0 : index
    %6 = vector.load %arg3[%c0_6, %c0_7] : memref<16x32xf32, #tpu.memory_space<vmem>>, vector<16x32xf32>
    %c0_8 = arith.constant 0 : index
    %c0_9 = arith.constant 0 : index
    %c0_10 = arith.constant 0 : index
    %7 = vector.load %arg4[%c0_8, %c0_9, %c0_10] : memref<2x1x16xf32, #tpu.memory_space<vmem>>, vector<2x1x16xf32>
    %8 = arith.addf %3, %6 : vector<16x32xf32>
    %c0_11 = arith.constant 0 : index
    %c0_12 = arith.constant 0 : index
    %c0_13 = arith.constant 0 : index
    %9 = vector.load %arg5[%c0_11, %c0_12, %c0_13] : memref<1x32x64xbf16, #tpu.memory_space<vmem>>, vector<1x32x64xbf16>
    %10 = vector.shape_cast %9 : vector<1x32x64xbf16> to vector<32x64xbf16>
    %11 = arith.truncf %8 : vector<16x32xf32> to vector<16x32xbf16>
    %cst = arith.constant dense<0.000000e+00> : vector<16x64xf32>
    %12 = tpu.matmul %11, %10, %cst {dimension_numbers = #tpu.dot_dimension_numbers<[1], [0], [0], [1], [0, 0, 1, 1], [], []>} : vector<16x32xbf16>, vector<32x64xbf16>, vector<16x64xf32> -> vector<16x64xf32>
    %c0_14 = arith.constant 0 : index
    %c0_15 = arith.constant 0 : index
    %c0_16 = arith.constant 0 : index
    %13 = vector.load %arg6[%c0_14, %c0_15, %c0_16] : memref<1x1x64xf32, #tpu.memory_space<vmem>>, vector<1x1x64xf32>
    %14 = vector.shape_cast %13 : vector<1x1x64xf32> to vector<1x64xf32>
    %15 = vector.broadcast %14 : vector<1x64xf32> to vector<16x64xf32>
    %16 = arith.addf %12, %15 : vector<16x64xf32>
    %c0_17 = arith.constant 0 : index
    %c0_18 = arith.constant 0 : index
    %c0_19 = arith.constant 0 : index
    %17 = vector.load %arg7[%c0_17, %c0_18, %c0_19] : memref<1x32x32xbf16, #tpu.memory_space<vmem>>, vector<1x32x32xbf16>
    %18 = vector.shape_cast %17 : vector<1x32x32xbf16> to vector<32x32xbf16>
    %19 = arith.truncf %3 : vector<16x32xf32> to vector<16x32xbf16>
    %cst_20 = arith.constant dense<0.000000e+00> : vector<16x32xf32>
    %20 = tpu.matmul %19, %18, %cst_20 {dimension_numbers = #tpu.dot_dimension_numbers<[1], [0], [0], [1], [0, 0, 1, 1], [], []>} : vector<16x32xbf16>, vector<32x32xbf16>, vector<16x32xf32> -> vector<16x32xf32>
    %c0_21 = arith.constant 0 : index
    %c0_22 = arith.constant 0 : index
    %c0_23 = arith.constant 0 : index
    %21 = vector.load %arg8[%c0_21, %c0_22, %c0_23] : memref<1x1x32xf32, #tpu.memory_space<vmem>>, vector<1x1x32xf32>
    %22 = vector.shape_cast %21 : vector<1x1x32xf32> to vector<1x32xf32>
    %23 = vector.broadcast %22 : vector<1x32xf32> to vector<16x32xf32>
    %24 = arith.addf %20, %23 : vector<16x32xf32>
    %25 = vector.extract_strided_slice %16 {offsets = [0, 0], sizes = [16, 32], strides = [1, 1]} : vector<16x64xf32> to vector<16x32xf32>
    %26 = vector.extract_strided_slice %16 {offsets = [0, 32], sizes = [16, 32], strides = [1, 1]} : vector<16x64xf32> to vector<16x32xf32>
    %c0_24 = arith.constant 0 : index
    %c0_25 = arith.constant 0 : index
    %c0_26 = arith.constant 0 : index
    %27 = vector.load %arg9[%c0_24, %c0_25, %c0_26] : memref<1x32x32xbf16, #tpu.memory_space<vmem>>, vector<1x32x32xbf16>
    %28 = vector.shape_cast %27 : vector<1x32x32xbf16> to vector<32x32xbf16>
    %c0_27 = arith.constant 0 : index
    %c0_28 = arith.constant 0 : index
    %c0_29 = arith.constant 0 : index
    %29 = vector.load %arg10[%c0_27, %c0_28, %c0_29] : memref<1x1x32xf32, #tpu.memory_space<vmem>>, vector<1x1x32xf32>
    %30 = vector.shape_cast %29 : vector<1x1x32xf32> to vector<1x32xf32>
    %31 = vector.shape_cast %25 : vector<16x32xf32> to vector<2x8x32xf32>
    %32 = vector.shape_cast %26 : vector<16x32xf32> to vector<2x8x32xf32>
    %33 = vector.shape_cast %24 : vector<16x32xf32> to vector<2x8x32xf32>
    %34 = vector.extract_strided_slice %31 {offsets = [0, 0, 0], sizes = [2, 8, 8], strides = [1, 1, 1]} : vector<2x8x32xf32> to vector<2x8x8xf32>
    %35 = vector.extract_strided_slice %32 {offsets = [0, 0, 0], sizes = [2, 8, 8], strides = [1, 1, 1]} : vector<2x8x32xf32> to vector<2x8x8xf32>
    %cst_30 = arith.constant dense<0.000000e+00> : vector<2x8x8xf32>
    %36 = tpu.matmul %34, %35, %cst_30 {dimension_numbers = #tpu.dot_dimension_numbers<[2], [2], [1], [1], [0, 0, 0, 1, 1, 1], [0], [0]>} : vector<2x8x8xf32>, vector<2x8x8xf32>, vector<2x8x8xf32> -> vector<2x8x8xf32>
    %cst_31 = arith.constant 0.353553385 : f32
    %37 = vector.broadcast %cst_31 : f32 to vector<2x8x8xf32>
    %38 = arith.mulf %36, %37 : vector<2x8x8xf32>
    %cst_32 = arith.constant dense<0xFF800000> : vector<2x8xf32>
    %39 = vector.multi_reduction <maximumf>, %38, %cst_32 [2] : vector<2x8x8xf32> to vector<2x8xf32>
    %40 = vector.shape_cast %39 : vector<2x8xf32> to vector<2x8x1xf32>
    %41 = vector.broadcast %40 : vector<2x8x1xf32> to vector<2x8x8xf32>
    %42 = arith.subf %38, %41 : vector<2x8x8xf32>
    %43 = math.exp %42 : vector<2x8x8xf32>
    %cst_33 = arith.constant dense<0.000000e+00> : vector<2x8xf32>
    %44 = vector.multi_reduction <add>, %43, %cst_33 [2] : vector<2x8x8xf32> to vector<2x8xf32>
    %45 = vector.shape_cast %44 : vector<2x8xf32> to vector<2x8x1xf32>
    %46 = vector.broadcast %45 : vector<2x8x1xf32> to vector<2x8x8xf32>
    %47 = arith.divf %43, %46 : vector<2x8x8xf32>
    %48 = vector.extract_strided_slice %33 {offsets = [0, 0, 0], sizes = [2, 8, 8], strides = [1, 1, 1]} : vector<2x8x32xf32> to vector<2x8x8xf32>
    %cst_34 = arith.constant dense<0.000000e+00> : vector<2x8x8xf32>
    %49 = tpu.matmul %47, %48, %cst_34 {dimension_numbers = #tpu.dot_dimension_numbers<[2], [1], [1], [2], [0, 0, 0, 1, 1, 2], [0], [0]>} : vector<2x8x8xf32>, vector<2x8x8xf32>, vector<2x8x8xf32> -> vector<2x8x8xf32>
    %50 = vector.extract_strided_slice %31 {offsets = [0, 0, 8], sizes = [2, 8, 8], strides = [1, 1, 1]} : vector<2x8x32xf32> to vector<2x8x8xf32>
    %51 = vector.extract_strided_slice %32 {offsets = [0, 0, 8], sizes = [2, 8, 8], strides = [1, 1, 1]} : vector<2x8x32xf32> to vector<2x8x8xf32>
    %cst_35 = arith.constant dense<0.000000e+00> : vector<2x8x8xf32>
    %52 = tpu.matmul %50, %51, %cst_35 {dimension_numbers = #tpu.dot_dimension_numbers<[2], [2], [1], [1], [0, 0, 0, 1, 1, 1], [0], [0]>} : vector<2x8x8xf32>, vector<2x8x8xf32>, vector<2x8x8xf32> -> vector<2x8x8xf32>
    %cst_36 = arith.constant 0.353553385 : f32
    %53 = vector.broadcast %cst_36 : f32 to vector<2x8x8xf32>
    %54 = arith.mulf %52, %53 : vector<2x8x8xf32>
    %cst_37 = arith.constant dense<0xFF800000> : vector<2x8xf32>
    %55 = vector.multi_reduction <maximumf>, %54, %cst_37 [2] : vector<2x8x8xf32> to vector<2x8xf32>
    %56 = vector.shape_cast %55 : vector<2x8xf32> to vector<2x8x1xf32>
    %57 = vector.broadcast %56 : vector<2x8x1xf32> to vector<2x8x8xf32>
    %58 = arith.subf %54, %57 : vector<2x8x8xf32>
    %59 = math.exp %58 : vector<2x8x8xf32>
    %cst_38 = arith.constant dense<0.000000e+00> : vector<2x8xf32>
    %60 = vector.multi_reduction <add>, %59, %cst_38 [2] : vector<2x8x8xf32> to vector<2x8xf32>
    %61 = vector.shape_cast %60 : vector<2x8xf32> to vector<2x8x1xf32>
    %62 = vector.broadcast %61 : vector<2x8x1xf32> to vector<2x8x8xf32>
    %63 = arith.divf %59, %62 : vector<2x8x8xf32>
    %64 = vector.extract_strided_slice %33 {offsets = [0, 0, 8], sizes = [2, 8, 8], strides = [1, 1, 1]} : vector<2x8x32xf32> to vector<2x8x8xf32>
    %cst_39 = arith.constant dense<0.000000e+00> : vector<2x8x8xf32>
    %65 = tpu.matmul %63, %64, %cst_39 {dimension_numbers = #tpu.dot_dimension_numbers<[2], [1], [1], [2], [0, 0, 0, 1, 1, 2], [0], [0]>} : vector<2x8x8xf32>, vector<2x8x8xf32>, vector<2x8x8xf32> -> vector<2x8x8xf32>
    %66 = vector.extract_strided_slice %31 {offsets = [0, 0, 16], sizes = [2, 8, 8], strides = [1, 1, 1]} : vector<2x8x32xf32> to vector<2x8x8xf32>
    %67 = vector.extract_strided_slice %32 {offsets = [0, 0, 16], sizes = [2, 8, 8], strides = [1, 1, 1]} : vector<2x8x32xf32> to vector<2x8x8xf32>
    %cst_40 = arith.constant dense<0.000000e+00> : vector<2x8x8xf32>
    %68 = tpu.matmul %66, %67, %cst_40 {dimension_numbers = #tpu.dot_dimension_numbers<[2], [2], [1], [1], [0, 0, 0, 1, 1, 1], [0], [0]>} : vector<2x8x8xf32>, vector<2x8x8xf32>, vector<2x8x8xf32> -> vector<2x8x8xf32>
    %cst_41 = arith.constant 0.353553385 : f32
    %69 = vector.broadcast %cst_41 : f32 to vector<2x8x8xf32>
    %70 = arith.mulf %68, %69 : vector<2x8x8xf32>
    %cst_42 = arith.constant dense<0xFF800000> : vector<2x8xf32>
    %71 = vector.multi_reduction <maximumf>, %70, %cst_42 [2] : vector<2x8x8xf32> to vector<2x8xf32>
    %72 = vector.shape_cast %71 : vector<2x8xf32> to vector<2x8x1xf32>
    %73 = vector.broadcast %72 : vector<2x8x1xf32> to vector<2x8x8xf32>
    %74 = arith.subf %70, %73 : vector<2x8x8xf32>
    %75 = math.exp %74 : vector<2x8x8xf32>
    %cst_43 = arith.constant dense<0.000000e+00> : vector<2x8xf32>
    %76 = vector.multi_reduction <add>, %75, %cst_43 [2] : vector<2x8x8xf32> to vector<2x8xf32>
    %77 = vector.shape_cast %76 : vector<2x8xf32> to vector<2x8x1xf32>
    %78 = vector.broadcast %77 : vector<2x8x1xf32> to vector<2x8x8xf32>
    %79 = arith.divf %75, %78 : vector<2x8x8xf32>
    %80 = vector.extract_strided_slice %33 {offsets = [0, 0, 16], sizes = [2, 8, 8], strides = [1, 1, 1]} : vector<2x8x32xf32> to vector<2x8x8xf32>
    %cst_44 = arith.constant dense<0.000000e+00> : vector<2x8x8xf32>
    %81 = tpu.matmul %79, %80, %cst_44 {dimension_numbers = #tpu.dot_dimension_numbers<[2], [1], [1], [2], [0, 0, 0, 1, 1, 2], [0], [0]>} : vector<2x8x8xf32>, vector<2x8x8xf32>, vector<2x8x8xf32> -> vector<2x8x8xf32>
    %82 = vector.extract_strided_slice %31 {offsets = [0, 0, 24], sizes = [2, 8, 8], strides = [1, 1, 1]} : vector<2x8x32xf32> to vector<2x8x8xf32>
    %83 = vector.extract_strided_slice %32 {offsets = [0, 0, 24], sizes = [2, 8, 8], strides = [1, 1, 1]} : vector<2x8x32xf32> to vector<2x8x8xf32>
    %cst_45 = arith.constant dense<0.000000e+00> : vector<2x8x8xf32>
    %84 = tpu.matmul %82, %83, %cst_45 {dimension_numbers = #tpu.dot_dimension_numbers<[2], [2], [1], [1], [0, 0, 0, 1, 1, 1], [0], [0]>} : vector<2x8x8xf32>, vector<2x8x8xf32>, vector<2x8x8xf32> -> vector<2x8x8xf32>
    %cst_46 = arith.constant 0.353553385 : f32
    %85 = vector.broadcast %cst_46 : f32 to vector<2x8x8xf32>
    %86 = arith.mulf %84, %85 : vector<2x8x8xf32>
    %cst_47 = arith.constant dense<0xFF800000> : vector<2x8xf32>
    %87 = vector.multi_reduction <maximumf>, %86, %cst_47 [2] : vector<2x8x8xf32> to vector<2x8xf32>
    %88 = vector.shape_cast %87 : vector<2x8xf32> to vector<2x8x1xf32>
    %89 = vector.broadcast %88 : vector<2x8x1xf32> to vector<2x8x8xf32>
    %90 = arith.subf %86, %89 : vector<2x8x8xf32>
    %91 = math.exp %90 : vector<2x8x8xf32>
    %cst_48 = arith.constant dense<0.000000e+00> : vector<2x8xf32>
    %92 = vector.multi_reduction <add>, %91, %cst_48 [2] : vector<2x8x8xf32> to vector<2x8xf32>
    %93 = vector.shape_cast %92 : vector<2x8xf32> to vector<2x8x1xf32>
    %94 = vector.broadcast %93 : vector<2x8x1xf32> to vector<2x8x8xf32>
    %95 = arith.divf %91, %94 : vector<2x8x8xf32>
    %96 = vector.extract_strided_slice %33 {offsets = [0, 0, 24], sizes = [2, 8, 8], strides = [1, 1, 1]} : vector<2x8x32xf32> to vector<2x8x8xf32>
    %cst_49 = arith.constant dense<0.000000e+00> : vector<2x8x8xf32>
    %97 = tpu.matmul %95, %96, %cst_49 {dimension_numbers = #tpu.dot_dimension_numbers<[2], [1], [1], [2], [0, 0, 0, 1, 1, 2], [0], [0]>} : vector<2x8x8xf32>, vector<2x8x8xf32>, vector<2x8x8xf32> -> vector<2x8x8xf32>
    %98 = tpu.concatenate %49, %65, %81, %97 in 2 : vector<2x8x8xf32>, vector<2x8x8xf32>, vector<2x8x8xf32>, vector<2x8x8xf32> -> vector<2x8x32xf32>
    %99 = vector.shape_cast %98 : vector<2x8x32xf32> to vector<16x32xf32>
    %100 = arith.truncf %99 : vector<16x32xf32> to vector<16x32xbf16>
    %cst_50 = arith.constant dense<0.000000e+00> : vector<16x32xf32>
    %101 = tpu.matmul %100, %28, %cst_50 {dimension_numbers = #tpu.dot_dimension_numbers<[1], [0], [0], [1], [0, 0, 1, 1], [], []>} : vector<16x32xbf16>, vector<32x32xbf16>, vector<16x32xf32> -> vector<16x32xf32>
    %102 = vector.broadcast %30 : vector<1x32xf32> to vector<16x32xf32>
    %103 = arith.addf %101, %102 : vector<16x32xf32>
    %104 = arith.addf %3, %103 : vector<16x32xf32>
    %c0_51 = arith.constant 0 : index
    %c0_52 = arith.constant 0 : index
    %c0_53 = arith.constant 0 : index
    %105 = vector.load %arg11[%c0_51, %c0_52, %c0_53] : memref<1x1x32xf32, #tpu.memory_space<vmem>>, vector<1x1x32xf32>
    %106 = vector.shape_cast %105 : vector<1x1x32xf32> to vector<1x32xf32>
    %c0_54 = arith.constant 0 : index
    %c0_55 = arith.constant 0 : index
    %c0_56 = arith.constant 0 : index
    %107 = vector.load %arg12[%c0_54, %c0_55, %c0_56] : memref<1x1x32xf32, #tpu.memory_space<vmem>>, vector<1x1x32xf32>
    %108 = vector.shape_cast %107 : vector<1x1x32xf32> to vector<1x32xf32>
    %cst_57 = arith.constant dense<0.000000e+00> : vector<16xf32>
    %109 = vector.multi_reduction <add>, %104, %cst_57 [1] : vector<16x32xf32> to vector<16xf32>
    %110 = vector.shape_cast %109 : vector<16xf32> to vector<16x1xf32>
    %cst_58 = arith.constant 3.200000e+01 : f32
    %111 = vector.broadcast %cst_58 : f32 to vector<16x1xf32>
    %112 = arith.divf %110, %111 : vector<16x1xf32>
    %113 = vector.broadcast %112 : vector<16x1xf32> to vector<16x32xf32>
    %114 = arith.subf %104, %113 : vector<16x32xf32>
    %115 = arith.mulf %114, %114 : vector<16x32xf32>
    %cst_59 = arith.constant dense<0.000000e+00> : vector<16xf32>
    %116 = vector.multi_reduction <add>, %115, %cst_59 [1] : vector<16x32xf32> to vector<16xf32>
    %117 = vector.shape_cast %116 : vector<16xf32> to vector<16x1xf32>
    %cst_60 = arith.constant 3.200000e+01 : f32
    %118 = vector.broadcast %cst_60 : f32 to vector<16x1xf32>
    %119 = arith.divf %117, %118 : vector<16x1xf32>
    %120 = vector.broadcast %112 : vector<16x1xf32> to vector<16x32xf32>
    %121 = arith.subf %104, %120 : vector<16x32xf32>
    %cst_61 = arith.constant 9.99999974E-6 : f32
    %122 = vector.broadcast %cst_61 : f32 to vector<16x1xf32>
    %123 = arith.addf %119, %122 : vector<16x1xf32>
    %124 = math.rsqrt %123 : vector<16x1xf32>
    %125 = vector.broadcast %124 : vector<16x1xf32> to vector<16x32xf32>
    %126 = arith.mulf %121, %125 : vector<16x32xf32>
    %127 = vector.broadcast %106 : vector<1x32xf32> to vector<16x32xf32>
    %128 = arith.mulf %126, %127 : vector<16x32xf32>
    %129 = vector.broadcast %108 : vector<1x32xf32> to vector<16x32xf32>
    %130 = arith.addf %128, %129 : vector<16x32xf32>
    %131 = arith.addf %130, %6 : vector<16x32xf32>
    %c0_62 = arith.constant 0 : index
    %c0_63 = arith.constant 0 : index
    %c0_64 = arith.constant 0 : index
    %132 = vector.load %arg13[%c0_62, %c0_63, %c0_64] : memref<1x32x32xbf16, #tpu.memory_space<vmem>>, vector<1x32x32xbf16>
    %133 = vector.shape_cast %132 : vector<1x32x32xbf16> to vector<32x32xbf16>
    %134 = arith.truncf %131 : vector<16x32xf32> to vector<16x32xbf16>
    %cst_65 = arith.constant dense<0.000000e+00> : vector<16x32xf32>
    %135 = tpu.matmul %134, %133, %cst_65 {dimension_numbers = #tpu.dot_dimension_numbers<[1], [0], [0], [1], [0, 0, 1, 1], [], []>} : vector<16x32xbf16>, vector<32x32xbf16>, vector<16x32xf32> -> vector<16x32xf32>
    %c0_66 = arith.constant 0 : index
    %c0_67 = arith.constant 0 : index
    %c0_68 = arith.constant 0 : index
    %136 = vector.load %arg14[%c0_66, %c0_67, %c0_68] : memref<1x1x32xf32, #tpu.memory_space<vmem>>, vector<1x1x32xf32>
    %137 = vector.shape_cast %136 : vector<1x1x32xf32> to vector<1x32xf32>
    %138 = vector.broadcast %137 : vector<1x32xf32> to vector<16x32xf32>
    %139 = arith.addf %135, %138 : vector<16x32xf32>
    %140 = arith.addf %4, %5 : vector<32x32xf32>
    %c0_69 = arith.constant 0 : index
    %c0_70 = arith.constant 0 : index
    %c0_71 = arith.constant 0 : index
    %141 = vector.load %arg15[%c0_69, %c0_70, %c0_71] : memref<1x32x32xbf16, #tpu.memory_space<vmem>>, vector<1x32x32xbf16>
    %142 = vector.shape_cast %141 : vector<1x32x32xbf16> to vector<32x32xbf16>
    %143 = arith.truncf %140 : vector<32x32xf32> to vector<32x32xbf16>
    %cst_72 = arith.constant dense<0.000000e+00> : vector<32x32xf32>
    %144 = tpu.matmul %143, %142, %cst_72 {dimension_numbers = #tpu.dot_dimension_numbers<[1], [0], [0], [1], [0, 0, 1, 1], [], []>} : vector<32x32xbf16>, vector<32x32xbf16>, vector<32x32xf32> -> vector<32x32xf32>
    %c0_73 = arith.constant 0 : index
    %c0_74 = arith.constant 0 : index
    %c0_75 = arith.constant 0 : index
    %145 = vector.load %arg16[%c0_73, %c0_74, %c0_75] : memref<1x1x32xf32, #tpu.memory_space<vmem>>, vector<1x1x32xf32>
    %146 = vector.shape_cast %145 : vector<1x1x32xf32> to vector<1x32xf32>
    %147 = vector.broadcast %146 : vector<1x32xf32> to vector<32x32xf32>
    %148 = arith.addf %144, %147 : vector<32x32xf32>
    %c0_76 = arith.constant 0 : index
    %c0_77 = arith.constant 0 : index
    %c0_78 = arith.constant 0 : index
    %149 = vector.load %arg17[%c0_76, %c0_77, %c0_78] : memref<1x32x32xbf16, #tpu.memory_space<vmem>>, vector<1x32x32xbf16>
    %150 = vector.shape_cast %149 : vector<1x32x32xbf16> to vector<32x32xbf16>
    %151 = arith.truncf %4 : vector<32x32xf32> to vector<32x32xbf16>
    %cst_79 = arith.constant dense<0.000000e+00> : vector<32x32xf32>
    %152 = tpu.matmul %151, %150, %cst_79 {dimension_numbers = #tpu.dot_dimension_numbers<[1], [0], [0], [1], [0, 0, 1, 1], [], []>} : vector<32x32xbf16>, vector<32x32xbf16>, vector<32x32xf32> -> vector<32x32xf32>
    %c0_80 = arith.constant 0 : index
    %c0_81 = arith.constant 0 : index
    %c0_82 = arith.constant 0 : index
    %153 = vector.load %arg18[%c0_80, %c0_81, %c0_82] : memref<1x1x32xf32, #tpu.memory_space<vmem>>, vector<1x1x32xf32>
    %154 = vector.shape_cast %153 : vector<1x1x32xf32> to vector<1x32xf32>
    %155 = vector.broadcast %154 : vector<1x32xf32> to vector<32x32xf32>
    %156 = arith.addf %152, %155 : vector<32x32xf32>
    %c0_83 = arith.constant 0 : index
    %c0_84 = arith.constant 0 : index
    %c0_85 = arith.constant 0 : index
    %157 = vector.load %arg19[%c0_83, %c0_84, %c0_85] : memref<1x32x32xbf16, #tpu.memory_space<vmem>>, vector<1x32x32xbf16>
    %158 = vector.shape_cast %157 : vector<1x32x32xbf16> to vector<32x32xbf16>
    %c0_86 = arith.constant 0 : index
    %c0_87 = arith.constant 0 : index
    %c0_88 = arith.constant 0 : index
    %159 = vector.load %arg20[%c0_86, %c0_87, %c0_88] : memref<1x1x32xf32, #tpu.memory_space<vmem>>, vector<1x1x32xf32>
    %160 = vector.shape_cast %159 : vector<1x1x32xf32> to vector<1x32xf32>
    %161 = vector.shape_cast %139 : vector<16x32xf32> to vector<2x8x32xf32>
    %162 = vector.shape_cast %148 : vector<32x32xf32> to vector<2x16x32xf32>
    %163 = vector.shape_cast %156 : vector<32x32xf32> to vector<2x16x32xf32>
    %164 = vector.extract_strided_slice %161 {offsets = [0, 0, 0], sizes = [2, 8, 8], strides = [1, 1, 1]} : vector<2x8x32xf32> to vector<2x8x8xf32>
    %165 = vector.extract_strided_slice %162 {offsets = [0, 0, 0], sizes = [2, 16, 8], strides = [1, 1, 1]} : vector<2x16x32xf32> to vector<2x16x8xf32>
    %cst_89 = arith.constant dense<0.000000e+00> : vector<2x8x16xf32>
    %166 = tpu.matmul %164, %165, %cst_89 {dimension_numbers = #tpu.dot_dimension_numbers<[2], [2], [1], [1], [0, 0, 0, 1, 1, 1], [0], [0]>} : vector<2x8x8xf32>, vector<2x16x8xf32>, vector<2x8x16xf32> -> vector<2x8x16xf32>
    %cst_90 = arith.constant 0.353553385 : f32
    %167 = vector.broadcast %cst_90 : f32 to vector<2x8x16xf32>
    %168 = arith.mulf %166, %167 : vector<2x8x16xf32>
    %169 = vector.broadcast %7 : vector<2x1x16xf32> to vector<2x8x16xf32>
    %170 = arith.addf %168, %169 : vector<2x8x16xf32>
    %cst_91 = arith.constant dense<0xFF800000> : vector<2x8xf32>
    %171 = vector.multi_reduction <maximumf>, %170, %cst_91 [2] : vector<2x8x16xf32> to vector<2x8xf32>
    %172 = vector.shape_cast %171 : vector<2x8xf32> to vector<2x8x1xf32>
    %173 = vector.broadcast %172 : vector<2x8x1xf32> to vector<2x8x16xf32>
    %174 = arith.subf %170, %173 : vector<2x8x16xf32>
    %175 = math.exp %174 : vector<2x8x16xf32>
    %cst_92 = arith.constant dense<0.000000e+00> : vector<2x8xf32>
    %176 = vector.multi_reduction <add>, %175, %cst_92 [2] : vector<2x8x16xf32> to vector<2x8xf32>
    %177 = vector.shape_cast %176 : vector<2x8xf32> to vector<2x8x1xf32>
    %178 = vector.broadcast %177 : vector<2x8x1xf32> to vector<2x8x16xf32>
    %179 = arith.divf %175, %178 : vector<2x8x16xf32>
    %180 = vector.extract_strided_slice %163 {offsets = [0, 0, 0], sizes = [2, 16, 8], strides = [1, 1, 1]} : vector<2x16x32xf32> to vector<2x16x8xf32>
    %cst_93 = arith.constant dense<0.000000e+00> : vector<2x8x8xf32>
    %181 = tpu.matmul %179, %180, %cst_93 {dimension_numbers = #tpu.dot_dimension_numbers<[2], [1], [1], [2], [0, 0, 0, 1, 1, 2], [0], [0]>} : vector<2x8x16xf32>, vector<2x16x8xf32>, vector<2x8x8xf32> -> vector<2x8x8xf32>
    %182 = vector.extract_strided_slice %161 {offsets = [0, 0, 8], sizes = [2, 8, 8], strides = [1, 1, 1]} : vector<2x8x32xf32> to vector<2x8x8xf32>
    %183 = vector.extract_strided_slice %162 {offsets = [0, 0, 8], sizes = [2, 16, 8], strides = [1, 1, 1]} : vector<2x16x32xf32> to vector<2x16x8xf32>
    %cst_94 = arith.constant dense<0.000000e+00> : vector<2x8x16xf32>
    %184 = tpu.matmul %182, %183, %cst_94 {dimension_numbers = #tpu.dot_dimension_numbers<[2], [2], [1], [1], [0, 0, 0, 1, 1, 1], [0], [0]>} : vector<2x8x8xf32>, vector<2x16x8xf32>, vector<2x8x16xf32> -> vector<2x8x16xf32>
    %cst_95 = arith.constant 0.353553385 : f32
    %185 = vector.broadcast %cst_95 : f32 to vector<2x8x16xf32>
    %186 = arith.mulf %184, %185 : vector<2x8x16xf32>
    %187 = vector.broadcast %7 : vector<2x1x16xf32> to vector<2x8x16xf32>
    %188 = arith.addf %186, %187 : vector<2x8x16xf32>
    %cst_96 = arith.constant dense<0xFF800000> : vector<2x8xf32>
    %189 = vector.multi_reduction <maximumf>, %188, %cst_96 [2] : vector<2x8x16xf32> to vector<2x8xf32>
    %190 = vector.shape_cast %189 : vector<2x8xf32> to vector<2x8x1xf32>
    %191 = vector.broadcast %190 : vector<2x8x1xf32> to vector<2x8x16xf32>
    %192 = arith.subf %188, %191 : vector<2x8x16xf32>
    %193 = math.exp %192 : vector<2x8x16xf32>
    %cst_97 = arith.constant dense<0.000000e+00> : vector<2x8xf32>
    %194 = vector.multi_reduction <add>, %193, %cst_97 [2] : vector<2x8x16xf32> to vector<2x8xf32>
    %195 = vector.shape_cast %194 : vector<2x8xf32> to vector<2x8x1xf32>
    %196 = vector.broadcast %195 : vector<2x8x1xf32> to vector<2x8x16xf32>
    %197 = arith.divf %193, %196 : vector<2x8x16xf32>
    %198 = vector.extract_strided_slice %163 {offsets = [0, 0, 8], sizes = [2, 16, 8], strides = [1, 1, 1]} : vector<2x16x32xf32> to vector<2x16x8xf32>
    %cst_98 = arith.constant dense<0.000000e+00> : vector<2x8x8xf32>
    %199 = tpu.matmul %197, %198, %cst_98 {dimension_numbers = #tpu.dot_dimension_numbers<[2], [1], [1], [2], [0, 0, 0, 1, 1, 2], [0], [0]>} : vector<2x8x16xf32>, vector<2x16x8xf32>, vector<2x8x8xf32> -> vector<2x8x8xf32>
    %200 = vector.extract_strided_slice %161 {offsets = [0, 0, 16], sizes = [2, 8, 8], strides = [1, 1, 1]} : vector<2x8x32xf32> to vector<2x8x8xf32>
    %201 = vector.extract_strided_slice %162 {offsets = [0, 0, 16], sizes = [2, 16, 8], strides = [1, 1, 1]} : vector<2x16x32xf32> to vector<2x16x8xf32>
    %cst_99 = arith.constant dense<0.000000e+00> : vector<2x8x16xf32>
    %202 = tpu.matmul %200, %201, %cst_99 {dimension_numbers = #tpu.dot_dimension_numbers<[2], [2], [1], [1], [0, 0, 0, 1, 1, 1], [0], [0]>} : vector<2x8x8xf32>, vector<2x16x8xf32>, vector<2x8x16xf32> -> vector<2x8x16xf32>
    %cst_100 = arith.constant 0.353553385 : f32
    %203 = vector.broadcast %cst_100 : f32 to vector<2x8x16xf32>
    %204 = arith.mulf %202, %203 : vector<2x8x16xf32>
    %205 = vector.broadcast %7 : vector<2x1x16xf32> to vector<2x8x16xf32>
    %206 = arith.addf %204, %205 : vector<2x8x16xf32>
    %cst_101 = arith.constant dense<0xFF800000> : vector<2x8xf32>
    %207 = vector.multi_reduction <maximumf>, %206, %cst_101 [2] : vector<2x8x16xf32> to vector<2x8xf32>
    %208 = vector.shape_cast %207 : vector<2x8xf32> to vector<2x8x1xf32>
    %209 = vector.broadcast %208 : vector<2x8x1xf32> to vector<2x8x16xf32>
    %210 = arith.subf %206, %209 : vector<2x8x16xf32>
    %211 = math.exp %210 : vector<2x8x16xf32>
    %cst_102 = arith.constant dense<0.000000e+00> : vector<2x8xf32>
    %212 = vector.multi_reduction <add>, %211, %cst_102 [2] : vector<2x8x16xf32> to vector<2x8xf32>
    %213 = vector.shape_cast %212 : vector<2x8xf32> to vector<2x8x1xf32>
    %214 = vector.broadcast %213 : vector<2x8x1xf32> to vector<2x8x16xf32>
    %215 = arith.divf %211, %214 : vector<2x8x16xf32>
    %216 = vector.extract_strided_slice %163 {offsets = [0, 0, 16], sizes = [2, 16, 8], strides = [1, 1, 1]} : vector<2x16x32xf32> to vector<2x16x8xf32>
    %cst_103 = arith.constant dense<0.000000e+00> : vector<2x8x8xf32>
    %217 = tpu.matmul %215, %216, %cst_103 {dimension_numbers = #tpu.dot_dimension_numbers<[2], [1], [1], [2], [0, 0, 0, 1, 1, 2], [0], [0]>} : vector<2x8x16xf32>, vector<2x16x8xf32>, vector<2x8x8xf32> -> vector<2x8x8xf32>
    %218 = vector.extract_strided_slice %161 {offsets = [0, 0, 24], sizes = [2, 8, 8], strides = [1, 1, 1]} : vector<2x8x32xf32> to vector<2x8x8xf32>
    %219 = vector.extract_strided_slice %162 {offsets = [0, 0, 24], sizes = [2, 16, 8], strides = [1, 1, 1]} : vector<2x16x32xf32> to vector<2x16x8xf32>
    %cst_104 = arith.constant dense<0.000000e+00> : vector<2x8x16xf32>
    %220 = tpu.matmul %218, %219, %cst_104 {dimension_numbers = #tpu.dot_dimension_numbers<[2], [2], [1], [1], [0, 0, 0, 1, 1, 1], [0], [0]>} : vector<2x8x8xf32>, vector<2x16x8xf32>, vector<2x8x16xf32> -> vector<2x8x16xf32>
    %cst_105 = arith.constant 0.353553385 : f32
    %221 = vector.broadcast %cst_105 : f32 to vector<2x8x16xf32>
    %222 = arith.mulf %220, %221 : vector<2x8x16xf32>
    %223 = vector.broadcast %7 : vector<2x1x16xf32> to vector<2x8x16xf32>
    %224 = arith.addf %222, %223 : vector<2x8x16xf32>
    %cst_106 = arith.constant dense<0xFF800000> : vector<2x8xf32>
    %225 = vector.multi_reduction <maximumf>, %224, %cst_106 [2] : vector<2x8x16xf32> to vector<2x8xf32>
    %226 = vector.shape_cast %225 : vector<2x8xf32> to vector<2x8x1xf32>
    %227 = vector.broadcast %226 : vector<2x8x1xf32> to vector<2x8x16xf32>
    %228 = arith.subf %224, %227 : vector<2x8x16xf32>
    %229 = math.exp %228 : vector<2x8x16xf32>
    %cst_107 = arith.constant dense<0.000000e+00> : vector<2x8xf32>
    %230 = vector.multi_reduction <add>, %229, %cst_107 [2] : vector<2x8x16xf32> to vector<2x8xf32>
    %231 = vector.shape_cast %230 : vector<2x8xf32> to vector<2x8x1xf32>
    %232 = vector.broadcast %231 : vector<2x8x1xf32> to vector<2x8x16xf32>
    %233 = arith.divf %229, %232 : vector<2x8x16xf32>
    %234 = vector.extract_strided_slice %163 {offsets = [0, 0, 24], sizes = [2, 16, 8], strides = [1, 1, 1]} : vector<2x16x32xf32> to vector<2x16x8xf32>
    %cst_108 = arith.constant dense<0.000000e+00> : vector<2x8x8xf32>
    %235 = tpu.matmul %233, %234, %cst_108 {dimension_numbers = #tpu.dot_dimension_numbers<[2], [1], [1], [2], [0, 0, 0, 1, 1, 2], [0], [0]>} : vector<2x8x16xf32>, vector<2x16x8xf32>, vector<2x8x8xf32> -> vector<2x8x8xf32>
    %236 = tpu.concatenate %181, %199, %217, %235 in 2 : vector<2x8x8xf32>, vector<2x8x8xf32>, vector<2x8x8xf32>, vector<2x8x8xf32> -> vector<2x8x32xf32>
    %237 = vector.shape_cast %236 : vector<2x8x32xf32> to vector<16x32xf32>
    %238 = arith.truncf %237 : vector<16x32xf32> to vector<16x32xbf16>
    %cst_109 = arith.constant dense<0.000000e+00> : vector<16x32xf32>
    %239 = tpu.matmul %238, %158, %cst_109 {dimension_numbers = #tpu.dot_dimension_numbers<[1], [0], [0], [1], [0, 0, 1, 1], [], []>} : vector<16x32xbf16>, vector<32x32xbf16>, vector<16x32xf32> -> vector<16x32xf32>
    %240 = vector.broadcast %160 : vector<1x32xf32> to vector<16x32xf32>
    %241 = arith.addf %239, %240 : vector<16x32xf32>
    %242 = arith.addf %130, %241 : vector<16x32xf32>
    %c0_110 = arith.constant 0 : index
    %c0_111 = arith.constant 0 : index
    %c0_112 = arith.constant 0 : index
    %243 = vector.load %arg21[%c0_110, %c0_111, %c0_112] : memref<1x1x32xf32, #tpu.memory_space<vmem>>, vector<1x1x32xf32>
    %244 = vector.shape_cast %243 : vector<1x1x32xf32> to vector<1x32xf32>
    %c0_113 = arith.constant 0 : index
    %c0_114 = arith.constant 0 : index
    %c0_115 = arith.constant 0 : index
    %245 = vector.load %arg22[%c0_113, %c0_114, %c0_115] : memref<1x1x32xf32, #tpu.memory_space<vmem>>, vector<1x1x32xf32>
    %246 = vector.shape_cast %245 : vector<1x1x32xf32> to vector<1x32xf32>
    %cst_116 = arith.constant dense<0.000000e+00> : vector<16xf32>
    %247 = vector.multi_reduction <add>, %242, %cst_116 [1] : vector<16x32xf32> to vector<16xf32>
    %248 = vector.shape_cast %247 : vector<16xf32> to vector<16x1xf32>
    %cst_117 = arith.constant 3.200000e+01 : f32
    %249 = vector.broadcast %cst_117 : f32 to vector<16x1xf32>
    %250 = arith.divf %248, %249 : vector<16x1xf32>
    %251 = vector.broadcast %250 : vector<16x1xf32> to vector<16x32xf32>
    %252 = arith.subf %242, %251 : vector<16x32xf32>
    %253 = arith.mulf %252, %252 : vector<16x32xf32>
    %cst_118 = arith.constant dense<0.000000e+00> : vector<16xf32>
    %254 = vector.multi_reduction <add>, %253, %cst_118 [1] : vector<16x32xf32> to vector<16xf32>
    %255 = vector.shape_cast %254 : vector<16xf32> to vector<16x1xf32>
    %cst_119 = arith.constant 3.200000e+01 : f32
    %256 = vector.broadcast %cst_119 : f32 to vector<16x1xf32>
    %257 = arith.divf %255, %256 : vector<16x1xf32>
    %258 = vector.broadcast %250 : vector<16x1xf32> to vector<16x32xf32>
    %259 = arith.subf %242, %258 : vector<16x32xf32>
    %cst_120 = arith.constant 9.99999974E-6 : f32
    %260 = vector.broadcast %cst_120 : f32 to vector<16x1xf32>
    %261 = arith.addf %257, %260 : vector<16x1xf32>
    %262 = math.rsqrt %261 : vector<16x1xf32>
    %263 = vector.broadcast %262 : vector<16x1xf32> to vector<16x32xf32>
    %264 = arith.mulf %259, %263 : vector<16x32xf32>
    %265 = vector.broadcast %244 : vector<1x32xf32> to vector<16x32xf32>
    %266 = arith.mulf %264, %265 : vector<16x32xf32>
    %267 = vector.broadcast %246 : vector<1x32xf32> to vector<16x32xf32>
    %268 = arith.addf %266, %267 : vector<16x32xf32>
    %c0_121 = arith.constant 0 : index
    %c0_122 = arith.constant 0 : index
    %c0_123 = arith.constant 0 : index
    %269 = vector.load %arg23[%c0_121, %c0_122, %c0_123] : memref<1x32x64xbf16, #tpu.memory_space<vmem>>, vector<1x32x64xbf16>
    %270 = vector.shape_cast %269 : vector<1x32x64xbf16> to vector<32x64xbf16>
    %271 = arith.truncf %268 : vector<16x32xf32> to vector<16x32xbf16>
    %cst_124 = arith.constant dense<0.000000e+00> : vector<16x64xf32>
    %272 = tpu.matmul %271, %270, %cst_124 {dimension_numbers = #tpu.dot_dimension_numbers<[1], [0], [0], [1], [0, 0, 1, 1], [], []>} : vector<16x32xbf16>, vector<32x64xbf16>, vector<16x64xf32> -> vector<16x64xf32>
    %c0_125 = arith.constant 0 : index
    %c0_126 = arith.constant 0 : index
    %c0_127 = arith.constant 0 : index
    %273 = vector.load %arg24[%c0_125, %c0_126, %c0_127] : memref<1x1x64xf32, #tpu.memory_space<vmem>>, vector<1x1x64xf32>
    %274 = vector.shape_cast %273 : vector<1x1x64xf32> to vector<1x64xf32>
    %275 = vector.broadcast %274 : vector<1x64xf32> to vector<16x64xf32>
    %276 = arith.addf %272, %275 : vector<16x64xf32>
    %cst_128 = arith.constant 0.000000e+00 : f32
    %277 = vector.broadcast %cst_128 : f32 to vector<16x64xf32>
    %278 = arith.maximumf %276, %277 : vector<16x64xf32>
    %c0_129 = arith.constant 0 : index
    %c0_130 = arith.constant 0 : index
    %c0_131 = arith.constant 0 : index
    %279 = vector.load %arg25[%c0_129, %c0_130, %c0_131] : memref<1x64x32xbf16, #tpu.memory_space<vmem>>, vector<1x64x32xbf16>
    %280 = vector.shape_cast %279 : vector<1x64x32xbf16> to vector<64x32xbf16>
    %281 = arith.truncf %278 : vector<16x64xf32> to vector<16x64xbf16>
    %cst_132 = arith.constant dense<0.000000e+00> : vector<16x32xf32>
    %282 = tpu.matmul %281, %280, %cst_132 {dimension_numbers = #tpu.dot_dimension_numbers<[1], [0], [0], [1], [0, 0, 1, 1], [], []>} : vector<16x64xbf16>, vector<64x32xbf16>, vector<16x32xf32> -> vector<16x32xf32>
    %c0_133 = arith.constant 0 : index
    %c0_134 = arith.constant 0 : index
    %c0_135 = arith.constant 0 : index
    %283 = vector.load %arg26[%c0_133, %c0_134, %c0_135] : memref<1x1x32xf32, #tpu.memory_space<vmem>>, vector<1x1x32xf32>
    %284 = vector.shape_cast %283 : vector<1x1x32xf32> to vector<1x32xf32>
    %285 = vector.broadcast %284 : vector<1x32xf32> to vector<16x32xf32>
    %286 = arith.addf %282, %285 : vector<16x32xf32>
    %287 = arith.addf %268, %286 : vector<16x32xf32>
    %c0_136 = arith.constant 0 : index
    %c0_137 = arith.constant 0 : index
    %c0_138 = arith.constant 0 : index
    %288 = vector.load %arg27[%c0_136, %c0_137, %c0_138] : memref<1x1x32xf32, #tpu.memory_space<vmem>>, vector<1x1x32xf32>
    %289 = vector.shape_cast %288 : vector<1x1x32xf32> to vector<1x32xf32>
    %c0_139 = arith.constant 0 : index
    %c0_140 = arith.constant 0 : index
    %c0_141 = arith.constant 0 : index
    %290 = vector.load %arg28[%c0_139, %c0_140, %c0_141] : memref<1x1x32xf32, #tpu.memory_space<vmem>>, vector<1x1x32xf32>
    %291 = vector.shape_cast %290 : vector<1x1x32xf32> to vector<1x32xf32>
    %cst_142 = arith.constant dense<0.000000e+00> : vector<16xf32>
    %292 = vector.multi_reduction <add>, %287, %cst_142 [1] : vector<16x32xf32> to vector<16xf32>
    %293 = vector.shape_cast %292 : vector<16xf32> to vector<16x1xf32>
    %cst_143 = arith.constant 3.200000e+01 : f32
    %294 = vector.broadcast %cst_143 : f32 to vector<16x1xf32>
    %295 = arith.divf %293, %294 : vector<16x1xf32>
    %296 = vector.broadcast %295 : vector<16x1xf32> to vector<16x32xf32>
    %297 = arith.subf %287, %296 : vector<16x32xf32>
    %298 = arith.mulf %297, %297 : vector<16x32xf32>
    %cst_144 = arith.constant dense<0.000000e+00> : vector<16xf32>
    %299 = vector.multi_reduction <add>, %298, %cst_144 [1] : vector<16x32xf32> to vector<16xf32>
    %300 = vector.shape_cast %299 : vector<16xf32> to vector<16x1xf32>
    %cst_145 = arith.constant 3.200000e+01 : f32
    %301 = vector.broadcast %cst_145 : f32 to vector<16x1xf32>
    %302 = arith.divf %300, %301 : vector<16x1xf32>
    %303 = vector.broadcast %295 : vector<16x1xf32> to vector<16x32xf32>
    %304 = arith.subf %287, %303 : vector<16x32xf32>
    %cst_146 = arith.constant 9.99999974E-6 : f32
    %305 = vector.broadcast %cst_146 : f32 to vector<16x1xf32>
    %306 = arith.addf %302, %305 : vector<16x1xf32>
    %307 = math.rsqrt %306 : vector<16x1xf32>
    %308 = vector.broadcast %307 : vector<16x1xf32> to vector<16x32xf32>
    %309 = arith.mulf %304, %308 : vector<16x32xf32>
    %310 = vector.broadcast %289 : vector<1x32xf32> to vector<16x32xf32>
    %311 = arith.mulf %309, %310 : vector<16x32xf32>
    %312 = vector.broadcast %291 : vector<1x32xf32> to vector<16x32xf32>
    %313 = arith.addf %311, %312 : vector<16x32xf32>
    %c1_i32 = arith.constant 1 : i32
    %314 = arith.cmpi slt, %arg0, %c1_i32 : i32
    %315 = arith.extui %314 : i1 to i32
    %c0_i32_147 = arith.constant 0 : i32
    %316 = arith.cmpi ne, %315, %c0_i32_147 : i32
    scf.if %316 {
      %c0_150 = arith.constant 0 : index
      %c0_151 = arith.constant 0 : index
      %320 = vector.load %arg31[%c0_150, %c0_151] : memref<16x32xf32, #tpu.memory_space<vmem>>, vector<16x32xf32>
      tpu.vector_store %arg31[%c0_150, %c0_151], %313 {strides = array<i32>} : memref<16x32xf32, #tpu.memory_space<vmem>>, vector<16x32xf32>,
    } else {
    }
    %c1_i32_148 = arith.constant 1 : i32
    %317 = arith.cmpi eq, %arg0, %c1_i32_148 : i32
    %318 = arith.extui %317 : i1 to i32
    %c0_i32_149 = arith.constant 0 : i32
    %319 = arith.cmpi ne, %318, %c0_i32_149 : i32
    scf.if %319 {
      %c0_150 = arith.constant 0 : index
      %c0_151 = arith.constant 0 : index
      %320 = vector.load %arg29[%c0_150, %c0_151] : memref<1x32xf32, #tpu.memory_space<vmem>>, vector<1x32xf32>
      %c0_152 = arith.constant 0 : index
      %c0_153 = arith.constant 0 : index
      %321 = vector.load %arg30[%c0_152, %c0_153] : memref<1x32xf32, #tpu.memory_space<vmem>>, vector<1x32xf32>
      %cst_154 = arith.constant dense<0.000000e+00> : vector<16xf32>
      %322 = vector.multi_reduction <add>, %313, %cst_154 [1] : vector<16x32xf32> to vector<16xf32>
      %323 = vector.shape_cast %322 : vector<16xf32> to vector<16x1xf32>
      %cst_155 = arith.constant 3.200000e+01 : f32
      %324 = vector.broadcast %cst_155 : f32 to vector<16x1xf32>
      %325 = arith.divf %323, %324 : vector<16x1xf32>
      %326 = vector.broadcast %325 : vector<16x1xf32> to vector<16x32xf32>
      %327 = arith.subf %313, %326 : vector<16x32xf32>
      %328 = arith.mulf %327, %327 : vector<16x32xf32>
      %cst_156 = arith.constant dense<0.000000e+00> : vector<16xf32>
      %329 = vector.multi_reduction <add>, %328, %cst_156 [1] : vector<16x32xf32> to vector<16xf32>
      %330 = vector.shape_cast %329 : vector<16xf32> to vector<16x1xf32>
      %cst_157 = arith.constant 3.200000e+01 : f32
      %331 = vector.broadcast %cst_157 : f32 to vector<16x1xf32>
      %332 = arith.divf %330, %331 : vector<16x1xf32>
      %333 = vector.broadcast %325 : vector<16x1xf32> to vector<16x32xf32>
      %334 = arith.subf %313, %333 : vector<16x32xf32>
      %cst_158 = arith.constant 9.99999974E-6 : f32
      %335 = vector.broadcast %cst_158 : f32 to vector<16x1xf32>
      %336 = arith.addf %332, %335 : vector<16x1xf32>
      %337 = math.rsqrt %336 : vector<16x1xf32>
      %338 = vector.broadcast %337 : vector<16x1xf32> to vector<16x32xf32>
      %339 = arith.mulf %334, %338 : vector<16x32xf32>
      %340 = vector.broadcast %320 : vector<1x32xf32> to vector<16x32xf32>
      %341 = arith.mulf %339, %340 : vector<16x32xf32>
      %342 = vector.broadcast %321 : vector<1x32xf32> to vector<16x32xf32>
      %343 = arith.addf %341, %342 : vector<16x32xf32>
      %c0_159 = arith.constant 0 : index
      %c0_160 = arith.constant 0 : index
      %344 = vector.load %arg31[%c0_159, %c0_160] : memref<16x32xf32, #tpu.memory_space<vmem>>, vector<16x32xf32>
      tpu.vector_store %arg31[%c0_159, %c0_160], %343 {strides = array<i32>} : memref<16x32xf32, #tpu.memory_space<vmem>>, vector<16x32xf32>,
    } else {
    }
    return
  }
  func.func @transform_0(%arg0: i32) -> (i32, i32) {
    %c0_i32 = arith.constant 0 : i32
    %c0_i32_0 = arith.constant 0 : i32
    %c0_i32_1 = arith.constant 0 : i32
    return %c0_i32, %c0_i32_0 : i32, i32
  }
  func.func @transform_1(%arg0: i32) -> (i32, i32) {
    %c0_i32 = arith.constant 0 : i32
    %c0_i32_0 = arith.constant 0 : i32
    %c0_i32_1 = arith.constant 0 : i32
    return %c0_i32, %c0_i32_0 : i32, i32
  }
  func.func @transform_2(%arg0: i32) -> (i32, i32) {
    %c0_i32 = arith.constant 0 : i32
    %c0_i32_0 = arith.constant 0 : i32
    %c0_i32_1 = arith.constant 0 : i32
    return %c0_i32, %c0_i32_0 : i32, i32
  }
  func.func @transform_3(%arg0: i32) -> (i32, i32, i32) {
    %c0_i32 = arith.constant 0 : i32
    %c0_i32_0 = arith.constant 0 : i32
    %c0_i32_1 = arith.constant 0 : i32
    %c0_i32_2 = arith.constant 0 : i32
    return %c0_i32, %c0_i32_0, %c0_i32_1 : i32, i32, i32
  }
  func.func @transform_4(%arg0: i32) -> (i32, i32, i32) {
    %c0_i32 = arith.constant 0 : i32
    %c0_i32_0 = arith.constant 0 : i32
    %c0_i32_1 = arith.constant 0 : i32
    return %arg0, %c0_i32, %c0_i32_0 : i32, i32, i32
  }
  func.func @transform_5(%arg0: i32) -> (i32, i32, i32) {
    %c0_i32 = arith.constant 0 : i32
    %c0_i32_0 = arith.constant 0 : i32
    %c0_i32_1 = arith.constant 0 : i32
    return %arg0, %c0_i32, %c0_i32_0 : i32, i32, i32
  }
  func.func @transform_6(%arg0: i32) -> (i32, i32, i32) {
    %c0_i32 = arith.constant 0 : i32
    %c0_i32_0 = arith.constant 0 : i32
    %c0_i32_1 = arith.constant 0 : i32
    return %arg0, %c0_i32, %c0_i32_0 : i32, i32, i32
  }
  func.func @transform_7(%arg0: i32) -> (i32, i32, i32) {
    %c0_i32 = arith.constant 0 : i32
    %c0_i32_0 = arith.constant 0 : i32
    %c0_i32_1 = arith.constant 0 : i32
    return %arg0, %c0_i32, %c0_i32_0 : i32, i32, i32
  }
  func.func @transform_8(%arg0: i32) -> (i32, i32, i32) {
    %c0_i32 = arith.constant 0 : i32
    %c0_i32_0 = arith.constant 0 : i32
    %c0_i32_1 = arith.constant 0 : i32
    return %arg0, %c0_i32, %c0_i32_0 : i32, i32, i32
  }
  func.func @transform_9(%arg0: i32) -> (i32, i32, i32) {
    %c0_i32 = arith.constant 0 : i32
    %c0_i32_0 = arith.constant 0 : i32
    %c0_i32_1 = arith.constant 0 : i32
    return %arg0, %c0_i32, %c0_i32_0 : i32, i32, i32
  }
  func.func @transform_10(%arg0: i32) -> (i32, i32, i32) {
    %c0_i32 = arith.constant 0 : i32
    %c0_i32_0 = arith.constant 0 : i32
    %c0_i32_1 = arith.constant 0 : i32
    return %arg0, %c0_i32, %c0_i32_0 : i32, i32, i32
  }
  func.func @transform_11(%arg0: i32) -> (i32, i32, i32) {
    %c0_i32 = arith.constant 0 : i32
    %c0_i32_0 = arith.constant 0 : i32
    %c0_i32_1 = arith.constant 0 : i32
    return %arg0, %c0_i32, %c0_i32_0 : i32, i32, i32
  }
  func.func @transform_12(%arg0: i32) -> (i32, i32, i32) {
    %c0_i32 = arith.constant 0 : i32
    %c0_i32_0 = arith.constant 0 : i32
    %c0_i32_1 = arith.constant 0 : i32
    return %arg0, %c0_i32, %c0_i32_0 : i32, i32, i32
  }
  func.func @transform_13(%arg0: i32) -> (i32, i32, i32) {
    %c0_i32 = arith.constant 0 : i32
    %c0_i32_0 = arith.constant 0 : i32
    %c0_i32_1 = arith.constant 0 : i32
    return %arg0, %c0_i32, %c0_i32_0 : i32, i32, i32
  }
  func.func @transform_14(%arg0: i32) -> (i32, i32, i32) {
    %c0_i32 = arith.constant 0 : i32
    %c0_i32_0 = arith.constant 0 : i32
    %c0_i32_1 = arith.constant 0 : i32
    return %arg0, %c0_i32, %c0_i32_0 : i32, i32, i32
  }
  func.func @transform_15(%arg0: i32) -> (i32, i32, i32) {
    %c0_i32 = arith.constant 0 : i32
    %c0_i32_0 = arith.constant 0 : i32
    %c0_i32_1 = arith.constant 0 : i32
    return %arg0, %c0_i32, %c0_i32_0 : i32, i32, i32
  }
  func.func @transform_16(%arg0: i32) -> (i32, i32, i32) {
    %c0_i32 = arith.constant 0 : i32
    %c0_i32_0 = arith.constant 0 : i32
    %c0_i32_1 = arith.constant 0 : i32
    return %arg0, %c0_i32, %c0_i32_0 : i32, i32, i32
  }
  func.func @transform_17(%arg0: i32) -> (i32, i32, i32) {
    %c0_i32 = arith.constant 0 : i32
    %c0_i32_0 = arith.constant 0 : i32
    %c0_i32_1 = arith.constant 0 : i32
    return %arg0, %c0_i32, %c0_i32_0 : i32, i32, i32
  }
  func.func @transform_18(%arg0: i32) -> (i32, i32, i32) {
    %c0_i32 = arith.constant 0 : i32
    %c0_i32_0 = arith.constant 0 : i32
    %c0_i32_1 = arith.constant 0 : i32
    return %arg0, %c0_i32, %c0_i32_0 : i32, i32, i32
  }
  func.func @transform_19(%arg0: i32) -> (i32, i32, i32) {
    %c0_i32 = arith.constant 0 : i32
    %c0_i32_0 = arith.constant 0 : i32
    %c0_i32_1 = arith.constant 0 : i32
    return %arg0, %c0_i32, %c0_i32_0 : i32, i32, i32
  }
  func.func @transform_20(%arg0: i32) -> (i32, i32, i32) {
    %c0_i32 = arith.constant 0 : i32
    %c0_i32_0 = arith.constant 0 : i32
    %c0_i32_1 = arith.constant 0 : i32
    return %arg0, %c0_i32, %c0_i32_0 : i32, i32, i32
  }
  func.func @transform_21(%arg0: i32) -> (i32, i32, i32) {
    %c0_i32 = arith.constant 0 : i32
    %c0_i32_0 = arith.constant 0 : i32
    %c0_i32_1 = arith.constant 0 : i32
    return %arg0, %c0_i32, %c0_i32_0 : i32, i32, i32
  }
  func.func @transform_22(%arg0: i32) -> (i32, i32, i32) {
    %c0_i32 = arith.constant 0 : i32
    %c0_i32_0 = arith.constant 0 : i32
    %c0_i32_1 = arith.constant 0 : i32
    return %arg0, %c0_i32, %c0_i32_0 : i32, i32, i32
  }
  func.func @transform_23(%arg0: i32) -> (i32, i32, i32) {
    %c0_i32 = arith.constant 0 : i32
    %c0_i32_0 = arith.constant 0 : i32
    %c0_i32_1 = arith.constant 0 : i32
    return %arg0, %c0_i32, %c0_i32_0 : i32, i32, i32
  }
  func.func @transform_24(%arg0: i32) -> (i32, i32, i32) {
    %c0_i32 = arith.constant 0 : i32
    %c0_i32_0 = arith.constant 0 : i32
    %c0_i32_1 = arith.constant 0 : i32
    return %arg0, %c0_i32, %c0_i32_0 : i32, i32, i32
  }
  func.func @transform_25(%arg0: i32) -> (i32, i32, i32) {
    %c0_i32 = arith.constant 0 : i32
    %c0_i32_0 = arith.constant 0 : i32
    %c0_i32_1 = arith.constant 0 : i32
    return %arg0, %c0_i32, %c0_i32_0 : i32, i32, i32
  }
  func.func @transform_26(%arg0: i32) -> (i32, i32, i32) {
    %c0_i32 = arith.constant 0 : i32
    %c0_i32_0 = arith.constant 0 : i32
    %c0_i32_1 = arith.constant 0 : i32
    return %arg0, %c0_i32, %c0_i32_0 : i32, i32, i32
  }
  func.func @transform_27(%arg0: i32) -> (i32, i32, i32) {
    %c0_i32 = arith.constant 0 : i32
    %c0_i32_0 = arith.constant 0 : i32
    %c0_i32_1 = arith.constant 0 : i32
    return %arg0, %c0_i32, %c0_i32_0 : i32, i32, i32
  }
  func.func @transform_28(%arg0: i32) -> (i32, i32) {
    %c0_i32 = arith.constant 0 : i32
    %c0_i32_0 = arith.constant 0 : i32
    %c0_i32_1 = arith.constant 0 : i32
    return %c0_i32, %c0_i32_0 : i32, i32
  }
  func.func @transform_29(%arg0: i32) -> (i32, i32) {
    %c0_i32 = arith.constant 0 : i32
    %c0_i32_0 = arith.constant 0 : i32
    %c0_i32_1 = arith.constant 0 : i32
    return %c0_i32, %c0_i32_0 : i32, i32
  }
  func.func @transform_30(%arg0: i32) -> (i32, i32) {
    %c0_i32 = arith.constant 0 : i32
    %c0_i32_0 = arith.constant 0 : i32
    %c0_i32_1 = arith.constant 0 : i32
    return %c0_i32, %c0_i32_0 : i32, i32
  }
}

</mosaic_0001>

<llo_original>
// kernel: transformer_forward.2
$region0: #{transformer_forward.2}
  #allocation0 [shape = 'u32[]', space=smem, size = 0x4, offset = 0x4, fixed_abs, tag = 'smem constant byte address 0x4 - core index']
  #allocation1 [shape = 'u32[144,128]{1,0:T(1,128)}', space=vmem, size = 0x12000, scoped, tag = 'internal scratch']
  %s0 = inlined_call_operand.vmem [shape: f32[32,32], index: 0, kind: input, shape index: {}]
  %s1 = inlined_call_operand.vmem [shape: f32[32,32], index: 1, kind: input, shape index: {}]
  %s2 = inlined_call_operand.vmem [shape: f32[2,1,16], index: 2, kind: input, shape index: {}]
  %s3 = inlined_call_operand.vmem [shape: bf16[2,32,64], index: 3, kind: input, shape index: {}]
  %s4 = inlined_call_operand.vmem [shape: f32[2,1,64], index: 4, kind: input, shape index: {}]
  %s5 = inlined_call_operand.vmem [shape: bf16[2,32,32], index: 5, kind: input, shape index: {}]
  %s6 = inlined_call_operand.vmem [shape: f32[2,1,32], index: 6, kind: input, shape index: {}]
  %s7 = inlined_call_operand.vmem [shape: bf16[2,32,32], index: 7, kind: input, shape index: {}]
  %s8 = inlined_call_operand.vmem [shape: f32[2,1,32], index: 8, kind: input, shape index: {}]
  %s9 = inlined_call_operand.vmem [shape: f32[2,1,32], index: 9, kind: input, shape index: {}]
  %s10 = inlined_call_operand.vmem [shape: f32[2,1,32], index: 10, kind: input, shape index: {}]
  %s11 = inlined_call_operand.vmem [shape: bf16[2,32,64], index: 11, kind: input, shape index: {}]
  %s12 = inlined_call_operand.vmem [shape: f32[2,1,64], index: 12, kind: input, shape index: {}]
  %s13 = inlined_call_operand.vmem [shape: bf16[2,64,32], index: 13, kind: input, shape index: {}]
  %s14 = inlined_call_operand.vmem [shape: f32[2,1,32], index: 14, kind: input, shape index: {}]
  %s15 = inlined_call_operand.vmem [shape: f32[2,1,32], index: 15, kind: input, shape index: {}]
  %s16 = inlined_call_operand.vmem [shape: f32[2,1,32], index: 16, kind: input, shape index: {}]
  %s17 = inlined_call_operand.vmem [shape: f32[32,32], index: 17, kind: output, shape index: {}]
  %s18 = sld [smem:[#allocation0]]
  $region105: #{transformer_forward.2} parent=0
    _
  %s20 = ssub.s32 1, %s18
  %s21 = scalar_select 0, %s20, %s18
  loop: start=0, step=1, limit=4
  $region2: #{transformer_forward.2} parent=0 // loop_pre_header
    _
  $region3: #{transformer_forward.2} parent=0 // loop_header
    %s23 = sphi 0, %s27
    %p24 = scmp.ge.s32.totalorder %s23, 4
    %s31 = sphi 0, %s31
    %s33 = sphi 0, %s31
    %s34 = sphi 0, %s33
    %s48 = sphi 0, %s34
    %s52 = sphi 0, %s52
    %s54 = sphi 0, %s52
    %s55 = sphi 0, %s54
    %s69 = sphi 0, %s55
    %s73 = sphi 0, %s73
    %s75 = sphi 0, %s73
    %s76 = sphi 0, %s75
    %s90 = sphi 0, %s76
    %s96 = sphi 0, %s98
    %s99 = sphi 0, %s96
    %s100 = sphi 0, %s99
    %s116 = sphi 0, %s100
    %s122 = sphi 0, %s124
    %s125 = sphi 0, %s122
    %s126 = sphi 0, %s125
    %s142 = sphi 0, %s126
    %s148 = sphi 0, %s150
    %s151 = sphi 0, %s148
    %s152 = sphi 0, %s151
    %s168 = sphi 0, %s152
    %s174 = sphi 0, %s176
    %s177 = sphi 0, %s174
    %s178 = sphi 0, %s177
    %s194 = sphi 0, %s178
    %s200 = sphi 0, %s202
    %s203 = sphi 0, %s200
    %s204 = sphi 0, %s203
    %s220 = sphi 0, %s204
    %s226 = sphi 0, %s228
    %s229 = sphi 0, %s226
    %s230 = sphi 0, %s229
    %s246 = sphi 0, %s230
    %s252 = sphi 0, %s254
    %s255 = sphi 0, %s252
    %s256 = sphi 0, %s255
    %s272 = sphi 0, %s256
    %s278 = sphi 0, %s280
    %s281 = sphi 0, %s278
    %s282 = sphi 0, %s281
    %s298 = sphi 0, %s282
    %s304 = sphi 0, %s306
    %s307 = sphi 0, %s304
    %s308 = sphi 0, %s307
    %s324 = sphi 0, %s308
    %s330 = sphi 0, %s332
    %s333 = sphi 0, %s330
    %s334 = sphi 0, %s333
    %s350 = sphi 0, %s334
    %s356 = sphi 0, %s358
    %s359 = sphi 0, %s356
    %s360 = sphi 0, %s359
    %s376 = sphi 0, %s360
    %s382 = sphi 0, %s384
    %s385 = sphi 0, %s382
    %s386 = sphi 0, %s385
    %s402 = sphi 0, %s386
    %s408 = sphi 0, %s410
    %s411 = sphi 0, %s408
    %s412 = sphi 0, %s411
    %s428 = sphi 0, %s412
    %s434 = sphi 0, %s436
    %s437 = sphi 0, %s434
    %s438 = sphi 0, %s437
    %s454 = sphi 0, %s438
    %s458 = sphi 0, %s458
    %s460 = sphi 0, %s458
    %s461 = sphi 0, %s460
    %s475 = sphi 0, %s461
  $region4: #{transformer_forward.2} parent=0 // loop_header_branch
    %26 = sbr.rel (%p24) target = $region8
  $region5: #{transformer_forward.2} parent=0 // loop_body
    %s28 = ssub.s32 %s23, 1
    %s29 = ssub.s32 %s23, 2
    %s30 = sadd.s32 %s23, 1
    %s32 = sadd.s32 %s31, 1
    %p35 = scmp.eq.s32.totalorder %s23, 1
    %p36 = scmp.ne.s32.totalorder %s31, %s33
    %p37 = scmp.eq.s32.totalorder %s23, 0
    %p38 = por %p36, %p37
    %p39 = scmp.ne.s32.totalorder %s31, %s33
    %p40 = scmp.eq.s32.totalorder %s28, 1
    %p41 = por %p39, %p40
    %p42 = scmp.ne.s32.totalorder %s33, %s34
    %p43 = scmp.eq.s32.totalorder %s28, 0
    %p44 = por %p42, %p43
    %p45 = scmp.ne.s32.totalorder %s33, %s34
    %p46 = scmp.eq.s32.totalorder %s29, 1
    %p47 = por %p45, %p46
    %p49 = scmp.ne.s32.totalorder %s34, %s48
    %p50 = scmp.eq.s32.totalorder %s29, 0
    %p51 = por %p49, %p50
    %s53 = sadd.s32 %s52, 1
    %p56 = scmp.eq.s32.totalorder %s23, 1
    %p57 = scmp.ne.s32.totalorder %s52, %s54
    %p58 = scmp.eq.s32.totalorder %s23, 0
    %p59 = por %p57, %p58
    %p60 = scmp.ne.s32.totalorder %s52, %s54
    %p61 = scmp.eq.s32.totalorder %s28, 1
    %p62 = por %p60, %p61
    %p63 = scmp.ne.s32.totalorder %s54, %s55
    %p64 = scmp.eq.s32.totalorder %s28, 0
    %p65 = por %p63, %p64
    %p66 = scmp.ne.s32.totalorder %s54, %s55
    %p67 = scmp.eq.s32.totalorder %s29, 1
    %p68 = por %p66, %p67
    %p70 = scmp.ne.s32.totalorder %s55, %s69
    %p71 = scmp.eq.s32.totalorder %s29, 0
    %p72 = por %p70, %p71
    %s74 = sadd.s32 %s73, 1
    %p77 = scmp.eq.s32.totalorder %s23, 1
    %p78 = scmp.ne.s32.totalorder %s73, %s75
    %p79 = scmp.eq.s32.totalorder %s23, 0
    %p80 = por %p78, %p79
    %p81 = scmp.ne.s32.totalorder %s73, %s75
    %p82 = scmp.eq.s32.totalorder %s28, 1
    %p83 = por %p81, %p82
    %p84 = scmp.ne.s32.totalorder %s75, %s76
    %p85 = scmp.eq.s32.totalorder %s28, 0
    %p86 = por %p84, %p85
    %p87 = scmp.ne.s32.totalorder %s75, %s76
    %p88 = scmp.eq.s32.totalorder %s29, 1
    %p89 = por %p87, %p88
    %p91 = scmp.ne.s32.totalorder %s76, %s90
    %p92 = scmp.eq.s32.totalorder %s29, 0
    %p93 = por %p91, %p92
    %s94 = ssub.s32 %s23, %s30
    %p95 = scmp.eq.s32.totalorder %s94, 0
    %s97 = sadd.s32 %s96, 1
    %s98 = scalar_select %p95, %s96, %s97
    %p101 = pneg %p95
    %p102 = scmp.eq.s32.totalorder %s23, 1
    %p103 = por %p101, %p102
    %p104 = scmp.ne.s32.totalorder %s96, %s99
    %p105 = scmp.eq.s32.totalorder %s23, 0
    %p106 = por %p104, %p105
    %p107 = scmp.ne.s32.totalorder %s96, %s99
    %p108 = scmp.eq.s32.totalorder %s28, 1
    %p109 = por %p107, %p108
    %p110 = scmp.ne.s32.totalorder %s99, %s100
    %p111 = scmp.eq.s32.totalorder %s28, 0
    %p112 = por %p110, %p111
    %p113 = scmp.ne.s32.totalorder %s99, %s100
    %p114 = scmp.eq.s32.totalorder %s29, 1
    %p115 = por %p113, %p114
    %p117 = scmp.ne.s32.totalorder %s100, %s116
    %p118 = scmp.eq.s32.totalorder %s29, 0
    %p119 = por %p117, %p118
    %s120 = ssub.s32 %s23, %s30
    %p121 = scmp.eq.s32.totalorder %s120, 0
    %s123 = sadd.s32 %s122, 1
    %s124 = scalar_select %p121, %s122, %s123
    %p127 = pneg %p121
    %p128 = scmp.eq.s32.totalorder %s23, 1
    %p129 = por %p127, %p128
    %p130 = scmp.ne.s32.totalorder %s122, %s125
    %p131 = scmp.eq.s32.totalorder %s23, 0
    %p132 = por %p130, %p131
    %p133 = scmp.ne.s32.totalorder %s122, %s125
    %p134 = scmp.eq.s32.totalorder %s28, 1
    %p135 = por %p133, %p134
    %p136 = scmp.ne.s32.totalorder %s125, %s126
    %p137 = scmp.eq.s32.totalorder %s28, 0
    %p138 = por %p136, %p137
    %p139 = scmp.ne.s32.totalorder %s125, %s126
    %p140 = scmp.eq.s32.totalorder %s29, 1
    %p141 = por %p139, %p140
    %p143 = scmp.ne.s32.totalorder %s126, %s142
    %p144 = scmp.eq.s32.totalorder %s29, 0
    %p145 = por %p143, %p144
    %s146 = ssub.s32 %s23, %s30
    %p147 = scmp.eq.s32.totalorder %s146, 0
    %s149 = sadd.s32 %s148, 1
    %s150 = scalar_select %p147, %s148, %s149
    %p153 = pneg %p147
    %p154 = scmp.eq.s32.totalorder %s23, 1
    %p155 = por %p153, %p154
    %p156 = scmp.ne.s32.totalorder %s148, %s151
    %p157 = scmp.eq.s32.totalorder %s23, 0
    %p158 = por %p156, %p157
    %p159 = scmp.ne.s32.totalorder %s148, %s151
    %p160 = scmp.eq.s32.totalorder %s28, 1
    %p161 = por %p159, %p160
    %p162 = scmp.ne.s32.totalorder %s151, %s152
    %p163 = scmp.eq.s32.totalorder %s28, 0
    %p164 = por %p162, %p163
    %p165 = scmp.ne.s32.totalorder %s151, %s152
    %p166 = scmp.eq.s32.totalorder %s29, 1
    %p167 = por %p165, %p166
    %p169 = scmp.ne.s32.totalorder %s152, %s168
    %p170 = scmp.eq.s32.totalorder %s29, 0
    %p171 = por %p169, %p170
    %s172 = ssub.s32 %s23, %s30
    %p173 = scmp.eq.s32.totalorder %s172, 0
    %s175 = sadd.s32 %s174, 1
    %s176 = scalar_select %p173, %s174, %s175
    %p179 = pneg %p173
    %p180 = scmp.eq.s32.totalorder %s23, 1
    %p181 = por %p179, %p180
    %p182 = scmp.ne.s32.totalorder %s174, %s177
    %p183 = scmp.eq.s32.totalorder %s23, 0
    %p184 = por %p182, %p183
    %p185 = scmp.ne.s32.totalorder %s174, %s177
    %p186 = scmp.eq.s32.totalorder %s28, 1
    %p187 = por %p185, %p186
    %p188 = scmp.ne.s32.totalorder %s177, %s178
    %p189 = scmp.eq.s32.totalorder %s28, 0
    %p190 = por %p188, %p189
    %p191 = scmp.ne.s32.totalorder %s177, %s178
    %p192 = scmp.eq.s32.totalorder %s29, 1
    %p193 = por %p191, %p192
    %p195 = scmp.ne.s32.totalorder %s178, %s194
    %p196 = scmp.eq.s32.totalorder %s29, 0
    %p197 = por %p195, %p196
    %s198 = ssub.s32 %s23, %s30
    %p199 = scmp.eq.s32.totalorder %s198, 0
    %s201 = sadd.s32 %s200, 1
    %s202 = scalar_select %p199, %s200, %s201
    %p205 = pneg %p199
    %p206 = scmp.eq.s32.totalorder %s23, 1
    %p207 = por %p205, %p206
    %p208 = scmp.ne.s32.totalorder %s200, %s203
    %p209 = scmp.eq.s32.totalorder %s23, 0
    %p210 = por %p208, %p209
    %p211 = scmp.ne.s32.totalorder %s200, %s203
    %p212 = scmp.eq.s32.totalorder %s28, 1
    %p213 = por %p211, %p212
    %p214 = scmp.ne.s32.totalorder %s203, %s204
    %p215 = scmp.eq.s32.totalorder %s28, 0
    %p216 = por %p214, %p215
    %p217 = scmp.ne.s32.totalorder %s203, %s204
    %p218 = scmp.eq.s32.totalorder %s29, 1
    %p219 = por %p217, %p218
    %p221 = scmp.ne.s32.totalorder %s204, %s220
    %p222 = scmp.eq.s32.totalorder %s29, 0
    %p223 = por %p221, %p222
    %s224 = ssub.s32 %s23, %s30
    %p225 = scmp.eq.s32.totalorder %s224, 0
    %s227 = sadd.s32 %s226, 1
    %s228 = scalar_select %p225, %s226, %s227
    %p231 = pneg %p225
    %p232 = scmp.eq.s32.totalorder %s23, 1
    %p233 = por %p231, %p232
    %p234 = scmp.ne.s32.totalorder %s226, %s229
    %p235 = scmp.eq.s32.totalorder %s23, 0
    %p236 = por %p234, %p235
    %p237 = scmp.ne.s32.totalorder %s226, %s229
    %p238 = scmp.eq.s32.totalorder %s28, 1
    %p239 = por %p237, %p238
    %p240 = scmp.ne.s32.totalorder %s229, %s230
    %p241 = scmp.eq.s32.totalorder %s28, 0
    %p242 = por %p240, %p241
    %p243 = scmp.ne.s32.totalorder %s229, %s230
    %p244 = scmp.eq.s32.totalorder %s29, 1
    %p245 = por %p243, %p244
    %p247 = scmp.ne.s32.totalorder %s230, %s246
    %p248 = scmp.eq.s32.totalorder %s29, 0
    %p249 = por %p247, %p248
    %s250 = ssub.s32 %s23, %s30
    %p251 = scmp.eq.s32.totalorder %s250, 0
    %s253 = sadd.s32 %s252, 1
    %s254 = scalar_select %p251, %s252, %s253
    %p257 = pneg %p251
    %p258 = scmp.eq.s32.totalorder %s23, 1
    %p259 = por %p257, %p258
    %p260 = scmp.ne.s32.totalorder %s252, %s255
    %p261 = scmp.eq.s32.totalorder %s23, 0
    %p262 = por %p260, %p261
    %p263 = scmp.ne.s32.totalorder %s252, %s255
    %p264 = scmp.eq.s32.totalorder %s28, 1
    %p265 = por %p263, %p264
    %p266 = scmp.ne.s32.totalorder %s255, %s256
    %p267 = scmp.eq.s32.totalorder %s28, 0
    %p268 = por %p266, %p267
    %p269 = scmp.ne.s32.totalorder %s255, %s256
    %p270 = scmp.eq.s32.totalorder %s29, 1
    %p271 = por %p269, %p270
    %p273 = scmp.ne.s32.totalorder %s256, %s272
    %p274 = scmp.eq.s32.totalorder %s29, 0
    %p275 = por %p273, %p274
    %s276 = ssub.s32 %s23, %s30
    %p277 = scmp.eq.s32.totalorder %s276, 0
    %s279 = sadd.s32 %s278, 1
    %s280 = scalar_select %p277, %s278, %s279
    %p283 = pneg %p277
    %p284 = scmp.eq.s32.totalorder %s23, 1
    %p285 = por %p283, %p284
    %p286 = scmp.ne.s32.totalorder %s278, %s281
    %p287 = scmp.eq.s32.totalorder %s23, 0
    %p288 = por %p286, %p287
    %p289 = scmp.ne.s32.totalorder %s278, %s281
    %p290 = scmp.eq.s32.totalorder %s28, 1
    %p291 = por %p289, %p290
    %p292 = scmp.ne.s32.totalorder %s281, %s282
    %p293 = scmp.eq.s32.totalorder %s28, 0
    %p294 = por %p292, %p293
    %p295 = scmp.ne.s32.totalorder %s281, %s282
    %p296 = scmp.eq.s32.totalorder %s29, 1
    %p297 = por %p295, %p296
    %p299 = scmp.ne.s32.totalorder %s282, %s298
    %p300 = scmp.eq.s32.totalorder %s29, 0
    %p301 = por %p299, %p300
    %s302 = ssub.s32 %s23, %s30
    %p303 = scmp.eq.s32.totalorder %s302, 0
    %s305 = sadd.s32 %s304, 1
    %s306 = scalar_select %p303, %s304, %s305
    %p309 = pneg %p303
    %p310 = scmp.eq.s32.totalorder %s23, 1
    %p311 = por %p309, %p310
    %p312 = scmp.ne.s32.totalorder %s304, %s307
    %p313 = scmp.eq.s32.totalorder %s23, 0
    %p314 = por %p312, %p313
    %p315 = scmp.ne.s32.totalorder %s304, %s307
    %p316 = scmp.eq.s32.totalorder %s28, 1
    %p317 = por %p315, %p316
    %p318 = scmp.ne.s32.totalorder %s307, %s308
    %p319 = scmp.eq.s32.totalorder %s28, 0
    %p320 = por %p318, %p319
    %p321 = scmp.ne.s32.totalorder %s307, %s308
    %p322 = scmp.eq.s32.totalorder %s29, 1
    %p323 = por %p321, %p322
    %p325 = scmp.ne.s32.totalorder %s308, %s324
    %p326 = scmp.eq.s32.totalorder %s29, 0
    %p327 = por %p325, %p326
    %s328 = ssub.s32 %s23, %s30
    %p329 = scmp.eq.s32.totalorder %s328, 0
    %s331 = sadd.s32 %s330, 1
    %s332 = scalar_select %p329, %s330, %s331
    %p335 = pneg %p329
    %p336 = scmp.eq.s32.totalorder %s23, 1
    %p337 = por %p335, %p336
    %p338 = scmp.ne.s32.totalorder %s330, %s333
    %p339 = scmp.eq.s32.totalorder %s23, 0
    %p340 = por %p338, %p339
    %p341 = scmp.ne.s32.totalorder %s330, %s333
    %p342 = scmp.eq.s32.totalorder %s28, 1
    %p343 = por %p341, %p342
    %p344 = scmp.ne.s32.totalorder %s333, %s334
    %p345 = scmp.eq.s32.totalorder %s28, 0
    %p346 = por %p344, %p345
    %p347 = scmp.ne.s32.totalorder %s333, %s334
    %p348 = scmp.eq.s32.totalorder %s29, 1
    %p349 = por %p347, %p348
    %p351 = scmp.ne.s32.totalorder %s334, %s350
    %p352 = scmp.eq.s32.totalorder %s29, 0
    %p353 = por %p351, %p352
    %s354 = ssub.s32 %s23, %s30
    %p355 = scmp.eq.s32.totalorder %s354, 0
    %s357 = sadd.s32 %s356, 1
    %s358 = scalar_select %p355, %s356, %s357
    %p361 = pneg %p355
    %p362 = scmp.eq.s32.totalorder %s23, 1
    %p363 = por %p361, %p362
    %p364 = scmp.ne.s32.totalorder %s356, %s359
    %p365 = scmp.eq.s32.totalorder %s23, 0
    %p366 = por %p364, %p365
    %p367 = scmp.ne.s32.totalorder %s356, %s359
    %p368 = scmp.eq.s32.totalorder %s28, 1
    %p369 = por %p367, %p368
    %p370 = scmp.ne.s32.totalorder %s359, %s360
    %p371 = scmp.eq.s32.totalorder %s28, 0
    %p372 = por %p370, %p371
    %p373 = scmp.ne.s32.totalorder %s359, %s360
    %p374 = scmp.eq.s32.totalorder %s29, 1
    %p375 = por %p373, %p374
    %p377 = scmp.ne.s32.totalorder %s360, %s376
    %p378 = scmp.eq.s32.totalorder %s29, 0
    %p379 = por %p377, %p378
    %s380 = ssub.s32 %s23, %s30
    %p381 = scmp.eq.s32.totalorder %s380, 0
    %s383 = sadd.s32 %s382, 1
    %s384 = scalar_select %p381, %s382, %s383
    %p387 = pneg %p381
    %p388 = scmp.eq.s32.totalorder %s23, 1
    %p389 = por %p387, %p388
    %p390 = scmp.ne.s32.totalorder %s382, %s385
    %p391 = scmp.eq.s32.totalorder %s23, 0
    %p392 = por %p390, %p391
    %p393 = scmp.ne.s32.totalorder %s382, %s385
    %p394 = scmp.eq.s32.totalorder %s28, 1
    %p395 = por %p393, %p394
    %p396 = scmp.ne.s32.totalorder %s385, %s386
    %p397 = scmp.eq.s32.totalorder %s28, 0
    %p398 = por %p396, %p397
    %p399 = scmp.ne.s32.totalorder %s385, %s386
    %p400 = scmp.eq.s32.totalorder %s29, 1
    %p401 = por %p399, %p400
    %p403 = scmp.ne.s32.totalorder %s386, %s402
    %p404 = scmp.eq.s32.totalorder %s29, 0
    %p405 = por %p403, %p404
    %s406 = ssub.s32 %s23, %s30
    %p407 = scmp.eq.s32.totalorder %s406, 0
    %s409 = sadd.s32 %s408, 1
    %s410 = scalar_select %p407, %s408, %s409
    %p413 = pneg %p407
    %p414 = scmp.eq.s32.totalorder %s23, 1
    %p415 = por %p413, %p414
    %p416 = scmp.ne.s32.totalorder %s408, %s411
    %p417 = scmp.eq.s32.totalorder %s23, 0
    %p418 = por %p416, %p417
    %p419 = scmp.ne.s32.totalorder %s408, %s411
    %p420 = scmp.eq.s32.totalorder %s28, 1
    %p421 = por %p419, %p420
    %p422 = scmp.ne.s32.totalorder %s411, %s412
    %p423 = scmp.eq.s32.totalorder %s28, 0
    %p424 = por %p422, %p423
    %p425 = scmp.ne.s32.totalorder %s411, %s412
    %p426 = scmp.eq.s32.totalorder %s29, 1
    %p427 = por %p425, %p426
    %p429 = scmp.ne.s32.totalorder %s412, %s428
    %p430 = scmp.eq.s32.totalorder %s29, 0
    %p431 = por %p429, %p430
    %s432 = ssub.s32 %s23, %s30
    %p433 = scmp.eq.s32.totalorder %s432, 0
    %s435 = sadd.s32 %s434, 1
    %s436 = scalar_select %p433, %s434, %s435
    %p439 = pneg %p433
    %p440 = scmp.eq.s32.totalorder %s23, 1
    %p441 = por %p439, %p440
    %p442 = scmp.ne.s32.totalorder %s434, %s437
    %p443 = scmp.eq.s32.totalorder %s23, 0
    %p444 = por %p442, %p443
    %p445 = scmp.ne.s32.totalorder %s434, %s437
    %p446 = scmp.eq.s32.totalorder %s28, 1
    %p447 = por %p445, %p446
    %p448 = scmp.ne.s32.totalorder %s437, %s438
    %p449 = scmp.eq.s32.totalorder %s28, 0
    %p450 = por %p448, %p449
    %p451 = scmp.ne.s32.totalorder %s437, %s438
    %p452 = scmp.eq.s32.totalorder %s29, 1
    %p453 = por %p451, %p452
    %p455 = scmp.ne.s32.totalorder %s438, %s454
    %p456 = scmp.eq.s32.totalorder %s29, 0
    %p457 = por %p455, %p456
    %s459 = sadd.s32 %s458, 1
    %p462 = scmp.eq.s32.totalorder %s23, 1
    %p463 = scmp.ne.s32.totalorder %s458, %s460
    %p464 = scmp.eq.s32.totalorder %s23, 0
    %p465 = por %p463, %p464
    %p466 = scmp.ne.s32.totalorder %s458, %s460
    %p467 = scmp.eq.s32.totalorder %s28, 1
    %p468 = por %p466, %p467
    %p469 = scmp.ne.s32.totalorder %s460, %s461
    %p470 = scmp.eq.s32.totalorder %s28, 0
    %p471 = por %p469, %p470
    %p472 = scmp.ne.s32.totalorder %s460, %s461
    %p473 = scmp.eq.s32.totalorder %s29, 1
    %p474 = por %p472, %p473
    %p476 = scmp.ne.s32.totalorder %s461, %s475
    %p477 = scmp.eq.s32.totalorder %s29, 0
    %p478 = por %p476, %p477
    %p479 = scmp.le.s32.totalorder 1, %s23
    %p480 = scmp.lt.s32.totalorder %s23, 3
    %p481 = pnand %p479, %p480
    %p482 = pneg %p481
    // Predicated region
    $region9: #{transformer_forward.2} parent=5 // pred_check
      _
    $region10: #{transformer_forward.2} parent=5 // pred_check_branch
      %484 = sbr.rel (%p481) target = $region12
    $region11: #{transformer_forward.2} parent=5 // pred_region
      %s485 = ssub.s32 %s23, 1
      // Predicated region
      $region13: #{transformer_forward.2} parent=11 // pred_check
        %p486 = pneg %p44
      $region14: #{transformer_forward.2} parent=11 // pred_check_branch
        %488 = sbr.rel (%p486) target = $region16
      $region15: #{transformer_forward.2} parent=11 // pred_region
        _
      $region16: #{transformer_forward.2} parent=11 // pred_fallthru
        _
      // Predicated region
      $region17: #{transformer_forward.2} parent=11 // pred_check
        %p489 = pneg %p65
      $region18: #{transformer_forward.2} parent=11 // pred_check_branch
        %491 = sbr.rel (%p489) target = $region20
      $region19: #{transformer_forward.2} parent=11 // pred_region
        _
      $region20: #{transformer_forward.2} parent=11 // pred_fallthru
        _
      // Predicated region
      $region21: #{transformer_forward.2} parent=11 // pred_check
        %p492 = pneg %p86
      $region22: #{transformer_forward.2} parent=11 // pred_check_branch
        %494 = sbr.rel (%p492) target = $region24
      $region23: #{transformer_forward.2} parent=11 // pred_region
        _
      $region24: #{transformer_forward.2} parent=11 // pred_fallthru
        _
    $region12: #{transformer_forward.2} parent=5 // pred_fallthru
      _
    %p495 = scmp.lt.s32.totalorder %s23, 2
    // Predicated region
    $region25: #{transformer_forward.2} parent=5 // pred_check
      %p496 = pneg %p495
    $region26: #{transformer_forward.2} parent=5 // pred_check_branch
      %498 = sbr.rel (%p496) target = $region28
    $region27: #{transformer_forward.2} parent=5 // pred_region
      // Predicated region
      $region29: #{transformer_forward.2} parent=27 // pred_check
        %p499 = pneg %p106
      $region30: #{transformer_forward.2} parent=27 // pred_check_branch
        %501 = sbr.rel (%p499) target = $region32
      $region31: #{transformer_forward.2} parent=27 // pred_region
        %p502 = scmp.lt.s32.totalorder %s23, 1
        %s503 = scalar_select %p502, %s23, 1
        %s504 = smul.addr %s503, 4
        %s505 = smul.addr %s504, 4
        %s506 = scalar_lea.vmem %s3, %s505
      $region32: #{transformer_forward.2} parent=27 // pred_fallthru
        _
      // Predicated region
      $region33: #{transformer_forward.2} parent=27 // pred_check
        %p507 = pneg %p132
      $region34: #{transformer_forward.2} parent=27 // pred_check_branch
        %509 = sbr.rel (%p507) target = $region36
      $region35: #{transformer_forward.2} parent=27 // pred_region
        %p510 = scmp.lt.s32.totalorder %s23, 1
        %s511 = scalar_select %p510, %s23, 1
        %s512 = scalar_lea.vmem %s4, %s511
      $region36: #{transformer_forward.2} parent=27 // pred_fallthru
        _
      // Predicated region
      $region37: #{transformer_forward.2} parent=27 // pred_check
        %p513 = pneg %p158
      $region38: #{transformer_forward.2} parent=27 // pred_check_branch
        %515 = sbr.rel (%p513) target = $region40
      $region39: #{transformer_forward.2} parent=27 // pred_region
        %p516 = scmp.lt.s32.totalorder %s23, 1
        %s517 = scalar_select %p516, %s23, 1
        %s518 = smul.addr %s517, 4
        %s519 = smul.addr %s518, 4
        %s520 = scalar_lea.vmem %s5, %s519
      $region40: #{transformer_forward.2} parent=27 // pred_fallthru
        _
      // Predicated region
      $region41: #{transformer_forward.2} parent=27 // pred_check
        %p521 = pneg %p184
      $region42: #{transformer_forward.2} parent=27 // pred_check_branch
        %523 = sbr.rel (%p521) target = $region44
      $region43: #{transformer_forward.2} parent=27 // pred_region
        %p524 = scmp.lt.s32.totalorder %s23, 1
        %s525 = scalar_select %p524, %s23, 1
        %s526 = scalar_lea.vmem %s6, %s525
      $region44: #{transformer_forward.2} parent=27 // pred_fallthru
        _
      // Predicated region
      $region45: #{transformer_forward.2} parent=27 // pred_check
        %p527 = pneg %p210
      $region46: #{transformer_forward.2} parent=27 // pred_check_branch
        %529 = sbr.rel (%p527) target = $region48
      $region47: #{transformer_forward.2} parent=27 // pred_region
        %p530 = scmp.lt.s32.totalorder %s23, 1
        %s531 = scalar_select %p530, %s23, 1
        %s532 = smul.addr %s531, 4
        %s533 = smul.addr %s532, 4
        %s534 = scalar_lea.vmem %s7, %s533
      $region48: #{transformer_forward.2} parent=27 // pred_fallthru
        _
      // Predicated region
      $region49: #{transformer_forward.2} parent=27 // pred_check
        %p535 = pneg %p236
      $region50: #{transformer_forward.2} parent=27 // pred_check_branch
        %537 = sbr.rel (%p535) target = $region52
      $region51: #{transformer_forward.2} parent=27 // pred_region
        %p538 = scmp.lt.s32.totalorder %s23, 1
        %s539 = scalar_select %p538, %s23, 1
        %s540 = scalar_lea.vmem %s8, %s539
      $region52: #{transformer_forward.2} parent=27 // pred_fallthru
        _
      // Predicated region
      $region53: #{transformer_forward.2} parent=27 // pred_check
        %p541 = pneg %p262
      $region54: #{transformer_forward.2} parent=27 // pred_check_branch
        %543 = sbr.rel (%p541) target = $region56
      $region55: #{transformer_forward.2} parent=27 // pred_region
        %p544 = scmp.lt.s32.totalorder %s23, 1
        %s545 = scalar_select %p544, %s23, 1
        %s546 = scalar_lea.vmem %s9, %s545
      $region56: #{transformer_forward.2} parent=27 // pred_fallthru
        _
      // Predicated region
      $region57: #{transformer_forward.2} parent=27 // pred_check
        %p547 = pneg %p288
      $region58: #{transformer_forward.2} parent=27 // pred_check_branch
        %549 = sbr.rel (%p547) target = $region60
      $region59: #{transformer_forward.2} parent=27 // pred_region
        %p550 = scmp.lt.s32.totalorder %s23, 1
        %s551 = scalar_select %p550, %s23, 1
        %s552 = scalar_lea.vmem %s10, %s551
      $region60: #{transformer_forward.2} parent=27 // pred_fallthru
        _
      // Predicated region
      $region61: #{transformer_forward.2} parent=27 // pred_check
        %p553 = pneg %p314
      $region62: #{transformer_forward.2} parent=27 // pred_check_branch
        %555 = sbr.rel (%p553) target = $region64
      $region63: #{transformer_forward.2} parent=27 // pred_region
        %p556 = scmp.lt.s32.totalorder %s23, 1
        %s557 = scalar_select %p556, %s23, 1
        %s558 = smul.addr %s557, 4
        %s559 = smul.addr %s558, 4
        %s560 = scalar_lea.vmem %s11, %s559
      $region64: #{transformer_forward.2} parent=27 // pred_fallthru
        _
      // Predicated region
      $region65: #{transformer_forward.2} parent=27 // pred_check
        %p561 = pneg %p340
      $region66: #{transformer_forward.2} parent=27 // pred_check_branch
        %563 = sbr.rel (%p561) target = $region68
      $region67: #{transformer_forward.2} parent=27 // pred_region
        %p564 = scmp.lt.s32.totalorder %s23, 1
        %s565 = scalar_select %p564, %s23, 1
        %s566 = scalar_lea.vmem %s12, %s565
      $region68: #{transformer_forward.2} parent=27 // pred_fallthru
        _
      // Predicated region
      $region69: #{transformer_forward.2} parent=27 // pred_check
        %p567 = pneg %p366
      $region70: #{transformer_forward.2} parent=27 // pred_check_branch
        %569 = sbr.rel (%p567) target = $region72
      $region71: #{transformer_forward.2} parent=27 // pred_region
        %p570 = scmp.lt.s32.totalorder %s23, 1
        %s571 = scalar_select %p570, %s23, 1
        %s572 = smul.addr %s571, 8
        %s573 = smul.addr %s572, 4
        %s574 = scalar_lea.vmem %s13, %s573
      $region72: #{transformer_forward.2} parent=27 // pred_fallthru
        _
      // Predicated region
      $region73: #{transformer_forward.2} parent=27 // pred_check
        %p575 = pneg %p392
      $region74: #{transformer_forward.2} parent=27 // pred_check_branch
        %577 = sbr.rel (%p575) target = $region76
      $region75: #{transformer_forward.2} parent=27 // pred_region
        %p578 = scmp.lt.s32.totalorder %s23, 1
        %s579 = scalar_select %p578, %s23, 1
        %s580 = scalar_lea.vmem %s14, %s579
      $region76: #{transformer_forward.2} parent=27 // pred_fallthru
        _
      // Predicated region
      $region77: #{transformer_forward.2} parent=27 // pred_check
        %p581 = pneg %p418
      $region78: #{transformer_forward.2} parent=27 // pred_check_branch
        %583 = sbr.rel (%p581) target = $region80
      $region79: #{transformer_forward.2} parent=27 // pred_region
        %p584 = scmp.lt.s32.totalorder %s23, 1
        %s585 = scalar_select %p584, %s23, 1
        %s586 = scalar_lea.vmem %s15, %s585
      $region80: #{transformer_forward.2} parent=27 // pred_fallthru
        _
      // Predicated region
      $region81: #{transformer_forward.2} parent=27 // pred_check
        %p587 = pneg %p444
      $region82: #{transformer_forward.2} parent=27 // pred_check_branch
        %589 = sbr.rel (%p587) target = $region84
      $region83: #{transformer_forward.2} parent=27 // pred_region
        %p590 = scmp.lt.s32.totalorder %s23, 1
        %s591 = scalar_select %p590, %s23, 1
        %s592 = scalar_lea.vmem %s16, %s591
      $region84: #{transformer_forward.2} parent=27 // pred_fallthru
        _
    $region28: #{transformer_forward.2} parent=5 // pred_fallthru
      _
    %p593 = scmp.le.s32.totalorder 1, %s23
    %p594 = scmp.lt.s32.totalorder %s23, 3
    %p595 = pnand %p593, %p594
    %p596 = pneg %p595
    // Predicated region
    $region85: #{transformer_forward.2} parent=5 // pred_check
      _
    $region86: #{transformer_forward.2} parent=5 // pred_check_branch
      %598 = sbr.rel (%p595) target = $region88
    $region87: #{transformer_forward.2} parent=5 // pred_region
      %s599 = ssub.s32 %s23, 1
      %p600 = pneg %p44
      %p601 = pneg %p41
      %p602 = pneg %p65
      %p603 = pneg %p62
      %p604 = pneg %p86
      %p605 = pneg %p83
      %p606 = scmp.lt.s32.totalorder %s28, 1
      %s607 = scalar_select %p606, %s28, 1
      %s608 = smul.addr %s607, 4
      %s609 = smul.addr %s608, 4
      %s610 = scalar_lea.vmem %s3, %s609
      %p611 = pneg %p112
      %p612 = pneg %p109
      %p613 = scmp.lt.s32.totalorder %s28, 1
      %s614 = scalar_select %p613, %s28, 1
      %s615 = scalar_lea.vmem %s4, %s614
      %p616 = pneg %p138
      %p617 = pneg %p135
      %p618 = scmp.lt.s32.totalorder %s28, 1
      %s619 = scalar_select %p618, %s28, 1
      %s620 = smul.addr %s619, 4
      %s621 = smul.addr %s620, 4
      %s622 = scalar_lea.vmem %s5, %s621
      %p623 = pneg %p164
      %p624 = pneg %p161
      %p625 = scmp.lt.s32.totalorder %s28, 1
      %s626 = scalar_select %p625, %s28, 1
      %s627 = scalar_lea.vmem %s6, %s626
      %p628 = pneg %p190
      %p629 = pneg %p187
      %p630 = scmp.lt.s32.totalorder %s28, 1
      %s631 = scalar_select %p630, %s28, 1
      %s632 = smul.addr %s631, 4
      %s633 = smul.addr %s632, 4
      %s634 = scalar_lea.vmem %s7, %s633
      %p635 = pneg %p216
      %p636 = pneg %p213
      %p637 = scmp.lt.s32.totalorder %s28, 1
      %s638 = scalar_select %p637, %s28, 1
      %s639 = scalar_lea.vmem %s8, %s638
      %p640 = pneg %p242
      %p641 = pneg %p239
      %p642 = scmp.lt.s32.totalorder %s28, 1
      %s643 = scalar_select %p642, %s28, 1
      %s644 = scalar_lea.vmem %s9, %s643
      %p645 = pneg %p268
      %p646 = pneg %p265
      %p647 = scmp.lt.s32.totalorder %s28, 1
      %s648 = scalar_select %p647, %s28, 1
      %s649 = scalar_lea.vmem %s10, %s648
      %p650 = pneg %p294
      %p651 = pneg %p291
      %p652 = scmp.lt.s32.totalorder %s28, 1
      %s653 = scalar_select %p652, %s28, 1
      %s654 = smul.addr %s653, 4
      %s655 = smul.addr %s654, 4
      %s656 = scalar_lea.vmem %s11, %s655
      %p657 = pneg %p320
      %p658 = pneg %p317
      %p659 = scmp.lt.s32.totalorder %s28, 1
      %s660 = scalar_select %p659, %s28, 1
      %s661 = scalar_lea.vmem %s12, %s660
      %p662 = pneg %p346
      %p663 = pneg %p343
      %p664 = scmp.lt.s32.totalorder %s28, 1
      %s665 = scalar_select %p664, %s28, 1
      %s666 = smul.addr %s665, 8
      %s667 = smul.addr %s666, 4
      %s668 = scalar_lea.vmem %s13, %s667
      %p669 = pneg %p372
      %p670 = pneg %p369
      %p671 = scmp.lt.s32.totalorder %s28, 1
      %s672 = scalar_select %p671, %s28, 1
      %s673 = scalar_lea.vmem %s14, %s672
      %p674 = pneg %p398
      %p675 = pneg %p395
      %p676 = scmp.lt.s32.totalorder %s28, 1
      %s677 = scalar_select %p676, %s28, 1
      %s678 = scalar_lea.vmem %s15, %s677
      %p679 = pneg %p424
      %p680 = pneg %p421
      %p681 = scmp.lt.s32.totalorder %s28, 1
      %s682 = scalar_select %p681, %s28, 1
      %s683 = scalar_lea.vmem %s16, %s682
      %p684 = pneg %p450
      %p685 = pneg %p447
      %p686 = pneg %p471
      %p687 = pneg %p468
      %p688 = scmp.lt.s32.totalorder %s28, 1
      %s689 = scalar_select %p688, %s28, 1
      %s690 = smul.addr %s689, 4
      %s691 = smul.addr %s690, 4
      %s692 = scalar_lea.vmem %s3, %s691
      %p693 = scmp.lt.s32.totalorder %s28, 1
      %s694 = scalar_select %p693, %s28, 1
      %s695 = scalar_lea.vmem %s4, %s694
      %p696 = scmp.lt.s32.totalorder %s28, 1
      %s697 = scalar_select %p696, %s28, 1
      %s698 = smul.addr %s697, 4
      %s699 = smul.addr %s698, 4
      %s700 = scalar_lea.vmem %s5, %s699
      %p701 = scmp.lt.s32.totalorder %s28, 1
      %s702 = scalar_select %p701, %s28, 1
      %s703 = scalar_lea.vmem %s6, %s702
      %p704 = scmp.lt.s32.totalorder %s28, 1
      %s705 = scalar_select %p704, %s28, 1
      %s706 = smul.addr %s705, 4
      %s707 = smul.addr %s706, 4
      %s708 = scalar_lea.vmem %s7, %s707
      %p709 = scmp.lt.s32.totalorder %s28, 1
      %s710 = scalar_select %p709, %s28, 1
      %s711 = scalar_lea.vmem %s8, %s710
      %p712 = scmp.lt.s32.totalorder %s28, 1
      %s713 = scalar_select %p712, %s28, 1
      %s714 = scalar_lea.vmem %s9, %s713
      %p715 = scmp.lt.s32.totalorder %s28, 1
      %s716 = scalar_select %p715, %s28, 1
      %s717 = scalar_lea.vmem %s10, %s716
      %p718 = scmp.lt.s32.totalorder %s28, 1
      %s719 = scalar_select %p718, %s28, 1
      %s720 = smul.addr %s719, 4
      %s721 = smul.addr %s720, 4
      %s722 = scalar_lea.vmem %s11, %s721
      %p723 = scmp.lt.s32.totalorder %s28, 1
      %s724 = scalar_select %p723, %s28, 1
      %s725 = scalar_lea.vmem %s12, %s724
      %p726 = scmp.lt.s32.totalorder %s28, 1
      %s727 = scalar_select %p726, %s28, 1
      %s728 = smul.addr %s727, 8
      %s729 = smul.addr %s728, 4
      %s730 = scalar_lea.vmem %s13, %s729
      %p731 = scmp.lt.s32.totalorder %s28, 1
      %s732 = scalar_select %p731, %s28, 1
      %s733 = scalar_lea.vmem %s14, %s732
      %p734 = scmp.lt.s32.totalorder %s28, 1
      %s735 = scalar_select %p734, %s28, 1
      %s736 = scalar_lea.vmem %s15, %s735
      %p737 = scmp.lt.s32.totalorder %s28, 1
      %s738 = scalar_select %p737, %s28, 1
      %s739 = scalar_lea.vmem %s16, %s738
      %p741 = scmp.eq.s32.totalorder %s28, 0
      // Predicated region
      $region89: #{transformer_forward.2} parent=87 // pred_check
        %p742 = pneg %p741
      $region90: #{transformer_forward.2} parent=87 // pred_check_branch
        %744 = sbr.rel (%p742) target = $region92
      $region91: #{transformer_forward.2} parent=87 // pred_region
        %v745 = vld [vmem:[%s0] sm:$0xff]
        %v746 = vld [vmem:[%s0 + $0x8] sm:$0xff]
        %v747 = vld [vmem:[%s0 + $0x10] sm:$0xff]
        %v748 = vld [vmem:[%s0 + $0x18] sm:$0xff]
        %vm749 = vcmask 261120
        %750 = vst.msk [vmem:[%s17] sm:$0xff] %vm749, %v745
        %751 = vst.msk [vmem:[%s17 + $0x8] sm:$0xff] %vm749, %v746
        %752 = vst.msk [vmem:[%s17 + $0x10] sm:$0xff] %vm749, %v747
        %753 = vst.msk [vmem:[%s17 + $0x18] sm:$0xff] %vm749, %v748
      $region92: #{transformer_forward.2} parent=87 // pred_fallthru
        _
      %v754 = vld [vmem:[%s17] sm:$0xff]
      %v755 = vld [vmem:[%s17 + $0x8] sm:$0xff]
      %v756 = vld [vmem:[%s17 + $0x10] sm:$0xff]
      %v757 = vld [vmem:[%s17 + $0x18] sm:$0xff]
      %v758 = vld [vmem:[%s1] sm:$0xff]
      %v759 = vld [vmem:[%s1 + $0x8] sm:$0xff]
      %v760 = vld [vmem:[%s1 + $0x10] sm:$0xff]
      %v761 = vld [vmem:[%s1 + $0x18] sm:$0xff]
      %v762 = vld [vmem:[%s2] sm:$0x1]
      %v763 = vld [vmem:[%s2 + $0x1] sm:$0x1]
      %v764 = vadd.f32 %v754, %v758
      %v765 = vadd.f32 %v755, %v759
      %v766 = vadd.f32 %v756, %v760
      %v767 = vadd.f32 %v757, %v761
      %v768 = vld [vmem:[%s692] sm:$0xf]
      %v769 = vld [vmem:[%s692 + $0x4] sm:$0xf]
      %v770 = vld [vmem:[%s692 + $0x8] sm:$0xf]
      %v771 = vld [vmem:[%s692 + $0xc] sm:$0xf]
      %v772 = vpack.c.bf16 %v765, %v764
      %v773 = vpack.c.bf16 %v767, %v766
      %v774 = vld [vmem:[%s695] sm:$0x1]
      %v776 = vlaneseq
      %v777 = vshrl.u32 %v776, 7
      %v778 = vsub.s32 0, %v777
      %v779 = vrot.slane %v774, %v778
      %v785 = vunpack.c.l.b16 %v768
      %v786 = vunpack.c.l.b16 %v769
      %v787 = vunpack.c.l.b16 %v770
      %v788 = vunpack.c.l.b16 %v771
      %v789 = vpack.c.b16 %v786, %v785
      %v790 = vpack.c.b16 %v788, %v787
      %vm793 = vcmask 261120
      %v795 = vsel %vm793, %v772, 0
      %v798 = vsel %vm793, %v773, 0
      %800 = vmatprep.subr.bf16.mxu0 0
      %801 = vmatpush1.bf16.msra.mxu0 %v789
      %802 = vmatprep.subr.bf16.mxu0 0
      %803 = vmatpush1.bf16.msra.mxu0 %v790
      %804 = vmatprep.subr.bf16.mxu0 0
      %805 = vmatpush1.bf16.msra.mxu0 0
      %806 = vmatprep.subr.bf16.mxu0 0
      %807 = vmatpush1.bf16.msra.mxu0 0
      %808 = vmatprep.subr.bf16.mxu0 0
      %809 = vmatpush1.bf16.msra.mxu0 0
      %810 = vmatprep.subr.bf16.mxu0 0
      %811 = vmatpush1.bf16.msra.mxu0 0
      %812 = vmatprep.subr.bf16.mxu0 0
      %813 = vmatpush1.bf16.msra.mxu0 0
      %814 = vmatprep.subr.bf16.mxu0 0
      %815 = vmatpush1.bf16.msra.mxu0 0
      %816 = vmatprep.subr.bf16.mxu0 0
      %817 = vmatpush1.bf16.msra.mxu0 0
      %818 = vmatprep.subr.bf16.mxu0 0
      %819 = vmatpush1.bf16.msra.mxu0 0
      %820 = vmatprep.subr.bf16.mxu0 0
      %821 = vmatpush1.bf16.msra.mxu0 0
      %822 = vmatprep.subr.bf16.mxu0 0
      %823 = vmatpush1.bf16.msra.mxu0 0
      %824 = vmatprep.subr.bf16.mxu0 0
      %825 = vmatpush1.bf16.msra.mxu0 0
      %826 = vmatprep.subr.bf16.mxu0 0
      %827 = vmatpush1.bf16.msra.mxu0 0
      %828 = vmatprep.subr.bf16.mxu0 0
      %829 = vmatpush1.bf16.msra.mxu0 0
      %830 = vmatprep.subr.bf16.mxu0 0
      %831 = vmatpush1.bf16.msra.mxu0 0
      %832 = vmatprep.mubr.bf16.mxu0 0
      %833 = vmatmul.mubr.bf16.gmra.mrb[0].mxu0 %v795
      %v834 = vpop.f32.mrb[0].mxu0
      %v835 = vadd.f32 %v779, %v834
      %v836 = vpop.f32.mrb[0].mxu0
      %v837 = vpop.f32.mrb[0].mxu0
      %v838 = vadd.f32 %v779, %v837
      %v839 = vpop.f32.mrb[0].mxu0
      %840 = vmatprep.mubr.bf16.mxu0 0
      %841 = vmatmul.mubr.bf16.gmra.mrb[0].mxu0 %v798
      %v842 = vpop.f32.mrb[0].mxu0
      %v843 = vadd.f32 %v779, %v842
      %v844 = vpop.f32.mrb[0].mxu0
      %v845 = vpop.f32.mrb[0].mxu0
      %v846 = vadd.f32 %v779, %v845
      %v847 = vpop.f32.mrb[0].mxu0
      %848 = vdwg.mxu0
      %v849 = vld [vmem:[%s700] sm:$0xf]
      %v850 = vld [vmem:[%s700 + $0x4] sm:$0xf]
      %v851 = vld [vmem:[%s700 + $0x8] sm:$0xf]
      %v852 = vld [vmem:[%s700 + $0xc] sm:$0xf]
      %v853 = vpack.c.bf16 %v755, %v754
      %v854 = vpack.c.bf16 %v757, %v756
      %v855 = vld [vmem:[%s703] sm:$0x1]
      %v857 = vlaneseq
      %v858 = vshrl.u32 %v857, 7
      %v859 = vsub.s32 0, %v858
      %v860 = vrot.slane %v855, %v859
      %v866 = vunpack.c.l.b16 %v849
      %v867 = vunpack.c.l.b16 %v850
      %v868 = vunpack.c.l.b16 %v851
      %v869 = vunpack.c.l.b16 %v852
      %v870 = vpack.c.b16 %v867, %v866
      %v871 = vpack.c.b16 %v869, %v868
      %v875 = vsel %vm793, %v853, 0
      %v878 = vsel %vm793, %v854, 0
      %880 = vmatprep.subr.bf16.mxu0 0
      %881 = vmatpush1.bf16.msra.mxu0 %v870
      %882 = vmatprep.subr.bf16.mxu0 0
      %883 = vmatpush1.bf16.msra.mxu0 %v871
      %884 = vmatprep.subr.bf16.mxu0 0
      %885 = vmatpush1.bf16.msra.mxu0 0
      %886 = vmatprep.subr.bf16.mxu0 0
      %887 = vmatpush1.bf16.msra.mxu0 0
      %888 = vmatprep.subr.bf16.mxu0 0
      %889 = vmatpush1.bf16.msra.mxu0 0
      %890 = vmatprep.subr.bf16.mxu0 0
      %891 = vmatpush1.bf16.msra.mxu0 0
      %892 = vmatprep.subr.bf16.mxu0 0
      %893 = vmatpush1.bf16.msra.mxu0 0
      %894 = vmatprep.subr.bf16.mxu0 0
      %895 = vmatpush1.bf16.msra.mxu0 0
      %896 = vmatprep.subr.bf16.mxu0 0
      %897 = vmatpush1.bf16.msra.mxu0 0
      %898 = vmatprep.subr.bf16.mxu0 0
      %899 = vmatpush1.bf16.msra.mxu0 0
      %900 = vmatprep.subr.bf16.mxu0 0
      %901 = vmatpush1.bf16.msra.mxu0 0
      %902 = vmatprep.subr.bf16.mxu0 0
      %903 = vmatpush1.bf16.msra.mxu0 0
      %904 = vmatprep.subr.bf16.mxu0 0
      %905 = vmatpush1.bf16.msra.mxu0 0
      %906 = vmatprep.subr.bf16.mxu0 0
      %907 = vmatpush1.bf16.msra.mxu0 0
      %908 = vmatprep.subr.bf16.mxu0 0
      %909 = vmatpush1.bf16.msra.mxu0 0
      %910 = vmatprep.subr.bf16.mxu0 0
      %911 = vmatpush1.bf16.msra.mxu0 0
      %912 = vmatprep.mubr.bf16.mxu0 0
      %913 = vmatmul.mubr.bf16.gmra.mrb[0].mxu0 %v875
      %v914 = vpop.f32.mrb[0].mxu0
      %v915 = vadd.f32 %v860, %v914
      %v916 = vpop.f32.mrb[0].mxu0
      %v917 = vpop.f32.mrb[0].mxu0
      %v918 = vadd.f32 %v860, %v917
      %v919 = vpop.f32.mrb[0].mxu0
      %920 = vmatprep.mubr.bf16.mxu0 0
      %921 = vmatmul.mubr.bf16.gmra.mrb[0].mxu0 %v878
      %v922 = vpop.f32.mrb[0].mxu0
      %v923 = vadd.f32 %v860, %v922
      %v924 = vpop.f32.mrb[0].mxu0
      %v925 = vpop.f32.mrb[0].mxu0
      %v926 = vadd.f32 %v860, %v925
      %v927 = vpop.f32.mrb[0].mxu0
      %928 = vdwg.mxu0
      %v929 = vld [vmem:[%s708] sm:$0xf]
      %v930 = vld [vmem:[%s708 + $0x4] sm:$0xf]
      %v931 = vld [vmem:[%s708 + $0x8] sm:$0xf]
      %v932 = vld [vmem:[%s708 + $0xc] sm:$0xf]
      %v933 = vld [vmem:[%s711] sm:$0x1]
      %936 = vrot.lane.b32.xlu0 %v835, 96
      %v937 = vpop.permute.xlu0 %936
      %938 = vrot.lane.b32.xlu0 %v838, 96
      %v939 = vpop.permute.xlu0 %938
      %vm940 = vcmask 64512
      %v941 = vsel %vm940, %v835, 0
      %v943 = vsel %vm940, %v838, 0
      %v945 = vsel %vm940, %v937, 0
      %v947 = vsel %vm940, %v939, 0
      %949 = vmatprep.subr.mxu0 0.0
      %950 = vmatpush1.xpose.msra.mxu0 %v945
      %951 = vmatprep.subr.mxu0 0.0
      %952 = vmatpush1.xpose.msra.mxu0 %v947
      %953 = vmatprep.subr.mxu0 0.0
      %954 = vmatpush1.xpose.msra.mxu0 0.0
      %955 = vmatprep.subr.mxu0 0.0
      %956 = vmatpush1.xpose.msra.mxu0 0.0
      %957 = vmatprep.subr.mxu0 0.0
      %958 = vmatpush1.xpose.msra.mxu0 0.0
      %959 = vmatprep.subr.mxu0 0.0
      %960 = vmatpush1.xpose.msra.mxu0 0.0
      %961 = vmatprep.subr.mxu0 0.0
      %962 = vmatpush1.xpose.msra.mxu0 0.0
      %963 = vmatprep.subr.mxu0 0.0
      %964 = vmatpush1.xpose.msra.mxu0 0.0
      %965 = vmatprep.subr.mxu0 0.0
      %966 = vmatpush1.xpose.msra.mxu0 0.0
      %967 = vmatprep.subr.mxu0 0.0
      %968 = vmatpush1.xpose.msra.mxu0 0.0
      %969 = vmatprep.subr.mxu0 0.0
      %970 = vmatpush1.xpose.msra.mxu0 0.0
      %971 = vmatprep.subr.mxu0 0.0
      %972 = vmatpush1.xpose.msra.mxu0 0.0
      %973 = vmatprep.subr.mxu0 0.0
      %974 = vmatpush1.xpose.msra.mxu0 0.0
      %975 = vmatprep.subr.mxu0 0.0
      %976 = vmatpush1.xpose.msra.mxu0 0.0
      %977 = vmatprep.subr.mxu0 0.0
      %978 = vmatpush1.xpose.msra.mxu0 0.0
      %979 = vmatprep.subr.mxu0 0.0
      %980 = vmatpush1.xpose.msra.mxu0 0.0
      %981 = vmatprep.subr.mxu0 0.0
      %982 = vmatpush1.xpose.msra.mxu0 0.0
      %983 = vmatprep.subr.mxu0 0.0
      %984 = vmatpush1.xpose.msra.mxu0 0.0
      %985 = vmatprep.subr.mxu0 0.0
      %986 = vmatpush1.xpose.msra.mxu0 0.0
      %987 = vmatprep.subr.mxu0 0.0
      %988 = vmatpush1.xpose.msra.mxu0 0.0
      %989 = vmatprep.subr.mxu0 0.0
      %990 = vmatpush1.xpose.msra.mxu0 0.0
      %991 = vmatprep.subr.mxu0 0.0
      %992 = vmatpush1.xpose.msra.mxu0 0.0
      %993 = vmatprep.subr.mxu0 0.0
      %994 = vmatpush1.xpose.msra.mxu0 0.0
      %995 = vmatprep.subr.mxu0 0.0
      %996 = vmatpush1.xpose.msra.mxu0 0.0
      %997 = vmatprep.subr.mxu0 0.0
      %998 = vmatpush1.xpose.msra.mxu0 0.0
      %999 = vmatprep.subr.mxu0 0.0
      %1000 = vmatpush1.xpose.msra.mxu0 0.0
      %1001 = vmatprep.subr.mxu0 0.0
      %1002 = vmatpush1.xpose.msra.mxu0 0.0
      %1003 = vmatprep.subr.mxu0 0.0
      %1004 = vmatpush1.xpose.msra.mxu0 0.0
      %1005 = vmatprep.subr.mxu0 0.0
      %1006 = vmatpush1.xpose.msra.mxu0 0.0
      %1007 = vmatprep.subr.mxu0 0.0
      %1008 = vmatpush1.xpose.msra.mxu0 0.0
      %1009 = vmatprep.subr.mxu0 0.0
      %1010 = vmatpush1.xpose.msra.mxu0 0.0
      %1011 = vmatprep.subr.mxu0 0.0
      %1012 = vmatpush1.xpose.msra.mxu0 0.0
      %1013 = vmatprep.mubr.f32.mxu0 0.0
      %1014 = vmatmul.mubr.f32.gmra.mrb[0].mxu0 %v941
      %v1015 = vpop.f32.mrb[0].mxu0
      %v1016 = vadd.f32 0.0, %v1015
      %v1017 = vpop.f32.mrb[0].mxu0
      %1018 = vmatprep.mubr.f32.mxu0 0.0
      %1019 = vmatmul.mubr.f32.gmra.mrb[0].mxu0 %v943
      %v1020 = vpop.f32.mrb[0].mxu0
      %v1021 = vadd.f32 0.0, %v1020
      %v1022 = vpop.f32.mrb[0].mxu0
      %1023 = vdwg.mxu0
      %1026 = vrot.lane.b32.xlu0 %v843, 96
      %v1027 = vpop.permute.xlu0 %1026
      %1028 = vrot.lane.b32.xlu0 %v846, 96
      %v1029 = vpop.permute.xlu0 %1028
      %v1030 = vsel %vm940, %v843, 0
      %v1032 = vsel %vm940, %v846, 0
      %v1034 = vsel %vm940, %v1027, 0
      %v1036 = vsel %vm940, %v1029, 0
      %1038 = vmatprep.subr.mxu0 0.0
      %1039 = vmatpush1.xpose.msra.mxu0 %v1034
      %1040 = vmatprep.subr.mxu0 0.0
      %1041 = vmatpush1.xpose.msra.mxu0 %v1036
      %1042 = vmatprep.subr.mxu0 0.0
      %1043 = vmatpush1.xpose.msra.mxu0 0.0
      %1044 = vmatprep.subr.mxu0 0.0
      %1045 = vmatpush1.xpose.msra.mxu0 0.0
      %1046 = vmatprep.subr.mxu0 0.0
      %1047 = vmatpush1.xpose.msra.mxu0 0.0
      %1048 = vmatprep.subr.mxu0 0.0
      %1049 = vmatpush1.xpose.msra.mxu0 0.0
      %1050 = vmatprep.subr.mxu0 0.0
      %1051 = vmatpush1.xpose.msra.mxu0 0.0
      %1052 = vmatprep.subr.mxu0 0.0
      %1053 = vmatpush1.xpose.msra.mxu0 0.0
      %1054 = vmatprep.subr.mxu0 0.0
      %1055 = vmatpush1.xpose.msra.mxu0 0.0
      %1056 = vmatprep.subr.mxu0 0.0
      %1057 = vmatpush1.xpose.msra.mxu0 0.0
      %1058 = vmatprep.subr.mxu0 0.0
      %1059 = vmatpush1.xpose.msra.mxu0 0.0
      %1060 = vmatprep.subr.mxu0 0.0
      %1061 = vmatpush1.xpose.msra.mxu0 0.0
      %1062 = vmatprep.subr.mxu0 0.0
      %1063 = vmatpush1.xpose.msra.mxu0 0.0
      %1064 = vmatprep.subr.mxu0 0.0
      %1065 = vmatpush1.xpose.msra.mxu0 0.0
      %1066 = vmatprep.subr.mxu0 0.0
      %1067 = vmatpush1.xpose.msra.mxu0 0.0
      %1068 = vmatprep.subr.mxu0 0.0
      %1069 = vmatpush1.xpose.msra.mxu0 0.0
      %1070 = vmatprep.subr.mxu0 0.0
      %1071 = vmatpush1.xpose.msra.mxu0 0.0
      %1072 = vmatprep.subr.mxu0 0.0
      %1073 = vmatpush1.xpose.msra.mxu0 0.0
      %1074 = vmatprep.subr.mxu0 0.0
      %1075 = vmatpush1.xpose.msra.mxu0 0.0
      %1076 = vmatprep.subr.mxu0 0.0
      %1077 = vmatpush1.xpose.msra.mxu0 0.0
      %1078 = vmatprep.subr.mxu0 0.0
      %1079 = vmatpush1.xpose.msra.mxu0 0.0
      %1080 = vmatprep.subr.mxu0 0.0
      %1081 = vmatpush1.xpose.msra.mxu0 0.0
      %1082 = vmatprep.subr.mxu0 0.0
      %1083 = vmatpush1.xpose.msra.mxu0 0.0
      %1084 = vmatprep.subr.mxu0 0.0
      %1085 = vmatpush1.xpose.msra.mxu0 0.0
      %1086 = vmatprep.subr.mxu0 0.0
      %1087 = vmatpush1.xpose.msra.mxu0 0.0
      %1088 = vmatprep.subr.mxu0 0.0
      %1089 = vmatpush1.xpose.msra.mxu0 0.0
      %1090 = vmatprep.subr.mxu0 0.0
      %1091 = vmatpush1.xpose.msra.mxu0 0.0
      %1092 = vmatprep.subr.mxu0 0.0
      %1093 = vmatpush1.xpose.msra.mxu0 0.0
      %1094 = vmatprep.subr.mxu0 0.0
      %1095 = vmatpush1.xpose.msra.mxu0 0.0
      %1096 = vmatprep.subr.mxu0 0.0
      %1097 = vmatpush1.xpose.msra.mxu0 0.0
      %1098 = vmatprep.subr.mxu0 0.0
      %1099 = vmatpush1.xpose.msra.mxu0 0.0
      %1100 = vmatprep.subr.mxu0 0.0
      %1101 = vmatpush1.xpose.msra.mxu0 0.0
      %1102 = vmatprep.mubr.f32.mxu0 0.0
      %1103 = vmatmul.mubr.f32.gmra.mrb[0].mxu0 %v1030
      %v1104 = vpop.f32.mrb[0].mxu0
      %v1105 = vadd.f32 0.0, %v1104
      %v1106 = vpop.f32.mrb[0].mxu0
      %1107 = vmatprep.mubr.f32.mxu0 0.0
      %1108 = vmatmul.mubr.f32.gmra.mrb[0].mxu0 %v1032
      %v1109 = vpop.f32.mrb[0].mxu0
      %v1110 = vadd.f32 0.0, %v1109
      %v1111 = vpop.f32.mrb[0].mxu0
      %1112 = vdwg.mxu0
      %v1113 = vmul.f32 %v1016, 0.35355338
      %v1114 = vmul.f32 %v1021, 0.35355338
      %v1115 = vmul.f32 %v1105, 0.35355338
      %v1116 = vmul.f32 %v1110, 0.35355338
      %v1119 = vlaneseq
      %v1120 = vshrl.u32 %v1119, 7
      %v1121 = vsub.s32 0, %v1120
      %v1122 = vrot.slane %v762, %v1121
      %v1123 = vlaneseq
      %v1124 = vshrl.u32 %v1123, 7
      %v1125 = vsub.s32 0, %v1124
      %v1126 = vrot.slane %v763, %v1125
      %v1129 = vadd.f32 %v1113, %v1122
      %v1130 = vadd.f32 %v1114, %v1122
      %v1131 = vadd.f32 %v1115, %v1126
      %v1132 = vadd.f32 %v1116, %v1126
      %vm1133 = vcmask 130048
      %v1134 = vsel %vm1133, %v1129, -inf
      %1135 = vmax.xlane.f32.xlu0 %v1134
      %v1136 = vpop.xlane.xlu0 %1135
      %v1137 = vsel %vm1133, %v1130, -inf
      %1138 = vmax.xlane.f32.xlu0 %v1137
      %v1139 = vpop.xlane.xlu0 %1138
      %v1140 = vsel %vm1133, %v1131, -inf
      %1141 = vmax.xlane.f32.xlu0 %v1140
      %v1142 = vpop.xlane.xlu0 %1141
      %v1143 = vsel %vm1133, %v1132, -inf
      %1144 = vmax.xlane.f32.xlu0 %v1143
      %v1145 = vpop.xlane.xlu0 %1144
      %v1146 = vsub.f32 %v1129, %v1136
      %v1147 = vsub.f32 %v1130, %v1139
      %v1148 = vsub.f32 %v1131, %v1142
      %v1149 = vsub.f32 %v1132, %v1145
      %v1150 = vmul.f32 %v1146, 1.442695
      %v1151 = vpow.pop %v1150
      %v1152 = vmul.f32 %v1147, 1.442695
      %v1153 = vpow.pop %v1152
      %v1154 = vmul.f32 %v1148, 1.442695
      %v1155 = vpow.pop %v1154
      %v1156 = vmul.f32 %v1149, 1.442695
      %v1157 = vpow.pop %v1156
      %v1158 = vsel %vm1133, %v1151, 0.0
      %1159 = vadd.xlane.f32.xlu0 %v1158
      %v1160 = vpop.xlane.xlu0 %1159
      %v1161 = vsel %vm1133, %v1153, 0.0
      %1162 = vadd.xlane.f32.xlu0 %v1161
      %v1163 = vpop.xlane.xlu0 %1162
      %v1164 = vsel %vm1133, %v1155, 0.0
      %1165 = vadd.xlane.f32.xlu0 %v1164
      %v1166 = vpop.xlane.xlu0 %1165
      %v1167 = vsel %vm1133, %v1157, 0.0
      %1168 = vadd.xlane.f32.xlu0 %v1167
      %v1169 = vpop.xlane.xlu0 %1168
      %v1170 = vrcp.pop %v1160
      %v1171 = vmul.f32 %v1151, %v1170
      %v1172 = vrcp.pop %v1163
      %v1173 = vmul.f32 %v1153, %v1172
      %v1174 = vrcp.pop %v1166
      %v1175 = vmul.f32 %v1155, %v1174
      %v1176 = vrcp.pop %v1169
      %v1177 = vmul.f32 %v1157, %v1176
      %v1179 = vsel %vm1133, %v1171, 0
      %v1182 = vsel %vm1133, %v1173, 0
      %1184 = vmatprep.subr.mxu0 0.0
      %1185 = vmatpush1.msra.mxu0 %v915
      %1186 = vmatprep.subr.mxu0 0.0
      %1187 = vmatpush1.msra.mxu0 %v918
      %1188 = vmatprep.subr.mxu0 0.0
      %1189 = vmatpush1.msra.mxu0 0.0
      %1190 = vmatprep.subr.mxu0 0.0
      %1191 = vmatpush1.msra.mxu0 0.0
      %1192 = vmatprep.subr.mxu0 0.0
      %1193 = vmatpush1.msra.mxu0 0.0
      %1194 = vmatprep.subr.mxu0 0.0
      %1195 = vmatpush1.msra.mxu0 0.0
      %1196 = vmatprep.subr.mxu0 0.0
      %1197 = vmatpush1.msra.mxu0 0.0
      %1198 = vmatprep.subr.mxu0 0.0
      %1199 = vmatpush1.msra.mxu0 0.0
      %1200 = vmatprep.subr.mxu0 0.0
      %1201 = vmatpush1.msra.mxu0 0.0
      %1202 = vmatprep.subr.mxu0 0.0
      %1203 = vmatpush1.msra.mxu0 0.0
      %1204 = vmatprep.subr.mxu0 0.0
      %1205 = vmatpush1.msra.mxu0 0.0
      %1206 = vmatprep.subr.mxu0 0.0
      %1207 = vmatpush1.msra.mxu0 0.0
      %1208 = vmatprep.subr.mxu0 0.0
      %1209 = vmatpush1.msra.mxu0 0.0
      %1210 = vmatprep.subr.mxu0 0.0
      %1211 = vmatpush1.msra.mxu0 0.0
      %1212 = vmatprep.subr.mxu0 0.0
      %1213 = vmatpush1.msra.mxu0 0.0
      %1214 = vmatprep.subr.mxu0 0.0
      %1215 = vmatpush1.msra.mxu0 0.0
      %1216 = vmatprep.subr.mxu0 0.0
      %1217 = vmatpush1.msra.mxu0 0.0
      %1218 = vmatprep.subr.mxu0 0.0
      %1219 = vmatpush1.msra.mxu0 0.0
      %1220 = vmatprep.subr.mxu0 0.0
      %1221 = vmatpush1.msra.mxu0 0.0
      %1222 = vmatprep.subr.mxu0 0.0
      %1223 = vmatpush1.msra.mxu0 0.0
      %1224 = vmatprep.subr.mxu0 0.0
      %1225 = vmatpush1.msra.mxu0 0.0
      %1226 = vmatprep.subr.mxu0 0.0
      %1227 = vmatpush1.msra.mxu0 0.0
      %1228 = vmatprep.subr.mxu0 0.0
      %1229 = vmatpush1.msra.mxu0 0.0
      %1230 = vmatprep.subr.mxu0 0.0
      %1231 = vmatpush1.msra.mxu0 0.0
      %1232 = vmatprep.subr.mxu0 0.0
      %1233 = vmatpush1.msra.mxu0 0.0
      %1234 = vmatprep.subr.mxu0 0.0
      %1235 = vmatpush1.msra.mxu0 0.0
      %1236 = vmatprep.subr.mxu0 0.0
      %1237 = vmatpush1.msra.mxu0 0.0
      %1238 = vmatprep.subr.mxu0 0.0
      %1239 = vmatpush1.msra.mxu0 0.0
      %1240 = vmatprep.subr.mxu0 0.0
      %1241 = vmatpush1.msra.mxu0 0.0
      %1242 = vmatprep.subr.mxu0 0.0
      %1243 = vmatpush1.msra.mxu0 0.0
      %1244 = vmatprep.subr.mxu0 0.0
      %1245 = vmatpush1.msra.mxu0 0.0
      %1246 = vmatprep.subr.mxu0 0.0
      %1247 = vmatpush1.msra.mxu0 0.0
      %1248 = vmatprep.mubr.f32.mxu0 0.0
      %1249 = vmatmul.mubr.f32.gmra.mrb[0].mxu0 %v1179
      %v1250 = vpop.f32.mrb[0].mxu0
      %v1251 = vadd.f32 0.0, %v1250
      %v1252 = vpop.f32.mrb[0].mxu0
      %1253 = vmatprep.mubr.f32.mxu0 0.0
      %1254 = vmatmul.mubr.f32.gmra.mrb[0].mxu0 %v1182
      %v1255 = vpop.f32.mrb[0].mxu0
      %v1256 = vadd.f32 0.0, %v1255
      %v1257 = vpop.f32.mrb[0].mxu0
      %1258 = vdwg.mxu0
      %v1260 = vsel %vm1133, %v1175, 0
      %v1263 = vsel %vm1133, %v1177, 0
      %1265 = vmatprep.subr.mxu0 0.0
      %1266 = vmatpush1.msra.mxu0 %v923
      %1267 = vmatprep.subr.mxu0 0.0
      %1268 = vmatpush1.msra.mxu0 %v926
      %1269 = vmatprep.subr.mxu0 0.0
      %1270 = vmatpush1.msra.mxu0 0.0
      %1271 = vmatprep.subr.mxu0 0.0
      %1272 = vmatpush1.msra.mxu0 0.0
      %1273 = vmatprep.subr.mxu0 0.0
      %1274 = vmatpush1.msra.mxu0 0.0
      %1275 = vmatprep.subr.mxu0 0.0
      %1276 = vmatpush1.msra.mxu0 0.0
      %1277 = vmatprep.subr.mxu0 0.0
      %1278 = vmatpush1.msra.mxu0 0.0
      %1279 = vmatprep.subr.mxu0 0.0
      %1280 = vmatpush1.msra.mxu0 0.0
      %1281 = vmatprep.subr.mxu0 0.0
      %1282 = vmatpush1.msra.mxu0 0.0
      %1283 = vmatprep.subr.mxu0 0.0
      %1284 = vmatpush1.msra.mxu0 0.0
      %1285 = vmatprep.subr.mxu0 0.0
      %1286 = vmatpush1.msra.mxu0 0.0
      %1287 = vmatprep.subr.mxu0 0.0
      %1288 = vmatpush1.msra.mxu0 0.0
      %1289 = vmatprep.subr.mxu0 0.0
      %1290 = vmatpush1.msra.mxu0 0.0
      %1291 = vmatprep.subr.mxu0 0.0
      %1292 = vmatpush1.msra.mxu0 0.0
      %1293 = vmatprep.subr.mxu0 0.0
      %1294 = vmatpush1.msra.mxu0 0.0
      %1295 = vmatprep.subr.mxu0 0.0
      %1296 = vmatpush1.msra.mxu0 0.0
      %1297 = vmatprep.subr.mxu0 0.0
      %1298 = vmatpush1.msra.mxu0 0.0
      %1299 = vmatprep.subr.mxu0 0.0
      %1300 = vmatpush1.msra.mxu0 0.0
      %1301 = vmatprep.subr.mxu0 0.0
      %1302 = vmatpush1.msra.mxu0 0.0
      %1303 = vmatprep.subr.mxu0 0.0
      %1304 = vmatpush1.msra.mxu0 0.0
      %1305 = vmatprep.subr.mxu0 0.0
      %1306 = vmatpush1.msra.mxu0 0.0
      %1307 = vmatprep.subr.mxu0 0.0
      %1308 = vmatpush1.msra.mxu0 0.0
      %1309 = vmatprep.subr.mxu0 0.0
      %1310 = vmatpush1.msra.mxu0 0.0
      %1311 = vmatprep.subr.mxu0 0.0
      %1312 = vmatpush1.msra.mxu0 0.0
      %1313 = vmatprep.subr.mxu0 0.0
      %1314 = vmatpush1.msra.mxu0 0.0
      %1315 = vmatprep.subr.mxu0 0.0
      %1316 = vmatpush1.msra.mxu0 0.0
      %1317 = vmatprep.subr.mxu0 0.0
      %1318 = vmatpush1.msra.mxu0 0.0
      %1319 = vmatprep.subr.mxu0 0.0
      %1320 = vmatpush1.msra.mxu0 0.0
      %1321 = vmatprep.subr.mxu0 0.0
      %1322 = vmatpush1.msra.mxu0 0.0
      %1323 = vmatprep.subr.mxu0 0.0
      %1324 = vmatpush1.msra.mxu0 0.0
      %1325 = vmatprep.subr.mxu0 0.0
      %1326 = vmatpush1.msra.mxu0 0.0
      %1327 = vmatprep.subr.mxu0 0.0
      %1328 = vmatpush1.msra.mxu0 0.0
      %1329 = vmatprep.mubr.f32.mxu0 0.0
      %1330 = vmatmul.mubr.f32.gmra.mrb[0].mxu0 %v1260
      %v1331 = vpop.f32.mrb[0].mxu0
      %v1332 = vadd.f32 0.0, %v1331
      %v1333 = vpop.f32.mrb[0].mxu0
      %1334 = vmatprep.mubr.f32.mxu0 0.0
      %1335 = vmatmul.mubr.f32.gmra.mrb[0].mxu0 %v1263
      %v1336 = vpop.f32.mrb[0].mxu0
      %v1337 = vadd.f32 0.0, %v1336
      %v1338 = vpop.f32.mrb[0].mxu0
      %1339 = vdwg.mxu0
      %1340 = vrot.lane.b32.xlu0 %v835, 120
      %v1341 = vpop.permute.xlu0 %1340
      %1342 = vrot.lane.b32.xlu0 %v838, 120
      %v1343 = vpop.permute.xlu0 %1342
      %1344 = vrot.lane.b32.xlu0 %v835, 88
      %v1345 = vpop.permute.xlu0 %1344
      %1346 = vrot.lane.b32.xlu0 %v838, 88
      %v1347 = vpop.permute.xlu0 %1346
      %v1348 = vsel %vm940, %v1341, 0
      %v1350 = vsel %vm940, %v1343, 0
      %v1352 = vsel %vm940, %v1345, 0
      %v1354 = vsel %vm940, %v1347, 0
      %1356 = vmatprep.subr.mxu0 0.0
      %1357 = vmatpush1.xpose.msra.mxu0 %v1352
      %1358 = vmatprep.subr.mxu0 0.0
      %1359 = vmatpush1.xpose.msra.mxu0 %v1354
      %1360 = vmatprep.subr.mxu0 0.0
      %1361 = vmatpush1.xpose.msra.mxu0 0.0
      %1362 = vmatprep.subr.mxu0 0.0
      %1363 = vmatpush1.xpose.msra.mxu0 0.0
      %1364 = vmatprep.subr.mxu0 0.0
      %1365 = vmatpush1.xpose.msra.mxu0 0.0
      %1366 = vmatprep.subr.mxu0 0.0
      %1367 = vmatpush1.xpose.msra.mxu0 0.0
      %1368 = vmatprep.subr.mxu0 0.0
      %1369 = vmatpush1.xpose.msra.mxu0 0.0
      %1370 = vmatprep.subr.mxu0 0.0
      %1371 = vmatpush1.xpose.msra.mxu0 0.0
      %1372 = vmatprep.subr.mxu0 0.0
      %1373 = vmatpush1.xpose.msra.mxu0 0.0
      %1374 = vmatprep.subr.mxu0 0.0
      %1375 = vmatpush1.xpose.msra.mxu0 0.0
      %1376 = vmatprep.subr.mxu0 0.0
      %1377 = vmatpush1.xpose.msra.mxu0 0.0
      %1378 = vmatprep.subr.mxu0 0.0
      %1379 = vmatpush1.xpose.msra.mxu0 0.0
      %1380 = vmatprep.subr.mxu0 0.0
      %1381 = vmatpush1.xpose.msra.mxu0 0.0
      %1382 = vmatprep.subr.mxu0 0.0
      %1383 = vmatpush1.xpose.msra.mxu0 0.0
      %1384 = vmatprep.subr.mxu0 0.0
      %1385 = vmatpush1.xpose.msra.mxu0 0.0
      %1386 = vmatprep.subr.mxu0 0.0
      %1387 = vmatpush1.xpose.msra.mxu0 0.0
      %1388 = vmatprep.subr.mxu0 0.0
      %1389 = vmatpush1.xpose.msra.mxu0 0.0
      %1390 = vmatprep.subr.mxu0 0.0
      %1391 = vmatpush1.xpose.msra.mxu0 0.0
      %1392 = vmatprep.subr.mxu0 0.0
      %1393 = vmatpush1.xpose.msra.mxu0 0.0
      %1394 = vmatprep.subr.mxu0 0.0
      %1395 = vmatpush1.xpose.msra.mxu0 0.0
      %1396 = vmatprep.subr.mxu0 0.0
      %1397 = vmatpush1.xpose.msra.mxu0 0.0
      %1398 = vmatprep.subr.mxu0 0.0
      %1399 = vmatpush1.xpose.msra.mxu0 0.0
      %1400 = vmatprep.subr.mxu0 0.0
      %1401 = vmatpush1.xpose.msra.mxu0 0.0
      %1402 = vmatprep.subr.mxu0 0.0
      %1403 = vmatpush1.xpose.msra.mxu0 0.0
      %1404 = vmatprep.subr.mxu0 0.0
      %1405 = vmatpush1.xpose.msra.mxu0 0.0
      %1406 = vmatprep.subr.mxu0 0.0
      %1407 = vmatpush1.xpose.msra.mxu0 0.0
      %1408 = vmatprep.subr.mxu0 0.0
      %1409 = vmatpush1.xpose.msra.mxu0 0.0
      %1410 = vmatprep.subr.mxu0 0.0
      %1411 = vmatpush1.xpose.msra.mxu0 0.0
      %1412 = vmatprep.subr.mxu0 0.0
      %1413 = vmatpush1.xpose.msra.mxu0 0.0
      %1414 = vmatprep.subr.mxu0 0.0
      %1415 = vmatpush1.xpose.msra.mxu0 0.0
      %1416 = vmatprep.subr.mxu0 0.0
      %1417 = vmatpush1.xpose.msra.mxu0 0.0
      %1418 = vmatprep.subr.mxu0 0.0
      %1419 = vmatpush1.xpose.msra.mxu0 0.0
      %1420 = vmatprep.mubr.f32.mxu0 0.0
      %1421 = vmatmul.mubr.f32.gmra.mrb[0].mxu0 %v1348
      %v1422 = vpop.f32.mrb[0].mxu0
      %v1423 = vadd.f32 0.0, %v1422
      %v1424 = vpop.f32.mrb[0].mxu0
      %1425 = vmatprep.mubr.f32.mxu0 0.0
      %1426 = vmatmul.mubr.f32.gmra.mrb[0].mxu0 %v1350
      %v1427 = vpop.f32.mrb[0].mxu0
      %v1428 = vadd.f32 0.0, %v1427
      %v1429 = vpop.f32.mrb[0].mxu0
      %1430 = vdwg.mxu0
      %1431 = vrot.lane.b32.xlu0 %v843, 120
      %v1432 = vpop.permute.xlu0 %1431
      %1433 = vrot.lane.b32.xlu0 %v846, 120
      %v1434 = vpop.permute.xlu0 %1433
      %1435 = vrot.lane.b32.xlu0 %v843, 88
      %v1436 = vpop.permute.xlu0 %1435
      %1437 = vrot.lane.b32.xlu0 %v846, 88
      %v1438 = vpop.permute.xlu0 %1437
      %v1439 = vsel %vm940, %v1432, 0
      %v1441 = vsel %vm940, %v1434, 0
      %v1443 = vsel %vm940, %v1436, 0
      %v1445 = vsel %vm940, %v1438, 0
      %1447 = vmatprep.subr.mxu0 0.0
      %1448 = vmatpush1.xpose.msra.mxu0 %v1443
      %1449 = vmatprep.subr.mxu0 0.0
      %1450 = vmatpush1.xpose.msra.mxu0 %v1445
      %1451 = vmatprep.subr.mxu0 0.0
      %1452 = vmatpush1.xpose.msra.mxu0 0.0
      %1453 = vmatprep.subr.mxu0 0.0
      %1454 = vmatpush1.xpose.msra.mxu0 0.0
      %1455 = vmatprep.subr.mxu0 0.0
      %1456 = vmatpush1.xpose.msra.mxu0 0.0
      %1457 = vmatprep.subr.mxu0 0.0
      %1458 = vmatpush1.xpose.msra.mxu0 0.0
      %1459 = vmatprep.subr.mxu0 0.0
      %1460 = vmatpush1.xpose.msra.mxu0 0.0
      %1461 = vmatprep.subr.mxu0 0.0
      %1462 = vmatpush1.xpose.msra.mxu0 0.0
      %1463 = vmatprep.subr.mxu0 0.0
      %1464 = vmatpush1.xpose.msra.mxu0 0.0
      %1465 = vmatprep.subr.mxu0 0.0
      %1466 = vmatpush1.xpose.msra.mxu0 0.0
      %1467 = vmatprep.subr.mxu0 0.0
      %1468 = vmatpush1.xpose.msra.mxu0 0.0
      %1469 = vmatprep.subr.mxu0 0.0
      %1470 = vmatpush1.xpose.msra.mxu0 0.0
      %1471 = vmatprep.subr.mxu0 0.0
      %1472 = vmatpush1.xpose.msra.mxu0 0.0
      %1473 = vmatprep.subr.mxu0 0.0
      %1474 = vmatpush1.xpose.msra.mxu0 0.0
      %1475 = vmatprep.subr.mxu0 0.0
      %1476 = vmatpush1.xpose.msra.mxu0 0.0
      %1477 = vmatprep.subr.mxu0 0.0
      %1478 = vmatpush1.xpose.msra.mxu0 0.0
      %1479 = vmatprep.subr.mxu0 0.0
      %1480 = vmatpush1.xpose.msra.mxu0 0.0
      %1481 = vmatprep.subr.mxu0 0.0
      %1482 = vmatpush1.xpose.msra.mxu0 0.0
      %1483 = vmatprep.subr.mxu0 0.0
      %1484 = vmatpush1.xpose.msra.mxu0 0.0
      %1485 = vmatprep.subr.mxu0 0.0
      %1486 = vmatpush1.xpose.msra.mxu0 0.0
      %1487 = vmatprep.subr.mxu0 0.0
      %1488 = vmatpush1.xpose.msra.mxu0 0.0
      %1489 = vmatprep.subr.mxu0 0.0
      %1490 = vmatpush1.xpose.msra.mxu0 0.0
      %1491 = vmatprep.subr.mxu0 0.0
      %1492 = vmatpush1.xpose.msra.mxu0 0.0
      %1493 = vmatprep.subr.mxu0 0.0
      %1494 = vmatpush1.xpose.msra.mxu0 0.0
      %1495 = vmatprep.subr.mxu0 0.0
      %1496 = vmatpush1.xpose.msra.mxu0 0.0
      %1497 = vmatprep.subr.mxu0 0.0
      %1498 = vmatpush1.xpose.msra.mxu0 0.0
      %1499 = vmatprep.subr.mxu0 0.0
      %1500 = vmatpush1.xpose.msra.mxu0 0.0
      %1501 = vmatprep.subr.mxu0 0.0
      %1502 = vmatpush1.xpose.msra.mxu0 0.0
      %1503 = vmatprep.subr.mxu0 0.0
      %1504 = vmatpush1.xpose.msra.mxu0 0.0
      %1505 = vmatprep.subr.mxu0 0.0
      %1506 = vmatpush1.xpose.msra.mxu0 0.0
      %1507 = vmatprep.subr.mxu0 0.0
      %1508 = vmatpush1.xpose.msra.mxu0 0.0
      %1509 = vmatprep.subr.mxu0 0.0
      %1510 = vmatpush1.xpose.msra.mxu0 0.0
      %1511 = vmatprep.mubr.f32.mxu0 0.0
      %1512 = vmatmul.mubr.f32.gmra.mrb[0].mxu0 %v1439
      %v1513 = vpop.f32.mrb[0].mxu0
      %v1514 = vadd.f32 0.0, %v1513
      %v1515 = vpop.f32.mrb[0].mxu0
      %1516 = vmatprep.mubr.f32.mxu0 0.0
      %1517 = vmatmul.mubr.f32.gmra.mrb[0].mxu0 %v1441
      %v1518 = vpop.f32.mrb[0].mxu0
      %v1519 = vadd.f32 0.0, %v1518
      %v1520 = vpop.f32.mrb[0].mxu0
      %1521 = vdwg.mxu0
      %v1522 = vmul.f32 %v1423, 0.35355338
      %v1523 = vmul.f32 %v1428, 0.35355338
      %v1524 = vmul.f32 %v1514, 0.35355338
      %v1525 = vmul.f32 %v1519, 0.35355338
      %v1526 = vadd.f32 %v1522, %v1122
      %v1527 = vadd.f32 %v1523, %v1122
      %v1528 = vadd.f32 %v1524, %v1126
      %v1529 = vadd.f32 %v1525, %v1126
      %v1530 = vsel %vm1133, %v1526, -inf
      %1531 = vmax.xlane.f32.xlu0 %v1530
      %v1532 = vpop.xlane.xlu0 %1531
      %v1533 = vsel %vm1133, %v1527, -inf
      %1534 = vmax.xlane.f32.xlu0 %v1533
      %v1535 = vpop.xlane.xlu0 %1534
      %v1536 = vsel %vm1133, %v1528, -inf
      %1537 = vmax.xlane.f32.xlu0 %v1536
      %v1538 = vpop.xlane.xlu0 %1537
      %v1539 = vsel %vm1133, %v1529, -inf
      %1540 = vmax.xlane.f32.xlu0 %v1539
      %v1541 = vpop.xlane.xlu0 %1540
      %v1542 = vsub.f32 %v1526, %v1532
      %v1543 = vsub.f32 %v1527, %v1535
      %v1544 = vsub.f32 %v1528, %v1538
      %v1545 = vsub.f32 %v1529, %v1541
      %v1546 = vmul.f32 %v1542, 1.442695
      %v1547 = vpow.pop %v1546
      %v1548 = vmul.f32 %v1543, 1.442695
      %v1549 = vpow.pop %v1548
      %v1550 = vmul.f32 %v1544, 1.442695
      %v1551 = vpow.pop %v1550
      %v1552 = vmul.f32 %v1545, 1.442695
      %v1553 = vpow.pop %v1552
      %v1554 = vsel %vm1133, %v1547, 0.0
      %1555 = vadd.xlane.f32.xlu0 %v1554
      %v1556 = vpop.xlane.xlu0 %1555
      %v1557 = vsel %vm1133, %v1549, 0.0
      %1558 = vadd.xlane.f32.xlu0 %v1557
      %v1559 = vpop.xlane.xlu0 %1558
      %v1560 = vsel %vm1133, %v1551, 0.0
      %1561 = vadd.xlane.f32.xlu0 %v1560
      %v1562 = vpop.xlane.xlu0 %1561
      %v1563 = vsel %vm1133, %v1553, 0.0
      %1564 = vadd.xlane.f32.xlu0 %v1563
      %v1565 = vpop.xlane.xlu0 %1564
      %v1566 = vrcp.pop %v1556
      %v1567 = vmul.f32 %v1547, %v1566
      %v1568 = vrcp.pop %v1559
      %v1569 = vmul.f32 %v1549, %v1568
      %v1570 = vrcp.pop %v1562
      %v1571 = vmul.f32 %v1551, %v1570
      %v1572 = vrcp.pop %v1565
      %v1573 = vmul.f32 %v1553, %v1572
      %1576 = vrot.lane.b32.xlu0 %v915, 120
      %v1577 = vpop.permute.xlu0 %1576
      %1578 = vrot.lane.b32.xlu0 %v918, 120
      %v1579 = vpop.permute.xlu0 %1578
      %v1583 = vsel %vm1133, %v1567, 0
      %v1586 = vsel %vm1133, %v1569, 0
      %1588 = vmatprep.subr.mxu0 0.0
      %1589 = vmatpush1.msra.mxu0 %v1577
      %1590 = vmatprep.subr.mxu0 0.0
      %1591 = vmatpush1.msra.mxu0 %v1579
      %1592 = vmatprep.subr.mxu0 0.0
      %1593 = vmatpush1.msra.mxu0 0.0
      %1594 = vmatprep.subr.mxu0 0.0
      %1595 = vmatpush1.msra.mxu0 0.0
      %1596 = vmatprep.subr.mxu0 0.0
      %1597 = vmatpush1.msra.mxu0 0.0
      %1598 = vmatprep.subr.mxu0 0.0
      %1599 = vmatpush1.msra.mxu0 0.0
      %1600 = vmatprep.subr.mxu0 0.0
      %1601 = vmatpush1.msra.mxu0 0.0
      %1602 = vmatprep.subr.mxu0 0.0
      %1603 = vmatpush1.msra.mxu0 0.0
      %1604 = vmatprep.subr.mxu0 0.0
      %1605 = vmatpush1.msra.mxu0 0.0
      %1606 = vmatprep.subr.mxu0 0.0
      %1607 = vmatpush1.msra.mxu0 0.0
      %1608 = vmatprep.subr.mxu0 0.0
      %1609 = vmatpush1.msra.mxu0 0.0
      %1610 = vmatprep.subr.mxu0 0.0
      %1611 = vmatpush1.msra.mxu0 0.0
      %1612 = vmatprep.subr.mxu0 0.0
      %1613 = vmatpush1.msra.mxu0 0.0
      %1614 = vmatprep.subr.mxu0 0.0
      %1615 = vmatpush1.msra.mxu0 0.0
      %1616 = vmatprep.subr.mxu0 0.0
      %1617 = vmatpush1.msra.mxu0 0.0
      %1618 = vmatprep.subr.mxu0 0.0
      %1619 = vmatpush1.msra.mxu0 0.0
      %1620 = vmatprep.subr.mxu0 0.0
      %1621 = vmatpush1.msra.mxu0 0.0
      %1622 = vmatprep.subr.mxu0 0.0
      %1623 = vmatpush1.msra.mxu0 0.0
      %1624 = vmatprep.subr.mxu0 0.0
      %1625 = vmatpush1.msra.mxu0 0.0
      %1626 = vmatprep.subr.mxu0 0.0
      %1627 = vmatpush1.msra.mxu0 0.0
      %1628 = vmatprep.subr.mxu0 0.0
      %1629 = vmatpush1.msra.mxu0 0.0
      %1630 = vmatprep.subr.mxu0 0.0
      %1631 = vmatpush1.msra.mxu0 0.0
      %1632 = vmatprep.subr.mxu0 0.0
      %1633 = vmatpush1.msra.mxu0 0.0
      %1634 = vmatprep.subr.mxu0 0.0
      %1635 = vmatpush1.msra.mxu0 0.0
      %1636 = vmatprep.subr.mxu0 0.0
      %1637 = vmatpush1.msra.mxu0 0.0
      %1638 = vmatprep.subr.mxu0 0.0
      %1639 = vmatpush1.msra.mxu0 0.0
      %1640 = vmatprep.subr.mxu0 0.0
      %1641 = vmatpush1.msra.mxu0 0.0
      %1642 = vmatprep.subr.mxu0 0.0
      %1643 = vmatpush1.msra.mxu0 0.0
      %1644 = vmatprep.subr.mxu0 0.0
      %1645 = vmatpush1.msra.mxu0 0.0
      %1646 = vmatprep.subr.mxu0 0.0
      %1647 = vmatpush1.msra.mxu0 0.0
      %1648 = vmatprep.subr.mxu0 0.0
      %1649 = vmatpush1.msra.mxu0 0.0
      %1650 = vmatprep.subr.mxu0 0.0
      %1651 = vmatpush1.msra.mxu0 0.0
      %1652 = vmatprep.mubr.f32.mxu0 0.0
      %1653 = vmatmul.mubr.f32.gmra.mrb[0].mxu0 %v1583
      %v1654 = vpop.f32.mrb[0].mxu0
      %v1655 = vadd.f32 0.0, %v1654
      %v1656 = vpop.f32.mrb[0].mxu0
      %1657 = vmatprep.mubr.f32.mxu0 0.0
      %1658 = vmatmul.mubr.f32.gmra.mrb[0].mxu0 %v1586
      %v1659 = vpop.f32.mrb[0].mxu0
      %v1660 = vadd.f32 0.0, %v1659
      %v1661 = vpop.f32.mrb[0].mxu0
      %1662 = vdwg.mxu0
      %1665 = vrot.lane.b32.xlu0 %v923, 120
      %v1666 = vpop.permute.xlu0 %1665
      %1667 = vrot.lane.b32.xlu0 %v926, 120
      %v1668 = vpop.permute.xlu0 %1667
      %v1672 = vsel %vm1133, %v1571, 0
      %v1675 = vsel %vm1133, %v1573, 0
      %1677 = vmatprep.subr.mxu0 0.0
      %1678 = vmatpush1.msra.mxu0 %v1666
      %1679 = vmatprep.subr.mxu0 0.0
      %1680 = vmatpush1.msra.mxu0 %v1668
      %1681 = vmatprep.subr.mxu0 0.0
      %1682 = vmatpush1.msra.mxu0 0.0
      %1683 = vmatprep.subr.mxu0 0.0
      %1684 = vmatpush1.msra.mxu0 0.0
      %1685 = vmatprep.subr.mxu0 0.0
      %1686 = vmatpush1.msra.mxu0 0.0
      %1687 = vmatprep.subr.mxu0 0.0
      %1688 = vmatpush1.msra.mxu0 0.0
      %1689 = vmatprep.subr.mxu0 0.0
      %1690 = vmatpush1.msra.mxu0 0.0
      %1691 = vmatprep.subr.mxu0 0.0
      %1692 = vmatpush1.msra.mxu0 0.0
      %1693 = vmatprep.subr.mxu0 0.0
      %1694 = vmatpush1.msra.mxu0 0.0
      %1695 = vmatprep.subr.mxu0 0.0
      %1696 = vmatpush1.msra.mxu0 0.0
      %1697 = vmatprep.subr.mxu0 0.0
      %1698 = vmatpush1.msra.mxu0 0.0
      %1699 = vmatprep.subr.mxu0 0.0
      %1700 = vmatpush1.msra.mxu0 0.0
      %1701 = vmatprep.subr.mxu0 0.0
      %1702 = vmatpush1.msra.mxu0 0.0
      %1703 = vmatprep.subr.mxu0 0.0
      %1704 = vmatpush1.msra.mxu0 0.0
      %1705 = vmatprep.subr.mxu0 0.0
      %1706 = vmatpush1.msra.mxu0 0.0
      %1707 = vmatprep.subr.mxu0 0.0
      %1708 = vmatpush1.msra.mxu0 0.0
      %1709 = vmatprep.subr.mxu0 0.0
      %1710 = vmatpush1.msra.mxu0 0.0
      %1711 = vmatprep.subr.mxu0 0.0
      %1712 = vmatpush1.msra.mxu0 0.0
      %1713 = vmatprep.subr.mxu0 0.0
      %1714 = vmatpush1.msra.mxu0 0.0
      %1715 = vmatprep.subr.mxu0 0.0
      %1716 = vmatpush1.msra.mxu0 0.0
      %1717 = vmatprep.subr.mxu0 0.0
      %1718 = vmatpush1.msra.mxu0 0.0
      %1719 = vmatprep.subr.mxu0 0.0
      %1720 = vmatpush1.msra.mxu0 0.0
      %1721 = vmatprep.subr.mxu0 0.0
      %1722 = vmatpush1.msra.mxu0 0.0
      %1723 = vmatprep.subr.mxu0 0.0
      %1724 = vmatpush1.msra.mxu0 0.0
      %1725 = vmatprep.subr.mxu0 0.0
      %1726 = vmatpush1.msra.mxu0 0.0
      %1727 = vmatprep.subr.mxu0 0.0
      %1728 = vmatpush1.msra.mxu0 0.0
      %1729 = vmatprep.subr.mxu0 0.0
      %1730 = vmatpush1.msra.mxu0 0.0
      %1731 = vmatprep.subr.mxu0 0.0
      %1732 = vmatpush1.msra.mxu0 0.0
      %1733 = vmatprep.subr.mxu0 0.0
      %1734 = vmatpush1.msra.mxu0 0.0
      %1735 = vmatprep.subr.mxu0 0.0
      %1736 = vmatpush1.msra.mxu0 0.0
      %1737 = vmatprep.subr.mxu0 0.0
      %1738 = vmatpush1.msra.mxu0 0.0
      %1739 = vmatprep.subr.mxu0 0.0
      %1740 = vmatpush1.msra.mxu0 0.0
      %1741 = vmatprep.mubr.f32.mxu0 0.0
      %1742 = vmatmul.mubr.f32.gmra.mrb[0].mxu0 %v1672
      %v1743 = vpop.f32.mrb[0].mxu0
      %v1744 = vadd.f32 0.0, %v1743
      %v1745 = vpop.f32.mrb[0].mxu0
      %1746 = vmatprep.mubr.f32.mxu0 0.0
      %1747 = vmatmul.mubr.f32.gmra.mrb[0].mxu0 %v1675
      %v1748 = vpop.f32.mrb[0].mxu0
      %v1749 = vadd.f32 0.0, %v1748
      %v1750 = vpop.f32.mrb[0].mxu0
      %1751 = vdwg.mxu0
      %1752 = vrot.lane.b32.xlu0 %v835, 112
      %v1753 = vpop.permute.xlu0 %1752
      %1754 = vrot.lane.b32.xlu0 %v838, 112
      %v1755 = vpop.permute.xlu0 %1754
      %1756 = vrot.lane.b32.xlu0 %v835, 80
      %v1757 = vpop.permute.xlu0 %1756
      %1758 = vrot.lane.b32.xlu0 %v838, 80
      %v1759 = vpop.permute.xlu0 %1758
      %v1760 = vsel %vm940, %v1753, 0
      %v1762 = vsel %vm940, %v1755, 0
      %v1764 = vsel %vm940, %v1757, 0
      %v1766 = vsel %vm940, %v1759, 0
      %1768 = vmatprep.subr.mxu0 0.0
      %1769 = vmatpush1.xpose.msra.mxu0 %v1764
      %1770 = vmatprep.subr.mxu0 0.0
      %1771 = vmatpush1.xpose.msra.mxu0 %v1766
      %1772 = vmatprep.subr.mxu0 0.0
      %1773 = vmatpush1.xpose.msra.mxu0 0.0
      %1774 = vmatprep.subr.mxu0 0.0
      %1775 = vmatpush1.xpose.msra.mxu0 0.0
      %1776 = vmatprep.subr.mxu0 0.0
      %1777 = vmatpush1.xpose.msra.mxu0 0.0
      %1778 = vmatprep.subr.mxu0 0.0
      %1779 = vmatpush1.xpose.msra.mxu0 0.0
      %1780 = vmatprep.subr.mxu0 0.0
      %1781 = vmatpush1.xpose.msra.mxu0 0.0
      %1782 = vmatprep.subr.mxu0 0.0
      %1783 = vmatpush1.xpose.msra.mxu0 0.0
      %1784 = vmatprep.subr.mxu0 0.0
      %1785 = vmatpush1.xpose.msra.mxu0 0.0
      %1786 = vmatprep.subr.mxu0 0.0
      %1787 = vmatpush1.xpose.msra.mxu0 0.0
      %1788 = vmatprep.subr.mxu0 0.0
      %1789 = vmatpush1.xpose.msra.mxu0 0.0
      %1790 = vmatprep.subr.mxu0 0.0
      %1791 = vmatpush1.xpose.msra.mxu0 0.0
      %1792 = vmatprep.subr.mxu0 0.0
      %1793 = vmatpush1.xpose.msra.mxu0 0.0
      %1794 = vmatprep.subr.mxu0 0.0
      %1795 = vmatpush1.xpose.msra.mxu0 0.0
      %1796 = vmatprep.subr.mxu0 0.0
      %1797 = vmatpush1.xpose.msra.mxu0 0.0
      %1798 = vmatprep.subr.mxu0 0.0
      %1799 = vmatpush1.xpose.msra.mxu0 0.0
      %1800 = vmatprep.subr.mxu0 0.0
      %1801 = vmatpush1.xpose.msra.mxu0 0.0
      %1802 = vmatprep.subr.mxu0 0.0
      %1803 = vmatpush1.xpose.msra.mxu0 0.0
      %1804 = vmatprep.subr.mxu0 0.0
      %1805 = vmatpush1.xpose.msra.mxu0 0.0
      %1806 = vmatprep.subr.mxu0 0.0
      %1807 = vmatpush1.xpose.msra.mxu0 0.0
      %1808 = vmatprep.subr.mxu0 0.0
      %1809 = vmatpush1.xpose.msra.mxu0 0.0
      %1810 = vmatprep.subr.mxu0 0.0
      %1811 = vmatpush1.xpose.msra.mxu0 0.0
      %1812 = vmatprep.subr.mxu0 0.0
      %1813 = vmatpush1.xpose.msra.mxu0 0.0
      %1814 = vmatprep.subr.mxu0 0.0
      %1815 = vmatpush1.xpose.msra.mxu0 0.0
      %1816 = vmatprep.subr.mxu0 0.0
      %1817 = vmatpush1.xpose.msra.mxu0 0.0
      %1818 = vmatprep.subr.mxu0 0.0
      %1819 = vmatpush1.xpose.msra.mxu0 0.0
      %1820 = vmatprep.subr.mxu0 0.0
      %1821 = vmatpush1.xpose.msra.mxu0 0.0
      %1822 = vmatprep.subr.mxu0 0.0
      %1823 = vmatpush1.xpose.msra.mxu0 0.0
      %1824 = vmatprep.subr.mxu0 0.0
      %1825 = vmatpush1.xpose.msra.mxu0 0.0
      %1826 = vmatprep.subr.mxu0 0.0
      %1827 = vmatpush1.xpose.msra.mxu0 0.0
      %1828 = vmatprep.subr.mxu0 0.0
      %1829 = vmatpush1.xpose.msra.mxu0 0.0
      %1830 = vmatprep.subr.mxu0 0.0
      %1831 = vmatpush1.xpose.msra.mxu0 0.0
      %1832 = vmatprep.mubr.f32.mxu0 0.0
      %1833 = vmatmul.mubr.f32.gmra.mrb[0].mxu0 %v1760
      %v1834 = vpop.f32.mrb[0].mxu0
      %v1835 = vadd.f32 0.0, %v1834
      %v1836 = vpop.f32.mrb[0].mxu0
      %1837 = vmatprep.mubr.f32.mxu0 0.0
      %1838 = vmatmul.mubr.f32.gmra.mrb[0].mxu0 %v1762
      %v1839 = vpop.f32.mrb[0].mxu0
      %v1840 = vadd.f32 0.0, %v1839
      %v1841 = vpop.f32.mrb[0].mxu0
      %1842 = vdwg.mxu0
      %1843 = vrot.lane.b32.xlu0 %v843, 112
      %v1844 = vpop.permute.xlu0 %1843
      %1845 = vrot.lane.b32.xlu0 %v846, 112
      %v1846 = vpop.permute.xlu0 %1845
      %1847 = vrot.lane.b32.xlu0 %v843, 80
      %v1848 = vpop.permute.xlu0 %1847
      %1849 = vrot.lane.b32.xlu0 %v846, 80
      %v1850 = vpop.permute.xlu0 %1849
      %v1851 = vsel %vm940, %v1844, 0
      %v1853 = vsel %vm940, %v1846, 0
      %v1855 = vsel %vm940, %v1848, 0
      %v1857 = vsel %vm940, %v1850, 0
      %1859 = vmatprep.subr.mxu0 0.0
      %1860 = vmatpush1.xpose.msra.mxu0 %v1855
      %1861 = vmatprep.subr.mxu0 0.0
      %1862 = vmatpush1.xpose.msra.mxu0 %v1857
      %1863 = vmatprep.subr.mxu0 0.0
      %1864 = vmatpush1.xpose.msra.mxu0 0.0
      %1865 = vmatprep.subr.mxu0 0.0
      %1866 = vmatpush1.xpose.msra.mxu0 0.0
      %1867 = vmatprep.subr.mxu0 0.0
      %1868 = vmatpush1.xpose.msra.mxu0 0.0
      %1869 = vmatprep.subr.mxu0 0.0
      %1870 = vmatpush1.xpose.msra.mxu0 0.0
      %1871 = vmatprep.subr.mxu0 0.0
      %1872 = vmatpush1.xpose.msra.mxu0 0.0
      %1873 = vmatprep.subr.mxu0 0.0
      %1874 = vmatpush1.xpose.msra.mxu0 0.0
      %1875 = vmatprep.subr.mxu0 0.0
      %1876 = vmatpush1.xpose.msra.mxu0 0.0
      %1877 = vmatprep.subr.mxu0 0.0
      %1878 = vmatpush1.xpose.msra.mxu0 0.0
      %1879 = vmatprep.subr.mxu0 0.0
      %1880 = vmatpush1.xpose.msra.mxu0 0.0
      %1881 = vmatprep.subr.mxu0 0.0
      %1882 = vmatpush1.xpose.msra.mxu0 0.0
      %1883 = vmatprep.subr.mxu0 0.0
      %1884 = vmatpush1.xpose.msra.mxu0 0.0
      %1885 = vmatprep.subr.mxu0 0.0
      %1886 = vmatpush1.xpose.msra.mxu0 0.0
      %1887 = vmatprep.subr.mxu0 0.0
      %1888 = vmatpush1.xpose.msra.mxu0 0.0
      %1889 = vmatprep.subr.mxu0 0.0
      %1890 = vmatpush1.xpose.msra.mxu0 0.0
      %1891 = vmatprep.subr.mxu0 0.0
      %1892 = vmatpush1.xpose.msra.mxu0 0.0
      %1893 = vmatprep.subr.mxu0 0.0
      %1894 = vmatpush1.xpose.msra.mxu0 0.0
      %1895 = vmatprep.subr.mxu0 0.0
      %1896 = vmatpush1.xpose.msra.mxu0 0.0
      %1897 = vmatprep.subr.mxu0 0.0
      %1898 = vmatpush1.xpose.msra.mxu0 0.0
      %1899 = vmatprep.subr.mxu0 0.0
      %1900 = vmatpush1.xpose.msra.mxu0 0.0
      %1901 = vmatprep.subr.mxu0 0.0
      %1902 = vmatpush1.xpose.msra.mxu0 0.0
      %1903 = vmatprep.subr.mxu0 0.0
      %1904 = vmatpush1.xpose.msra.mxu0 0.0
      %1905 = vmatprep.subr.mxu0 0.0
      %1906 = vmatpush1.xpose.msra.mxu0 0.0
      %1907 = vmatprep.subr.mxu0 0.0
      %1908 = vmatpush1.xpose.msra.mxu0 0.0
      %1909 = vmatprep.subr.mxu0 0.0
      %1910 = vmatpush1.xpose.msra.mxu0 0.0
      %1911 = vmatprep.subr.mxu0 0.0
      %1912 = vmatpush1.xpose.msra.mxu0 0.0
      %1913 = vmatprep.subr.mxu0 0.0
      %1914 = vmatpush1.xpose.msra.mxu0 0.0
      %1915 = vmatprep.subr.mxu0 0.0
      %1916 = vmatpush1.xpose.msra.mxu0 0.0
      %1917 = vmatprep.subr.mxu0 0.0
      %1918 = vmatpush1.xpose.msra.mxu0 0.0
      %1919 = vmatprep.subr.mxu0 0.0
      %1920 = vmatpush1.xpose.msra.mxu0 0.0
      %1921 = vmatprep.subr.mxu0 0.0
      %1922 = vmatpush1.xpose.msra.mxu0 0.0
      %1923 = vmatprep.mubr.f32.mxu0 0.0
      %1924 = vmatmul.mubr.f32.gmra.mrb[0].mxu0 %v1851
      %v1925 = vpop.f32.mrb[0].mxu0
      %v1926 = vadd.f32 0.0, %v1925
      %v1927 = vpop.f32.mrb[0].mxu0
      %1928 = vmatprep.mubr.f32.mxu0 0.0
      %1929 = vmatmul.mubr.f32.gmra.mrb[0].mxu0 %v1853
      %v1930 = vpop.f32.mrb[0].mxu0
      %v1931 = vadd.f32 0.0, %v1930
      %v1932 = vpop.f32.mrb[0].mxu0
      %1933 = vdwg.mxu0
      %v1934 = vmul.f32 %v1835, 0.35355338
      %v1935 = vmul.f32 %v1840, 0.35355338
      %v1936 = vmul.f32 %v1926, 0.35355338
      %v1937 = vmul.f32 %v1931, 0.35355338
      %v1938 = vadd.f32 %v1934, %v1122
      %v1939 = vadd.f32 %v1935, %v1122
      %v1940 = vadd.f32 %v1936, %v1126
      %v1941 = vadd.f32 %v1937, %v1126
      %v1942 = vsel %vm1133, %v1938, -inf
      %1943 = vmax.xlane.f32.xlu0 %v1942
      %v1944 = vpop.xlane.xlu0 %1943
      %v1945 = vsel %vm1133, %v1939, -inf
      %1946 = vmax.xlane.f32.xlu0 %v1945
      %v1947 = vpop.xlane.xlu0 %1946
      %v1948 = vsel %vm1133, %v1940, -inf
      %1949 = vmax.xlane.f32.xlu0 %v1948
      %v1950 = vpop.xlane.xlu0 %1949
      %v1951 = vsel %vm1133, %v1941, -inf
      %1952 = vmax.xlane.f32.xlu0 %v1951
      %v1953 = vpop.xlane.xlu0 %1952
      %v1954 = vsub.f32 %v1938, %v1944
      %v1955 = vsub.f32 %v1939, %v1947
      %v1956 = vsub.f32 %v1940, %v1950
      %v1957 = vsub.f32 %v1941, %v1953
      %v1958 = vmul.f32 %v1954, 1.442695
      %v1959 = vpow.pop %v1958
      %v1960 = vmul.f32 %v1955, 1.442695
      %v1961 = vpow.pop %v1960
      %v1962 = vmul.f32 %v1956, 1.442695
      %v1963 = vpow.pop %v1962
      %v1964 = vmul.f32 %v1957, 1.442695
      %v1965 = vpow.pop %v1964
      %v1966 = vsel %vm1133, %v1959, 0.0
      %1967 = vadd.xlane.f32.xlu0 %v1966
      %v1968 = vpop.xlane.xlu0 %1967
      %v1969 = vsel %vm1133, %v1961, 0.0
      %1970 = vadd.xlane.f32.xlu0 %v1969
      %v1971 = vpop.xlane.xlu0 %1970
      %v1972 = vsel %vm1133, %v1963, 0.0
      %1973 = vadd.xlane.f32.xlu0 %v1972
      %v1974 = vpop.xlane.xlu0 %1973
      %v1975 = vsel %vm1133, %v1965, 0.0
      %1976 = vadd.xlane.f32.xlu0 %v1975
      %v1977 = vpop.xlane.xlu0 %1976
      %v1978 = vrcp.pop %v1968
      %v1979 = vmul.f32 %v1959, %v1978
      %v1980 = vrcp.pop %v1971
      %v1981 = vmul.f32 %v1961, %v1980
      %v1982 = vrcp.pop %v1974
      %v1983 = vmul.f32 %v1963, %v1982
      %v1984 = vrcp.pop %v1977
      %v1985 = vmul.f32 %v1965, %v1984
      %1986 = vrot.lane.b32.xlu0 %v915, 112
      %v1987 = vpop.permute.xlu0 %1986
      %1988 = vrot.lane.b32.xlu0 %v918, 112
      %v1989 = vpop.permute.xlu0 %1988
      %v1993 = vsel %vm1133, %v1979, 0
      %v1996 = vsel %vm1133, %v1981, 0
      %1998 = vmatprep.subr.mxu0 0.0
      %1999 = vmatpush1.msra.mxu0 %v1987
      %2000 = vmatprep.subr.mxu0 0.0
      %2001 = vmatpush1.msra.mxu0 %v1989
      %2002 = vmatprep.subr.mxu0 0.0
      %2003 = vmatpush1.msra.mxu0 0.0
      %2004 = vmatprep.subr.mxu0 0.0
      %2005 = vmatpush1.msra.mxu0 0.0
      %2006 = vmatprep.subr.mxu0 0.0
      %2007 = vmatpush1.msra.mxu0 0.0
      %2008 = vmatprep.subr.mxu0 0.0
      %2009 = vmatpush1.msra.mxu0 0.0
      %2010 = vmatprep.subr.mxu0 0.0
      %2011 = vmatpush1.msra.mxu0 0.0
      %2012 = vmatprep.subr.mxu0 0.0
      %2013 = vmatpush1.msra.mxu0 0.0
      %2014 = vmatprep.subr.mxu0 0.0
      %2015 = vmatpush1.msra.mxu0 0.0
      %2016 = vmatprep.subr.mxu0 0.0
      %2017 = vmatpush1.msra.mxu0 0.0
      %2018 = vmatprep.subr.mxu0 0.0
      %2019 = vmatpush1.msra.mxu0 0.0
      %2020 = vmatprep.subr.mxu0 0.0
      %2021 = vmatpush1.msra.mxu0 0.0
      %2022 = vmatprep.subr.mxu0 0.0
      %2023 = vmatpush1.msra.mxu0 0.0
      %2024 = vmatprep.subr.mxu0 0.0
      %2025 = vmatpush1.msra.mxu0 0.0
      %2026 = vmatprep.subr.mxu0 0.0
      %2027 = vmatpush1.msra.mxu0 0.0
      %2028 = vmatprep.subr.mxu0 0.0
      %2029 = vmatpush1.msra.mxu0 0.0
      %2030 = vmatprep.subr.mxu0 0.0
      %2031 = vmatpush1.msra.mxu0 0.0
      %2032 = vmatprep.subr.mxu0 0.0
      %2033 = vmatpush1.msra.mxu0 0.0
      %2034 = vmatprep.subr.mxu0 0.0
      %2035 = vmatpush1.msra.mxu0 0.0
      %2036 = vmatprep.subr.mxu0 0.0
      %2037 = vmatpush1.msra.mxu0 0.0
      %2038 = vmatprep.subr.mxu0 0.0
      %2039 = vmatpush1.msra.mxu0 0.0
      %2040 = vmatprep.subr.mxu0 0.0
      %2041 = vmatpush1.msra.mxu0 0.0
      %2042 = vmatprep.subr.mxu0 0.0
      %2043 = vmatpush1.msra.mxu0 0.0
      %2044 = vmatprep.subr.mxu0 0.0
      %2045 = vmatpush1.msra.mxu0 0.0
      %2046 = vmatprep.subr.mxu0 0.0
      %2047 = vmatpush1.msra.mxu0 0.0
      %2048 = vmatprep.subr.mxu0 0.0
      %2049 = vmatpush1.msra.mxu0 0.0
      %2050 = vmatprep.subr.mxu0 0.0
      %2051 = vmatpush1.msra.mxu0 0.0
      %2052 = vmatprep.subr.mxu0 0.0
      %2053 = vmatpush1.msra.mxu0 0.0
      %2054 = vmatprep.subr.mxu0 0.0
      %2055 = vmatpush1.msra.mxu0 0.0
      %2056 = vmatprep.subr.mxu0 0.0
      %2057 = vmatpush1.msra.mxu0 0.0
      %2058 = vmatprep.subr.mxu0 0.0
      %2059 = vmatpush1.msra.mxu0 0.0
      %2060 = vmatprep.subr.mxu0 0.0
      %2061 = vmatpush1.msra.mxu0 0.0
      %2062 = vmatprep.mubr.f32.mxu0 0.0
      %2063 = vmatmul.mubr.f32.gmra.mrb[0].mxu0 %v1993
      %v2064 = vpop.f32.mrb[0].mxu0
      %v2065 = vadd.f32 0.0, %v2064
      %v2066 = vpop.f32.mrb[0].mxu0
      %2067 = vmatprep.mubr.f32.mxu0 0.0
      %2068 = vmatmul.mubr.f32.gmra.mrb[0].mxu0 %v1996
      %v2069 = vpop.f32.mrb[0].mxu0
      %v2070 = vadd.f32 0.0, %v2069
      %v2071 = vpop.f32.mrb[0].mxu0
      %2072 = vdwg.mxu0
      %2073 = vrot.lane.b32.xlu0 %v923, 112
      %v2074 = vpop.permute.xlu0 %2073
      %2075 = vrot.lane.b32.xlu0 %v926, 112
      %v2076 = vpop.permute.xlu0 %2075
      %v2080 = vsel %vm1133, %v1983, 0
      %v2083 = vsel %vm1133, %v1985, 0
      %2085 = vmatprep.subr.mxu0 0.0
      %2086 = vmatpush1.msra.mxu0 %v2074
      %2087 = vmatprep.subr.mxu0 0.0
      %2088 = vmatpush1.msra.mxu0 %v2076
      %2089 = vmatprep.subr.mxu0 0.0
      %2090 = vmatpush1.msra.mxu0 0.0
      %2091 = vmatprep.subr.mxu0 0.0
      %2092 = vmatpush1.msra.mxu0 0.0
      %2093 = vmatprep.subr.mxu0 0.0
      %2094 = vmatpush1.msra.mxu0 0.0
      %2095 = vmatprep.subr.mxu0 0.0
      %2096 = vmatpush1.msra.mxu0 0.0
      %2097 = vmatprep.subr.mxu0 0.0
      %2098 = vmatpush1.msra.mxu0 0.0
      %2099 = vmatprep.subr.mxu0 0.0
      %2100 = vmatpush1.msra.mxu0 0.0
      %2101 = vmatprep.subr.mxu0 0.0
      %2102 = vmatpush1.msra.mxu0 0.0
      %2103 = vmatprep.subr.mxu0 0.0
      %2104 = vmatpush1.msra.mxu0 0.0
      %2105 = vmatprep.subr.mxu0 0.0
      %2106 = vmatpush1.msra.mxu0 0.0
      %2107 = vmatprep.subr.mxu0 0.0
      %2108 = vmatpush1.msra.mxu0 0.0
      %2109 = vmatprep.subr.mxu0 0.0
      %2110 = vmatpush1.msra.mxu0 0.0
      %2111 = vmatprep.subr.mxu0 0.0
      %2112 = vmatpush1.msra.mxu0 0.0
      %2113 = vmatprep.subr.mxu0 0.0
      %2114 = vmatpush1.msra.mxu0 0.0
      %2115 = vmatprep.subr.mxu0 0.0
      %2116 = vmatpush1.msra.mxu0 0.0
      %2117 = vmatprep.subr.mxu0 0.0
      %2118 = vmatpush1.msra.mxu0 0.0
      %2119 = vmatprep.subr.mxu0 0.0
      %2120 = vmatpush1.msra.mxu0 0.0
      %2121 = vmatprep.subr.mxu0 0.0
      %2122 = vmatpush1.msra.mxu0 0.0
      %2123 = vmatprep.subr.mxu0 0.0
      %2124 = vmatpush1.msra.mxu0 0.0
      %2125 = vmatprep.subr.mxu0 0.0
      %2126 = vmatpush1.msra.mxu0 0.0
      %2127 = vmatprep.subr.mxu0 0.0
      %2128 = vmatpush1.msra.mxu0 0.0
      %2129 = vmatprep.subr.mxu0 0.0
      %2130 = vmatpush1.msra.mxu0 0.0
      %2131 = vmatprep.subr.mxu0 0.0
      %2132 = vmatpush1.msra.mxu0 0.0
      %2133 = vmatprep.subr.mxu0 0.0
      %2134 = vmatpush1.msra.mxu0 0.0
      %2135 = vmatprep.subr.mxu0 0.0
      %2136 = vmatpush1.msra.mxu0 0.0
      %2137 = vmatprep.subr.mxu0 0.0
      %2138 = vmatpush1.msra.mxu0 0.0
      %2139 = vmatprep.subr.mxu0 0.0
      %2140 = vmatpush1.msra.mxu0 0.0
      %2141 = vmatprep.subr.mxu0 0.0
      %2142 = vmatpush1.msra.mxu0 0.0
      %2143 = vmatprep.subr.mxu0 0.0
      %2144 = vmatpush1.msra.mxu0 0.0
      %2145 = vmatprep.subr.mxu0 0.0
      %2146 = vmatpush1.msra.mxu0 0.0
      %2147 = vmatprep.subr.mxu0 0.0
      %2148 = vmatpush1.msra.mxu0 0.0
      %2149 = vmatprep.mubr.f32.mxu0 0.0
      %2150 = vmatmul.mubr.f32.gmra.mrb[0].mxu0 %v2080
      %v2151 = vpop.f32.mrb[0].mxu0
      %v2152 = vadd.f32 0.0, %v2151
      %v2153 = vpop.f32.mrb[0].mxu0
      %2154 = vmatprep.mubr.f32.mxu0 0.0
      %2155 = vmatmul.mubr.f32.gmra.mrb[0].mxu0 %v2083
      %v2156 = vpop.f32.mrb[0].mxu0
      %v2157 = vadd.f32 0.0, %v2156
      %v2158 = vpop.f32.mrb[0].mxu0
      %2159 = vdwg.mxu0
      %2160 = vrot.lane.b32.xlu0 %v835, 104
      %v2161 = vpop.permute.xlu0 %2160
      %2162 = vrot.lane.b32.xlu0 %v838, 104
      %v2163 = vpop.permute.xlu0 %2162
      %2164 = vrot.lane.b32.xlu0 %v835, 72
      %v2165 = vpop.permute.xlu0 %2164
      %2166 = vrot.lane.b32.xlu0 %v838, 72
      %v2167 = vpop.permute.xlu0 %2166
      %v2168 = vsel %vm940, %v2161, 0
      %v2170 = vsel %vm940, %v2163, 0
      %v2172 = vsel %vm940, %v2165, 0
      %v2174 = vsel %vm940, %v2167, 0
      %2176 = vmatprep.subr.mxu0 0.0
      %2177 = vmatpush1.xpose.msra.mxu0 %v2172
      %2178 = vmatprep.subr.mxu0 0.0
      %2179 = vmatpush1.xpose.msra.mxu0 %v2174
      %2180 = vmatprep.subr.mxu0 0.0
      %2181 = vmatpush1.xpose.msra.mxu0 0.0
      %2182 = vmatprep.subr.mxu0 0.0
      %2183 = vmatpush1.xpose.msra.mxu0 0.0
      %2184 = vmatprep.subr.mxu0 0.0
      %2185 = vmatpush1.xpose.msra.mxu0 0.0
      %2186 = vmatprep.subr.mxu0 0.0
      %2187 = vmatpush1.xpose.msra.mxu0 0.0
      %2188 = vmatprep.subr.mxu0 0.0
      %2189 = vmatpush1.xpose.msra.mxu0 0.0
      %2190 = vmatprep.subr.mxu0 0.0
      %2191 = vmatpush1.xpose.msra.mxu0 0.0
      %2192 = vmatprep.subr.mxu0 0.0
      %2193 = vmatpush1.xpose.msra.mxu0 0.0
      %2194 = vmatprep.subr.mxu0 0.0
      %2195 = vmatpush1.xpose.msra.mxu0 0.0
      %2196 = vmatprep.subr.mxu0 0.0
      %2197 = vmatpush1.xpose.msra.mxu0 0.0
      %2198 = vmatprep.subr.mxu0 0.0
      %2199 = vmatpush1.xpose.msra.mxu0 0.0
      %2200 = vmatprep.subr.mxu0 0.0
      %2201 = vmatpush1.xpose.msra.mxu0 0.0
      %2202 = vmatprep.subr.mxu0 0.0
      %2203 = vmatpush1.xpose.msra.mxu0 0.0
      %2204 = vmatprep.subr.mxu0 0.0
      %2205 = vmatpush1.xpose.msra.mxu0 0.0
      %2206 = vmatprep.subr.mxu0 0.0
      %2207 = vmatpush1.xpose.msra.mxu0 0.0
      %2208 = vmatprep.subr.mxu0 0.0
      %2209 = vmatpush1.xpose.msra.mxu0 0.0
      %2210 = vmatprep.subr.mxu0 0.0
      %2211 = vmatpush1.xpose.msra.mxu0 0.0
      %2212 = vmatprep.subr.mxu0 0.0
      %2213 = vmatpush1.xpose.msra.mxu0 0.0
      %2214 = vmatprep.subr.mxu0 0.0
      %2215 = vmatpush1.xpose.msra.mxu0 0.0
      %2216 = vmatprep.subr.mxu0 0.0
      %2217 = vmatpush1.xpose.msra.mxu0 0.0
      %2218 = vmatprep.subr.mxu0 0.0
      %2219 = vmatpush1.xpose.msra.mxu0 0.0
      %2220 = vmatprep.subr.mxu0 0.0
      %2221 = vmatpush1.xpose.msra.mxu0 0.0
      %2222 = vmatprep.subr.mxu0 0.0
      %2223 = vmatpush1.xpose.msra.mxu0 0.0
      %2224 = vmatprep.subr.mxu0 0.0
      %2225 = vmatpush1.xpose.msra.mxu0 0.0
      %2226 = vmatprep.subr.mxu0 0.0
      %2227 = vmatpush1.xpose.msra.mxu0 0.0
      %2228 = vmatprep.subr.mxu0 0.0
      %2229 = vmatpush1.xpose.msra.mxu0 0.0
      %2230 = vmatprep.subr.mxu0 0.0
      %2231 = vmatpush1.xpose.msra.mxu0 0.0
      %2232 = vmatprep.subr.mxu0 0.0
      %2233 = vmatpush1.xpose.msra.mxu0 0.0
      %2234 = vmatprep.subr.mxu0 0.0
      %2235 = vmatpush1.xpose.msra.mxu0 0.0
      %2236 = vmatprep.subr.mxu0 0.0
      %2237 = vmatpush1.xpose.msra.mxu0 0.0
      %2238 = vmatprep.subr.mxu0 0.0
      %2239 = vmatpush1.xpose.msra.mxu0 0.0
      %2240 = vmatprep.mubr.f32.mxu0 0.0
      %2241 = vmatmul.mubr.f32.gmra.mrb[0].mxu0 %v2168
      %v2242 = vpop.f32.mrb[0].mxu0
      %v2243 = vadd.f32 0.0, %v2242
      %v2244 = vpop.f32.mrb[0].mxu0
      %2245 = vmatprep.mubr.f32.mxu0 0.0
      %2246 = vmatmul.mubr.f32.gmra.mrb[0].mxu0 %v2170
      %v2247 = vpop.f32.mrb[0].mxu0
      %v2248 = vadd.f32 0.0, %v2247
      %v2249 = vpop.f32.mrb[0].mxu0
      %2250 = vdwg.mxu0
      %2251 = vrot.lane.b32.xlu0 %v843, 104
      %v2252 = vpop.permute.xlu0 %2251
      %2253 = vrot.lane.b32.xlu0 %v846, 104
      %v2254 = vpop.permute.xlu0 %2253
      %2255 = vrot.lane.b32.xlu0 %v843, 72
      %v2256 = vpop.permute.xlu0 %2255
      %2257 = vrot.lane.b32.xlu0 %v846, 72
      %v2258 = vpop.permute.xlu0 %2257
      %v2259 = vsel %vm940, %v2252, 0
      %v2261 = vsel %vm940, %v2254, 0
      %v2263 = vsel %vm940, %v2256, 0
      %v2265 = vsel %vm940, %v2258, 0
      %2267 = vmatprep.subr.mxu0 0.0
      %2268 = vmatpush1.xpose.msra.mxu0 %v2263
      %2269 = vmatprep.subr.mxu0 0.0
      %2270 = vmatpush1.xpose.msra.mxu0 %v2265
      %2271 = vmatprep.subr.mxu0 0.0
      %2272 = vmatpush1.xpose.msra.mxu0 0.0
      %2273 = vmatprep.subr.mxu0 0.0
      %2274 = vmatpush1.xpose.msra.mxu0 0.0
      %2275 = vmatprep.subr.mxu0 0.0
      %2276 = vmatpush1.xpose.msra.mxu0 0.0
      %2277 = vmatprep.subr.mxu0 0.0
      %2278 = vmatpush1.xpose.msra.mxu0 0.0
      %2279 = vmatprep.subr.mxu0 0.0
      %2280 = vmatpush1.xpose.msra.mxu0 0.0
      %2281 = vmatprep.subr.mxu0 0.0
      %2282 = vmatpush1.xpose.msra.mxu0 0.0
      %2283 = vmatprep.subr.mxu0 0.0
      %2284 = vmatpush1.xpose.msra.mxu0 0.0
      %2285 = vmatprep.subr.mxu0 0.0
      %2286 = vmatpush1.xpose.msra.mxu0 0.0
      %2287 = vmatprep.subr.mxu0 0.0
      %2288 = vmatpush1.xpose.msra.mxu0 0.0
      %2289 = vmatprep.subr.mxu0 0.0
      %2290 = vmatpush1.xpose.msra.mxu0 0.0
      %2291 = vmatprep.subr.mxu0 0.0
      %2292 = vmatpush1.xpose.msra.mxu0 0.0
      %2293 = vmatprep.subr.mxu0 0.0
      %2294 = vmatpush1.xpose.msra.mxu0 0.0
      %2295 = vmatprep.subr.mxu0 0.0
      %2296 = vmatpush1.xpose.msra.mxu0 0.0
      %2297 = vmatprep.subr.mxu0 0.0
      %2298 = vmatpush1.xpose.msra.mxu0 0.0
      %2299 = vmatprep.subr.mxu0 0.0
      %2300 = vmatpush1.xpose.msra.mxu0 0.0
      %2301 = vmatprep.subr.mxu0 0.0
      %2302 = vmatpush1.xpose.msra.mxu0 0.0
      %2303 = vmatprep.subr.mxu0 0.0
      %2304 = vmatpush1.xpose.msra.mxu0 0.0
      %2305 = vmatprep.subr.mxu0 0.0
      %2306 = vmatpush1.xpose.msra.mxu0 0.0
      %2307 = vmatprep.subr.mxu0 0.0
      %2308 = vmatpush1.xpose.msra.mxu0 0.0
      %2309 = vmatprep.subr.mxu0 0.0
      %2310 = vmatpush1.xpose.msra.mxu0 0.0
      %2311 = vmatprep.subr.mxu0 0.0
      %2312 = vmatpush1.xpose.msra.mxu0 0.0
      %2313 = vmatprep.subr.mxu0 0.0
      %2314 = vmatpush1.xpose.msra.mxu0 0.0
      %2315 = vmatprep.subr.mxu0 0.0
      %2316 = vmatpush1.xpose.msra.mxu0 0.0
      %2317 = vmatprep.subr.mxu0 0.0
      %2318 = vmatpush1.xpose.msra.mxu0 0.0
      %2319 = vmatprep.subr.mxu0 0.0
      %2320 = vmatpush1.xpose.msra.mxu0 0.0
      %2321 = vmatprep.subr.mxu0 0.0
      %2322 = vmatpush1.xpose.msra.mxu0 0.0
      %2323 = vmatprep.subr.mxu0 0.0
      %2324 = vmatpush1.xpose.msra.mxu0 0.0
      %2325 = vmatprep.subr.mxu0 0.0
      %2326 = vmatpush1.xpose.msra.mxu0 0.0
      %2327 = vmatprep.subr.mxu0 0.0
      %2328 = vmatpush1.xpose.msra.mxu0 0.0
      %2329 = vmatprep.subr.mxu0 0.0
      %2330 = vmatpush1.xpose.msra.mxu0 0.0
      %2331 = vmatprep.mubr.f32.mxu0 0.0
      %2332 = vmatmul.mubr.f32.gmra.mrb[0].mxu0 %v2259
      %v2333 = vpop.f32.mrb[0].mxu0
      %v2334 = vadd.f32 0.0, %v2333
      %v2335 = vpop.f32.mrb[0].mxu0
      %2336 = vmatprep.mubr.f32.mxu0 0.0
      %2337 = vmatmul.mubr.f32.gmra.mrb[0].mxu0 %v2261
      %v2338 = vpop.f32.mrb[0].mxu0
      %v2339 = vadd.f32 0.0, %v2338
      %v2340 = vpop.f32.mrb[0].mxu0
      %2341 = vdwg.mxu0
      %v2342 = vmul.f32 %v2243, 0.35355338
      %v2343 = vmul.f32 %v2248, 0.35355338
      %v2344 = vmul.f32 %v2334, 0.35355338
      %v2345 = vmul.f32 %v2339, 0.35355338
      %v2346 = vadd.f32 %v2342, %v1122
      %v2347 = vadd.f32 %v2343, %v1122
      %v2348 = vadd.f32 %v2344, %v1126
      %v2349 = vadd.f32 %v2345, %v1126
      %v2350 = vsel %vm1133, %v2346, -inf
      %2351 = vmax.xlane.f32.xlu0 %v2350
      %v2352 = vpop.xlane.xlu0 %2351
      %v2353 = vsel %vm1133, %v2347, -inf
      %2354 = vmax.xlane.f32.xlu0 %v2353
      %v2355 = vpop.xlane.xlu0 %2354
      %v2356 = vsel %vm1133, %v2348, -inf
      %2357 = vmax.xlane.f32.xlu0 %v2356
      %v2358 = vpop.xlane.xlu0 %2357
      %v2359 = vsel %vm1133, %v2349, -inf
      %2360 = vmax.xlane.f32.xlu0 %v2359
      %v2361 = vpop.xlane.xlu0 %2360
      %v2362 = vsub.f32 %v2346, %v2352
      %v2363 = vsub.f32 %v2347, %v2355
      %v2364 = vsub.f32 %v2348, %v2358
      %v2365 = vsub.f32 %v2349, %v2361
      %v2366 = vmul.f32 %v2362, 1.442695
      %v2367 = vpow.pop %v2366
      %v2368 = vmul.f32 %v2363, 1.442695
      %v2369 = vpow.pop %v2368
      %v2370 = vmul.f32 %v2364, 1.442695
      %v2371 = vpow.pop %v2370
      %v2372 = vmul.f32 %v2365, 1.442695
      %v2373 = vpow.pop %v2372
      %v2374 = vsel %vm1133, %v2367, 0.0
      %2375 = vadd.xlane.f32.xlu0 %v2374
      %v2376 = vpop.xlane.xlu0 %2375
      %v2377 = vsel %vm1133, %v2369, 0.0
      %2378 = vadd.xlane.f32.xlu0 %v2377
      %v2379 = vpop.xlane.xlu0 %2378
      %v2380 = vsel %vm1133, %v2371, 0.0
      %2381 = vadd.xlane.f32.xlu0 %v2380
      %v2382 = vpop.xlane.xlu0 %2381
      %v2383 = vsel %vm1133, %v2373, 0.0
      %2384 = vadd.xlane.f32.xlu0 %v2383
      %v2385 = vpop.xlane.xlu0 %2384
      %v2386 = vrcp.pop %v2376
      %v2387 = vmul.f32 %v2367, %v2386
      %v2388 = vrcp.pop %v2379
      %v2389 = vmul.f32 %v2369, %v2388
      %v2390 = vrcp.pop %v2382
      %v2391 = vmul.f32 %v2371, %v2390
      %v2392 = vrcp.pop %v2385
      %v2393 = vmul.f32 %v2373, %v2392
      %2394 = vrot.lane.b32.xlu0 %v915, 104
      %v2395 = vpop.permute.xlu0 %2394
      %2396 = vrot.lane.b32.xlu0 %v918, 104
      %v2397 = vpop.permute.xlu0 %2396
      %v2401 = vsel %vm1133, %v2387, 0
      %v2404 = vsel %vm1133, %v2389, 0
      %2406 = vmatprep.subr.mxu0 0.0
      %2407 = vmatpush1.msra.mxu0 %v2395
      %2408 = vmatprep.subr.mxu0 0.0
      %2409 = vmatpush1.msra.mxu0 %v2397
      %2410 = vmatprep.subr.mxu0 0.0
      %2411 = vmatpush1.msra.mxu0 0.0
      %2412 = vmatprep.subr.mxu0 0.0
      %2413 = vmatpush1.msra.mxu0 0.0
      %2414 = vmatprep.subr.mxu0 0.0
      %2415 = vmatpush1.msra.mxu0 0.0
      %2416 = vmatprep.subr.mxu0 0.0
      %2417 = vmatpush1.msra.mxu0 0.0
      %2418 = vmatprep.subr.mxu0 0.0
      %2419 = vmatpush1.msra.mxu0 0.0
      %2420 = vmatprep.subr.mxu0 0.0
      %2421 = vmatpush1.msra.mxu0 0.0
      %2422 = vmatprep.subr.mxu0 0.0
      %2423 = vmatpush1.msra.mxu0 0.0
      %2424 = vmatprep.subr.mxu0 0.0
      %2425 = vmatpush1.msra.mxu0 0.0
      %2426 = vmatprep.subr.mxu0 0.0
      %2427 = vmatpush1.msra.mxu0 0.0
      %2428 = vmatprep.subr.mxu0 0.0
      %2429 = vmatpush1.msra.mxu0 0.0
      %2430 = vmatprep.subr.mxu0 0.0
      %2431 = vmatpush1.msra.mxu0 0.0
      %2432 = vmatprep.subr.mxu0 0.0
      %2433 = vmatpush1.msra.mxu0 0.0
      %2434 = vmatprep.subr.mxu0 0.0
      %2435 = vmatpush1.msra.mxu0 0.0
      %2436 = vmatprep.subr.mxu0 0.0
      %2437 = vmatpush1.msra.mxu0 0.0
      %2438 = vmatprep.subr.mxu0 0.0
      %2439 = vmatpush1.msra.mxu0 0.0
      %2440 = vmatprep.subr.mxu0 0.0
      %2441 = vmatpush1.msra.mxu0 0.0
      %2442 = vmatprep.subr.mxu0 0.0
      %2443 = vmatpush1.msra.mxu0 0.0
      %2444 = vmatprep.subr.mxu0 0.0
      %2445 = vmatpush1.msra.mxu0 0.0
      %2446 = vmatprep.subr.mxu0 0.0
      %2447 = vmatpush1.msra.mxu0 0.0
      %2448 = vmatprep.subr.mxu0 0.0
      %2449 = vmatpush1.msra.mxu0 0.0
      %2450 = vmatprep.subr.mxu0 0.0
      %2451 = vmatpush1.msra.mxu0 0.0
      %2452 = vmatprep.subr.mxu0 0.0
      %2453 = vmatpush1.msra.mxu0 0.0
      %2454 = vmatprep.subr.mxu0 0.0
      %2455 = vmatpush1.msra.mxu0 0.0
      %2456 = vmatprep.subr.mxu0 0.0
      %2457 = vmatpush1.msra.mxu0 0.0
      %2458 = vmatprep.subr.mxu0 0.0
      %2459 = vmatpush1.msra.mxu0 0.0
      %2460 = vmatprep.subr.mxu0 0.0
      %2461 = vmatpush1.msra.mxu0 0.0
      %2462 = vmatprep.subr.mxu0 0.0
      %2463 = vmatpush1.msra.mxu0 0.0
      %2464 = vmatprep.subr.mxu0 0.0
      %2465 = vmatpush1.msra.mxu0 0.0
      %2466 = vmatprep.subr.mxu0 0.0
      %2467 = vmatpush1.msra.mxu0 0.0
      %2468 = vmatprep.subr.mxu0 0.0
      %2469 = vmatpush1.msra.mxu0 0.0
      %2470 = vmatprep.mubr.f32.mxu0 0.0
      %2471 = vmatmul.mubr.f32.gmra.mrb[0].mxu0 %v2401
      %v2472 = vpop.f32.mrb[0].mxu0
      %v2473 = vadd.f32 0.0, %v2472
      %v2474 = vpop.f32.mrb[0].mxu0
      %2475 = vmatprep.mubr.f32.mxu0 0.0
      %2476 = vmatmul.mubr.f32.gmra.mrb[0].mxu0 %v2404
      %v2477 = vpop.f32.mrb[0].mxu0
      %v2478 = vadd.f32 0.0, %v2477
      %v2479 = vpop.f32.mrb[0].mxu0
      %2480 = vdwg.mxu0
      %2481 = vrot.lane.b32.xlu0 %v923, 104
      %v2482 = vpop.permute.xlu0 %2481
      %2483 = vrot.lane.b32.xlu0 %v926, 104
      %v2484 = vpop.permute.xlu0 %2483
      %v2488 = vsel %vm1133, %v2391, 0
      %v2491 = vsel %vm1133, %v2393, 0
      %2493 = vmatprep.subr.mxu0 0.0
      %2494 = vmatpush1.msra.mxu0 %v2482
      %2495 = vmatprep.subr.mxu0 0.0
      %2496 = vmatpush1.msra.mxu0 %v2484
      %2497 = vmatprep.subr.mxu0 0.0
      %2498 = vmatpush1.msra.mxu0 0.0
      %2499 = vmatprep.subr.mxu0 0.0
      %2500 = vmatpush1.msra.mxu0 0.0
      %2501 = vmatprep.subr.mxu0 0.0
      %2502 = vmatpush1.msra.mxu0 0.0
      %2503 = vmatprep.subr.mxu0 0.0
      %2504 = vmatpush1.msra.mxu0 0.0
      %2505 = vmatprep.subr.mxu0 0.0
      %2506 = vmatpush1.msra.mxu0 0.0
      %2507 = vmatprep.subr.mxu0 0.0
      %2508 = vmatpush1.msra.mxu0 0.0
      %2509 = vmatprep.subr.mxu0 0.0
      %2510 = vmatpush1.msra.mxu0 0.0
      %2511 = vmatprep.subr.mxu0 0.0
      %2512 = vmatpush1.msra.mxu0 0.0
      %2513 = vmatprep.subr.mxu0 0.0
      %2514 = vmatpush1.msra.mxu0 0.0
      %2515 = vmatprep.subr.mxu0 0.0
      %2516 = vmatpush1.msra.mxu0 0.0
      %2517 = vmatprep.subr.mxu0 0.0
      %2518 = vmatpush1.msra.mxu0 0.0
      %2519 = vmatprep.subr.mxu0 0.0
      %2520 = vmatpush1.msra.mxu0 0.0
      %2521 = vmatprep.subr.mxu0 0.0
      %2522 = vmatpush1.msra.mxu0 0.0
      %2523 = vmatprep.subr.mxu0 0.0
      %2524 = vmatpush1.msra.mxu0 0.0
      %2525 = vmatprep.subr.mxu0 0.0
      %2526 = vmatpush1.msra.mxu0 0.0
      %2527 = vmatprep.subr.mxu0 0.0
      %2528 = vmatpush1.msra.mxu0 0.0
      %2529 = vmatprep.subr.mxu0 0.0
      %2530 = vmatpush1.msra.mxu0 0.0
      %2531 = vmatprep.subr.mxu0 0.0
      %2532 = vmatpush1.msra.mxu0 0.0
      %2533 = vmatprep.subr.mxu0 0.0
      %2534 = vmatpush1.msra.mxu0 0.0
      %2535 = vmatprep.subr.mxu0 0.0
      %2536 = vmatpush1.msra.mxu0 0.0
      %2537 = vmatprep.subr.mxu0 0.0
      %2538 = vmatpush1.msra.mxu0 0.0
      %2539 = vmatprep.subr.mxu0 0.0
      %2540 = vmatpush1.msra.mxu0 0.0
      %2541 = vmatprep.subr.mxu0 0.0
      %2542 = vmatpush1.msra.mxu0 0.0
      %2543 = vmatprep.subr.mxu0 0.0
      %2544 = vmatpush1.msra.mxu0 0.0
      %2545 = vmatprep.subr.mxu0 0.0
      %2546 = vmatpush1.msra.mxu0 0.0
      %2547 = vmatprep.subr.mxu0 0.0
      %2548 = vmatpush1.msra.mxu0 0.0
      %2549 = vmatprep.subr.mxu0 0.0
      %2550 = vmatpush1.msra.mxu0 0.0
      %2551 = vmatprep.subr.mxu0 0.0
      %2552 = vmatpush1.msra.mxu0 0.0
      %2553 = vmatprep.subr.mxu0 0.0
      %2554 = vmatpush1.msra.mxu0 0.0
      %2555 = vmatprep.subr.mxu0 0.0
      %2556 = vmatpush1.msra.mxu0 0.0
      %2557 = vmatprep.mubr.f32.mxu0 0.0
      %2558 = vmatmul.mubr.f32.gmra.mrb[0].mxu0 %v2488
      %v2559 = vpop.f32.mrb[0].mxu0
      %v2560 = vadd.f32 0.0, %v2559
      %v2561 = vpop.f32.mrb[0].mxu0
      %2562 = vmatprep.mubr.f32.mxu0 0.0
      %2563 = vmatmul.mubr.f32.gmra.mrb[0].mxu0 %v2491
      %v2564 = vpop.f32.mrb[0].mxu0
      %v2565 = vadd.f32 0.0, %v2564
      %v2566 = vpop.f32.mrb[0].mxu0
      %2567 = vdwg.mxu0
      %2572 = vrot.lane.b32.xlu0 %v1655, 8
      %v2573 = vpop.permute.xlu0 %2572
      %2574 = vrot.lane.b32.xlu0 %v1660, 8
      %v2575 = vpop.permute.xlu0 %2574
      %2576 = vrot.lane.b32.xlu0 %v1744, 8
      %v2577 = vpop.permute.xlu0 %2576
      %2578 = vrot.lane.b32.xlu0 %v1749, 8
      %v2579 = vpop.permute.xlu0 %2578
      %2588 = vrot.lane.b32.xlu0 %v2065, 16
      %v2589 = vpop.permute.xlu0 %2588
      %2590 = vrot.lane.b32.xlu0 %v2070, 16
      %v2591 = vpop.permute.xlu0 %2590
      %2592 = vrot.lane.b32.xlu0 %v2152, 16
      %v2593 = vpop.permute.xlu0 %2592
      %2594 = vrot.lane.b32.xlu0 %v2157, 16
      %v2595 = vpop.permute.xlu0 %2594
      %2604 = vrot.lane.b32.xlu0 %v2473, 24
      %v2605 = vpop.permute.xlu0 %2604
      %2606 = vrot.lane.b32.xlu0 %v2478, 24
      %v2607 = vpop.permute.xlu0 %2606
      %2608 = vrot.lane.b32.xlu0 %v2560, 24
      %v2609 = vpop.permute.xlu0 %2608
      %2610 = vrot.lane.b32.xlu0 %v2565, 24
      %v2611 = vpop.permute.xlu0 %2610
      %v2616 = vsel %vm940, %v1251, %v2573
      %v2617 = vsel %vm940, %v1256, %v2575
      %v2618 = vsel %vm940, %v1332, %v2577
      %v2619 = vsel %vm940, %v1337, %v2579
      %v2620 = vsel %vm1133, %v2616, %v2589
      %v2621 = vsel %vm1133, %v2617, %v2591
      %v2622 = vsel %vm1133, %v2618, %v2593
      %v2623 = vsel %vm1133, %v2619, %v2595
      %vm2624 = vcmask 195584
      %v2625 = vsel %vm2624, %v2620, %v2605
      %v2626 = vsel %vm2624, %v2621, %v2607
      %v2627 = vsel %vm2624, %v2622, %v2609
      %v2628 = vsel %vm2624, %v2623, %v2611
      %v2629 = vpack.c.bf16 %v2626, %v2625
      %v2630 = vpack.c.bf16 %v2628, %v2627
      %v2632 = vlaneseq
      %v2633 = vshrl.u32 %v2632, 7
      %v2634 = vsub.s32 0, %v2633
      %v2635 = vrot.slane %v933, %v2634
      %v2641 = vunpack.c.l.b16 %v929
      %v2642 = vunpack.c.l.b16 %v930
      %v2643 = vunpack.c.l.b16 %v931
      %v2644 = vunpack.c.l.b16 %v932
      %v2645 = vpack.c.b16 %v2642, %v2641
      %v2646 = vpack.c.b16 %v2644, %v2643
      %v2650 = vsel %vm793, %v2629, 0
      %v2653 = vsel %vm793, %v2630, 0
      %2655 = vmatprep.subr.bf16.mxu0 0
      %2656 = vmatpush1.bf16.msra.mxu0 %v2645
      %2657 = vmatprep.subr.bf16.mxu0 0
      %2658 = vmatpush1.bf16.msra.mxu0 %v2646
      %2659 = vmatprep.subr.bf16.mxu0 0
      %2660 = vmatpush1.bf16.msra.mxu0 0
      %2661 = vmatprep.subr.bf16.mxu0 0
      %2662 = vmatpush1.bf16.msra.mxu0 0
      %2663 = vmatprep.subr.bf16.mxu0 0
      %2664 = vmatpush1.bf16.msra.mxu0 0
      %2665 = vmatprep.subr.bf16.mxu0 0
      %2666 = vmatpush1.bf16.msra.mxu0 0
      %2667 = vmatprep.subr.bf16.mxu0 0
      %2668 = vmatpush1.bf16.msra.mxu0 0
      %2669 = vmatprep.subr.bf16.mxu0 0
      %2670 = vmatpush1.bf16.msra.mxu0 0
      %2671 = vmatprep.subr.bf16.mxu0 0
      %2672 = vmatpush1.bf16.msra.mxu0 0
      %2673 = vmatprep.subr.bf16.mxu0 0
      %2674 = vmatpush1.bf16.msra.mxu0 0
      %2675 = vmatprep.subr.bf16.mxu0 0
      %2676 = vmatpush1.bf16.msra.mxu0 0
      %2677 = vmatprep.subr.bf16.mxu0 0
      %2678 = vmatpush1.bf16.msra.mxu0 0
      %2679 = vmatprep.subr.bf16.mxu0 0
      %2680 = vmatpush1.bf16.msra.mxu0 0
      %2681 = vmatprep.subr.bf16.mxu0 0
      %2682 = vmatpush1.bf16.msra.mxu0 0
      %2683 = vmatprep.subr.bf16.mxu0 0
      %2684 = vmatpush1.bf16.msra.mxu0 0
      %2685 = vmatprep.subr.bf16.mxu0 0
      %2686 = vmatpush1.bf16.msra.mxu0 0
      %2687 = vmatprep.mubr.bf16.mxu0 0
      %2688 = vmatmul.mubr.bf16.gmra.mrb[0].mxu0 %v2650
      %v2689 = vpop.f32.mrb[0].mxu0
      %v2690 = vadd.f32 %v2635, %v2689
      %v2691 = vpop.f32.mrb[0].mxu0
      %v2692 = vpop.f32.mrb[0].mxu0
      %v2693 = vadd.f32 %v2635, %v2692
      %v2694 = vpop.f32.mrb[0].mxu0
      %2695 = vmatprep.mubr.bf16.mxu0 0
      %2696 = vmatmul.mubr.bf16.gmra.mrb[0].mxu0 %v2653
      %v2697 = vpop.f32.mrb[0].mxu0
      %v2698 = vadd.f32 %v2635, %v2697
      %v2699 = vpop.f32.mrb[0].mxu0
      %v2700 = vpop.f32.mrb[0].mxu0
      %v2701 = vadd.f32 %v2635, %v2700
      %v2702 = vpop.f32.mrb[0].mxu0
      %2703 = vdwg.mxu0
      %v2704 = vadd.f32 %v754, %v2690
      %v2705 = vadd.f32 %v755, %v2693
      %v2706 = vadd.f32 %v756, %v2698
      %v2707 = vadd.f32 %v757, %v2701
      %v2708 = vld [vmem:[%s714] sm:$0x1]
      %v2709 = vld [vmem:[%s717] sm:$0x1]
      %v2710 = vsel %vm793, %v2704, 0.0
      %2711 = vadd.xlane.f32.xlu0 %v2710
      %v2712 = vpop.xlane.xlu0 %2711
      %v2713 = vsel %vm793, %v2705, 0.0
      %2714 = vadd.xlane.f32.xlu0 %v2713
      %v2715 = vpop.xlane.xlu0 %2714
      %v2716 = vsel %vm793, %v2706, 0.0
      %2717 = vadd.xlane.f32.xlu0 %v2716
      %v2718 = vpop.xlane.xlu0 %2717
      %v2719 = vsel %vm793, %v2707, 0.0
      %2720 = vadd.xlane.f32.xlu0 %v2719
      %v2721 = vpop.xlane.xlu0 %2720
      %v2722 = vrcp.pop 32.0
      %v2723 = vmul.f32 %v2712, %v2722
      %v2724 = vmul.f32 %v2715, %v2722
      %v2725 = vmul.f32 %v2718, %v2722
      %v2726 = vmul.f32 %v2721, %v2722
      %v2727 = vsub.f32 %v2704, %v2723
      %v2728 = vsub.f32 %v2705, %v2724
      %v2729 = vsub.f32 %v2706, %v2725
      %v2730 = vsub.f32 %v2707, %v2726
      %v2731 = vmul.f32 %v2727, %v2727
      %v2732 = vmul.f32 %v2728, %v2728
      %v2733 = vmul.f32 %v2729, %v2729
      %v2734 = vmul.f32 %v2730, %v2730
      %v2735 = vsel %vm793, %v2731, 0.0
      %2736 = vadd.xlane.f32.xlu0 %v2735
      %v2737 = vpop.xlane.xlu0 %2736
      %v2738 = vsel %vm793, %v2732, 0.0
      %2739 = vadd.xlane.f32.xlu0 %v2738
      %v2740 = vpop.xlane.xlu0 %2739
      %v2741 = vsel %vm793, %v2733, 0.0
      %2742 = vadd.xlane.f32.xlu0 %v2741
      %v2743 = vpop.xlane.xlu0 %2742
      %v2744 = vsel %vm793, %v2734, 0.0
      %2745 = vadd.xlane.f32.xlu0 %v2744
      %v2746 = vpop.xlane.xlu0 %2745
      %v2747 = vmul.f32 %v2737, %v2722
      %v2748 = vmul.f32 %v2740, %v2722
      %v2749 = vmul.f32 %v2743, %v2722
      %v2750 = vmul.f32 %v2746, %v2722
      %v2751 = vadd.f32 %v2747, 1e-05
      %v2752 = vadd.f32 %v2748, 1e-05
      %v2753 = vadd.f32 %v2749, 1e-05
      %v2754 = vadd.f32 %v2750, 1e-05
      %v2755 = vrsqrt.pop %v2751
      %v2756 = vrsqrt.pop %v2752
      %v2757 = vrsqrt.pop %v2753
      %v2758 = vrsqrt.pop %v2754
      %v2759 = vmul.f32 %v2727, %v2755
      %v2760 = vmul.f32 %v2728, %v2756
      %v2761 = vmul.f32 %v2729, %v2757
      %v2762 = vmul.f32 %v2730, %v2758
      %v2764 = vlaneseq
      %v2765 = vshrl.u32 %v2764, 7
      %v2766 = vsub.s32 0, %v2765
      %v2767 = vrot.slane %v2708, %v2766
      %v2769 = vmul.f32 %v2759, %v2767
      %v2770 = vmul.f32 %v2760, %v2767
      %v2771 = vmul.f32 %v2761, %v2767
      %v2772 = vmul.f32 %v2762, %v2767
      %v2774 = vlaneseq
      %v2775 = vshrl.u32 %v2774, 7
      %v2776 = vsub.s32 0, %v2775
      %v2777 = vrot.slane %v2709, %v2776
      %v2779 = vadd.f32 %v2769, %v2777
      %v2780 = vadd.f32 %v2770, %v2777
      %v2781 = vadd.f32 %v2771, %v2777
      %v2782 = vadd.f32 %v2772, %v2777
      %v2783 = vld [vmem:[%s722] sm:$0xf]
      %v2784 = vld [vmem:[%s722 + $0x4] sm:$0xf]
      %v2785 = vld [vmem:[%s722 + $0x8] sm:$0xf]
      %v2786 = vld [vmem:[%s722 + $0xc] sm:$0xf]
      %v2787 = vpack.c.bf16 %v2780, %v2779
      %v2788 = vpack.c.bf16 %v2782, %v2781
      %v2789 = vld [vmem:[%s725] sm:$0x1]
      %v2791 = vlaneseq
      %v2792 = vshrl.u32 %v2791, 7
      %v2793 = vsub.s32 0, %v2792
      %v2794 = vrot.slane %v2789, %v2793
      %v2800 = vunpack.c.l.b16 %v2783
      %v2801 = vunpack.c.l.b16 %v2784
      %v2802 = vunpack.c.l.b16 %v2785
      %v2803 = vunpack.c.l.b16 %v2786
      %v2804 = vpack.c.b16 %v2801, %v2800
      %v2805 = vpack.c.b16 %v2803, %v2802
      %v2809 = vsel %vm793, %v2787, 0
      %v2812 = vsel %vm793, %v2788, 0
      %2814 = vmatprep.subr.bf16.mxu0 0
      %2815 = vmatpush1.bf16.msra.mxu0 %v2804
      %2816 = vmatprep.subr.bf16.mxu0 0
      %2817 = vmatpush1.bf16.msra.mxu0 %v2805
      %2818 = vmatprep.subr.bf16.mxu0 0
      %2819 = vmatpush1.bf16.msra.mxu0 0
      %2820 = vmatprep.subr.bf16.mxu0 0
      %2821 = vmatpush1.bf16.msra.mxu0 0
      %2822 = vmatprep.subr.bf16.mxu0 0
      %2823 = vmatpush1.bf16.msra.mxu0 0
      %2824 = vmatprep.subr.bf16.mxu0 0
      %2825 = vmatpush1.bf16.msra.mxu0 0
      %2826 = vmatprep.subr.bf16.mxu0 0
      %2827 = vmatpush1.bf16.msra.mxu0 0
      %2828 = vmatprep.subr.bf16.mxu0 0
      %2829 = vmatpush1.bf16.msra.mxu0 0
      %2830 = vmatprep.subr.bf16.mxu0 0
      %2831 = vmatpush1.bf16.msra.mxu0 0
      %2832 = vmatprep.subr.bf16.mxu0 0
      %2833 = vmatpush1.bf16.msra.mxu0 0
      %2834 = vmatprep.subr.bf16.mxu0 0
      %2835 = vmatpush1.bf16.msra.mxu0 0
      %2836 = vmatprep.subr.bf16.mxu0 0
      %2837 = vmatpush1.bf16.msra.mxu0 0
      %2838 = vmatprep.subr.bf16.mxu0 0
      %2839 = vmatpush1.bf16.msra.mxu0 0
      %2840 = vmatprep.subr.bf16.mxu0 0
      %2841 = vmatpush1.bf16.msra.mxu0 0
      %2842 = vmatprep.subr.bf16.mxu0 0
      %2843 = vmatpush1.bf16.msra.mxu0 0
      %2844 = vmatprep.subr.bf16.mxu0 0
      %2845 = vmatpush1.bf16.msra.mxu0 0
      %2846 = vmatprep.mubr.bf16.mxu0 0
      %2847 = vmatmul.mubr.bf16.gmra.mrb[0].mxu0 %v2809
      %v2848 = vpop.f32.mrb[0].mxu0
      %v2849 = vadd.f32 %v2794, %v2848
      %v2850 = vpop.f32.mrb[0].mxu0
      %v2851 = vpop.f32.mrb[0].mxu0
      %v2852 = vadd.f32 %v2794, %v2851
      %v2853 = vpop.f32.mrb[0].mxu0
      %2854 = vmatprep.mubr.bf16.mxu0 0
      %2855 = vmatmul.mubr.bf16.gmra.mrb[0].mxu0 %v2812
      %v2856 = vpop.f32.mrb[0].mxu0
      %v2857 = vadd.f32 %v2794, %v2856
      %v2858 = vpop.f32.mrb[0].mxu0
      %v2859 = vpop.f32.mrb[0].mxu0
      %v2860 = vadd.f32 %v2794, %v2859
      %v2861 = vpop.f32.mrb[0].mxu0
      %2862 = vdwg.mxu0
      %v2863 = vmax.f32 %v2849, 0.0
      %v2864 = vmax.f32 %v2852, 0.0
      %v2865 = vmax.f32 %v2857, 0.0
      %v2866 = vmax.f32 %v2860, 0.0
      %v2867 = vld [vmem:[%s730] sm:$0xf]
      %v2868 = vld [vmem:[%s730 + $0x4] sm:$0xf]
      %v2869 = vld [vmem:[%s730 + $0x8] sm:$0xf]
      %v2870 = vld [vmem:[%s730 + $0xc] sm:$0xf]
      %v2871 = vld [vmem:[%s730 + $0x10] sm:$0xf]
      %v2872 = vld [vmem:[%s730 + $0x14] sm:$0xf]
      %v2873 = vld [vmem:[%s730 + $0x18] sm:$0xf]
      %v2874 = vld [vmem:[%s730 + $0x1c] sm:$0xf]
      %v2875 = vpack.c.bf16 %v2864, %v2863
      %v2876 = vpack.c.bf16 %v2866, %v2865
      %v2877 = vld [vmem:[%s733] sm:$0x1]
      %v2879 = vlaneseq
      %v2880 = vshrl.u32 %v2879, 7
      %v2881 = vsub.s32 0, %v2880
      %v2882 = vrot.slane %v2877, %v2881
      %v2892 = vunpack.c.l.b16 %v2867
      %v2893 = vunpack.c.l.b16 %v2868
      %v2894 = vunpack.c.l.b16 %v2869
      %v2895 = vunpack.c.l.b16 %v2870
      %v2896 = vunpack.c.l.b16 %v2871
      %v2897 = vunpack.c.l.b16 %v2872
      %v2898 = vunpack.c.l.b16 %v2873
      %v2899 = vunpack.c.l.b16 %v2874
      %v2900 = vpack.c.b16 %v2893, %v2892
      %v2901 = vpack.c.b16 %v2895, %v2894
      %v2902 = vpack.c.b16 %v2897, %v2896
      %v2903 = vpack.c.b16 %v2899, %v2898
      %vm2908 = vcmask 523264
      %v2910 = vsel %vm2908, %v2875, 0
      %v2913 = vsel %vm2908, %v2876, 0
      %2915 = vmatprep.subr.bf16.mxu0 0
      %2916 = vmatpush1.bf16.msra.mxu0 %v2900
      %2917 = vmatprep.subr.bf16.mxu0 0
      %2918 = vmatpush1.bf16.msra.mxu0 %v2901
      %2919 = vmatprep.subr.bf16.mxu0 0
      %2920 = vmatpush1.bf16.msra.mxu0 %v2902
      %2921 = vmatprep.subr.bf16.mxu0 0
      %2922 = vmatpush1.bf16.msra.mxu0 %v2903
      %2923 = vmatprep.subr.bf16.mxu0 0
      %2924 = vmatpush1.bf16.msra.mxu0 0
      %2925 = vmatprep.subr.bf16.mxu0 0
      %2926 = vmatpush1.bf16.msra.mxu0 0
      %2927 = vmatprep.subr.bf16.mxu0 0
      %2928 = vmatpush1.bf16.msra.mxu0 0
      %2929 = vmatprep.subr.bf16.mxu0 0
      %2930 = vmatpush1.bf16.msra.mxu0 0
      %2931 = vmatprep.subr.bf16.mxu0 0
      %2932 = vmatpush1.bf16.msra.mxu0 0
      %2933 = vmatprep.subr.bf16.mxu0 0
      %2934 = vmatpush1.bf16.msra.mxu0 0
      %2935 = vmatprep.subr.bf16.mxu0 0
      %2936 = vmatpush1.bf16.msra.mxu0 0
      %2937 = vmatprep.subr.bf16.mxu0 0
      %2938 = vmatpush1.bf16.msra.mxu0 0
      %2939 = vmatprep.subr.bf16.mxu0 0
      %2940 = vmatpush1.bf16.msra.mxu0 0
      %2941 = vmatprep.subr.bf16.mxu0 0
      %2942 = vmatpush1.bf16.msra.mxu0 0
      %2943 = vmatprep.subr.bf16.mxu0 0
      %2944 = vmatpush1.bf16.msra.mxu0 0
      %2945 = vmatprep.subr.bf16.mxu0 0
      %2946 = vmatpush1.bf16.msra.mxu0 0
      %2947 = vmatprep.mubr.bf16.mxu0 0
      %2948 = vmatmul.mubr.bf16.gmra.mrb[0].mxu0 %v2910
      %v2949 = vpop.f32.mrb[0].mxu0
      %v2950 = vadd.f32 %v2882, %v2949
      %v2951 = vpop.f32.mrb[0].mxu0
      %v2952 = vpop.f32.mrb[0].mxu0
      %v2953 = vadd.f32 %v2882, %v2952
      %v2954 = vpop.f32.mrb[0].mxu0
      %2955 = vmatprep.mubr.bf16.mxu0 0
      %2956 = vmatmul.mubr.bf16.gmra.mrb[0].mxu0 %v2913
      %v2957 = vpop.f32.mrb[0].mxu0
      %v2958 = vadd.f32 %v2882, %v2957
      %v2959 = vpop.f32.mrb[0].mxu0
      %v2960 = vpop.f32.mrb[0].mxu0
      %v2961 = vadd.f32 %v2882, %v2960
      %v2962 = vpop.f32.mrb[0].mxu0
      %2963 = vdwg.mxu0
      %v2964 = vadd.f32 %v2779, %v2950
      %v2965 = vadd.f32 %v2780, %v2953
      %v2966 = vadd.f32 %v2781, %v2958
      %v2967 = vadd.f32 %v2782, %v2961
      %v2968 = vld [vmem:[%s736] sm:$0x1]
      %v2969 = vld [vmem:[%s739] sm:$0x1]
      %v2970 = vsel %vm793, %v2964, 0.0
      %2971 = vadd.xlane.f32.xlu0 %v2970
      %v2972 = vpop.xlane.xlu0 %2971
      %v2973 = vsel %vm793, %v2965, 0.0
      %2974 = vadd.xlane.f32.xlu0 %v2973
      %v2975 = vpop.xlane.xlu0 %2974
      %v2976 = vsel %vm793, %v2966, 0.0
      %2977 = vadd.xlane.f32.xlu0 %v2976
      %v2978 = vpop.xlane.xlu0 %2977
      %v2979 = vsel %vm793, %v2967, 0.0
      %2980 = vadd.xlane.f32.xlu0 %v2979
      %v2981 = vpop.xlane.xlu0 %2980
      %v2982 = vmul.f32 %v2972, %v2722
      %v2983 = vmul.f32 %v2975, %v2722
      %v2984 = vmul.f32 %v2978, %v2722
      %v2985 = vmul.f32 %v2981, %v2722
      %v2986 = vsub.f32 %v2964, %v2982
      %v2987 = vsub.f32 %v2965, %v2983
      %v2988 = vsub.f32 %v2966, %v2984
      %v2989 = vsub.f32 %v2967, %v2985
      %v2990 = vmul.f32 %v2986, %v2986
      %v2991 = vmul.f32 %v2987, %v2987
      %v2992 = vmul.f32 %v2988, %v2988
      %v2993 = vmul.f32 %v2989, %v2989
      %v2994 = vsel %vm793, %v2990, 0.0
      %2995 = vadd.xlane.f32.xlu0 %v2994
      %v2996 = vpop.xlane.xlu0 %2995
      %v2997 = vsel %vm793, %v2991, 0.0
      %2998 = vadd.xlane.f32.xlu0 %v2997
      %v2999 = vpop.xlane.xlu0 %2998
      %v3000 = vsel %vm793, %v2992, 0.0
      %3001 = vadd.xlane.f32.xlu0 %v3000
      %v3002 = vpop.xlane.xlu0 %3001
      %v3003 = vsel %vm793, %v2993, 0.0
      %3004 = vadd.xlane.f32.xlu0 %v3003
      %v3005 = vpop.xlane.xlu0 %3004
      %v3006 = vmul.f32 %v2996, %v2722
      %v3007 = vmul.f32 %v2999, %v2722
      %v3008 = vmul.f32 %v3002, %v2722
      %v3009 = vmul.f32 %v3005, %v2722
      %v3010 = vadd.f32 %v3006, 1e-05
      %v3011 = vadd.f32 %v3007, 1e-05
      %v3012 = vadd.f32 %v3008, 1e-05
      %v3013 = vadd.f32 %v3009, 1e-05
      %v3014 = vrsqrt.pop %v3010
      %v3015 = vrsqrt.pop %v3011
      %v3016 = vrsqrt.pop %v3012
      %v3017 = vrsqrt.pop %v3013
      %v3018 = vmul.f32 %v2986, %v3014
      %v3019 = vmul.f32 %v2987, %v3015
      %v3020 = vmul.f32 %v2988, %v3016
      %v3021 = vmul.f32 %v2989, %v3017
      %v3023 = vlaneseq
      %v3024 = vshrl.u32 %v3023, 7
      %v3025 = vsub.s32 0, %v3024
      %v3026 = vrot.slane %v2968, %v3025
      %v3028 = vmul.f32 %v3018, %v3026
      %v3029 = vmul.f32 %v3019, %v3026
      %v3030 = vmul.f32 %v3020, %v3026
      %v3031 = vmul.f32 %v3021, %v3026
      %v3033 = vlaneseq
      %v3034 = vshrl.u32 %v3033, 7
      %v3035 = vsub.s32 0, %v3034
      %v3036 = vrot.slane %v2969, %v3035
      %v3038 = vadd.f32 %v3028, %v3036
      %v3039 = vadd.f32 %v3029, %v3036
      %v3040 = vadd.f32 %v3030, %v3036
      %v3041 = vadd.f32 %v3031, %v3036
      %3042 = vst.msk [vmem:[%s17] sm:$0xff] %vm793, %v3038
      %3043 = vst.msk [vmem:[%s17 + $0x8] sm:$0xff] %vm793, %v3039
      %3044 = vst.msk [vmem:[%s17 + $0x10] sm:$0xff] %vm793, %v3040
      %3045 = vst.msk [vmem:[%s17 + $0x18] sm:$0xff] %vm793, %v3041
      // Predicated region
      $region93: #{transformer_forward.2} parent=87 // pred_check
        %p3046 = pneg %p468
      $region94: #{transformer_forward.2} parent=87 // pred_check_branch
        %3048 = sbr.rel (%p3046) target = $region96
      $region95: #{transformer_forward.2} parent=87 // pred_region
        _
      $region96: #{transformer_forward.2} parent=87 // pred_fallthru
        _
      // Predicated region
      $region97: #{transformer_forward.2} parent=87 // pred_check
        %p3049 = pneg %p468
      $region98: #{transformer_forward.2} parent=87 // pred_check_branch
        %3051 = sbr.rel (%p3049) target = $region100
      $region99: #{transformer_forward.2} parent=87 // pred_region
        _
      $region100: #{transformer_forward.2} parent=87 // pred_fallthru
        _
    $region88: #{transformer_forward.2} parent=5 // pred_fallthru
      _
    %p3052 = scmp.le.s32.totalorder 2, %s23
    // Predicated region
    $region101: #{transformer_forward.2} parent=5 // pred_check
      %p3053 = pneg %p3052
    $region102: #{transformer_forward.2} parent=5 // pred_check_branch
      %3055 = sbr.rel (%p3053) target = $region104
    $region103: #{transformer_forward.2} parent=5 // pred_region
      %s3056 = ssub.s32 %s23, 2
    $region104: #{transformer_forward.2} parent=5 // pred_fallthru
      _
  $region6: #{transformer_forward.2} parent=0 // loop_footer
    %s27 = sadd.s32 1, %s23
  $region7: #{transformer_forward.2} parent=0 // loop_footer_branch
    %22 = sbr.rel target = $region3
  $region8: #{transformer_forward.2} parent=0 // loop_exit
    _

// kernel: transformer_forward.3
$region0: #{transformer_forward.3}
  #allocation0 [shape = 'u32[]', space=smem, size = 0x4, offset = 0x4, fixed_abs, tag = 'smem constant byte address 0x4 - core index']
  #allocation1 [shape = 'u32[144,128]{1,0:T(1,128)}', space=vmem, size = 0x12000, scoped, tag = 'internal scratch']
  %s0 = inlined_call_operand.smem [shape: u32[31], index: -1, kind: input, shape index: {}]
  %s1 = sld [smem:[%s0]]
  %s2 = scalar_lea.smem %s0, 1
  %s3 = sld [smem:[%s2]]
  %s4 = scalar_lea.smem %s0, 2
  %s5 = sld [smem:[%s4]]
  %s6 = scalar_lea.smem %s0, 3
  %s7 = sld [smem:[%s6]]
  %s8 = scalar_lea.smem %s0, 4
  %s9 = sld [smem:[%s8]]
  %s10 = scalar_lea.smem %s0, 5
  %s11 = sld [smem:[%s10]]
  %s12 = scalar_lea.smem %s0, 6
  %s13 = sld [smem:[%s12]]
  %s14 = scalar_lea.smem %s0, 7
  %s15 = sld [smem:[%s14]]
  %s16 = scalar_lea.smem %s0, 8
  %s17 = sld [smem:[%s16]]
  %s18 = scalar_lea.smem %s0, 9
  %s19 = sld [smem:[%s18]]
  %s20 = scalar_lea.smem %s0, 10
  %s21 = sld [smem:[%s20]]
  %s22 = scalar_lea.smem %s0, 11
  %s23 = sld [smem:[%s22]]
  %s24 = scalar_lea.smem %s0, 12
  %s25 = sld [smem:[%s24]]
  %s26 = scalar_lea.smem %s0, 13
  %s27 = sld [smem:[%s26]]
  %s28 = scalar_lea.smem %s0, 14
  %s29 = sld [smem:[%s28]]
  %s30 = scalar_lea.smem %s0, 15
  %s31 = sld [smem:[%s30]]
  %s32 = scalar_lea.smem %s0, 16
  %s33 = sld [smem:[%s32]]
  %s34 = scalar_lea.smem %s0, 17
  %s35 = sld [smem:[%s34]]
  %s36 = scalar_lea.smem %s0, 18
  %s37 = sld [smem:[%s36]]
  %s38 = scalar_lea.smem %s0, 19
  %s39 = sld [smem:[%s38]]
  %s40 = scalar_lea.smem %s0, 20
  %s41 = sld [smem:[%s40]]
  %s42 = scalar_lea.smem %s0, 21
  %s43 = sld [smem:[%s42]]
  %s44 = scalar_lea.smem %s0, 22
  %s45 = sld [smem:[%s44]]
  %s46 = scalar_lea.smem %s0, 23
  %s47 = sld [smem:[%s46]]
  %s48 = scalar_lea.smem %s0, 24
  %s49 = sld [smem:[%s48]]
  %s50 = scalar_lea.smem %s0, 25
  %s51 = sld [smem:[%s50]]
  %s52 = scalar_lea.smem %s0, 26
  %s53 = sld [smem:[%s52]]
  %s54 = scalar_lea.smem %s0, 27
  %s55 = sld [smem:[%s54]]
  %s56 = scalar_lea.smem %s0, 28
  %s57 = sld [smem:[%s56]]
  %s58 = scalar_lea.smem %s0, 29
  %s59 = sld [smem:[%s58]]
  %s60 = scalar_lea.smem %s0, 30
  %s61 = sld [smem:[%s60]]
  %s62 = sld [smem:[#allocation0]]
  $region173: #{transformer_forward.3} parent=0
    _
  %s64 = ssub.s32 1, %s62
  %s65 = scalar_select 0, %s64, %s62
  $region1: #{transformer_forward.3} parent=0
    #allocation2 [shape = 'u8[512]{0}', space=vmem, size = 0x400, scoped, tag = 'input window, operand 28, single buffered']
    #allocation3 [shape = 's32[2]{0}', space=sflag, size = 0x8, scoped, tag = 'scoped memory for transformer_forward.3']
    #allocation4 [shape = 's32[2]{0}', space=sflag, size = 0x8, scoped, tag = 'scoped memory for transformer_forward.3']
    #allocation5 [shape = 'u8[512]{0}', space=vmem, size = 0x400, scoped, tag = 'input window, operand 29, single buffered']
    #allocation6 [shape = 's32[1]{0}', space=sflag, size = 0x4, scoped, tag = 'scoped memory for transformer_forward.3']
    #allocation7 [shape = 'u8[8192]{0}', space=vmem, size = 0x2000, scoped, tag = 'output window, operand 0, single buffered']
    %66 = vsyncpa [#allocation3], 0
    %67 = vsyncpa [#allocation6], 0
    %68 = vsyncpa [#allocation4], 0
    loop: start=0, step=1, limit=4
    $region2: #{transformer_forward.3} parent=1 // loop_pre_header
      _
    $region3: #{transformer_forward.3} parent=1 // loop_header
      %s70 = sphi 0, %s74
      %p71 = scmp.ge.s32.totalorder %s70, 4
      %s78 = sphi 0, %s78
      %s80 = sphi 0, %s78
      %s81 = sphi 0, %s80
      %s95 = sphi 0, %s81
      %s99 = sphi 0, %s99
      %s101 = sphi 0, %s99
      %s102 = sphi 0, %s101
      %s116 = sphi 0, %s102
      %s120 = sphi 0, %s120
      %s122 = sphi 0, %s120
      %s123 = sphi 0, %s122
      %s137 = sphi 0, %s123
      %s141 = sphi 0, %s141
      %s143 = sphi 0, %s141
      %s144 = sphi 0, %s143
      %s158 = sphi 0, %s144
      %s164 = sphi 0, %s166
      %s167 = sphi 0, %s164
      %s168 = sphi 0, %s167
      %s184 = sphi 0, %s168
      %s190 = sphi 0, %s192
      %s193 = sphi 0, %s190
      %s194 = sphi 0, %s193
      %s210 = sphi 0, %s194
      %s216 = sphi 0, %s218
      %s219 = sphi 0, %s216
      %s220 = sphi 0, %s219
      %s236 = sphi 0, %s220
      %s242 = sphi 0, %s244
      %s245 = sphi 0, %s242
      %s246 = sphi 0, %s245
      %s262 = sphi 0, %s246
      %s268 = sphi 0, %s270
      %s271 = sphi 0, %s268
      %s272 = sphi 0, %s271
      %s288 = sphi 0, %s272
      %s294 = sphi 0, %s296
      %s297 = sphi 0, %s294
      %s298 = sphi 0, %s297
      %s314 = sphi 0, %s298
      %s320 = sphi 0, %s322
      %s323 = sphi 0, %s320
      %s324 = sphi 0, %s323
      %s340 = sphi 0, %s324
      %s346 = sphi 0, %s348
      %s349 = sphi 0, %s346
      %s350 = sphi 0, %s349
      %s366 = sphi 0, %s350
      %s372 = sphi 0, %s374
      %s375 = sphi 0, %s372
      %s376 = sphi 0, %s375
      %s392 = sphi 0, %s376
      %s398 = sphi 0, %s400
      %s401 = sphi 0, %s398
      %s402 = sphi 0, %s401
      %s418 = sphi 0, %s402
      %s424 = sphi 0, %s426
      %s427 = sphi 0, %s424
      %s428 = sphi 0, %s427
      %s444 = sphi 0, %s428
      %s450 = sphi 0, %s452
      %s453 = sphi 0, %s450
      %s454 = sphi 0, %s453
      %s470 = sphi 0, %s454
      %s476 = sphi 0, %s478
      %s479 = sphi 0, %s476
      %s480 = sphi 0, %s479
      %s496 = sphi 0, %s480
      %s502 = sphi 0, %s504
      %s505 = sphi 0, %s502
      %s506 = sphi 0, %s505
      %s522 = sphi 0, %s506
      %s528 = sphi 0, %s530
      %s531 = sphi 0, %s528
      %s532 = sphi 0, %s531
      %s548 = sphi 0, %s532
      %s554 = sphi 0, %s556
      %s557 = sphi 0, %s554
      %s558 = sphi 0, %s557
      %s574 = sphi 0, %s558
      %s580 = sphi 0, %s582
      %s583 = sphi 0, %s580
      %s584 = sphi 0, %s583
      %s600 = sphi 0, %s584
      %s606 = sphi 0, %s608
      %s609 = sphi 0, %s606
      %s610 = sphi 0, %s609
      %s626 = sphi 0, %s610
      %s632 = sphi 0, %s634
      %s635 = sphi 0, %s632
      %s636 = sphi 0, %s635
      %s652 = sphi 0, %s636
      %s658 = sphi 0, %s660
      %s661 = sphi 0, %s658
      %s662 = sphi 0, %s661
      %s678 = sphi 0, %s662
      %s684 = sphi 0, %s686
      %s687 = sphi 0, %s684
      %s688 = sphi 0, %s687
      %s704 = sphi 0, %s688
      %s710 = sphi 0, %s712
      %s713 = sphi 0, %s710
      %s714 = sphi 0, %s713
      %s730 = sphi 0, %s714
      %s736 = sphi 0, %s738
      %s739 = sphi 0, %s736
      %s740 = sphi 0, %s739
      %s756 = sphi 0, %s740
      %s762 = sphi 0, %s764
      %s765 = sphi 0, %s762
      %s766 = sphi 0, %s765
      %s782 = sphi 0, %s766
      %s786 = sphi 0, %s786
      %s788 = sphi 0, %s786
      %s789 = sphi 0, %s788
      %s803 = sphi 0, %s789
      %s807 = sphi 0, %s807
      %s809 = sphi 0, %s807
      %s810 = sphi 0, %s809
      %s824 = sphi 0, %s810
      %s828 = sphi 0, %s828
      %s830 = sphi 0, %s828
      %s831 = sphi 0, %s830
      %s845 = sphi 0, %s831
    $region4: #{transformer_forward.3} parent=1 // loop_header_branch
      %73 = sbr.rel (%p71) target = $region8
    $region5: #{transformer_forward.3} parent=1 // loop_body
      %s75 = ssub.s32 %s70, 1
      %s76 = ssub.s32 %s70, 2
      %s77 = sadd.s32 %s70, 1
      %s79 = sadd.s32 %s78, 1
      %p82 = scmp.eq.s32.totalorder %s70, 1
      %p83 = scmp.ne.s32.totalorder %s78, %s80
      %p84 = scmp.eq.s32.totalorder %s70, 0
      %p85 = por %p83, %p84
      %p86 = scmp.ne.s32.totalorder %s78, %s80
      %p87 = scmp.eq.s32.totalorder %s75, 1
      %p88 = por %p86, %p87
      %p89 = scmp.ne.s32.totalorder %s80, %s81
      %p90 = scmp.eq.s32.totalorder %s75, 0
      %p91 = por %p89, %p90
      %p92 = scmp.ne.s32.totalorder %s80, %s81
      %p93 = scmp.eq.s32.totalorder %s76, 1
      %p94 = por %p92, %p93
      %p96 = scmp.ne.s32.totalorder %s81, %s95
      %p97 = scmp.eq.s32.totalorder %s76, 0
      %p98 = por %p96, %p97
      %s100 = sadd.s32 %s99, 1
      %p103 = scmp.eq.s32.totalorder %s70, 1
      %p104 = scmp.ne.s32.totalorder %s99, %s101
      %p105 = scmp.eq.s32.totalorder %s70, 0
      %p106 = por %p104, %p105
      %p107 = scmp.ne.s32.totalorder %s99, %s101
      %p108 = scmp.eq.s32.totalorder %s75, 1
      %p109 = por %p107, %p108
      %p110 = scmp.ne.s32.totalorder %s101, %s102
      %p111 = scmp.eq.s32.totalorder %s75, 0
      %p112 = por %p110, %p111
      %p113 = scmp.ne.s32.totalorder %s101, %s102
      %p114 = scmp.eq.s32.totalorder %s76, 1
      %p115 = por %p113, %p114
      %p117 = scmp.ne.s32.totalorder %s102, %s116
      %p118 = scmp.eq.s32.totalorder %s76, 0
      %p119 = por %p117, %p118
      %s121 = sadd.s32 %s120, 1
      %p124 = scmp.eq.s32.totalorder %s70, 1
      %p125 = scmp.ne.s32.totalorder %s120, %s122
      %p126 = scmp.eq.s32.totalorder %s70, 0
      %p127 = por %p125, %p126
      %p128 = scmp.ne.s32.totalorder %s120, %s122
      %p129 = scmp.eq.s32.totalorder %s75, 1
      %p130 = por %p128, %p129
      %p131 = scmp.ne.s32.totalorder %s122, %s123
      %p132 = scmp.eq.s32.totalorder %s75, 0
      %p133 = por %p131, %p132
      %p134 = scmp.ne.s32.totalorder %s122, %s123
      %p135 = scmp.eq.s32.totalorder %s76, 1
      %p136 = por %p134, %p135
      %p138 = scmp.ne.s32.totalorder %s123, %s137
      %p139 = scmp.eq.s32.totalorder %s76, 0
      %p140 = por %p138, %p139
      %s142 = sadd.s32 %s141, 1
      %p145 = scmp.eq.s32.totalorder %s70, 1
      %p146 = scmp.ne.s32.totalorder %s141, %s143
      %p147 = scmp.eq.s32.totalorder %s70, 0
      %p148 = por %p146, %p147
      %p149 = scmp.ne.s32.totalorder %s141, %s143
      %p150 = scmp.eq.s32.totalorder %s75, 1
      %p151 = por %p149, %p150
      %p152 = scmp.ne.s32.totalorder %s143, %s144
      %p153 = scmp.eq.s32.totalorder %s75, 0
      %p154 = por %p152, %p153
      %p155 = scmp.ne.s32.totalorder %s143, %s144
      %p156 = scmp.eq.s32.totalorder %s76, 1
      %p157 = por %p155, %p156
      %p159 = scmp.ne.s32.totalorder %s144, %s158
      %p160 = scmp.eq.s32.totalorder %s76, 0
      %p161 = por %p159, %p160
      %s162 = ssub.s32 %s70, %s77
      %p163 = scmp.eq.s32.totalorder %s162, 0
      %s165 = sadd.s32 %s164, 1
      %s166 = scalar_select %p163, %s164, %s165
      %p169 = pneg %p163
      %p170 = scmp.eq.s32.totalorder %s70, 1
      %p171 = por %p169, %p170
      %p172 = scmp.ne.s32.totalorder %s164, %s167
      %p173 = scmp.eq.s32.totalorder %s70, 0
      %p174 = por %p172, %p173
      %p175 = scmp.ne.s32.totalorder %s164, %s167
      %p176 = scmp.eq.s32.totalorder %s75, 1
      %p177 = por %p175, %p176
      %p178 = scmp.ne.s32.totalorder %s167, %s168
      %p179 = scmp.eq.s32.totalorder %s75, 0
      %p180 = por %p178, %p179
      %p181 = scmp.ne.s32.totalorder %s167, %s168
      %p182 = scmp.eq.s32.totalorder %s76, 1
      %p183 = por %p181, %p182
      %p185 = scmp.ne.s32.totalorder %s168, %s184
      %p186 = scmp.eq.s32.totalorder %s76, 0
      %p187 = por %p185, %p186
      %s188 = ssub.s32 %s70, %s77
      %p189 = scmp.eq.s32.totalorder %s188, 0
      %s191 = sadd.s32 %s190, 1
      %s192 = scalar_select %p189, %s190, %s191
      %p195 = pneg %p189
      %p196 = scmp.eq.s32.totalorder %s70, 1
      %p197 = por %p195, %p196
      %p198 = scmp.ne.s32.totalorder %s190, %s193
      %p199 = scmp.eq.s32.totalorder %s70, 0
      %p200 = por %p198, %p199
      %p201 = scmp.ne.s32.totalorder %s190, %s193
      %p202 = scmp.eq.s32.totalorder %s75, 1
      %p203 = por %p201, %p202
      %p204 = scmp.ne.s32.totalorder %s193, %s194
      %p205 = scmp.eq.s32.totalorder %s75, 0
      %p206 = por %p204, %p205
      %p207 = scmp.ne.s32.totalorder %s193, %s194
      %p208 = scmp.eq.s32.totalorder %s76, 1
      %p209 = por %p207, %p208
      %p211 = scmp.ne.s32.totalorder %s194, %s210
      %p212 = scmp.eq.s32.totalorder %s76, 0
      %p213 = por %p211, %p212
      %s214 = ssub.s32 %s70, %s77
      %p215 = scmp.eq.s32.totalorder %s214, 0
      %s217 = sadd.s32 %s216, 1
      %s218 = scalar_select %p215, %s216, %s217
      %p221 = pneg %p215
      %p222 = scmp.eq.s32.totalorder %s70, 1
      %p223 = por %p221, %p222
      %p224 = scmp.ne.s32.totalorder %s216, %s219
      %p225 = scmp.eq.s32.totalorder %s70, 0
      %p226 = por %p224, %p225
      %p227 = scmp.ne.s32.totalorder %s216, %s219
      %p228 = scmp.eq.s32.totalorder %s75, 1
      %p229 = por %p227, %p228
      %p230 = scmp.ne.s32.totalorder %s219, %s220
      %p231 = scmp.eq.s32.totalorder %s75, 0
      %p232 = por %p230, %p231
      %p233 = scmp.ne.s32.totalorder %s219, %s220
      %p234 = scmp.eq.s32.totalorder %s76, 1
      %p235 = por %p233, %p234
      %p237 = scmp.ne.s32.totalorder %s220, %s236
      %p238 = scmp.eq.s32.totalorder %s76, 0
      %p239 = por %p237, %p238
      %s240 = ssub.s32 %s70, %s77
      %p241 = scmp.eq.s32.totalorder %s240, 0
      %s243 = sadd.s32 %s242, 1
      %s244 = scalar_select %p241, %s242, %s243
      %p247 = pneg %p241
      %p248 = scmp.eq.s32.totalorder %s70, 1
      %p249 = por %p247, %p248
      %p250 = scmp.ne.s32.totalorder %s242, %s245
      %p251 = scmp.eq.s32.totalorder %s70, 0
      %p252 = por %p250, %p251
      %p253 = scmp.ne.s32.totalorder %s242, %s245
      %p254 = scmp.eq.s32.totalorder %s75, 1
      %p255 = por %p253, %p254
      %p256 = scmp.ne.s32.totalorder %s245, %s246
      %p257 = scmp.eq.s32.totalorder %s75, 0
      %p258 = por %p256, %p257
      %p259 = scmp.ne.s32.totalorder %s245, %s246
      %p260 = scmp.eq.s32.totalorder %s76, 1
      %p261 = por %p259, %p260
      %p263 = scmp.ne.s32.totalorder %s246, %s262
      %p264 = scmp.eq.s32.totalorder %s76, 0
      %p265 = por %p263, %p264
      %s266 = ssub.s32 %s70, %s77
      %p267 = scmp.eq.s32.totalorder %s266, 0
      %s269 = sadd.s32 %s268, 1
      %s270 = scalar_select %p267, %s268, %s269
      %p273 = pneg %p267
      %p274 = scmp.eq.s32.totalorder %s70, 1
      %p275 = por %p273, %p274
      %p276 = scmp.ne.s32.totalorder %s268, %s271
      %p277 = scmp.eq.s32.totalorder %s70, 0
      %p278 = por %p276, %p277
      %p279 = scmp.ne.s32.totalorder %s268, %s271
      %p280 = scmp.eq.s32.totalorder %s75, 1
      %p281 = por %p279, %p280
      %p282 = scmp.ne.s32.totalorder %s271, %s272
      %p283 = scmp.eq.s32.totalorder %s75, 0
      %p284 = por %p282, %p283
      %p285 = scmp.ne.s32.totalorder %s271, %s272
      %p286 = scmp.eq.s32.totalorder %s76, 1
      %p287 = por %p285, %p286
      %p289 = scmp.ne.s32.totalorder %s272, %s288
      %p290 = scmp.eq.s32.totalorder %s76, 0
      %p291 = por %p289, %p290
      %s292 = ssub.s32 %s70, %s77
      %p293 = scmp.eq.s32.totalorder %s292, 0
      %s295 = sadd.s32 %s294, 1
      %s296 = scalar_select %p293, %s294, %s295
      %p299 = pneg %p293
      %p300 = scmp.eq.s32.totalorder %s70, 1
      %p301 = por %p299, %p300
      %p302 = scmp.ne.s32.totalorder %s294, %s297
      %p303 = scmp.eq.s32.totalorder %s70, 0
      %p304 = por %p302, %p303
      %p305 = scmp.ne.s32.totalorder %s294, %s297
      %p306 = scmp.eq.s32.totalorder %s75, 1
      %p307 = por %p305, %p306
      %p308 = scmp.ne.s32.totalorder %s297, %s298
      %p309 = scmp.eq.s32.totalorder %s75, 0
      %p310 = por %p308, %p309
      %p311 = scmp.ne.s32.totalorder %s297, %s298
      %p312 = scmp.eq.s32.totalorder %s76, 1
      %p313 = por %p311, %p312
      %p315 = scmp.ne.s32.totalorder %s298, %s314
      %p316 = scmp.eq.s32.totalorder %s76, 0
      %p317 = por %p315, %p316
      %s318 = ssub.s32 %s70, %s77
      %p319 = scmp.eq.s32.totalorder %s318, 0
      %s321 = sadd.s32 %s320, 1
      %s322 = scalar_select %p319, %s320, %s321
      %p325 = pneg %p319
      %p326 = scmp.eq.s32.totalorder %s70, 1
      %p327 = por %p325, %p326
      %p328 = scmp.ne.s32.totalorder %s320, %s323
      %p329 = scmp.eq.s32.totalorder %s70, 0
      %p330 = por %p328, %p329
      %p331 = scmp.ne.s32.totalorder %s320, %s323
      %p332 = scmp.eq.s32.totalorder %s75, 1
      %p333 = por %p331, %p332
      %p334 = scmp.ne.s32.totalorder %s323, %s324
      %p335 = scmp.eq.s32.totalorder %s75, 0
      %p336 = por %p334, %p335
      %p337 = scmp.ne.s32.totalorder %s323, %s324
      %p338 = scmp.eq.s32.totalorder %s76, 1
      %p339 = por %p337, %p338
      %p341 = scmp.ne.s32.totalorder %s324, %s340
      %p342 = scmp.eq.s32.totalorder %s76, 0
      %p343 = por %p341, %p342
      %s344 = ssub.s32 %s70, %s77
      %p345 = scmp.eq.s32.totalorder %s344, 0
      %s347 = sadd.s32 %s346, 1
      %s348 = scalar_select %p345, %s346, %s347
      %p351 = pneg %p345
      %p352 = scmp.eq.s32.totalorder %s70, 1
      %p353 = por %p351, %p352
      %p354 = scmp.ne.s32.totalorder %s346, %s349
      %p355 = scmp.eq.s32.totalorder %s70, 0
      %p356 = por %p354, %p355
      %p357 = scmp.ne.s32.totalorder %s346, %s349
      %p358 = scmp.eq.s32.totalorder %s75, 1
      %p359 = por %p357, %p358
      %p360 = scmp.ne.s32.totalorder %s349, %s350
      %p361 = scmp.eq.s32.totalorder %s75, 0
      %p362 = por %p360, %p361
      %p363 = scmp.ne.s32.totalorder %s349, %s350
      %p364 = scmp.eq.s32.totalorder %s76, 1
      %p365 = por %p363, %p364
      %p367 = scmp.ne.s32.totalorder %s350, %s366
      %p368 = scmp.eq.s32.totalorder %s76, 0
      %p369 = por %p367, %p368
      %s370 = ssub.s32 %s70, %s77
      %p371 = scmp.eq.s32.totalorder %s370, 0
      %s373 = sadd.s32 %s372, 1
      %s374 = scalar_select %p371, %s372, %s373
      %p377 = pneg %p371
      %p378 = scmp.eq.s32.totalorder %s70, 1
      %p379 = por %p377, %p378
      %p380 = scmp.ne.s32.totalorder %s372, %s375
      %p381 = scmp.eq.s32.totalorder %s70, 0
      %p382 = por %p380, %p381
      %p383 = scmp.ne.s32.totalorder %s372, %s375
      %p384 = scmp.eq.s32.totalorder %s75, 1
      %p385 = por %p383, %p384
      %p386 = scmp.ne.s32.totalorder %s375, %s376
      %p387 = scmp.eq.s32.totalorder %s75, 0
      %p388 = por %p386, %p387
      %p389 = scmp.ne.s32.totalorder %s375, %s376
      %p390 = scmp.eq.s32.totalorder %s76, 1
      %p391 = por %p389, %p390
      %p393 = scmp.ne.s32.totalorder %s376, %s392
      %p394 = scmp.eq.s32.totalorder %s76, 0
      %p395 = por %p393, %p394
      %s396 = ssub.s32 %s70, %s77
      %p397 = scmp.eq.s32.totalorder %s396, 0
      %s399 = sadd.s32 %s398, 1
      %s400 = scalar_select %p397, %s398, %s399
      %p403 = pneg %p397
      %p404 = scmp.eq.s32.totalorder %s70, 1
      %p405 = por %p403, %p404
      %p406 = scmp.ne.s32.totalorder %s398, %s401
      %p407 = scmp.eq.s32.totalorder %s70, 0
      %p408 = por %p406, %p407
      %p409 = scmp.ne.s32.totalorder %s398, %s401
      %p410 = scmp.eq.s32.totalorder %s75, 1
      %p411 = por %p409, %p410
      %p412 = scmp.ne.s32.totalorder %s401, %s402
      %p413 = scmp.eq.s32.totalorder %s75, 0
      %p414 = por %p412, %p413
      %p415 = scmp.ne.s32.totalorder %s401, %s402
      %p416 = scmp.eq.s32.totalorder %s76, 1
      %p417 = por %p415, %p416
      %p419 = scmp.ne.s32.totalorder %s402, %s418
      %p420 = scmp.eq.s32.totalorder %s76, 0
      %p421 = por %p419, %p420
      %s422 = ssub.s32 %s70, %s77
      %p423 = scmp.eq.s32.totalorder %s422, 0
      %s425 = sadd.s32 %s424, 1
      %s426 = scalar_select %p423, %s424, %s425
      %p429 = pneg %p423
      %p430 = scmp.eq.s32.totalorder %s70, 1
      %p431 = por %p429, %p430
      %p432 = scmp.ne.s32.totalorder %s424, %s427
      %p433 = scmp.eq.s32.totalorder %s70, 0
      %p434 = por %p432, %p433
      %p435 = scmp.ne.s32.totalorder %s424, %s427
      %p436 = scmp.eq.s32.totalorder %s75, 1
      %p437 = por %p435, %p436
      %p438 = scmp.ne.s32.totalorder %s427, %s428
      %p439 = scmp.eq.s32.totalorder %s75, 0
      %p440 = por %p438, %p439
      %p441 = scmp.ne.s32.totalorder %s427, %s428
      %p442 = scmp.eq.s32.totalorder %s76, 1
      %p443 = por %p441, %p442
      %p445 = scmp.ne.s32.totalorder %s428, %s444
      %p446 = scmp.eq.s32.totalorder %s76, 0
      %p447 = por %p445, %p446
      %s448 = ssub.s32 %s70, %s77
      %p449 = scmp.eq.s32.totalorder %s448, 0
      %s451 = sadd.s32 %s450, 1
      %s452 = scalar_select %p449, %s450, %s451
      %p455 = pneg %p449
      %p456 = scmp.eq.s32.totalorder %s70, 1
      %p457 = por %p455, %p456
      %p458 = scmp.ne.s32.totalorder %s450, %s453
      %p459 = scmp.eq.s32.totalorder %s70, 0
      %p460 = por %p458, %p459
      %p461 = scmp.ne.s32.totalorder %s450, %s453
      %p462 = scmp.eq.s32.totalorder %s75, 1
      %p463 = por %p461, %p462
      %p464 = scmp.ne.s32.totalorder %s453, %s454
      %p465 = scmp.eq.s32.totalorder %s75, 0
      %p466 = por %p464, %p465
      %p467 = scmp.ne.s32.totalorder %s453, %s454
      %p468 = scmp.eq.s32.totalorder %s76, 1
      %p469 = por %p467, %p468
      %p471 = scmp.ne.s32.totalorder %s454, %s470
      %p472 = scmp.eq.s32.totalorder %s76, 0
      %p473 = por %p471, %p472
      %s474 = ssub.s32 %s70, %s77
      %p475 = scmp.eq.s32.totalorder %s474, 0
      %s477 = sadd.s32 %s476, 1
      %s478 = scalar_select %p475, %s476, %s477
      %p481 = pneg %p475
      %p482 = scmp.eq.s32.totalorder %s70, 1
      %p483 = por %p481, %p482
      %p484 = scmp.ne.s32.totalorder %s476, %s479
      %p485 = scmp.eq.s32.totalorder %s70, 0
      %p486 = por %p484, %p485
      %p487 = scmp.ne.s32.totalorder %s476, %s479
      %p488 = scmp.eq.s32.totalorder %s75, 1
      %p489 = por %p487, %p488
      %p490 = scmp.ne.s32.totalorder %s479, %s480
      %p491 = scmp.eq.s32.totalorder %s75, 0
      %p492 = por %p490, %p491
      %p493 = scmp.ne.s32.totalorder %s479, %s480
      %p494 = scmp.eq.s32.totalorder %s76, 1
      %p495 = por %p493, %p494
      %p497 = scmp.ne.s32.totalorder %s480, %s496
      %p498 = scmp.eq.s32.totalorder %s76, 0
      %p499 = por %p497, %p498
      %s500 = ssub.s32 %s70, %s77
      %p501 = scmp.eq.s32.totalorder %s500, 0
      %s503 = sadd.s32 %s502, 1
      %s504 = scalar_select %p501, %s502, %s503
      %p507 = pneg %p501
      %p508 = scmp.eq.s32.totalorder %s70, 1
      %p509 = por %p507, %p508
      %p510 = scmp.ne.s32.totalorder %s502, %s505
      %p511 = scmp.eq.s32.totalorder %s70, 0
      %p512 = por %p510, %p511
      %p513 = scmp.ne.s32.totalorder %s502, %s505
      %p514 = scmp.eq.s32.totalorder %s75, 1
      %p515 = por %p513, %p514
      %p516 = scmp.ne.s32.totalorder %s505, %s506
      %p517 = scmp.eq.s32.totalorder %s75, 0
      %p518 = por %p516, %p517
      %p519 = scmp.ne.s32.totalorder %s505, %s506
      %p520 = scmp.eq.s32.totalorder %s76, 1
      %p521 = por %p519, %p520
      %p523 = scmp.ne.s32.totalorder %s506, %s522
      %p524 = scmp.eq.s32.totalorder %s76, 0
      %p525 = por %p523, %p524
      %s526 = ssub.s32 %s70, %s77
      %p527 = scmp.eq.s32.totalorder %s526, 0
      %s529 = sadd.s32 %s528, 1
      %s530 = scalar_select %p527, %s528, %s529
      %p533 = pneg %p527
      %p534 = scmp.eq.s32.totalorder %s70, 1
      %p535 = por %p533, %p534
      %p536 = scmp.ne.s32.totalorder %s528, %s531
      %p537 = scmp.eq.s32.totalorder %s70, 0
      %p538 = por %p536, %p537
      %p539 = scmp.ne.s32.totalorder %s528, %s531
      %p540 = scmp.eq.s32.totalorder %s75, 1
      %p541 = por %p539, %p540
      %p542 = scmp.ne.s32.totalorder %s531, %s532
      %p543 = scmp.eq.s32.totalorder %s75, 0
      %p544 = por %p542, %p543
      %p545 = scmp.ne.s32.totalorder %s531, %s532
      %p546 = scmp.eq.s32.totalorder %s76, 1
      %p547 = por %p545, %p546
      %p549 = scmp.ne.s32.totalorder %s532, %s548
      %p550 = scmp.eq.s32.totalorder %s76, 0
      %p551 = por %p549, %p550
      %s552 = ssub.s32 %s70, %s77
      %p553 = scmp.eq.s32.totalorder %s552, 0
      %s555 = sadd.s32 %s554, 1
      %s556 = scalar_select %p553, %s554, %s555
      %p559 = pneg %p553
      %p560 = scmp.eq.s32.totalorder %s70, 1
      %p561 = por %p559, %p560
      %p562 = scmp.ne.s32.totalorder %s554, %s557
      %p563 = scmp.eq.s32.totalorder %s70, 0
      %p564 = por %p562, %p563
      %p565 = scmp.ne.s32.totalorder %s554, %s557
      %p566 = scmp.eq.s32.totalorder %s75, 1
      %p567 = por %p565, %p566
      %p568 = scmp.ne.s32.totalorder %s557, %s558
      %p569 = scmp.eq.s32.totalorder %s75, 0
      %p570 = por %p568, %p569
      %p571 = scmp.ne.s32.totalorder %s557, %s558
      %p572 = scmp.eq.s32.totalorder %s76, 1
      %p573 = por %p571, %p572
      %p575 = scmp.ne.s32.totalorder %s558, %s574
      %p576 = scmp.eq.s32.totalorder %s76, 0
      %p577 = por %p575, %p576
      %s578 = ssub.s32 %s70, %s77
      %p579 = scmp.eq.s32.totalorder %s578, 0
      %s581 = sadd.s32 %s580, 1
      %s582 = scalar_select %p579, %s580, %s581
      %p585 = pneg %p579
      %p586 = scmp.eq.s32.totalorder %s70, 1
      %p587 = por %p585, %p586
      %p588 = scmp.ne.s32.totalorder %s580, %s583
      %p589 = scmp.eq.s32.totalorder %s70, 0
      %p590 = por %p588, %p589
      %p591 = scmp.ne.s32.totalorder %s580, %s583
      %p592 = scmp.eq.s32.totalorder %s75, 1
      %p593 = por %p591, %p592
      %p594 = scmp.ne.s32.totalorder %s583, %s584
      %p595 = scmp.eq.s32.totalorder %s75, 0
      %p596 = por %p594, %p595
      %p597 = scmp.ne.s32.totalorder %s583, %s584
      %p598 = scmp.eq.s32.totalorder %s76, 1
      %p599 = por %p597, %p598
      %p601 = scmp.ne.s32.totalorder %s584, %s600
      %p602 = scmp.eq.s32.totalorder %s76, 0
      %p603 = por %p601, %p602
      %s604 = ssub.s32 %s70, %s77
      %p605 = scmp.eq.s32.totalorder %s604, 0
      %s607 = sadd.s32 %s606, 1
      %s608 = scalar_select %p605, %s606, %s607
      %p611 = pneg %p605
      %p612 = scmp.eq.s32.totalorder %s70, 1
      %p613 = por %p611, %p612
      %p614 = scmp.ne.s32.totalorder %s606, %s609
      %p615 = scmp.eq.s32.totalorder %s70, 0
      %p616 = por %p614, %p615
      %p617 = scmp.ne.s32.totalorder %s606, %s609
      %p618 = scmp.eq.s32.totalorder %s75, 1
      %p619 = por %p617, %p618
      %p620 = scmp.ne.s32.totalorder %s609, %s610
      %p621 = scmp.eq.s32.totalorder %s75, 0
      %p622 = por %p620, %p621
      %p623 = scmp.ne.s32.totalorder %s609, %s610
      %p624 = scmp.eq.s32.totalorder %s76, 1
      %p625 = por %p623, %p624
      %p627 = scmp.ne.s32.totalorder %s610, %s626
      %p628 = scmp.eq.s32.totalorder %s76, 0
      %p629 = por %p627, %p628
      %s630 = ssub.s32 %s70, %s77
      %p631 = scmp.eq.s32.totalorder %s630, 0
      %s633 = sadd.s32 %s632, 1
      %s634 = scalar_select %p631, %s632, %s633
      %p637 = pneg %p631
      %p638 = scmp.eq.s32.totalorder %s70, 1
      %p639 = por %p637, %p638
      %p640 = scmp.ne.s32.totalorder %s632, %s635
      %p641 = scmp.eq.s32.totalorder %s70, 0
      %p642 = por %p640, %p641
      %p643 = scmp.ne.s32.totalorder %s632, %s635
      %p644 = scmp.eq.s32.totalorder %s75, 1
      %p645 = por %p643, %p644
      %p646 = scmp.ne.s32.totalorder %s635, %s636
      %p647 = scmp.eq.s32.totalorder %s75, 0
      %p648 = por %p646, %p647
      %p649 = scmp.ne.s32.totalorder %s635, %s636
      %p650 = scmp.eq.s32.totalorder %s76, 1
      %p651 = por %p649, %p650
      %p653 = scmp.ne.s32.totalorder %s636, %s652
      %p654 = scmp.eq.s32.totalorder %s76, 0
      %p655 = por %p653, %p654
      %s656 = ssub.s32 %s70, %s77
      %p657 = scmp.eq.s32.totalorder %s656, 0
      %s659 = sadd.s32 %s658, 1
      %s660 = scalar_select %p657, %s658, %s659
      %p663 = pneg %p657
      %p664 = scmp.eq.s32.totalorder %s70, 1
      %p665 = por %p663, %p664
      %p666 = scmp.ne.s32.totalorder %s658, %s661
      %p667 = scmp.eq.s32.totalorder %s70, 0
      %p668 = por %p666, %p667
      %p669 = scmp.ne.s32.totalorder %s658, %s661
      %p670 = scmp.eq.s32.totalorder %s75, 1
      %p671 = por %p669, %p670
      %p672 = scmp.ne.s32.totalorder %s661, %s662
      %p673 = scmp.eq.s32.totalorder %s75, 0
      %p674 = por %p672, %p673
      %p675 = scmp.ne.s32.totalorder %s661, %s662
      %p676 = scmp.eq.s32.totalorder %s76, 1
      %p677 = por %p675, %p676
      %p679 = scmp.ne.s32.totalorder %s662, %s678
      %p680 = scmp.eq.s32.totalorder %s76, 0
      %p681 = por %p679, %p680
      %s682 = ssub.s32 %s70, %s77
      %p683 = scmp.eq.s32.totalorder %s682, 0
      %s685 = sadd.s32 %s684, 1
      %s686 = scalar_select %p683, %s684, %s685
      %p689 = pneg %p683
      %p690 = scmp.eq.s32.totalorder %s70, 1
      %p691 = por %p689, %p690
      %p692 = scmp.ne.s32.totalorder %s684, %s687
      %p693 = scmp.eq.s32.totalorder %s70, 0
      %p694 = por %p692, %p693
      %p695 = scmp.ne.s32.totalorder %s684, %s687
      %p696 = scmp.eq.s32.totalorder %s75, 1
      %p697 = por %p695, %p696
      %p698 = scmp.ne.s32.totalorder %s687, %s688
      %p699 = scmp.eq.s32.totalorder %s75, 0
      %p700 = por %p698, %p699
      %p701 = scmp.ne.s32.totalorder %s687, %s688
      %p702 = scmp.eq.s32.totalorder %s76, 1
      %p703 = por %p701, %p702
      %p705 = scmp.ne.s32.totalorder %s688, %s704
      %p706 = scmp.eq.s32.totalorder %s76, 0
      %p707 = por %p705, %p706
      %s708 = ssub.s32 %s70, %s77
      %p709 = scmp.eq.s32.totalorder %s708, 0
      %s711 = sadd.s32 %s710, 1
      %s712 = scalar_select %p709, %s710, %s711
      %p715 = pneg %p709
      %p716 = scmp.eq.s32.totalorder %s70, 1
      %p717 = por %p715, %p716
      %p718 = scmp.ne.s32.totalorder %s710, %s713
      %p719 = scmp.eq.s32.totalorder %s70, 0
      %p720 = por %p718, %p719
      %p721 = scmp.ne.s32.totalorder %s710, %s713
      %p722 = scmp.eq.s32.totalorder %s75, 1
      %p723 = por %p721, %p722
      %p724 = scmp.ne.s32.totalorder %s713, %s714
      %p725 = scmp.eq.s32.totalorder %s75, 0
      %p726 = por %p724, %p725
      %p727 = scmp.ne.s32.totalorder %s713, %s714
      %p728 = scmp.eq.s32.totalorder %s76, 1
      %p729 = por %p727, %p728
      %p731 = scmp.ne.s32.totalorder %s714, %s730
      %p732 = scmp.eq.s32.totalorder %s76, 0
      %p733 = por %p731, %p732
      %s734 = ssub.s32 %s70, %s77
      %p735 = scmp.eq.s32.totalorder %s734, 0
      %s737 = sadd.s32 %s736, 1
      %s738 = scalar_select %p735, %s736, %s737
      %p741 = pneg %p735
      %p742 = scmp.eq.s32.totalorder %s70, 1
      %p743 = por %p741, %p742
      %p744 = scmp.ne.s32.totalorder %s736, %s739
      %p745 = scmp.eq.s32.totalorder %s70, 0
      %p746 = por %p744, %p745
      %p747 = scmp.ne.s32.totalorder %s736, %s739
      %p748 = scmp.eq.s32.totalorder %s75, 1
      %p749 = por %p747, %p748
      %p750 = scmp.ne.s32.totalorder %s739, %s740
      %p751 = scmp.eq.s32.totalorder %s75, 0
      %p752 = por %p750, %p751
      %p753 = scmp.ne.s32.totalorder %s739, %s740
      %p754 = scmp.eq.s32.totalorder %s76, 1
      %p755 = por %p753, %p754
      %p757 = scmp.ne.s32.totalorder %s740, %s756
      %p758 = scmp.eq.s32.totalorder %s76, 0
      %p759 = por %p757, %p758
      %s760 = ssub.s32 %s70, %s77
      %p761 = scmp.eq.s32.totalorder %s760, 0
      %s763 = sadd.s32 %s762, 1
      %s764 = scalar_select %p761, %s762, %s763
      %p767 = pneg %p761
      %p768 = scmp.eq.s32.totalorder %s70, 1
      %p769 = por %p767, %p768
      %p770 = scmp.ne.s32.totalorder %s762, %s765
      %p771 = scmp.eq.s32.totalorder %s70, 0
      %p772 = por %p770, %p771
      %p773 = scmp.ne.s32.totalorder %s762, %s765
      %p774 = scmp.eq.s32.totalorder %s75, 1
      %p775 = por %p773, %p774
      %p776 = scmp.ne.s32.totalorder %s765, %s766
      %p777 = scmp.eq.s32.totalorder %s75, 0
      %p778 = por %p776, %p777
      %p779 = scmp.ne.s32.totalorder %s765, %s766
      %p780 = scmp.eq.s32.totalorder %s76, 1
      %p781 = por %p779, %p780
      %p783 = scmp.ne.s32.totalorder %s766, %s782
      %p784 = scmp.eq.s32.totalorder %s76, 0
      %p785 = por %p783, %p784
      %s787 = sadd.s32 %s786, 1
      %p790 = scmp.eq.s32.totalorder %s70, 1
      %p791 = scmp.ne.s32.totalorder %s786, %s788
      %p792 = scmp.eq.s32.totalorder %s70, 0
      %p793 = por %p791, %p792
      %p794 = scmp.ne.s32.totalorder %s786, %s788
      %p795 = scmp.eq.s32.totalorder %s75, 1
      %p796 = por %p794, %p795
      %p797 = scmp.ne.s32.totalorder %s788, %s789
      %p798 = scmp.eq.s32.totalorder %s75, 0
      %p799 = por %p797, %p798
      %p800 = scmp.ne.s32.totalorder %s788, %s789
      %p801 = scmp.eq.s32.totalorder %s76, 1
      %p802 = por %p800, %p801
      %p804 = scmp.ne.s32.totalorder %s789, %s803
      %p805 = scmp.eq.s32.totalorder %s76, 0
      %p806 = por %p804, %p805
      %s808 = sadd.s32 %s807, 1
      %p811 = scmp.eq.s32.totalorder %s70, 1
      %p812 = scmp.ne.s32.totalorder %s807, %s809
      %p813 = scmp.eq.s32.totalorder %s70, 0
      %p814 = por %p812, %p813
      %p815 = scmp.ne.s32.totalorder %s807, %s809
      %p816 = scmp.eq.s32.totalorder %s75, 1
      %p817 = por %p815, %p816
      %p818 = scmp.ne.s32.totalorder %s809, %s810
      %p819 = scmp.eq.s32.totalorder %s75, 0
      %p820 = por %p818, %p819
      %p821 = scmp.ne.s32.totalorder %s809, %s810
      %p822 = scmp.eq.s32.totalorder %s76, 1
      %p823 = por %p821, %p822
      %p825 = scmp.ne.s32.totalorder %s810, %s824
      %p826 = scmp.eq.s32.totalorder %s76, 0
      %p827 = por %p825, %p826
      %s829 = sadd.s32 %s828, 1
      %p832 = scmp.eq.s32.totalorder %s70, 1
      %p833 = scmp.ne.s32.totalorder %s828, %s830
      %p834 = scmp.eq.s32.totalorder %s70, 0
      %p835 = por %p833, %p834
      %p836 = scmp.ne.s32.totalorder %s828, %s830
      %p837 = scmp.eq.s32.totalorder %s75, 1
      %p838 = por %p836, %p837
      %p839 = scmp.ne.s32.totalorder %s830, %s831
      %p840 = scmp.eq.s32.totalorder %s75, 0
      %p841 = por %p839, %p840
      %p842 = scmp.ne.s32.totalorder %s830, %s831
      %p843 = scmp.eq.s32.totalorder %s76, 1
      %p844 = por %p842, %p843
      %p846 = scmp.ne.s32.totalorder %s831, %s845
      %p847 = scmp.eq.s32.totalorder %s76, 0
      %p848 = por %p846, %p847
      %p849 = scmp.le.s32.totalorder 1, %s70
      %p850 = scmp.lt.s32.totalorder %s70, 3
      %p851 = pnand %p849, %p850
      %p852 = pneg %p851
      // Predicated region
      $region9: #{transformer_forward.3} parent=5 // pred_check
        _
      $region10: #{transformer_forward.3} parent=5 // pred_check_branch
        %854 = sbr.rel (%p851) target = $region12
      $region11: #{transformer_forward.3} parent=5 // pred_region
        %s855 = ssub.s32 %s70, 1
        // Predicated region
        $region13: #{transformer_forward.3} parent=11 // pred_check
          %p856 = pneg %p91
        $region14: #{transformer_forward.3} parent=11 // pred_check_branch
          %858 = sbr.rel (%p856) target = $region16
        $region15: #{transformer_forward.3} parent=11 // pred_region
          _
        $region16: #{transformer_forward.3} parent=11 // pred_fallthru
          _
        // Predicated region
        $region17: #{transformer_forward.3} parent=11 // pred_check
          %p859 = pneg %p112
        $region18: #{transformer_forward.3} parent=11 // pred_check_branch
          %861 = sbr.rel (%p859) target = $region20
        $region19: #{transformer_forward.3} parent=11 // pred_region
          _
        $region20: #{transformer_forward.3} parent=11 // pred_fallthru
          _
        // Predicated region
        $region21: #{transformer_forward.3} parent=11 // pred_check
          %p862 = pneg %p133
        $region22: #{transformer_forward.3} parent=11 // pred_check_branch
          %864 = sbr.rel (%p862) target = $region24
        $region23: #{transformer_forward.3} parent=11 // pred_region
          _
        $region24: #{transformer_forward.3} parent=11 // pred_fallthru
          _
        // Predicated region
        $region25: #{transformer_forward.3} parent=11 // pred_check
          %p865 = pneg %p154
        $region26: #{transformer_forward.3} parent=11 // pred_check_branch
          %867 = sbr.rel (%p865) target = $region28
        $region27: #{transformer_forward.3} parent=11 // pred_region
          _
        $region28: #{transformer_forward.3} parent=11 // pred_fallthru
          _
        // Predicated region
        $region29: #{transformer_forward.3} parent=11 // pred_check
          %p868 = pneg %p799
        $region30: #{transformer_forward.3} parent=11 // pred_check_branch
          %870 = sbr.rel (%p868) target = $region32
        $region31: #{transformer_forward.3} parent=11 // pred_region
          %s872 = ssub.s32 16, 16
          %873 = vsyncadd [#allocation3], %s872
          %s875 = sshll.u32 [#allocation2], 4
          %s876 = int_to_ptr.vmem [resolvable:$true] %s875
          %878 = dma.hbm_to_vmem [thread:$0]  %s57, 16, %s876, [#allocation3]
        $region32: #{transformer_forward.3} parent=11 // pred_fallthru
          _
        // Predicated region
        $region33: #{transformer_forward.3} parent=11 // pred_check
          %p879 = pneg %p820
        $region34: #{transformer_forward.3} parent=11 // pred_check_branch
          %881 = sbr.rel (%p879) target = $region36
        $region35: #{transformer_forward.3} parent=11 // pred_region
          %s883 = ssub.s32 16, 16
          %884 = vsyncadd [#allocation6], %s883
          %s886 = sshll.u32 [#allocation5], 4
          %s887 = int_to_ptr.vmem [resolvable:$true] %s886
          %889 = dma.hbm_to_vmem [thread:$0]  %s59, 16, %s887, [#allocation6]
        $region36: #{transformer_forward.3} parent=11 // pred_fallthru
          _
      $region12: #{transformer_forward.3} parent=5 // pred_fallthru
        _
      %p890 = scmp.lt.s32.totalorder %s70, 2
      // Predicated region
      $region37: #{transformer_forward.3} parent=5 // pred_check
        %p891 = pneg %p890
      $region38: #{transformer_forward.3} parent=5 // pred_check_branch
        %893 = sbr.rel (%p891) target = $region40
      $region39: #{transformer_forward.3} parent=5 // pred_region
        // Predicated region
        $region41: #{transformer_forward.3} parent=39 // pred_check
          %p894 = pneg %p174
        $region42: #{transformer_forward.3} parent=39 // pred_check_branch
          %896 = sbr.rel (%p894) target = $region44
        $region43: #{transformer_forward.3} parent=39 // pred_region
          %p897 = scmp.lt.s32.totalorder %s70, 1
          %s898 = scalar_select %p897, %s70, 1
          %s899 = smul.addr %s898, 4
          %s900 = smul.addr %s899, 4
          %s901 = scalar_lea.vmem %s9, %s900
        $region44: #{transformer_forward.3} parent=39 // pred_fallthru
          _
        // Predicated region
        $region45: #{transformer_forward.3} parent=39 // pred_check
          %p902 = pneg %p200
        $region46: #{transformer_forward.3} parent=39 // pred_check_branch
          %904 = sbr.rel (%p902) target = $region48
        $region47: #{transformer_forward.3} parent=39 // pred_region
          %p905 = scmp.lt.s32.totalorder %s70, 1
          %s906 = scalar_select %p905, %s70, 1
          %s907 = scalar_lea.vmem %s11, %s906
        $region48: #{transformer_forward.3} parent=39 // pred_fallthru
          _
        // Predicated region
        $region49: #{transformer_forward.3} parent=39 // pred_check
          %p908 = pneg %p226
        $region50: #{transformer_forward.3} parent=39 // pred_check_branch
          %910 = sbr.rel (%p908) target = $region52
        $region51: #{transformer_forward.3} parent=39 // pred_region
          %p911 = scmp.lt.s32.totalorder %s70, 1
          %s912 = scalar_select %p911, %s70, 1
          %s913 = smul.addr %s912, 4
          %s914 = smul.addr %s913, 4
          %s915 = scalar_lea.vmem %s13, %s914
        $region52: #{transformer_forward.3} parent=39 // pred_fallthru
          _
        // Predicated region
        $region53: #{transformer_forward.3} parent=39 // pred_check
          %p916 = pneg %p252
        $region54: #{transformer_forward.3} parent=39 // pred_check_branch
          %918 = sbr.rel (%p916) target = $region56
        $region55: #{transformer_forward.3} parent=39 // pred_region
          %p919 = scmp.lt.s32.totalorder %s70, 1
          %s920 = scalar_select %p919, %s70, 1
          %s921 = scalar_lea.vmem %s15, %s920
        $region56: #{transformer_forward.3} parent=39 // pred_fallthru
          _
        // Predicated region
        $region57: #{transformer_forward.3} parent=39 // pred_check
          %p922 = pneg %p278
        $region58: #{transformer_forward.3} parent=39 // pred_check_branch
          %924 = sbr.rel (%p922) target = $region60
        $region59: #{transformer_forward.3} parent=39 // pred_region
          %p925 = scmp.lt.s32.totalorder %s70, 1
          %s926 = scalar_select %p925, %s70, 1
          %s927 = smul.addr %s926, 4
          %s928 = smul.addr %s927, 4
          %s929 = scalar_lea.vmem %s17, %s928
        $region60: #{transformer_forward.3} parent=39 // pred_fallthru
          _
        // Predicated region
        $region61: #{transformer_forward.3} parent=39 // pred_check
          %p930 = pneg %p304
        $region62: #{transformer_forward.3} parent=39 // pred_check_branch
          %932 = sbr.rel (%p930) target = $region64
        $region63: #{transformer_forward.3} parent=39 // pred_region
          %p933 = scmp.lt.s32.totalorder %s70, 1
          %s934 = scalar_select %p933, %s70, 1
          %s935 = scalar_lea.vmem %s19, %s934
        $region64: #{transformer_forward.3} parent=39 // pred_fallthru
          _
        // Predicated region
        $region65: #{transformer_forward.3} parent=39 // pred_check
          %p936 = pneg %p330
        $region66: #{transformer_forward.3} parent=39 // pred_check_branch
          %938 = sbr.rel (%p936) target = $region68
        $region67: #{transformer_forward.3} parent=39 // pred_region
          %p939 = scmp.lt.s32.totalorder %s70, 1
          %s940 = scalar_select %p939, %s70, 1
          %s941 = scalar_lea.vmem %s21, %s940
        $region68: #{transformer_forward.3} parent=39 // pred_fallthru
          _
        // Predicated region
        $region69: #{transformer_forward.3} parent=39 // pred_check
          %p942 = pneg %p356
        $region70: #{transformer_forward.3} parent=39 // pred_check_branch
          %944 = sbr.rel (%p942) target = $region72
        $region71: #{transformer_forward.3} parent=39 // pred_region
          %p945 = scmp.lt.s32.totalorder %s70, 1
          %s946 = scalar_select %p945, %s70, 1
          %s947 = scalar_lea.vmem %s23, %s946
        $region72: #{transformer_forward.3} parent=39 // pred_fallthru
          _
        // Predicated region
        $region73: #{transformer_forward.3} parent=39 // pred_check
          %p948 = pneg %p382
        $region74: #{transformer_forward.3} parent=39 // pred_check_branch
          %950 = sbr.rel (%p948) target = $region76
        $region75: #{transformer_forward.3} parent=39 // pred_region
          %p951 = scmp.lt.s32.totalorder %s70, 1
          %s952 = scalar_select %p951, %s70, 1
          %s953 = smul.addr %s952, 4
          %s954 = smul.addr %s953, 4
          %s955 = scalar_lea.vmem %s25, %s954
        $region76: #{transformer_forward.3} parent=39 // pred_fallthru
          _
        // Predicated region
        $region77: #{transformer_forward.3} parent=39 // pred_check
          %p956 = pneg %p408
        $region78: #{transformer_forward.3} parent=39 // pred_check_branch
          %958 = sbr.rel (%p956) target = $region80
        $region79: #{transformer_forward.3} parent=39 // pred_region
          %p959 = scmp.lt.s32.totalorder %s70, 1
          %s960 = scalar_select %p959, %s70, 1
          %s961 = scalar_lea.vmem %s27, %s960
        $region80: #{transformer_forward.3} parent=39 // pred_fallthru
          _
        // Predicated region
        $region81: #{transformer_forward.3} parent=39 // pred_check
          %p962 = pneg %p434
        $region82: #{transformer_forward.3} parent=39 // pred_check_branch
          %964 = sbr.rel (%p962) target = $region84
        $region83: #{transformer_forward.3} parent=39 // pred_region
          %p965 = scmp.lt.s32.totalorder %s70, 1
          %s966 = scalar_select %p965, %s70, 1
          %s967 = smul.addr %s966, 4
          %s968 = smul.addr %s967, 4
          %s969 = scalar_lea.vmem %s29, %s968
        $region84: #{transformer_forward.3} parent=39 // pred_fallthru
          _
        // Predicated region
        $region85: #{transformer_forward.3} parent=39 // pred_check
          %p970 = pneg %p460
        $region86: #{transformer_forward.3} parent=39 // pred_check_branch
          %972 = sbr.rel (%p970) target = $region88
        $region87: #{transformer_forward.3} parent=39 // pred_region
          %p973 = scmp.lt.s32.totalorder %s70, 1
          %s974 = scalar_select %p973, %s70, 1
          %s975 = scalar_lea.vmem %s31, %s974
        $region88: #{transformer_forward.3} parent=39 // pred_fallthru
          _
        // Predicated region
        $region89: #{transformer_forward.3} parent=39 // pred_check
          %p976 = pneg %p486
        $region90: #{transformer_forward.3} parent=39 // pred_check_branch
          %978 = sbr.rel (%p976) target = $region92
        $region91: #{transformer_forward.3} parent=39 // pred_region
          %p979 = scmp.lt.s32.totalorder %s70, 1
          %s980 = scalar_select %p979, %s70, 1
          %s981 = smul.addr %s980, 4
          %s982 = smul.addr %s981, 4
          %s983 = scalar_lea.vmem %s33, %s982
        $region92: #{transformer_forward.3} parent=39 // pred_fallthru
          _
        // Predicated region
        $region93: #{transformer_forward.3} parent=39 // pred_check
          %p984 = pneg %p512
        $region94: #{transformer_forward.3} parent=39 // pred_check_branch
          %986 = sbr.rel (%p984) target = $region96
        $region95: #{transformer_forward.3} parent=39 // pred_region
          %p987 = scmp.lt.s32.totalorder %s70, 1
          %s988 = scalar_select %p987, %s70, 1
          %s989 = scalar_lea.vmem %s35, %s988
        $region96: #{transformer_forward.3} parent=39 // pred_fallthru
          _
        // Predicated region
        $region97: #{transformer_forward.3} parent=39 // pred_check
          %p990 = pneg %p538
        $region98: #{transformer_forward.3} parent=39 // pred_check_branch
          %992 = sbr.rel (%p990) target = $region100
        $region99: #{transformer_forward.3} parent=39 // pred_region
          %p993 = scmp.lt.s32.totalorder %s70, 1
          %s994 = scalar_select %p993, %s70, 1
          %s995 = smul.addr %s994, 4
          %s996 = smul.addr %s995, 4
          %s997 = scalar_lea.vmem %s37, %s996
        $region100: #{transformer_forward.3} parent=39 // pred_fallthru
          _
        // Predicated region
        $region101: #{transformer_forward.3} parent=39 // pred_check
          %p998 = pneg %p564
        $region102: #{transformer_forward.3} parent=39 // pred_check_branch
          %1000 = sbr.rel (%p998) target = $region104
        $region103: #{transformer_forward.3} parent=39 // pred_region
          %p1001 = scmp.lt.s32.totalorder %s70, 1
          %s1002 = scalar_select %p1001, %s70, 1
          %s1003 = scalar_lea.vmem %s39, %s1002
        $region104: #{transformer_forward.3} parent=39 // pred_fallthru
          _
        // Predicated region
        $region105: #{transformer_forward.3} parent=39 // pred_check
          %p1004 = pneg %p590
        $region106: #{transformer_forward.3} parent=39 // pred_check_branch
          %1006 = sbr.rel (%p1004) target = $region108
        $region107: #{transformer_forward.3} parent=39 // pred_region
          %p1007 = scmp.lt.s32.totalorder %s70, 1
          %s1008 = scalar_select %p1007, %s70, 1
          %s1009 = scalar_lea.vmem %s41, %s1008
        $region108: #{transformer_forward.3} parent=39 // pred_fallthru
          _
        // Predicated region
        $region109: #{transformer_forward.3} parent=39 // pred_check
          %p1010 = pneg %p616
        $region110: #{transformer_forward.3} parent=39 // pred_check_branch
          %1012 = sbr.rel (%p1010) target = $region112
        $region111: #{transformer_forward.3} parent=39 // pred_region
          %p1013 = scmp.lt.s32.totalorder %s70, 1
          %s1014 = scalar_select %p1013, %s70, 1
          %s1015 = scalar_lea.vmem %s43, %s1014
        $region112: #{transformer_forward.3} parent=39 // pred_fallthru
          _
        // Predicated region
        $region113: #{transformer_forward.3} parent=39 // pred_check
          %p1016 = pneg %p642
        $region114: #{transformer_forward.3} parent=39 // pred_check_branch
          %1018 = sbr.rel (%p1016) target = $region116
        $region115: #{transformer_forward.3} parent=39 // pred_region
          %p1019 = scmp.lt.s32.totalorder %s70, 1
          %s1020 = scalar_select %p1019, %s70, 1
          %s1021 = smul.addr %s1020, 4
          %s1022 = smul.addr %s1021, 4
          %s1023 = scalar_lea.vmem %s45, %s1022
        $region116: #{transformer_forward.3} parent=39 // pred_fallthru
          _
        // Predicated region
        $region117: #{transformer_forward.3} parent=39 // pred_check
          %p1024 = pneg %p668
        $region118: #{transformer_forward.3} parent=39 // pred_check_branch
          %1026 = sbr.rel (%p1024) target = $region120
        $region119: #{transformer_forward.3} parent=39 // pred_region
          %p1027 = scmp.lt.s32.totalorder %s70, 1
          %s1028 = scalar_select %p1027, %s70, 1
          %s1029 = scalar_lea.vmem %s47, %s1028
        $region120: #{transformer_forward.3} parent=39 // pred_fallthru
          _
        // Predicated region
        $region121: #{transformer_forward.3} parent=39 // pred_check
          %p1030 = pneg %p694
        $region122: #{transformer_forward.3} parent=39 // pred_check_branch
          %1032 = sbr.rel (%p1030) target = $region124
        $region123: #{transformer_forward.3} parent=39 // pred_region
          %p1033 = scmp.lt.s32.totalorder %s70, 1
          %s1034 = scalar_select %p1033, %s70, 1
          %s1035 = smul.addr %s1034, 8
          %s1036 = smul.addr %s1035, 4
          %s1037 = scalar_lea.vmem %s49, %s1036
        $region124: #{transformer_forward.3} parent=39 // pred_fallthru
          _
        // Predicated region
        $region125: #{transformer_forward.3} parent=39 // pred_check
          %p1038 = pneg %p720
        $region126: #{transformer_forward.3} parent=39 // pred_check_branch
          %1040 = sbr.rel (%p1038) target = $region128
        $region127: #{transformer_forward.3} parent=39 // pred_region
          %p1041 = scmp.lt.s32.totalorder %s70, 1
          %s1042 = scalar_select %p1041, %s70, 1
          %s1043 = scalar_lea.vmem %s51, %s1042
        $region128: #{transformer_forward.3} parent=39 // pred_fallthru
          _
        // Predicated region
        $region129: #{transformer_forward.3} parent=39 // pred_check
          %p1044 = pneg %p746
        $region130: #{transformer_forward.3} parent=39 // pred_check_branch
          %1046 = sbr.rel (%p1044) target = $region132
        $region131: #{transformer_forward.3} parent=39 // pred_region
          %p1047 = scmp.lt.s32.totalorder %s70, 1
          %s1048 = scalar_select %p1047, %s70, 1
          %s1049 = scalar_lea.vmem %s53, %s1048
        $region132: #{transformer_forward.3} parent=39 // pred_fallthru
          _
        // Predicated region
        $region133: #{transformer_forward.3} parent=39 // pred_check
          %p1050 = pneg %p772
        $region134: #{transformer_forward.3} parent=39 // pred_check_branch
          %1052 = sbr.rel (%p1050) target = $region136
        $region135: #{transformer_forward.3} parent=39 // pred_region
          %p1053 = scmp.lt.s32.totalorder %s70, 1
          %s1054 = scalar_select %p1053, %s70, 1
          %s1055 = scalar_lea.vmem %s55, %s1054
        $region136: #{transformer_forward.3} parent=39 // pred_fallthru
          _
      $region40: #{transformer_forward.3} parent=5 // pred_fallthru
        _
      %p1056 = scmp.le.s32.totalorder 1, %s70
      %p1057 = scmp.lt.s32.totalorder %s70, 3
      %p1058 = pnand %p1056, %p1057
      %p1059 = pneg %p1058
      // Predicated region
      $region137: #{transformer_forward.3} parent=5 // pred_check
        _
      $region138: #{transformer_forward.3} parent=5 // pred_check_branch
        %1061 = sbr.rel (%p1058) target = $region140
      $region139: #{transformer_forward.3} parent=5 // pred_region
        %s1062 = ssub.s32 %s70, 1
        // Predicated region
        $region141: #{transformer_forward.3} parent=139 // pred_check
          %p1063 = pneg %p799
        $region142: #{transformer_forward.3} parent=139 // pred_check_branch
          %1065 = sbr.rel (%p1063) target = $region144
        $region143: #{transformer_forward.3} parent=139 // pred_region
          %1066 = dma.done [#allocation3], 16
        $region144: #{transformer_forward.3} parent=139 // pred_fallthru
          _
        // Predicated region
        $region145: #{transformer_forward.3} parent=139 // pred_check
          %p1067 = pneg %p820
        $region146: #{transformer_forward.3} parent=139 // pred_check_branch
          %1069 = sbr.rel (%p1067) target = $region148
        $region147: #{transformer_forward.3} parent=139 // pred_region
          %1070 = dma.done [#allocation6], 16
        $region148: #{transformer_forward.3} parent=139 // pred_fallthru
          _
        %p1071 = pneg %p91
        %p1072 = pneg %p88
        %p1073 = pneg %p112
        %p1074 = pneg %p109
        %p1075 = pneg %p133
        %p1076 = pneg %p130
        %p1077 = pneg %p154
        %p1078 = pneg %p151
        %p1079 = scmp.lt.s32.totalorder %s75, 1
        %s1080 = scalar_select %p1079, %s75, 1
        %s1081 = smul.addr %s1080, 4
        %s1082 = smul.addr %s1081, 4
        %s1083 = scalar_lea.vmem %s9, %s1082
        %p1084 = pneg %p180
        %p1085 = pneg %p177
        %p1086 = scmp.lt.s32.totalorder %s75, 1
        %s1087 = scalar_select %p1086, %s75, 1
        %s1088 = scalar_lea.vmem %s11, %s1087
        %p1089 = pneg %p206
        %p1090 = pneg %p203
        %p1091 = scmp.lt.s32.totalorder %s75, 1
        %s1092 = scalar_select %p1091, %s75, 1
        %s1093 = smul.addr %s1092, 4
        %s1094 = smul.addr %s1093, 4
        %s1095 = scalar_lea.vmem %s13, %s1094
        %p1096 = pneg %p232
        %p1097 = pneg %p229
        %p1098 = scmp.lt.s32.totalorder %s75, 1
        %s1099 = scalar_select %p1098, %s75, 1
        %s1100 = scalar_lea.vmem %s15, %s1099
        %p1101 = pneg %p258
        %p1102 = pneg %p255
        %p1103 = scmp.lt.s32.totalorder %s75, 1
        %s1104 = scalar_select %p1103, %s75, 1
        %s1105 = smul.addr %s1104, 4
        %s1106 = smul.addr %s1105, 4
        %s1107 = scalar_lea.vmem %s17, %s1106
        %p1108 = pneg %p284
        %p1109 = pneg %p281
        %p1110 = scmp.lt.s32.totalorder %s75, 1
        %s1111 = scalar_select %p1110, %s75, 1
        %s1112 = scalar_lea.vmem %s19, %s1111
        %p1113 = pneg %p310
        %p1114 = pneg %p307
        %p1115 = scmp.lt.s32.totalorder %s75, 1
        %s1116 = scalar_select %p1115, %s75, 1
        %s1117 = scalar_lea.vmem %s21, %s1116
        %p1118 = pneg %p336
        %p1119 = pneg %p333
        %p1120 = scmp.lt.s32.totalorder %s75, 1
        %s1121 = scalar_select %p1120, %s75, 1
        %s1122 = scalar_lea.vmem %s23, %s1121
        %p1123 = pneg %p362
        %p1124 = pneg %p359
        %p1125 = scmp.lt.s32.totalorder %s75, 1
        %s1126 = scalar_select %p1125, %s75, 1
        %s1127 = smul.addr %s1126, 4
        %s1128 = smul.addr %s1127, 4
        %s1129 = scalar_lea.vmem %s25, %s1128
        %p1130 = pneg %p388
        %p1131 = pneg %p385
        %p1132 = scmp.lt.s32.totalorder %s75, 1
        %s1133 = scalar_select %p1132, %s75, 1
        %s1134 = scalar_lea.vmem %s27, %s1133
        %p1135 = pneg %p414
        %p1136 = pneg %p411
        %p1137 = scmp.lt.s32.totalorder %s75, 1
        %s1138 = scalar_select %p1137, %s75, 1
        %s1139 = smul.addr %s1138, 4
        %s1140 = smul.addr %s1139, 4
        %s1141 = scalar_lea.vmem %s29, %s1140
        %p1142 = pneg %p440
        %p1143 = pneg %p437
        %p1144 = scmp.lt.s32.totalorder %s75, 1
        %s1145 = scalar_select %p1144, %s75, 1
        %s1146 = scalar_lea.vmem %s31, %s1145
        %p1147 = pneg %p466
        %p1148 = pneg %p463
        %p1149 = scmp.lt.s32.totalorder %s75, 1
        %s1150 = scalar_select %p1149, %s75, 1
        %s1151 = smul.addr %s1150, 4
        %s1152 = smul.addr %s1151, 4
        %s1153 = scalar_lea.vmem %s33, %s1152
        %p1154 = pneg %p492
        %p1155 = pneg %p489
        %p1156 = scmp.lt.s32.totalorder %s75, 1
        %s1157 = scalar_select %p1156, %s75, 1
        %s1158 = scalar_lea.vmem %s35, %s1157
        %p1159 = pneg %p518
        %p1160 = pneg %p515
        %p1161 = scmp.lt.s32.totalorder %s75, 1
        %s1162 = scalar_select %p1161, %s75, 1
        %s1163 = smul.addr %s1162, 4
        %s1164 = smul.addr %s1163, 4
        %s1165 = scalar_lea.vmem %s37, %s1164
        %p1166 = pneg %p544
        %p1167 = pneg %p541
        %p1168 = scmp.lt.s32.totalorder %s75, 1
        %s1169 = scalar_select %p1168, %s75, 1
        %s1170 = scalar_lea.vmem %s39, %s1169
        %p1171 = pneg %p570
        %p1172 = pneg %p567
        %p1173 = scmp.lt.s32.totalorder %s75, 1
        %s1174 = scalar_select %p1173, %s75, 1
        %s1175 = scalar_lea.vmem %s41, %s1174
        %p1176 = pneg %p596
        %p1177 = pneg %p593
        %p1178 = scmp.lt.s32.totalorder %s75, 1
        %s1179 = scalar_select %p1178, %s75, 1
        %s1180 = scalar_lea.vmem %s43, %s1179
        %p1181 = pneg %p622
        %p1182 = pneg %p619
        %p1183 = scmp.lt.s32.totalorder %s75, 1
        %s1184 = scalar_select %p1183, %s75, 1
        %s1185 = smul.addr %s1184, 4
        %s1186 = smul.addr %s1185, 4
        %s1187 = scalar_lea.vmem %s45, %s1186
        %p1188 = pneg %p648
        %p1189 = pneg %p645
        %p1190 = scmp.lt.s32.totalorder %s75, 1
        %s1191 = scalar_select %p1190, %s75, 1
        %s1192 = scalar_lea.vmem %s47, %s1191
        %p1193 = pneg %p674
        %p1194 = pneg %p671
        %p1195 = scmp.lt.s32.totalorder %s75, 1
        %s1196 = scalar_select %p1195, %s75, 1
        %s1197 = smul.addr %s1196, 8
        %s1198 = smul.addr %s1197, 4
        %s1199 = scalar_lea.vmem %s49, %s1198
        %p1200 = pneg %p700
        %p1201 = pneg %p697
        %p1202 = scmp.lt.s32.totalorder %s75, 1
        %s1203 = scalar_select %p1202, %s75, 1
        %s1204 = scalar_lea.vmem %s51, %s1203
        %p1205 = pneg %p726
        %p1206 = pneg %p723
        %p1207 = scmp.lt.s32.totalorder %s75, 1
        %s1208 = scalar_select %p1207, %s75, 1
        %s1209 = scalar_lea.vmem %s53, %s1208
        %p1210 = pneg %p752
        %p1211 = pneg %p749
        %p1212 = scmp.lt.s32.totalorder %s75, 1
        %s1213 = scalar_select %p1212, %s75, 1
        %s1214 = scalar_lea.vmem %s55, %s1213
        %p1215 = pneg %p778
        %p1216 = pneg %p775
        %p1217 = pneg %p799
        %p1218 = pneg %p796
        %p1219 = pneg %p820
        %p1220 = pneg %p817
        %p1221 = pneg %p841
        %p1222 = pneg %p838
        %p1223 = scmp.lt.s32.totalorder %s75, 1
        %s1224 = scalar_select %p1223, %s75, 1
        %s1225 = smul.addr %s1224, 4
        %s1226 = smul.addr %s1225, 4
        %s1227 = scalar_lea.vmem %s9, %s1226
        %p1228 = scmp.lt.s32.totalorder %s75, 1
        %s1229 = scalar_select %p1228, %s75, 1
        %s1230 = scalar_lea.vmem %s11, %s1229
        %p1231 = scmp.lt.s32.totalorder %s75, 1
        %s1232 = scalar_select %p1231, %s75, 1
        %s1233 = smul.addr %s1232, 4
        %s1234 = smul.addr %s1233, 4
        %s1235 = scalar_lea.vmem %s13, %s1234
        %p1236 = scmp.lt.s32.totalorder %s75, 1
        %s1237 = scalar_select %p1236, %s75, 1
        %s1238 = scalar_lea.vmem %s15, %s1237
        %p1239 = scmp.lt.s32.totalorder %s75, 1
        %s1240 = scalar_select %p1239, %s75, 1
        %s1241 = smul.addr %s1240, 4
        %s1242 = smul.addr %s1241, 4
        %s1243 = scalar_lea.vmem %s17, %s1242
        %p1244 = scmp.lt.s32.totalorder %s75, 1
        %s1245 = scalar_select %p1244, %s75, 1
        %s1246 = scalar_lea.vmem %s19, %s1245
        %p1247 = scmp.lt.s32.totalorder %s75, 1
        %s1248 = scalar_select %p1247, %s75, 1
        %s1249 = scalar_lea.vmem %s21, %s1248
        %p1250 = scmp.lt.s32.totalorder %s75, 1
        %s1251 = scalar_select %p1250, %s75, 1
        %s1252 = scalar_lea.vmem %s23, %s1251
        %p1253 = scmp.lt.s32.totalorder %s75, 1
        %s1254 = scalar_select %p1253, %s75, 1
        %s1255 = smul.addr %s1254, 4
        %s1256 = smul.addr %s1255, 4
        %s1257 = scalar_lea.vmem %s25, %s1256
        %p1258 = scmp.lt.s32.totalorder %s75, 1
        %s1259 = scalar_select %p1258, %s75, 1
        %s1260 = scalar_lea.vmem %s27, %s1259
        %p1261 = scmp.lt.s32.totalorder %s75, 1
        %s1262 = scalar_select %p1261, %s75, 1
        %s1263 = smul.addr %s1262, 4
        %s1264 = smul.addr %s1263, 4
        %s1265 = scalar_lea.vmem %s29, %s1264
        %p1266 = scmp.lt.s32.totalorder %s75, 1
        %s1267 = scalar_select %p1266, %s75, 1
        %s1268 = scalar_lea.vmem %s31, %s1267
        %p1269 = scmp.lt.s32.totalorder %s75, 1
        %s1270 = scalar_select %p1269, %s75, 1
        %s1271 = smul.addr %s1270, 4
        %s1272 = smul.addr %s1271, 4
        %s1273 = scalar_lea.vmem %s33, %s1272
        %p1274 = scmp.lt.s32.totalorder %s75, 1
        %s1275 = scalar_select %p1274, %s75, 1
        %s1276 = scalar_lea.vmem %s35, %s1275
        %p1277 = scmp.lt.s32.totalorder %s75, 1
        %s1278 = scalar_select %p1277, %s75, 1
        %s1279 = smul.addr %s1278, 4
        %s1280 = smul.addr %s1279, 4
        %s1281 = scalar_lea.vmem %s37, %s1280
        %p1282 = scmp.lt.s32.totalorder %s75, 1
        %s1283 = scalar_select %p1282, %s75, 1
        %s1284 = scalar_lea.vmem %s39, %s1283
        %p1285 = scmp.lt.s32.totalorder %s75, 1
        %s1286 = scalar_select %p1285, %s75, 1
        %s1287 = scalar_lea.vmem %s41, %s1286
        %p1288 = scmp.lt.s32.totalorder %s75, 1
        %s1289 = scalar_select %p1288, %s75, 1
        %s1290 = scalar_lea.vmem %s43, %s1289
        %p1291 = scmp.lt.s32.totalorder %s75, 1
        %s1292 = scalar_select %p1291, %s75, 1
        %s1293 = smul.addr %s1292, 4
        %s1294 = smul.addr %s1293, 4
        %s1295 = scalar_lea.vmem %s45, %s1294
        %p1296 = scmp.lt.s32.totalorder %s75, 1
        %s1297 = scalar_select %p1296, %s75, 1
        %s1298 = scalar_lea.vmem %s47, %s1297
        %p1299 = scmp.lt.s32.totalorder %s75, 1
        %s1300 = scalar_select %p1299, %s75, 1
        %s1301 = smul.addr %s1300, 8
        %s1302 = smul.addr %s1301, 4
        %s1303 = scalar_lea.vmem %s49, %s1302
        %p1304 = scmp.lt.s32.totalorder %s75, 1
        %s1305 = scalar_select %p1304, %s75, 1
        %s1306 = scalar_lea.vmem %s51, %s1305
        %p1307 = scmp.lt.s32.totalorder %s75, 1
        %s1308 = scalar_select %p1307, %s75, 1
        %s1309 = scalar_lea.vmem %s53, %s1308
        %p1310 = scmp.lt.s32.totalorder %s75, 1
        %s1311 = scalar_select %p1310, %s75, 1
        %s1312 = scalar_lea.vmem %s55, %s1311
        %p1314 = scmp.eq.s32.totalorder %s75, 0
        // Predicated region
        $region149: #{transformer_forward.3} parent=139 // pred_check
          %p1315 = pneg %p1314
        $region150: #{transformer_forward.3} parent=139 // pred_check_branch
          %1317 = sbr.rel (%p1315) target = $region152
        $region151: #{transformer_forward.3} parent=139 // pred_region
          %vm1318 = vcmask 261120
          %1319 = vst.msk [vmem:[#allocation7] sm:$0xff] %vm1318, 0.0
          %1320 = vst.msk [vmem:[#allocation7 + $0x8] sm:$0xff] %vm1318, 0.0
        $region152: #{transformer_forward.3} parent=139 // pred_fallthru
          _
        %v1321 = vld [vmem:[#allocation7] sm:$0xff]
        %v1322 = vld [vmem:[#allocation7 + $0x8] sm:$0xff]
        %v1323 = vld [vmem:[%s1] sm:$0xff]
        %v1324 = vld [vmem:[%s1 + $0x8] sm:$0xff]
        %v1325 = vld [vmem:[%s1 + $0x10] sm:$0xff]
        %v1326 = vld [vmem:[%s1 + $0x18] sm:$0xff]
        %v1327 = vld [vmem:[%s3] sm:$0xff]
        %v1328 = vld [vmem:[%s3 + $0x8] sm:$0xff]
        %v1329 = vld [vmem:[%s3 + $0x10] sm:$0xff]
        %v1330 = vld [vmem:[%s3 + $0x18] sm:$0xff]
        %v1331 = vld [vmem:[%s5] sm:$0xff]
        %v1332 = vld [vmem:[%s5 + $0x8] sm:$0xff]
        %v1333 = vld [vmem:[%s7] sm:$0x1]
        %v1334 = vld [vmem:[%s7 + $0x1] sm:$0x1]
        %v1335 = vadd.f32 %v1321, %v1331
        %v1336 = vadd.f32 %v1322, %v1332
        %v1337 = vld [vmem:[%s1227] sm:$0xf]
        %v1338 = vld [vmem:[%s1227 + $0x4] sm:$0xf]
        %v1339 = vld [vmem:[%s1227 + $0x8] sm:$0xf]
        %v1340 = vld [vmem:[%s1227 + $0xc] sm:$0xf]
        %v1341 = vpack.c.bf16 %v1336, %v1335
        %v1342 = vld [vmem:[%s1230] sm:$0x1]
        %v1344 = vlaneseq
        %v1345 = vshrl.u32 %v1344, 7
        %v1346 = vsub.s32 0, %v1345
        %v1347 = vrot.slane %v1342, %v1346
        %v1353 = vunpack.c.l.b16 %v1337
        %v1354 = vunpack.c.l.b16 %v1338
        %v1355 = vunpack.c.l.b16 %v1339
        %v1356 = vunpack.c.l.b16 %v1340
        %v1357 = vpack.c.b16 %v1354, %v1353
        %v1358 = vpack.c.b16 %v1356, %v1355
        %vm1361 = vcmask 261120
        %v1363 = vsel %vm1361, %v1341, 0
        %1365 = vmatprep.subr.bf16.mxu0 0
        %1366 = vmatpush1.bf16.msra.mxu0 %v1357
        %1367 = vmatprep.subr.bf16.mxu0 0
        %1368 = vmatpush1.bf16.msra.mxu0 %v1358
        %1369 = vmatprep.subr.bf16.mxu0 0
        %1370 = vmatpush1.bf16.msra.mxu0 0
        %1371 = vmatprep.subr.bf16.mxu0 0
        %1372 = vmatpush1.bf16.msra.mxu0 0
        %1373 = vmatprep.subr.bf16.mxu0 0
        %1374 = vmatpush1.bf16.msra.mxu0 0
        %1375 = vmatprep.subr.bf16.mxu0 0
        %1376 = vmatpush1.bf16.msra.mxu0 0
        %1377 = vmatprep.subr.bf16.mxu0 0
        %1378 = vmatpush1.bf16.msra.mxu0 0
        %1379 = vmatprep.subr.bf16.mxu0 0
        %1380 = vmatpush1.bf16.msra.mxu0 0
        %1381 = vmatprep.subr.bf16.mxu0 0
        %1382 = vmatpush1.bf16.msra.mxu0 0
        %1383 = vmatprep.subr.bf16.mxu0 0
        %1384 = vmatpush1.bf16.msra.mxu0 0
        %1385 = vmatprep.subr.bf16.mxu0 0
        %1386 = vmatpush1.bf16.msra.mxu0 0
        %1387 = vmatprep.subr.bf16.mxu0 0
        %1388 = vmatpush1.bf16.msra.mxu0 0
        %1389 = vmatprep.subr.bf16.mxu0 0
        %1390 = vmatpush1.bf16.msra.mxu0 0
        %1391 = vmatprep.subr.bf16.mxu0 0
        %1392 = vmatpush1.bf16.msra.mxu0 0
        %1393 = vmatprep.subr.bf16.mxu0 0
        %1394 = vmatpush1.bf16.msra.mxu0 0
        %1395 = vmatprep.subr.bf16.mxu0 0
        %1396 = vmatpush1.bf16.msra.mxu0 0
        %1397 = vmatprep.mubr.bf16.mxu0 0
        %1398 = vmatmul.mubr.bf16.gmra.mrb[0].mxu0 %v1363
        %v1399 = vpop.f32.mrb[0].mxu0
        %v1400 = vadd.f32 %v1347, %v1399
        %v1401 = vpop.f32.mrb[0].mxu0
        %v1402 = vpop.f32.mrb[0].mxu0
        %v1403 = vadd.f32 %v1347, %v1402
        %v1404 = vpop.f32.mrb[0].mxu0
        %1405 = vdwg.mxu0
        %v1406 = vld [vmem:[%s1235] sm:$0xf]
        %v1407 = vld [vmem:[%s1235 + $0x4] sm:$0xf]
        %v1408 = vld [vmem:[%s1235 + $0x8] sm:$0xf]
        %v1409 = vld [vmem:[%s1235 + $0xc] sm:$0xf]
        %v1410 = vpack.c.bf16 %v1322, %v1321
        %v1411 = vld [vmem:[%s1238] sm:$0x1]
        %v1413 = vlaneseq
        %v1414 = vshrl.u32 %v1413, 7
        %v1415 = vsub.s32 0, %v1414
        %v1416 = vrot.slane %v1411, %v1415
        %v1422 = vunpack.c.l.b16 %v1406
        %v1423 = vunpack.c.l.b16 %v1407
        %v1424 = vunpack.c.l.b16 %v1408
        %v1425 = vunpack.c.l.b16 %v1409
        %v1426 = vpack.c.b16 %v1423, %v1422
        %v1427 = vpack.c.b16 %v1425, %v1424
        %v1431 = vsel %vm1361, %v1410, 0
        %1433 = vmatprep.subr.bf16.mxu0 0
        %1434 = vmatpush1.bf16.msra.mxu0 %v1426
        %1435 = vmatprep.subr.bf16.mxu0 0
        %1436 = vmatpush1.bf16.msra.mxu0 %v1427
        %1437 = vmatprep.subr.bf16.mxu0 0
        %1438 = vmatpush1.bf16.msra.mxu0 0
        %1439 = vmatprep.subr.bf16.mxu0 0
        %1440 = vmatpush1.bf16.msra.mxu0 0
        %1441 = vmatprep.subr.bf16.mxu0 0
        %1442 = vmatpush1.bf16.msra.mxu0 0
        %1443 = vmatprep.subr.bf16.mxu0 0
        %1444 = vmatpush1.bf16.msra.mxu0 0
        %1445 = vmatprep.subr.bf16.mxu0 0
        %1446 = vmatpush1.bf16.msra.mxu0 0
        %1447 = vmatprep.subr.bf16.mxu0 0
        %1448 = vmatpush1.bf16.msra.mxu0 0
        %1449 = vmatprep.subr.bf16.mxu0 0
        %1450 = vmatpush1.bf16.msra.mxu0 0
        %1451 = vmatprep.subr.bf16.mxu0 0
        %1452 = vmatpush1.bf16.msra.mxu0 0
        %1453 = vmatprep.subr.bf16.mxu0 0
        %1454 = vmatpush1.bf16.msra.mxu0 0
        %1455 = vmatprep.subr.bf16.mxu0 0
        %1456 = vmatpush1.bf16.msra.mxu0 0
        %1457 = vmatprep.subr.bf16.mxu0 0
        %1458 = vmatpush1.bf16.msra.mxu0 0
        %1459 = vmatprep.subr.bf16.mxu0 0
        %1460 = vmatpush1.bf16.msra.mxu0 0
        %1461 = vmatprep.subr.bf16.mxu0 0
        %1462 = vmatpush1.bf16.msra.mxu0 0
        %1463 = vmatprep.subr.bf16.mxu0 0
        %1464 = vmatpush1.bf16.msra.mxu0 0
        %1465 = vmatprep.mubr.bf16.mxu0 0
        %1466 = vmatmul.mubr.bf16.gmra.mrb[0].mxu0 %v1431
        %v1467 = vpop.f32.mrb[0].mxu0
        %v1468 = vadd.f32 %v1416, %v1467
        %v1469 = vpop.f32.mrb[0].mxu0
        %v1470 = vpop.f32.mrb[0].mxu0
        %v1471 = vadd.f32 %v1416, %v1470
        %v1472 = vpop.f32.mrb[0].mxu0
        %1473 = vdwg.mxu0
        %v1474 = vld [vmem:[%s1243] sm:$0xf]
        %v1475 = vld [vmem:[%s1243 + $0x4] sm:$0xf]
        %v1476 = vld [vmem:[%s1243 + $0x8] sm:$0xf]
        %v1477 = vld [vmem:[%s1243 + $0xc] sm:$0xf]
        %v1478 = vld [vmem:[%s1246] sm:$0x1]
        %1480 = vrot.lane.b32.xlu0 %v1400, 96
        %v1481 = vpop.permute.xlu0 %1480
        %vm1482 = vcmask 64512
        %v1483 = vsel %vm1482, %v1400, 0
        %v1485 = vsel %vm1482, %v1481, 0
        %1487 = vmatprep.subr.mxu0 0.0
        %1488 = vmatpush1.xpose.msra.mxu0 %v1485
        %1489 = vmatprep.subr.mxu0 0.0
        %1490 = vmatpush1.xpose.msra.mxu0 0.0
        %1491 = vmatprep.subr.mxu0 0.0
        %1492 = vmatpush1.xpose.msra.mxu0 0.0
        %1493 = vmatprep.subr.mxu0 0.0
        %1494 = vmatpush1.xpose.msra.mxu0 0.0
        %1495 = vmatprep.subr.mxu0 0.0
        %1496 = vmatpush1.xpose.msra.mxu0 0.0
        %1497 = vmatprep.subr.mxu0 0.0
        %1498 = vmatpush1.xpose.msra.mxu0 0.0
        %1499 = vmatprep.subr.mxu0 0.0
        %1500 = vmatpush1.xpose.msra.mxu0 0.0
        %1501 = vmatprep.subr.mxu0 0.0
        %1502 = vmatpush1.xpose.msra.mxu0 0.0
        %1503 = vmatprep.subr.mxu0 0.0
        %1504 = vmatpush1.xpose.msra.mxu0 0.0
        %1505 = vmatprep.subr.mxu0 0.0
        %1506 = vmatpush1.xpose.msra.mxu0 0.0
        %1507 = vmatprep.subr.mxu0 0.0
        %1508 = vmatpush1.xpose.msra.mxu0 0.0
        %1509 = vmatprep.subr.mxu0 0.0
        %1510 = vmatpush1.xpose.msra.mxu0 0.0
        %1511 = vmatprep.subr.mxu0 0.0
        %1512 = vmatpush1.xpose.msra.mxu0 0.0
        %1513 = vmatprep.subr.mxu0 0.0
        %1514 = vmatpush1.xpose.msra.mxu0 0.0
        %1515 = vmatprep.subr.mxu0 0.0
        %1516 = vmatpush1.xpose.msra.mxu0 0.0
        %1517 = vmatprep.subr.mxu0 0.0
        %1518 = vmatpush1.xpose.msra.mxu0 0.0
        %1519 = vmatprep.subr.mxu0 0.0
        %1520 = vmatpush1.xpose.msra.mxu0 0.0
        %1521 = vmatprep.subr.mxu0 0.0
        %1522 = vmatpush1.xpose.msra.mxu0 0.0
        %1523 = vmatprep.subr.mxu0 0.0
        %1524 = vmatpush1.xpose.msra.mxu0 0.0
        %1525 = vmatprep.subr.mxu0 0.0
        %1526 = vmatpush1.xpose.msra.mxu0 0.0
        %1527 = vmatprep.subr.mxu0 0.0
        %1528 = vmatpush1.xpose.msra.mxu0 0.0
        %1529 = vmatprep.subr.mxu0 0.0
        %1530 = vmatpush1.xpose.msra.mxu0 0.0
        %1531 = vmatprep.subr.mxu0 0.0
        %1532 = vmatpush1.xpose.msra.mxu0 0.0
        %1533 = vmatprep.subr.mxu0 0.0
        %1534 = vmatpush1.xpose.msra.mxu0 0.0
        %1535 = vmatprep.subr.mxu0 0.0
        %1536 = vmatpush1.xpose.msra.mxu0 0.0
        %1537 = vmatprep.subr.mxu0 0.0
        %1538 = vmatpush1.xpose.msra.mxu0 0.0
        %1539 = vmatprep.subr.mxu0 0.0
        %1540 = vmatpush1.xpose.msra.mxu0 0.0
        %1541 = vmatprep.subr.mxu0 0.0
        %1542 = vmatpush1.xpose.msra.mxu0 0.0
        %1543 = vmatprep.subr.mxu0 0.0
        %1544 = vmatpush1.xpose.msra.mxu0 0.0
        %1545 = vmatprep.subr.mxu0 0.0
        %1546 = vmatpush1.xpose.msra.mxu0 0.0
        %1547 = vmatprep.subr.mxu0 0.0
        %1548 = vmatpush1.xpose.msra.mxu0 0.0
        %1549 = vmatprep.subr.mxu0 0.0
        %1550 = vmatpush1.xpose.msra.mxu0 0.0
        %1551 = vmatprep.mubr.f32.mxu0 0.0
        %1552 = vmatmul.mubr.f32.gmra.mrb[0].mxu0 %v1483
        %v1553 = vpop.f32.mrb[0].mxu0
        %v1554 = vadd.f32 0.0, %v1553
        %v1555 = vpop.f32.mrb[0].mxu0
        %1556 = vdwg.mxu0
        %1558 = vrot.lane.b32.xlu0 %v1403, 96
        %v1559 = vpop.permute.xlu0 %1558
        %v1560 = vsel %vm1482, %v1403, 0
        %v1562 = vsel %vm1482, %v1559, 0
        %1564 = vmatprep.subr.mxu0 0.0
        %1565 = vmatpush1.xpose.msra.mxu0 %v1562
        %1566 = vmatprep.subr.mxu0 0.0
        %1567 = vmatpush1.xpose.msra.mxu0 0.0
        %1568 = vmatprep.subr.mxu0 0.0
        %1569 = vmatpush1.xpose.msra.mxu0 0.0
        %1570 = vmatprep.subr.mxu0 0.0
        %1571 = vmatpush1.xpose.msra.mxu0 0.0
        %1572 = vmatprep.subr.mxu0 0.0
        %1573 = vmatpush1.xpose.msra.mxu0 0.0
        %1574 = vmatprep.subr.mxu0 0.0
        %1575 = vmatpush1.xpose.msra.mxu0 0.0
        %1576 = vmatprep.subr.mxu0 0.0
        %1577 = vmatpush1.xpose.msra.mxu0 0.0
        %1578 = vmatprep.subr.mxu0 0.0
        %1579 = vmatpush1.xpose.msra.mxu0 0.0
        %1580 = vmatprep.subr.mxu0 0.0
        %1581 = vmatpush1.xpose.msra.mxu0 0.0
        %1582 = vmatprep.subr.mxu0 0.0
        %1583 = vmatpush1.xpose.msra.mxu0 0.0
        %1584 = vmatprep.subr.mxu0 0.0
        %1585 = vmatpush1.xpose.msra.mxu0 0.0
        %1586 = vmatprep.subr.mxu0 0.0
        %1587 = vmatpush1.xpose.msra.mxu0 0.0
        %1588 = vmatprep.subr.mxu0 0.0
        %1589 = vmatpush1.xpose.msra.mxu0 0.0
        %1590 = vmatprep.subr.mxu0 0.0
        %1591 = vmatpush1.xpose.msra.mxu0 0.0
        %1592 = vmatprep.subr.mxu0 0.0
        %1593 = vmatpush1.xpose.msra.mxu0 0.0
        %1594 = vmatprep.subr.mxu0 0.0
        %1595 = vmatpush1.xpose.msra.mxu0 0.0
        %1596 = vmatprep.subr.mxu0 0.0
        %1597 = vmatpush1.xpose.msra.mxu0 0.0
        %1598 = vmatprep.subr.mxu0 0.0
        %1599 = vmatpush1.xpose.msra.mxu0 0.0
        %1600 = vmatprep.subr.mxu0 0.0
        %1601 = vmatpush1.xpose.msra.mxu0 0.0
        %1602 = vmatprep.subr.mxu0 0.0
        %1603 = vmatpush1.xpose.msra.mxu0 0.0
        %1604 = vmatprep.subr.mxu0 0.0
        %1605 = vmatpush1.xpose.msra.mxu0 0.0
        %1606 = vmatprep.subr.mxu0 0.0
        %1607 = vmatpush1.xpose.msra.mxu0 0.0
        %1608 = vmatprep.subr.mxu0 0.0
        %1609 = vmatpush1.xpose.msra.mxu0 0.0
        %1610 = vmatprep.subr.mxu0 0.0
        %1611 = vmatpush1.xpose.msra.mxu0 0.0
        %1612 = vmatprep.subr.mxu0 0.0
        %1613 = vmatpush1.xpose.msra.mxu0 0.0
        %1614 = vmatprep.subr.mxu0 0.0
        %1615 = vmatpush1.xpose.msra.mxu0 0.0
        %1616 = vmatprep.subr.mxu0 0.0
        %1617 = vmatpush1.xpose.msra.mxu0 0.0
        %1618 = vmatprep.subr.mxu0 0.0
        %1619 = vmatpush1.xpose.msra.mxu0 0.0
        %1620 = vmatprep.subr.mxu0 0.0
        %1621 = vmatpush1.xpose.msra.mxu0 0.0
        %1622 = vmatprep.subr.mxu0 0.0
        %1623 = vmatpush1.xpose.msra.mxu0 0.0
        %1624 = vmatprep.subr.mxu0 0.0
        %1625 = vmatpush1.xpose.msra.mxu0 0.0
        %1626 = vmatprep.subr.mxu0 0.0
        %1627 = vmatpush1.xpose.msra.mxu0 0.0
        %1628 = vmatprep.mubr.f32.mxu0 0.0
        %1629 = vmatmul.mubr.f32.gmra.mrb[0].mxu0 %v1560
        %v1630 = vpop.f32.mrb[0].mxu0
        %v1631 = vadd.f32 0.0, %v1630
        %v1632 = vpop.f32.mrb[0].mxu0
        %1633 = vdwg.mxu0
        %v1634 = vmul.f32 %v1554, 0.35355338
        %v1635 = vmul.f32 %v1631, 0.35355338
        %v1636 = vsel %vm1482, %v1634, -inf
        %1637 = vmax.xlane.f32.xlu0 %v1636
        %v1638 = vpop.xlane.xlu0 %1637
        %v1639 = vsel %vm1482, %v1635, -inf
        %1640 = vmax.xlane.f32.xlu0 %v1639
        %v1641 = vpop.xlane.xlu0 %1640
        %v1642 = vsub.f32 %v1634, %v1638
        %v1643 = vsub.f32 %v1635, %v1641
        %v1644 = vmul.f32 %v1642, 1.442695
        %v1645 = vpow.pop %v1644
        %v1646 = vmul.f32 %v1643, 1.442695
        %v1647 = vpow.pop %v1646
        %v1648 = vsel %vm1482, %v1645, 0.0
        %1649 = vadd.xlane.f32.xlu0 %v1648
        %v1650 = vpop.xlane.xlu0 %1649
        %v1651 = vsel %vm1482, %v1647, 0.0
        %1652 = vadd.xlane.f32.xlu0 %v1651
        %v1653 = vpop.xlane.xlu0 %1652
        %v1654 = vrcp.pop %v1650
        %v1655 = vmul.f32 %v1645, %v1654
        %v1656 = vrcp.pop %v1653
        %v1657 = vmul.f32 %v1647, %v1656
        %v1659 = vsel %vm1482, %v1655, 0
        %1661 = vmatprep.subr.mxu0 0.0
        %1662 = vmatpush1.msra.mxu0 %v1468
        %1663 = vmatprep.subr.mxu0 0.0
        %1664 = vmatpush1.msra.mxu0 0.0
        %1665 = vmatprep.subr.mxu0 0.0
        %1666 = vmatpush1.msra.mxu0 0.0
        %1667 = vmatprep.subr.mxu0 0.0
        %1668 = vmatpush1.msra.mxu0 0.0
        %1669 = vmatprep.subr.mxu0 0.0
        %1670 = vmatpush1.msra.mxu0 0.0
        %1671 = vmatprep.subr.mxu0 0.0
        %1672 = vmatpush1.msra.mxu0 0.0
        %1673 = vmatprep.subr.mxu0 0.0
        %1674 = vmatpush1.msra.mxu0 0.0
        %1675 = vmatprep.subr.mxu0 0.0
        %1676 = vmatpush1.msra.mxu0 0.0
        %1677 = vmatprep.subr.mxu0 0.0
        %1678 = vmatpush1.msra.mxu0 0.0
        %1679 = vmatprep.subr.mxu0 0.0
        %1680 = vmatpush1.msra.mxu0 0.0
        %1681 = vmatprep.subr.mxu0 0.0
        %1682 = vmatpush1.msra.mxu0 0.0
        %1683 = vmatprep.subr.mxu0 0.0
        %1684 = vmatpush1.msra.mxu0 0.0
        %1685 = vmatprep.subr.mxu0 0.0
        %1686 = vmatpush1.msra.mxu0 0.0
        %1687 = vmatprep.subr.mxu0 0.0
        %1688 = vmatpush1.msra.mxu0 0.0
        %1689 = vmatprep.subr.mxu0 0.0
        %1690 = vmatpush1.msra.mxu0 0.0
        %1691 = vmatprep.subr.mxu0 0.0
        %1692 = vmatpush1.msra.mxu0 0.0
        %1693 = vmatprep.subr.mxu0 0.0
        %1694 = vmatpush1.msra.mxu0 0.0
        %1695 = vmatprep.subr.mxu0 0.0
        %1696 = vmatpush1.msra.mxu0 0.0
        %1697 = vmatprep.subr.mxu0 0.0
        %1698 = vmatpush1.msra.mxu0 0.0
        %1699 = vmatprep.subr.mxu0 0.0
        %1700 = vmatpush1.msra.mxu0 0.0
        %1701 = vmatprep.subr.mxu0 0.0
        %1702 = vmatpush1.msra.mxu0 0.0
        %1703 = vmatprep.subr.mxu0 0.0
        %1704 = vmatpush1.msra.mxu0 0.0
        %1705 = vmatprep.subr.mxu0 0.0
        %1706 = vmatpush1.msra.mxu0 0.0
        %1707 = vmatprep.subr.mxu0 0.0
        %1708 = vmatpush1.msra.mxu0 0.0
        %1709 = vmatprep.subr.mxu0 0.0
        %1710 = vmatpush1.msra.mxu0 0.0
        %1711 = vmatprep.subr.mxu0 0.0
        %1712 = vmatpush1.msra.mxu0 0.0
        %1713 = vmatprep.subr.mxu0 0.0
        %1714 = vmatpush1.msra.mxu0 0.0
        %1715 = vmatprep.subr.mxu0 0.0
        %1716 = vmatpush1.msra.mxu0 0.0
        %1717 = vmatprep.subr.mxu0 0.0
        %1718 = vmatpush1.msra.mxu0 0.0
        %1719 = vmatprep.subr.mxu0 0.0
        %1720 = vmatpush1.msra.mxu0 0.0
        %1721 = vmatprep.subr.mxu0 0.0
        %1722 = vmatpush1.msra.mxu0 0.0
        %1723 = vmatprep.subr.mxu0 0.0
        %1724 = vmatpush1.msra.mxu0 0.0
        %1725 = vmatprep.mubr.f32.mxu0 0.0
        %1726 = vmatmul.mubr.f32.gmra.mrb[0].mxu0 %v1659
        %v1727 = vpop.f32.mrb[0].mxu0
        %v1728 = vadd.f32 0.0, %v1727
        %v1729 = vpop.f32.mrb[0].mxu0
        %1730 = vdwg.mxu0
        %v1732 = vsel %vm1482, %v1657, 0
        %1734 = vmatprep.subr.mxu0 0.0
        %1735 = vmatpush1.msra.mxu0 %v1471
        %1736 = vmatprep.subr.mxu0 0.0
        %1737 = vmatpush1.msra.mxu0 0.0
        %1738 = vmatprep.subr.mxu0 0.0
        %1739 = vmatpush1.msra.mxu0 0.0
        %1740 = vmatprep.subr.mxu0 0.0
        %1741 = vmatpush1.msra.mxu0 0.0
        %1742 = vmatprep.subr.mxu0 0.0
        %1743 = vmatpush1.msra.mxu0 0.0
        %1744 = vmatprep.subr.mxu0 0.0
        %1745 = vmatpush1.msra.mxu0 0.0
        %1746 = vmatprep.subr.mxu0 0.0
        %1747 = vmatpush1.msra.mxu0 0.0
        %1748 = vmatprep.subr.mxu0 0.0
        %1749 = vmatpush1.msra.mxu0 0.0
        %1750 = vmatprep.subr.mxu0 0.0
        %1751 = vmatpush1.msra.mxu0 0.0
        %1752 = vmatprep.subr.mxu0 0.0
        %1753 = vmatpush1.msra.mxu0 0.0
        %1754 = vmatprep.subr.mxu0 0.0
        %1755 = vmatpush1.msra.mxu0 0.0
        %1756 = vmatprep.subr.mxu0 0.0
        %1757 = vmatpush1.msra.mxu0 0.0
        %1758 = vmatprep.subr.mxu0 0.0
        %1759 = vmatpush1.msra.mxu0 0.0
        %1760 = vmatprep.subr.mxu0 0.0
        %1761 = vmatpush1.msra.mxu0 0.0
        %1762 = vmatprep.subr.mxu0 0.0
        %1763 = vmatpush1.msra.mxu0 0.0
        %1764 = vmatprep.subr.mxu0 0.0
        %1765 = vmatpush1.msra.mxu0 0.0
        %1766 = vmatprep.subr.mxu0 0.0
        %1767 = vmatpush1.msra.mxu0 0.0
        %1768 = vmatprep.subr.mxu0 0.0
        %1769 = vmatpush1.msra.mxu0 0.0
        %1770 = vmatprep.subr.mxu0 0.0
        %1771 = vmatpush1.msra.mxu0 0.0
        %1772 = vmatprep.subr.mxu0 0.0
        %1773 = vmatpush1.msra.mxu0 0.0
        %1774 = vmatprep.subr.mxu0 0.0
        %1775 = vmatpush1.msra.mxu0 0.0
        %1776 = vmatprep.subr.mxu0 0.0
        %1777 = vmatpush1.msra.mxu0 0.0
        %1778 = vmatprep.subr.mxu0 0.0
        %1779 = vmatpush1.msra.mxu0 0.0
        %1780 = vmatprep.subr.mxu0 0.0
        %1781 = vmatpush1.msra.mxu0 0.0
        %1782 = vmatprep.subr.mxu0 0.0
        %1783 = vmatpush1.msra.mxu0 0.0
        %1784 = vmatprep.subr.mxu0 0.0
        %1785 = vmatpush1.msra.mxu0 0.0
        %1786 = vmatprep.subr.mxu0 0.0
        %1787 = vmatpush1.msra.mxu0 0.0
        %1788 = vmatprep.subr.mxu0 0.0
        %1789 = vmatpush1.msra.mxu0 0.0
        %1790 = vmatprep.subr.mxu0 0.0
        %1791 = vmatpush1.msra.mxu0 0.0
        %1792 = vmatprep.subr.mxu0 0.0
        %1793 = vmatpush1.msra.mxu0 0.0
        %1794 = vmatprep.subr.mxu0 0.0
        %1795 = vmatpush1.msra.mxu0 0.0
        %1796 = vmatprep.subr.mxu0 0.0
        %1797 = vmatpush1.msra.mxu0 0.0
        %1798 = vmatprep.mubr.f32.mxu0 0.0
        %1799 = vmatmul.mubr.f32.gmra.mrb[0].mxu0 %v1732
        %v1800 = vpop.f32.mrb[0].mxu0
        %v1801 = vadd.f32 0.0, %v1800
        %v1802 = vpop.f32.mrb[0].mxu0
        %1803 = vdwg.mxu0
        %1804 = vrot.lane.b32.xlu0 %v1400, 120
        %v1805 = vpop.permute.xlu0 %1804
        %1806 = vrot.lane.b32.xlu0 %v1400, 88
        %v1807 = vpop.permute.xlu0 %1806
        %v1808 = vsel %vm1482, %v1805, 0
        %v1810 = vsel %vm1482, %v1807, 0
        %1812 = vmatprep.subr.mxu0 0.0
        %1813 = vmatpush1.xpose.msra.mxu0 %v1810
        %1814 = vmatprep.subr.mxu0 0.0
        %1815 = vmatpush1.xpose.msra.mxu0 0.0
        %1816 = vmatprep.subr.mxu0 0.0
        %1817 = vmatpush1.xpose.msra.mxu0 0.0
        %1818 = vmatprep.subr.mxu0 0.0
        %1819 = vmatpush1.xpose.msra.mxu0 0.0
        %1820 = vmatprep.subr.mxu0 0.0
        %1821 = vmatpush1.xpose.msra.mxu0 0.0
        %1822 = vmatprep.subr.mxu0 0.0
        %1823 = vmatpush1.xpose.msra.mxu0 0.0
        %1824 = vmatprep.subr.mxu0 0.0
        %1825 = vmatpush1.xpose.msra.mxu0 0.0
        %1826 = vmatprep.subr.mxu0 0.0
        %1827 = vmatpush1.xpose.msra.mxu0 0.0
        %1828 = vmatprep.subr.mxu0 0.0
        %1829 = vmatpush1.xpose.msra.mxu0 0.0
        %1830 = vmatprep.subr.mxu0 0.0
        %1831 = vmatpush1.xpose.msra.mxu0 0.0
        %1832 = vmatprep.subr.mxu0 0.0
        %1833 = vmatpush1.xpose.msra.mxu0 0.0
        %1834 = vmatprep.subr.mxu0 0.0
        %1835 = vmatpush1.xpose.msra.mxu0 0.0
        %1836 = vmatprep.subr.mxu0 0.0
        %1837 = vmatpush1.xpose.msra.mxu0 0.0
        %1838 = vmatprep.subr.mxu0 0.0
        %1839 = vmatpush1.xpose.msra.mxu0 0.0
        %1840 = vmatprep.subr.mxu0 0.0
        %1841 = vmatpush1.xpose.msra.mxu0 0.0
        %1842 = vmatprep.subr.mxu0 0.0
        %1843 = vmatpush1.xpose.msra.mxu0 0.0
        %1844 = vmatprep.subr.mxu0 0.0
        %1845 = vmatpush1.xpose.msra.mxu0 0.0
        %1846 = vmatprep.subr.mxu0 0.0
        %1847 = vmatpush1.xpose.msra.mxu0 0.0
        %1848 = vmatprep.subr.mxu0 0.0
        %1849 = vmatpush1.xpose.msra.mxu0 0.0
        %1850 = vmatprep.subr.mxu0 0.0
        %1851 = vmatpush1.xpose.msra.mxu0 0.0
        %1852 = vmatprep.subr.mxu0 0.0
        %1853 = vmatpush1.xpose.msra.mxu0 0.0
        %1854 = vmatprep.subr.mxu0 0.0
        %1855 = vmatpush1.xpose.msra.mxu0 0.0
        %1856 = vmatprep.subr.mxu0 0.0
        %1857 = vmatpush1.xpose.msra.mxu0 0.0
        %1858 = vmatprep.subr.mxu0 0.0
        %1859 = vmatpush1.xpose.msra.mxu0 0.0
        %1860 = vmatprep.subr.mxu0 0.0
        %1861 = vmatpush1.xpose.msra.mxu0 0.0
        %1862 = vmatprep.subr.mxu0 0.0
        %1863 = vmatpush1.xpose.msra.mxu0 0.0
        %1864 = vmatprep.subr.mxu0 0.0
        %1865 = vmatpush1.xpose.msra.mxu0 0.0
        %1866 = vmatprep.subr.mxu0 0.0
        %1867 = vmatpush1.xpose.msra.mxu0 0.0
        %1868 = vmatprep.subr.mxu0 0.0
        %1869 = vmatpush1.xpose.msra.mxu0 0.0
        %1870 = vmatprep.subr.mxu0 0.0
        %1871 = vmatpush1.xpose.msra.mxu0 0.0
        %1872 = vmatprep.subr.mxu0 0.0
        %1873 = vmatpush1.xpose.msra.mxu0 0.0
        %1874 = vmatprep.subr.mxu0 0.0
        %1875 = vmatpush1.xpose.msra.mxu0 0.0
        %1876 = vmatprep.mubr.f32.mxu0 0.0
        %1877 = vmatmul.mubr.f32.gmra.mrb[0].mxu0 %v1808
        %v1878 = vpop.f32.mrb[0].mxu0
        %v1879 = vadd.f32 0.0, %v1878
        %v1880 = vpop.f32.mrb[0].mxu0
        %1881 = vdwg.mxu0
        %1882 = vrot.lane.b32.xlu0 %v1403, 120
        %v1883 = vpop.permute.xlu0 %1882
        %1884 = vrot.lane.b32.xlu0 %v1403, 88
        %v1885 = vpop.permute.xlu0 %1884
        %v1886 = vsel %vm1482, %v1883, 0
        %v1888 = vsel %vm1482, %v1885, 0
        %1890 = vmatprep.subr.mxu0 0.0
        %1891 = vmatpush1.xpose.msra.mxu0 %v1888
        %1892 = vmatprep.subr.mxu0 0.0
        %1893 = vmatpush1.xpose.msra.mxu0 0.0
        %1894 = vmatprep.subr.mxu0 0.0
        %1895 = vmatpush1.xpose.msra.mxu0 0.0
        %1896 = vmatprep.subr.mxu0 0.0
        %1897 = vmatpush1.xpose.msra.mxu0 0.0
        %1898 = vmatprep.subr.mxu0 0.0
        %1899 = vmatpush1.xpose.msra.mxu0 0.0
        %1900 = vmatprep.subr.mxu0 0.0
        %1901 = vmatpush1.xpose.msra.mxu0 0.0
        %1902 = vmatprep.subr.mxu0 0.0
        %1903 = vmatpush1.xpose.msra.mxu0 0.0
        %1904 = vmatprep.subr.mxu0 0.0
        %1905 = vmatpush1.xpose.msra.mxu0 0.0
        %1906 = vmatprep.subr.mxu0 0.0
        %1907 = vmatpush1.xpose.msra.mxu0 0.0
        %1908 = vmatprep.subr.mxu0 0.0
        %1909 = vmatpush1.xpose.msra.mxu0 0.0
        %1910 = vmatprep.subr.mxu0 0.0
        %1911 = vmatpush1.xpose.msra.mxu0 0.0
        %1912 = vmatprep.subr.mxu0 0.0
        %1913 = vmatpush1.xpose.msra.mxu0 0.0
        %1914 = vmatprep.subr.mxu0 0.0
        %1915 = vmatpush1.xpose.msra.mxu0 0.0
        %1916 = vmatprep.subr.mxu0 0.0
        %1917 = vmatpush1.xpose.msra.mxu0 0.0
        %1918 = vmatprep.subr.mxu0 0.0
        %1919 = vmatpush1.xpose.msra.mxu0 0.0
        %1920 = vmatprep.subr.mxu0 0.0
        %1921 = vmatpush1.xpose.msra.mxu0 0.0
        %1922 = vmatprep.subr.mxu0 0.0
        %1923 = vmatpush1.xpose.msra.mxu0 0.0
        %1924 = vmatprep.subr.mxu0 0.0
        %1925 = vmatpush1.xpose.msra.mxu0 0.0
        %1926 = vmatprep.subr.mxu0 0.0
        %1927 = vmatpush1.xpose.msra.mxu0 0.0
        %1928 = vmatprep.subr.mxu0 0.0
        %1929 = vmatpush1.xpose.msra.mxu0 0.0
        %1930 = vmatprep.subr.mxu0 0.0
        %1931 = vmatpush1.xpose.msra.mxu0 0.0
        %1932 = vmatprep.subr.mxu0 0.0
        %1933 = vmatpush1.xpose.msra.mxu0 0.0
        %1934 = vmatprep.subr.mxu0 0.0
        %1935 = vmatpush1.xpose.msra.mxu0 0.0
        %1936 = vmatprep.subr.mxu0 0.0
        %1937 = vmatpush1.xpose.msra.mxu0 0.0
        %1938 = vmatprep.subr.mxu0 0.0
        %1939 = vmatpush1.xpose.msra.mxu0 0.0
        %1940 = vmatprep.subr.mxu0 0.0
        %1941 = vmatpush1.xpose.msra.mxu0 0.0
        %1942 = vmatprep.subr.mxu0 0.0
        %1943 = vmatpush1.xpose.msra.mxu0 0.0
        %1944 = vmatprep.subr.mxu0 0.0
        %1945 = vmatpush1.xpose.msra.mxu0 0.0
        %1946 = vmatprep.subr.mxu0 0.0
        %1947 = vmatpush1.xpose.msra.mxu0 0.0
        %1948 = vmatprep.subr.mxu0 0.0
        %1949 = vmatpush1.xpose.msra.mxu0 0.0
        %1950 = vmatprep.subr.mxu0 0.0
        %1951 = vmatpush1.xpose.msra.mxu0 0.0
        %1952 = vmatprep.subr.mxu0 0.0
        %1953 = vmatpush1.xpose.msra.mxu0 0.0
        %1954 = vmatprep.mubr.f32.mxu0 0.0
        %1955 = vmatmul.mubr.f32.gmra.mrb[0].mxu0 %v1886
        %v1956 = vpop.f32.mrb[0].mxu0
        %v1957 = vadd.f32 0.0, %v1956
        %v1958 = vpop.f32.mrb[0].mxu0
        %1959 = vdwg.mxu0
        %v1960 = vmul.f32 %v1879, 0.35355338
        %v1961 = vmul.f32 %v1957, 0.35355338
        %v1962 = vsel %vm1482, %v1960, -inf
        %1963 = vmax.xlane.f32.xlu0 %v1962
        %v1964 = vpop.xlane.xlu0 %1963
        %v1965 = vsel %vm1482, %v1961, -inf
        %1966 = vmax.xlane.f32.xlu0 %v1965
        %v1967 = vpop.xlane.xlu0 %1966
        %v1968 = vsub.f32 %v1960, %v1964
        %v1969 = vsub.f32 %v1961, %v1967
        %v1970 = vmul.f32 %v1968, 1.442695
        %v1971 = vpow.pop %v1970
        %v1972 = vmul.f32 %v1969, 1.442695
        %v1973 = vpow.pop %v1972
        %v1974 = vsel %vm1482, %v1971, 0.0
        %1975 = vadd.xlane.f32.xlu0 %v1974
        %v1976 = vpop.xlane.xlu0 %1975
        %v1977 = vsel %vm1482, %v1973, 0.0
        %1978 = vadd.xlane.f32.xlu0 %v1977
        %v1979 = vpop.xlane.xlu0 %1978
        %v1980 = vrcp.pop %v1976
        %v1981 = vmul.f32 %v1971, %v1980
        %v1982 = vrcp.pop %v1979
        %v1983 = vmul.f32 %v1973, %v1982
        %1985 = vrot.lane.b32.xlu0 %v1468, 120
        %v1986 = vpop.permute.xlu0 %1985
        %v1989 = vsel %vm1482, %v1981, 0
        %1991 = vmatprep.subr.mxu0 0.0
        %1992 = vmatpush1.msra.mxu0 %v1986
        %1993 = vmatprep.subr.mxu0 0.0
        %1994 = vmatpush1.msra.mxu0 0.0
        %1995 = vmatprep.subr.mxu0 0.0
        %1996 = vmatpush1.msra.mxu0 0.0
        %1997 = vmatprep.subr.mxu0 0.0
        %1998 = vmatpush1.msra.mxu0 0.0
        %1999 = vmatprep.subr.mxu0 0.0
        %2000 = vmatpush1.msra.mxu0 0.0
        %2001 = vmatprep.subr.mxu0 0.0
        %2002 = vmatpush1.msra.mxu0 0.0
        %2003 = vmatprep.subr.mxu0 0.0
        %2004 = vmatpush1.msra.mxu0 0.0
        %2005 = vmatprep.subr.mxu0 0.0
        %2006 = vmatpush1.msra.mxu0 0.0
        %2007 = vmatprep.subr.mxu0 0.0
        %2008 = vmatpush1.msra.mxu0 0.0
        %2009 = vmatprep.subr.mxu0 0.0
        %2010 = vmatpush1.msra.mxu0 0.0
        %2011 = vmatprep.subr.mxu0 0.0
        %2012 = vmatpush1.msra.mxu0 0.0
        %2013 = vmatprep.subr.mxu0 0.0
        %2014 = vmatpush1.msra.mxu0 0.0
        %2015 = vmatprep.subr.mxu0 0.0
        %2016 = vmatpush1.msra.mxu0 0.0
        %2017 = vmatprep.subr.mxu0 0.0
        %2018 = vmatpush1.msra.mxu0 0.0
        %2019 = vmatprep.subr.mxu0 0.0
        %2020 = vmatpush1.msra.mxu0 0.0
        %2021 = vmatprep.subr.mxu0 0.0
        %2022 = vmatpush1.msra.mxu0 0.0
        %2023 = vmatprep.subr.mxu0 0.0
        %2024 = vmatpush1.msra.mxu0 0.0
        %2025 = vmatprep.subr.mxu0 0.0
        %2026 = vmatpush1.msra.mxu0 0.0
        %2027 = vmatprep.subr.mxu0 0.0
        %2028 = vmatpush1.msra.mxu0 0.0
        %2029 = vmatprep.subr.mxu0 0.0
        %2030 = vmatpush1.msra.mxu0 0.0
        %2031 = vmatprep.subr.mxu0 0.0
        %2032 = vmatpush1.msra.mxu0 0.0
        %2033 = vmatprep.subr.mxu0 0.0
        %2034 = vmatpush1.msra.mxu0 0.0
        %2035 = vmatprep.subr.mxu0 0.0
        %2036 = vmatpush1.msra.mxu0 0.0
        %2037 = vmatprep.subr.mxu0 0.0
        %2038 = vmatpush1.msra.mxu0 0.0
        %2039 = vmatprep.subr.mxu0 0.0
        %2040 = vmatpush1.msra.mxu0 0.0
        %2041 = vmatprep.subr.mxu0 0.0
        %2042 = vmatpush1.msra.mxu0 0.0
        %2043 = vmatprep.subr.mxu0 0.0
        %2044 = vmatpush1.msra.mxu0 0.0
        %2045 = vmatprep.subr.mxu0 0.0
        %2046 = vmatpush1.msra.mxu0 0.0
        %2047 = vmatprep.subr.mxu0 0.0
        %2048 = vmatpush1.msra.mxu0 0.0
        %2049 = vmatprep.subr.mxu0 0.0
        %2050 = vmatpush1.msra.mxu0 0.0
        %2051 = vmatprep.subr.mxu0 0.0
        %2052 = vmatpush1.msra.mxu0 0.0
        %2053 = vmatprep.subr.mxu0 0.0
        %2054 = vmatpush1.msra.mxu0 0.0
        %2055 = vmatprep.mubr.f32.mxu0 0.0
        %2056 = vmatmul.mubr.f32.gmra.mrb[0].mxu0 %v1989
        %v2057 = vpop.f32.mrb[0].mxu0
        %v2058 = vadd.f32 0.0, %v2057
        %v2059 = vpop.f32.mrb[0].mxu0
        %2060 = vdwg.mxu0
        %2062 = vrot.lane.b32.xlu0 %v1471, 120
        %v2063 = vpop.permute.xlu0 %2062
        %v2066 = vsel %vm1482, %v1983, 0
        %2068 = vmatprep.subr.mxu0 0.0
        %2069 = vmatpush1.msra.mxu0 %v2063
        %2070 = vmatprep.subr.mxu0 0.0
        %2071 = vmatpush1.msra.mxu0 0.0
        %2072 = vmatprep.subr.mxu0 0.0
        %2073 = vmatpush1.msra.mxu0 0.0
        %2074 = vmatprep.subr.mxu0 0.0
        %2075 = vmatpush1.msra.mxu0 0.0
        %2076 = vmatprep.subr.mxu0 0.0
        %2077 = vmatpush1.msra.mxu0 0.0
        %2078 = vmatprep.subr.mxu0 0.0
        %2079 = vmatpush1.msra.mxu0 0.0
        %2080 = vmatprep.subr.mxu0 0.0
        %2081 = vmatpush1.msra.mxu0 0.0
        %2082 = vmatprep.subr.mxu0 0.0
        %2083 = vmatpush1.msra.mxu0 0.0
        %2084 = vmatprep.subr.mxu0 0.0
        %2085 = vmatpush1.msra.mxu0 0.0
        %2086 = vmatprep.subr.mxu0 0.0
        %2087 = vmatpush1.msra.mxu0 0.0
        %2088 = vmatprep.subr.mxu0 0.0
        %2089 = vmatpush1.msra.mxu0 0.0
        %2090 = vmatprep.subr.mxu0 0.0
        %2091 = vmatpush1.msra.mxu0 0.0
        %2092 = vmatprep.subr.mxu0 0.0
        %2093 = vmatpush1.msra.mxu0 0.0
        %2094 = vmatprep.subr.mxu0 0.0
        %2095 = vmatpush1.msra.mxu0 0.0
        %2096 = vmatprep.subr.mxu0 0.0
        %2097 = vmatpush1.msra.mxu0 0.0
        %2098 = vmatprep.subr.mxu0 0.0
        %2099 = vmatpush1.msra.mxu0 0.0
        %2100 = vmatprep.subr.mxu0 0.0
        %2101 = vmatpush1.msra.mxu0 0.0
        %2102 = vmatprep.subr.mxu0 0.0
        %2103 = vmatpush1.msra.mxu0 0.0
        %2104 = vmatprep.subr.mxu0 0.0
        %2105 = vmatpush1.msra.mxu0 0.0
        %2106 = vmatprep.subr.mxu0 0.0
        %2107 = vmatpush1.msra.mxu0 0.0
        %2108 = vmatprep.subr.mxu0 0.0
        %2109 = vmatpush1.msra.mxu0 0.0
        %2110 = vmatprep.subr.mxu0 0.0
        %2111 = vmatpush1.msra.mxu0 0.0
        %2112 = vmatprep.subr.mxu0 0.0
        %2113 = vmatpush1.msra.mxu0 0.0
        %2114 = vmatprep.subr.mxu0 0.0
        %2115 = vmatpush1.msra.mxu0 0.0
        %2116 = vmatprep.subr.mxu0 0.0
        %2117 = vmatpush1.msra.mxu0 0.0
        %2118 = vmatprep.subr.mxu0 0.0
        %2119 = vmatpush1.msra.mxu0 0.0
        %2120 = vmatprep.subr.mxu0 0.0
        %2121 = vmatpush1.msra.mxu0 0.0
        %2122 = vmatprep.subr.mxu0 0.0
        %2123 = vmatpush1.msra.mxu0 0.0
        %2124 = vmatprep.subr.mxu0 0.0
        %2125 = vmatpush1.msra.mxu0 0.0
        %2126 = vmatprep.subr.mxu0 0.0
        %2127 = vmatpush1.msra.mxu0 0.0
        %2128 = vmatprep.subr.mxu0 0.0
        %2129 = vmatpush1.msra.mxu0 0.0
        %2130 = vmatprep.subr.mxu0 0.0
        %2131 = vmatpush1.msra.mxu0 0.0
        %2132 = vmatprep.mubr.f32.mxu0 0.0
        %2133 = vmatmul.mubr.f32.gmra.mrb[0].mxu0 %v2066
        %v2134 = vpop.f32.mrb[0].mxu0
        %v2135 = vadd.f32 0.0, %v2134
        %v2136 = vpop.f32.mrb[0].mxu0
        %2137 = vdwg.mxu0
        %2138 = vrot.lane.b32.xlu0 %v1400, 112
        %v2139 = vpop.permute.xlu0 %2138
        %2140 = vrot.lane.b32.xlu0 %v1400, 80
        %v2141 = vpop.permute.xlu0 %2140
        %v2142 = vsel %vm1482, %v2139, 0
        %v2144 = vsel %vm1482, %v2141, 0
        %2146 = vmatprep.subr.mxu0 0.0
        %2147 = vmatpush1.xpose.msra.mxu0 %v2144
        %2148 = vmatprep.subr.mxu0 0.0
        %2149 = vmatpush1.xpose.msra.mxu0 0.0
        %2150 = vmatprep.subr.mxu0 0.0
        %2151 = vmatpush1.xpose.msra.mxu0 0.0
        %2152 = vmatprep.subr.mxu0 0.0
        %2153 = vmatpush1.xpose.msra.mxu0 0.0
        %2154 = vmatprep.subr.mxu0 0.0
        %2155 = vmatpush1.xpose.msra.mxu0 0.0
        %2156 = vmatprep.subr.mxu0 0.0
        %2157 = vmatpush1.xpose.msra.mxu0 0.0
        %2158 = vmatprep.subr.mxu0 0.0
        %2159 = vmatpush1.xpose.msra.mxu0 0.0
        %2160 = vmatprep.subr.mxu0 0.0
        %2161 = vmatpush1.xpose.msra.mxu0 0.0
        %2162 = vmatprep.subr.mxu0 0.0
        %2163 = vmatpush1.xpose.msra.mxu0 0.0
        %2164 = vmatprep.subr.mxu0 0.0
        %2165 = vmatpush1.xpose.msra.mxu0 0.0
        %2166 = vmatprep.subr.mxu0 0.0
        %2167 = vmatpush1.xpose.msra.mxu0 0.0
        %2168 = vmatprep.subr.mxu0 0.0
        %2169 = vmatpush1.xpose.msra.mxu0 0.0
        %2170 = vmatprep.subr.mxu0 0.0
        %2171 = vmatpush1.xpose.msra.mxu0 0.0
        %2172 = vmatprep.subr.mxu0 0.0
        %2173 = vmatpush1.xpose.msra.mxu0 0.0
        %2174 = vmatprep.subr.mxu0 0.0
        %2175 = vmatpush1.xpose.msra.mxu0 0.0
        %2176 = vmatprep.subr.mxu0 0.0
        %2177 = vmatpush1.xpose.msra.mxu0 0.0
        %2178 = vmatprep.subr.mxu0 0.0
        %2179 = vmatpush1.xpose.msra.mxu0 0.0
        %2180 = vmatprep.subr.mxu0 0.0
        %2181 = vmatpush1.xpose.msra.mxu0 0.0
        %2182 = vmatprep.subr.mxu0 0.0
        %2183 = vmatpush1.xpose.msra.mxu0 0.0
        %2184 = vmatprep.subr.mxu0 0.0
        %2185 = vmatpush1.xpose.msra.mxu0 0.0
        %2186 = vmatprep.subr.mxu0 0.0
        %2187 = vmatpush1.xpose.msra.mxu0 0.0
        %2188 = vmatprep.subr.mxu0 0.0
        %2189 = vmatpush1.xpose.msra.mxu0 0.0
        %2190 = vmatprep.subr.mxu0 0.0
        %2191 = vmatpush1.xpose.msra.mxu0 0.0
        %2192 = vmatprep.subr.mxu0 0.0
        %2193 = vmatpush1.xpose.msra.mxu0 0.0
        %2194 = vmatprep.subr.mxu0 0.0
        %2195 = vmatpush1.xpose.msra.mxu0 0.0
        %2196 = vmatprep.subr.mxu0 0.0
        %2197 = vmatpush1.xpose.msra.mxu0 0.0
        %2198 = vmatprep.subr.mxu0 0.0
        %2199 = vmatpush1.xpose.msra.mxu0 0.0
        %2200 = vmatprep.subr.mxu0 0.0
        %2201 = vmatpush1.xpose.msra.mxu0 0.0
        %2202 = vmatprep.subr.mxu0 0.0
        %2203 = vmatpush1.xpose.msra.mxu0 0.0
        %2204 = vmatprep.subr.mxu0 0.0
        %2205 = vmatpush1.xpose.msra.mxu0 0.0
        %2206 = vmatprep.subr.mxu0 0.0
        %2207 = vmatpush1.xpose.msra.mxu0 0.0
        %2208 = vmatprep.subr.mxu0 0.0
        %2209 = vmatpush1.xpose.msra.mxu0 0.0
        %2210 = vmatprep.mubr.f32.mxu0 0.0
        %2211 = vmatmul.mubr.f32.gmra.mrb[0].mxu0 %v2142
        %v2212 = vpop.f32.mrb[0].mxu0
        %v2213 = vadd.f32 0.0, %v2212
        %v2214 = vpop.f32.mrb[0].mxu0
        %2215 = vdwg.mxu0
        %2216 = vrot.lane.b32.xlu0 %v1403, 112
        %v2217 = vpop.permute.xlu0 %2216
        %2218 = vrot.lane.b32.xlu0 %v1403, 80
        %v2219 = vpop.permute.xlu0 %2218
        %v2220 = vsel %vm1482, %v2217, 0
        %v2222 = vsel %vm1482, %v2219, 0
        %2224 = vmatprep.subr.mxu0 0.0
        %2225 = vmatpush1.xpose.msra.mxu0 %v2222
        %2226 = vmatprep.subr.mxu0 0.0
        %2227 = vmatpush1.xpose.msra.mxu0 0.0
        %2228 = vmatprep.subr.mxu0 0.0
        %2229 = vmatpush1.xpose.msra.mxu0 0.0
        %2230 = vmatprep.subr.mxu0 0.0
        %2231 = vmatpush1.xpose.msra.mxu0 0.0
        %2232 = vmatprep.subr.mxu0 0.0
        %2233 = vmatpush1.xpose.msra.mxu0 0.0
        %2234 = vmatprep.subr.mxu0 0.0
        %2235 = vmatpush1.xpose.msra.mxu0 0.0
        %2236 = vmatprep.subr.mxu0 0.0
        %2237 = vmatpush1.xpose.msra.mxu0 0.0
        %2238 = vmatprep.subr.mxu0 0.0
        %2239 = vmatpush1.xpose.msra.mxu0 0.0
        %2240 = vmatprep.subr.mxu0 0.0
        %2241 = vmatpush1.xpose.msra.mxu0 0.0
        %2242 = vmatprep.subr.mxu0 0.0
        %2243 = vmatpush1.xpose.msra.mxu0 0.0
        %2244 = vmatprep.subr.mxu0 0.0
        %2245 = vmatpush1.xpose.msra.mxu0 0.0
        %2246 = vmatprep.subr.mxu0 0.0
        %2247 = vmatpush1.xpose.msra.mxu0 0.0
        %2248 = vmatprep.subr.mxu0 0.0
        %2249 = vmatpush1.xpose.msra.mxu0 0.0
        %2250 = vmatprep.subr.mxu0 0.0
        %2251 = vmatpush1.xpose.msra.mxu0 0.0
        %2252 = vmatprep.subr.mxu0 0.0
        %2253 = vmatpush1.xpose.msra.mxu0 0.0
        %2254 = vmatprep.subr.mxu0 0.0
        %2255 = vmatpush1.xpose.msra.mxu0 0.0
        %2256 = vmatprep.subr.mxu0 0.0
        %2257 = vmatpush1.xpose.msra.mxu0 0.0
        %2258 = vmatprep.subr.mxu0 0.0
        %2259 = vmatpush1.xpose.msra.mxu0 0.0
        %2260 = vmatprep.subr.mxu0 0.0
        %2261 = vmatpush1.xpose.msra.mxu0 0.0
        %2262 = vmatprep.subr.mxu0 0.0
        %2263 = vmatpush1.xpose.msra.mxu0 0.0
        %2264 = vmatprep.subr.mxu0 0.0
        %2265 = vmatpush1.xpose.msra.mxu0 0.0
        %2266 = vmatprep.subr.mxu0 0.0
        %2267 = vmatpush1.xpose.msra.mxu0 0.0
        %2268 = vmatprep.subr.mxu0 0.0
        %2269 = vmatpush1.xpose.msra.mxu0 0.0
        %2270 = vmatprep.subr.mxu0 0.0
        %2271 = vmatpush1.xpose.msra.mxu0 0.0
        %2272 = vmatprep.subr.mxu0 0.0
        %2273 = vmatpush1.xpose.msra.mxu0 0.0
        %2274 = vmatprep.subr.mxu0 0.0
        %2275 = vmatpush1.xpose.msra.mxu0 0.0
        %2276 = vmatprep.subr.mxu0 0.0
        %2277 = vmatpush1.xpose.msra.mxu0 0.0
        %2278 = vmatprep.subr.mxu0 0.0
        %2279 = vmatpush1.xpose.msra.mxu0 0.0
        %2280 = vmatprep.subr.mxu0 0.0
        %2281 = vmatpush1.xpose.msra.mxu0 0.0
        %2282 = vmatprep.subr.mxu0 0.0
        %2283 = vmatpush1.xpose.msra.mxu0 0.0
        %2284 = vmatprep.subr.mxu0 0.0
        %2285 = vmatpush1.xpose.msra.mxu0 0.0
        %2286 = vmatprep.subr.mxu0 0.0
        %2287 = vmatpush1.xpose.msra.mxu0 0.0
        %2288 = vmatprep.mubr.f32.mxu0 0.0
        %2289 = vmatmul.mubr.f32.gmra.mrb[0].mxu0 %v2220
        %v2290 = vpop.f32.mrb[0].mxu0
        %v2291 = vadd.f32 0.0, %v2290
        %v2292 = vpop.f32.mrb[0].mxu0
        %2293 = vdwg.mxu0
        %v2294 = vmul.f32 %v2213, 0.35355338
        %v2295 = vmul.f32 %v2291, 0.35355338
        %v2296 = vsel %vm1482, %v2294, -inf
        %2297 = vmax.xlane.f32.xlu0 %v2296
        %v2298 = vpop.xlane.xlu0 %2297
        %v2299 = vsel %vm1482, %v2295, -inf
        %2300 = vmax.xlane.f32.xlu0 %v2299
        %v2301 = vpop.xlane.xlu0 %2300
        %v2302 = vsub.f32 %v2294, %v2298
        %v2303 = vsub.f32 %v2295, %v2301
        %v2304 = vmul.f32 %v2302, 1.442695
        %v2305 = vpow.pop %v2304
        %v2306 = vmul.f32 %v2303, 1.442695
        %v2307 = vpow.pop %v2306
        %v2308 = vsel %vm1482, %v2305, 0.0
        %2309 = vadd.xlane.f32.xlu0 %v2308
        %v2310 = vpop.xlane.xlu0 %2309
        %v2311 = vsel %vm1482, %v2307, 0.0
        %2312 = vadd.xlane.f32.xlu0 %v2311
        %v2313 = vpop.xlane.xlu0 %2312
        %v2314 = vrcp.pop %v2310
        %v2315 = vmul.f32 %v2305, %v2314
        %v2316 = vrcp.pop %v2313
        %v2317 = vmul.f32 %v2307, %v2316
        %2318 = vrot.lane.b32.xlu0 %v1468, 112
        %v2319 = vpop.permute.xlu0 %2318
        %v2322 = vsel %vm1482, %v2315, 0
        %2324 = vmatprep.subr.mxu0 0.0
        %2325 = vmatpush1.msra.mxu0 %v2319
        %2326 = vmatprep.subr.mxu0 0.0
        %2327 = vmatpush1.msra.mxu0 0.0
        %2328 = vmatprep.subr.mxu0 0.0
        %2329 = vmatpush1.msra.mxu0 0.0
        %2330 = vmatprep.subr.mxu0 0.0
        %2331 = vmatpush1.msra.mxu0 0.0
        %2332 = vmatprep.subr.mxu0 0.0
        %2333 = vmatpush1.msra.mxu0 0.0
        %2334 = vmatprep.subr.mxu0 0.0
        %2335 = vmatpush1.msra.mxu0 0.0
        %2336 = vmatprep.subr.mxu0 0.0
        %2337 = vmatpush1.msra.mxu0 0.0
        %2338 = vmatprep.subr.mxu0 0.0
        %2339 = vmatpush1.msra.mxu0 0.0
        %2340 = vmatprep.subr.mxu0 0.0
        %2341 = vmatpush1.msra.mxu0 0.0
        %2342 = vmatprep.subr.mxu0 0.0
        %2343 = vmatpush1.msra.mxu0 0.0
        %2344 = vmatprep.subr.mxu0 0.0
        %2345 = vmatpush1.msra.mxu0 0.0
        %2346 = vmatprep.subr.mxu0 0.0
        %2347 = vmatpush1.msra.mxu0 0.0
        %2348 = vmatprep.subr.mxu0 0.0
        %2349 = vmatpush1.msra.mxu0 0.0
        %2350 = vmatprep.subr.mxu0 0.0
        %2351 = vmatpush1.msra.mxu0 0.0
        %2352 = vmatprep.subr.mxu0 0.0
        %2353 = vmatpush1.msra.mxu0 0.0
        %2354 = vmatprep.subr.mxu0 0.0
        %2355 = vmatpush1.msra.mxu0 0.0
        %2356 = vmatprep.subr.mxu0 0.0
        %2357 = vmatpush1.msra.mxu0 0.0
        %2358 = vmatprep.subr.mxu0 0.0
        %2359 = vmatpush1.msra.mxu0 0.0
        %2360 = vmatprep.subr.mxu0 0.0
        %2361 = vmatpush1.msra.mxu0 0.0
        %2362 = vmatprep.subr.mxu0 0.0
        %2363 = vmatpush1.msra.mxu0 0.0
        %2364 = vmatprep.subr.mxu0 0.0
        %2365 = vmatpush1.msra.mxu0 0.0
        %2366 = vmatprep.subr.mxu0 0.0
        %2367 = vmatpush1.msra.mxu0 0.0
        %2368 = vmatprep.subr.mxu0 0.0
        %2369 = vmatpush1.msra.mxu0 0.0
        %2370 = vmatprep.subr.mxu0 0.0
        %2371 = vmatpush1.msra.mxu0 0.0
        %2372 = vmatprep.subr.mxu0 0.0
        %2373 = vmatpush1.msra.mxu0 0.0
        %2374 = vmatprep.subr.mxu0 0.0
        %2375 = vmatpush1.msra.mxu0 0.0
        %2376 = vmatprep.subr.mxu0 0.0
        %2377 = vmatpush1.msra.mxu0 0.0
        %2378 = vmatprep.subr.mxu0 0.0
        %2379 = vmatpush1.msra.mxu0 0.0
        %2380 = vmatprep.subr.mxu0 0.0
        %2381 = vmatpush1.msra.mxu0 0.0
        %2382 = vmatprep.subr.mxu0 0.0
        %2383 = vmatpush1.msra.mxu0 0.0
        %2384 = vmatprep.subr.mxu0 0.0
        %2385 = vmatpush1.msra.mxu0 0.0
        %2386 = vmatprep.subr.mxu0 0.0
        %2387 = vmatpush1.msra.mxu0 0.0
        %2388 = vmatprep.mubr.f32.mxu0 0.0
        %2389 = vmatmul.mubr.f32.gmra.mrb[0].mxu0 %v2322
        %v2390 = vpop.f32.mrb[0].mxu0
        %v2391 = vadd.f32 0.0, %v2390
        %v2392 = vpop.f32.mrb[0].mxu0
        %2393 = vdwg.mxu0
        %2394 = vrot.lane.b32.xlu0 %v1471, 112
        %v2395 = vpop.permute.xlu0 %2394
        %v2398 = vsel %vm1482, %v2317, 0
        %2400 = vmatprep.subr.mxu0 0.0
        %2401 = vmatpush1.msra.mxu0 %v2395
        %2402 = vmatprep.subr.mxu0 0.0
        %2403 = vmatpush1.msra.mxu0 0.0
        %2404 = vmatprep.subr.mxu0 0.0
        %2405 = vmatpush1.msra.mxu0 0.0
        %2406 = vmatprep.subr.mxu0 0.0
        %2407 = vmatpush1.msra.mxu0 0.0
        %2408 = vmatprep.subr.mxu0 0.0
        %2409 = vmatpush1.msra.mxu0 0.0
        %2410 = vmatprep.subr.mxu0 0.0
        %2411 = vmatpush1.msra.mxu0 0.0
        %2412 = vmatprep.subr.mxu0 0.0
        %2413 = vmatpush1.msra.mxu0 0.0
        %2414 = vmatprep.subr.mxu0 0.0
        %2415 = vmatpush1.msra.mxu0 0.0
        %2416 = vmatprep.subr.mxu0 0.0
        %2417 = vmatpush1.msra.mxu0 0.0
        %2418 = vmatprep.subr.mxu0 0.0
        %2419 = vmatpush1.msra.mxu0 0.0
        %2420 = vmatprep.subr.mxu0 0.0
        %2421 = vmatpush1.msra.mxu0 0.0
        %2422 = vmatprep.subr.mxu0 0.0
        %2423 = vmatpush1.msra.mxu0 0.0
        %2424 = vmatprep.subr.mxu0 0.0
        %2425 = vmatpush1.msra.mxu0 0.0
        %2426 = vmatprep.subr.mxu0 0.0
        %2427 = vmatpush1.msra.mxu0 0.0
        %2428 = vmatprep.subr.mxu0 0.0
        %2429 = vmatpush1.msra.mxu0 0.0
        %2430 = vmatprep.subr.mxu0 0.0
        %2431 = vmatpush1.msra.mxu0 0.0
        %2432 = vmatprep.subr.mxu0 0.0
        %2433 = vmatpush1.msra.mxu0 0.0
        %2434 = vmatprep.subr.mxu0 0.0
        %2435 = vmatpush1.msra.mxu0 0.0
        %2436 = vmatprep.subr.mxu0 0.0
        %2437 = vmatpush1.msra.mxu0 0.0
        %2438 = vmatprep.subr.mxu0 0.0
        %2439 = vmatpush1.msra.mxu0 0.0
        %2440 = vmatprep.subr.mxu0 0.0
        %2441 = vmatpush1.msra.mxu0 0.0
        %2442 = vmatprep.subr.mxu0 0.0
        %2443 = vmatpush1.msra.mxu0 0.0
        %2444 = vmatprep.subr.mxu0 0.0
        %2445 = vmatpush1.msra.mxu0 0.0
        %2446 = vmatprep.subr.mxu0 0.0
        %2447 = vmatpush1.msra.mxu0 0.0
        %2448 = vmatprep.subr.mxu0 0.0
        %2449 = vmatpush1.msra.mxu0 0.0
        %2450 = vmatprep.subr.mxu0 0.0
        %2451 = vmatpush1.msra.mxu0 0.0
        %2452 = vmatprep.subr.mxu0 0.0
        %2453 = vmatpush1.msra.mxu0 0.0
        %2454 = vmatprep.subr.mxu0 0.0
        %2455 = vmatpush1.msra.mxu0 0.0
        %2456 = vmatprep.subr.mxu0 0.0
        %2457 = vmatpush1.msra.mxu0 0.0
        %2458 = vmatprep.subr.mxu0 0.0
        %2459 = vmatpush1.msra.mxu0 0.0
        %2460 = vmatprep.subr.mxu0 0.0
        %2461 = vmatpush1.msra.mxu0 0.0
        %2462 = vmatprep.subr.mxu0 0.0
        %2463 = vmatpush1.msra.mxu0 0.0
        %2464 = vmatprep.mubr.f32.mxu0 0.0
        %2465 = vmatmul.mubr.f32.gmra.mrb[0].mxu0 %v2398
        %v2466 = vpop.f32.mrb[0].mxu0
        %v2467 = vadd.f32 0.0, %v2466
        %v2468 = vpop.f32.mrb[0].mxu0
        %2469 = vdwg.mxu0
        %2470 = vrot.lane.b32.xlu0 %v1400, 104
        %v2471 = vpop.permute.xlu0 %2470
        %2472 = vrot.lane.b32.xlu0 %v1400, 72
        %v2473 = vpop.permute.xlu0 %2472
        %v2474 = vsel %vm1482, %v2471, 0
        %v2476 = vsel %vm1482, %v2473, 0
        %2478 = vmatprep.subr.mxu0 0.0
        %2479 = vmatpush1.xpose.msra.mxu0 %v2476
        %2480 = vmatprep.subr.mxu0 0.0
        %2481 = vmatpush1.xpose.msra.mxu0 0.0
        %2482 = vmatprep.subr.mxu0 0.0
        %2483 = vmatpush1.xpose.msra.mxu0 0.0
        %2484 = vmatprep.subr.mxu0 0.0
        %2485 = vmatpush1.xpose.msra.mxu0 0.0
        %2486 = vmatprep.subr.mxu0 0.0
        %2487 = vmatpush1.xpose.msra.mxu0 0.0
        %2488 = vmatprep.subr.mxu0 0.0
        %2489 = vmatpush1.xpose.msra.mxu0 0.0
        %2490 = vmatprep.subr.mxu0 0.0
        %2491 = vmatpush1.xpose.msra.mxu0 0.0
        %2492 = vmatprep.subr.mxu0 0.0
        %2493 = vmatpush1.xpose.msra.mxu0 0.0
        %2494 = vmatprep.subr.mxu0 0.0
        %2495 = vmatpush1.xpose.msra.mxu0 0.0
        %2496 = vmatprep.subr.mxu0 0.0
        %2497 = vmatpush1.xpose.msra.mxu0 0.0
        %2498 = vmatprep.subr.mxu0 0.0
        %2499 = vmatpush1.xpose.msra.mxu0 0.0
        %2500 = vmatprep.subr.mxu0 0.0
        %2501 = vmatpush1.xpose.msra.mxu0 0.0
        %2502 = vmatprep.subr.mxu0 0.0
        %2503 = vmatpush1.xpose.msra.mxu0 0.0
        %2504 = vmatprep.subr.mxu0 0.0
        %2505 = vmatpush1.xpose.msra.mxu0 0.0
        %2506 = vmatprep.subr.mxu0 0.0
        %2507 = vmatpush1.xpose.msra.mxu0 0.0
        %2508 = vmatprep.subr.mxu0 0.0
        %2509 = vmatpush1.xpose.msra.mxu0 0.0
        %2510 = vmatprep.subr.mxu0 0.0
        %2511 = vmatpush1.xpose.msra.mxu0 0.0
        %2512 = vmatprep.subr.mxu0 0.0
        %2513 = vmatpush1.xpose.msra.mxu0 0.0
        %2514 = vmatprep.subr.mxu0 0.0
        %2515 = vmatpush1.xpose.msra.mxu0 0.0
        %2516 = vmatprep.subr.mxu0 0.0
        %2517 = vmatpush1.xpose.msra.mxu0 0.0
        %2518 = vmatprep.subr.mxu0 0.0
        %2519 = vmatpush1.xpose.msra.mxu0 0.0
        %2520 = vmatprep.subr.mxu0 0.0
        %2521 = vmatpush1.xpose.msra.mxu0 0.0
        %2522 = vmatprep.subr.mxu0 0.0
        %2523 = vmatpush1.xpose.msra.mxu0 0.0
        %2524 = vmatprep.subr.mxu0 0.0
        %2525 = vmatpush1.xpose.msra.mxu0 0.0
        %2526 = vmatprep.subr.mxu0 0.0
        %2527 = vmatpush1.xpose.msra.mxu0 0.0
        %2528 = vmatprep.subr.mxu0 0.0
        %2529 = vmatpush1.xpose.msra.mxu0 0.0
        %2530 = vmatprep.subr.mxu0 0.0
        %2531 = vmatpush1.xpose.msra.mxu0 0.0
        %2532 = vmatprep.subr.mxu0 0.0
        %2533 = vmatpush1.xpose.msra.mxu0 0.0
        %2534 = vmatprep.subr.mxu0 0.0
        %2535 = vmatpush1.xpose.msra.mxu0 0.0
        %2536 = vmatprep.subr.mxu0 0.0
        %2537 = vmatpush1.xpose.msra.mxu0 0.0
        %2538 = vmatprep.subr.mxu0 0.0
        %2539 = vmatpush1.xpose.msra.mxu0 0.0
        %2540 = vmatprep.subr.mxu0 0.0
        %2541 = vmatpush1.xpose.msra.mxu0 0.0
        %2542 = vmatprep.mubr.f32.mxu0 0.0
        %2543 = vmatmul.mubr.f32.gmra.mrb[0].mxu0 %v2474
        %v2544 = vpop.f32.mrb[0].mxu0
        %v2545 = vadd.f32 0.0, %v2544
        %v2546 = vpop.f32.mrb[0].mxu0
        %2547 = vdwg.mxu0
        %2548 = vrot.lane.b32.xlu0 %v1403, 104
        %v2549 = vpop.permute.xlu0 %2548
        %2550 = vrot.lane.b32.xlu0 %v1403, 72
        %v2551 = vpop.permute.xlu0 %2550
        %v2552 = vsel %vm1482, %v2549, 0
        %v2554 = vsel %vm1482, %v2551, 0
        %2556 = vmatprep.subr.mxu0 0.0
        %2557 = vmatpush1.xpose.msra.mxu0 %v2554
        %2558 = vmatprep.subr.mxu0 0.0
        %2559 = vmatpush1.xpose.msra.mxu0 0.0
        %2560 = vmatprep.subr.mxu0 0.0
        %2561 = vmatpush1.xpose.msra.mxu0 0.0
        %2562 = vmatprep.subr.mxu0 0.0
        %2563 = vmatpush1.xpose.msra.mxu0 0.0
        %2564 = vmatprep.subr.mxu0 0.0
        %2565 = vmatpush1.xpose.msra.mxu0 0.0
        %2566 = vmatprep.subr.mxu0 0.0
        %2567 = vmatpush1.xpose.msra.mxu0 0.0
        %2568 = vmatprep.subr.mxu0 0.0
        %2569 = vmatpush1.xpose.msra.mxu0 0.0
        %2570 = vmatprep.subr.mxu0 0.0
        %2571 = vmatpush1.xpose.msra.mxu0 0.0
        %2572 = vmatprep.subr.mxu0 0.0
        %2573 = vmatpush1.xpose.msra.mxu0 0.0
        %2574 = vmatprep.subr.mxu0 0.0
        %2575 = vmatpush1.xpose.msra.mxu0 0.0
        %2576 = vmatprep.subr.mxu0 0.0
        %2577 = vmatpush1.xpose.msra.mxu0 0.0
        %2578 = vmatprep.subr.mxu0 0.0
        %2579 = vmatpush1.xpose.msra.mxu0 0.0
        %2580 = vmatprep.subr.mxu0 0.0
        %2581 = vmatpush1.xpose.msra.mxu0 0.0
        %2582 = vmatprep.subr.mxu0 0.0
        %2583 = vmatpush1.xpose.msra.mxu0 0.0
        %2584 = vmatprep.subr.mxu0 0.0
        %2585 = vmatpush1.xpose.msra.mxu0 0.0
        %2586 = vmatprep.subr.mxu0 0.0
        %2587 = vmatpush1.xpose.msra.mxu0 0.0
        %2588 = vmatprep.subr.mxu0 0.0
        %2589 = vmatpush1.xpose.msra.mxu0 0.0
        %2590 = vmatprep.subr.mxu0 0.0
        %2591 = vmatpush1.xpose.msra.mxu0 0.0
        %2592 = vmatprep.subr.mxu0 0.0
        %2593 = vmatpush1.xpose.msra.mxu0 0.0
        %2594 = vmatprep.subr.mxu0 0.0
        %2595 = vmatpush1.xpose.msra.mxu0 0.0
        %2596 = vmatprep.subr.mxu0 0.0
        %2597 = vmatpush1.xpose.msra.mxu0 0.0
        %2598 = vmatprep.subr.mxu0 0.0
        %2599 = vmatpush1.xpose.msra.mxu0 0.0
        %2600 = vmatprep.subr.mxu0 0.0
        %2601 = vmatpush1.xpose.msra.mxu0 0.0
        %2602 = vmatprep.subr.mxu0 0.0
        %2603 = vmatpush1.xpose.msra.mxu0 0.0
        %2604 = vmatprep.subr.mxu0 0.0
        %2605 = vmatpush1.xpose.msra.mxu0 0.0
        %2606 = vmatprep.subr.mxu0 0.0
        %2607 = vmatpush1.xpose.msra.mxu0 0.0
        %2608 = vmatprep.subr.mxu0 0.0
        %2609 = vmatpush1.xpose.msra.mxu0 0.0
        %2610 = vmatprep.subr.mxu0 0.0
        %2611 = vmatpush1.xpose.msra.mxu0 0.0
        %2612 = vmatprep.subr.mxu0 0.0
        %2613 = vmatpush1.xpose.msra.mxu0 0.0
        %2614 = vmatprep.subr.mxu0 0.0
        %2615 = vmatpush1.xpose.msra.mxu0 0.0
        %2616 = vmatprep.subr.mxu0 0.0
        %2617 = vmatpush1.xpose.msra.mxu0 0.0
        %2618 = vmatprep.subr.mxu0 0.0
        %2619 = vmatpush1.xpose.msra.mxu0 0.0
        %2620 = vmatprep.mubr.f32.mxu0 0.0
        %2621 = vmatmul.mubr.f32.gmra.mrb[0].mxu0 %v2552
        %v2622 = vpop.f32.mrb[0].mxu0
        %v2623 = vadd.f32 0.0, %v2622
        %v2624 = vpop.f32.mrb[0].mxu0
        %2625 = vdwg.mxu0
        %v2626 = vmul.f32 %v2545, 0.35355338
        %v2627 = vmul.f32 %v2623, 0.35355338
        %v2628 = vsel %vm1482, %v2626, -inf
        %2629 = vmax.xlane.f32.xlu0 %v2628
        %v2630 = vpop.xlane.xlu0 %2629
        %v2631 = vsel %vm1482, %v2627, -inf
        %2632 = vmax.xlane.f32.xlu0 %v2631
        %v2633 = vpop.xlane.xlu0 %2632
        %v2634 = vsub.f32 %v2626, %v2630
        %v2635 = vsub.f32 %v2627, %v2633
        %v2636 = vmul.f32 %v2634, 1.442695
        %v2637 = vpow.pop %v2636
        %v2638 = vmul.f32 %v2635, 1.442695
        %v2639 = vpow.pop %v2638
        %v2640 = vsel %vm1482, %v2637, 0.0
        %2641 = vadd.xlane.f32.xlu0 %v2640
        %v2642 = vpop.xlane.xlu0 %2641
        %v2643 = vsel %vm1482, %v2639, 0.0
        %2644 = vadd.xlane.f32.xlu0 %v2643
        %v2645 = vpop.xlane.xlu0 %2644
        %v2646 = vrcp.pop %v2642
        %v2647 = vmul.f32 %v2637, %v2646
        %v2648 = vrcp.pop %v2645
        %v2649 = vmul.f32 %v2639, %v2648
        %2650 = vrot.lane.b32.xlu0 %v1468, 104
        %v2651 = vpop.permute.xlu0 %2650
        %v2654 = vsel %vm1482, %v2647, 0
        %2656 = vmatprep.subr.mxu0 0.0
        %2657 = vmatpush1.msra.mxu0 %v2651
        %2658 = vmatprep.subr.mxu0 0.0
        %2659 = vmatpush1.msra.mxu0 0.0
        %2660 = vmatprep.subr.mxu0 0.0
        %2661 = vmatpush1.msra.mxu0 0.0
        %2662 = vmatprep.subr.mxu0 0.0
        %2663 = vmatpush1.msra.mxu0 0.0
        %2664 = vmatprep.subr.mxu0 0.0
        %2665 = vmatpush1.msra.mxu0 0.0
        %2666 = vmatprep.subr.mxu0 0.0
        %2667 = vmatpush1.msra.mxu0 0.0
        %2668 = vmatprep.subr.mxu0 0.0
        %2669 = vmatpush1.msra.mxu0 0.0
        %2670 = vmatprep.subr.mxu0 0.0
        %2671 = vmatpush1.msra.mxu0 0.0
        %2672 = vmatprep.subr.mxu0 0.0
        %2673 = vmatpush1.msra.mxu0 0.0
        %2674 = vmatprep.subr.mxu0 0.0
        %2675 = vmatpush1.msra.mxu0 0.0
        %2676 = vmatprep.subr.mxu0 0.0
        %2677 = vmatpush1.msra.mxu0 0.0
        %2678 = vmatprep.subr.mxu0 0.0
        %2679 = vmatpush1.msra.mxu0 0.0
        %2680 = vmatprep.subr.mxu0 0.0
        %2681 = vmatpush1.msra.mxu0 0.0
        %2682 = vmatprep.subr.mxu0 0.0
        %2683 = vmatpush1.msra.mxu0 0.0
        %2684 = vmatprep.subr.mxu0 0.0
        %2685 = vmatpush1.msra.mxu0 0.0
        %2686 = vmatprep.subr.mxu0 0.0
        %2687 = vmatpush1.msra.mxu0 0.0
        %2688 = vmatprep.subr.mxu0 0.0
        %2689 = vmatpush1.msra.mxu0 0.0
        %2690 = vmatprep.subr.mxu0 0.0
        %2691 = vmatpush1.msra.mxu0 0.0
        %2692 = vmatprep.subr.mxu0 0.0
        %2693 = vmatpush1.msra.mxu0 0.0
        %2694 = vmatprep.subr.mxu0 0.0
        %2695 = vmatpush1.msra.mxu0 0.0
        %2696 = vmatprep.subr.mxu0 0.0
        %2697 = vmatpush1.msra.mxu0 0.0
        %2698 = vmatprep.subr.mxu0 0.0
        %2699 = vmatpush1.msra.mxu0 0.0
        %2700 = vmatprep.subr.mxu0 0.0
        %2701 = vmatpush1.msra.mxu0 0.0
        %2702 = vmatprep.subr.mxu0 0.0
        %2703 = vmatpush1.msra.mxu0 0.0
        %2704 = vmatprep.subr.mxu0 0.0
        %2705 = vmatpush1.msra.mxu0 0.0
        %2706 = vmatprep.subr.mxu0 0.0
        %2707 = vmatpush1.msra.mxu0 0.0
        %2708 = vmatprep.subr.mxu0 0.0
        %2709 = vmatpush1.msra.mxu0 0.0
        %2710 = vmatprep.subr.mxu0 0.0
        %2711 = vmatpush1.msra.mxu0 0.0
        %2712 = vmatprep.subr.mxu0 0.0
        %2713 = vmatpush1.msra.mxu0 0.0
        %2714 = vmatprep.subr.mxu0 0.0
        %2715 = vmatpush1.msra.mxu0 0.0
        %2716 = vmatprep.subr.mxu0 0.0
        %2717 = vmatpush1.msra.mxu0 0.0
        %2718 = vmatprep.subr.mxu0 0.0
        %2719 = vmatpush1.msra.mxu0 0.0
        %2720 = vmatprep.mubr.f32.mxu0 0.0
        %2721 = vmatmul.mubr.f32.gmra.mrb[0].mxu0 %v2654
        %v2722 = vpop.f32.mrb[0].mxu0
        %v2723 = vadd.f32 0.0, %v2722
        %v2724 = vpop.f32.mrb[0].mxu0
        %2725 = vdwg.mxu0
        %2726 = vrot.lane.b32.xlu0 %v1471, 104
        %v2727 = vpop.permute.xlu0 %2726
        %v2730 = vsel %vm1482, %v2649, 0
        %2732 = vmatprep.subr.mxu0 0.0
        %2733 = vmatpush1.msra.mxu0 %v2727
        %2734 = vmatprep.subr.mxu0 0.0
        %2735 = vmatpush1.msra.mxu0 0.0
        %2736 = vmatprep.subr.mxu0 0.0
        %2737 = vmatpush1.msra.mxu0 0.0
        %2738 = vmatprep.subr.mxu0 0.0
        %2739 = vmatpush1.msra.mxu0 0.0
        %2740 = vmatprep.subr.mxu0 0.0
        %2741 = vmatpush1.msra.mxu0 0.0
        %2742 = vmatprep.subr.mxu0 0.0
        %2743 = vmatpush1.msra.mxu0 0.0
        %2744 = vmatprep.subr.mxu0 0.0
        %2745 = vmatpush1.msra.mxu0 0.0
        %2746 = vmatprep.subr.mxu0 0.0
        %2747 = vmatpush1.msra.mxu0 0.0
        %2748 = vmatprep.subr.mxu0 0.0
        %2749 = vmatpush1.msra.mxu0 0.0
        %2750 = vmatprep.subr.mxu0 0.0
        %2751 = vmatpush1.msra.mxu0 0.0
        %2752 = vmatprep.subr.mxu0 0.0
        %2753 = vmatpush1.msra.mxu0 0.0
        %2754 = vmatprep.subr.mxu0 0.0
        %2755 = vmatpush1.msra.mxu0 0.0
        %2756 = vmatprep.subr.mxu0 0.0
        %2757 = vmatpush1.msra.mxu0 0.0
        %2758 = vmatprep.subr.mxu0 0.0
        %2759 = vmatpush1.msra.mxu0 0.0
        %2760 = vmatprep.subr.mxu0 0.0
        %2761 = vmatpush1.msra.mxu0 0.0
        %2762 = vmatprep.subr.mxu0 0.0
        %2763 = vmatpush1.msra.mxu0 0.0
        %2764 = vmatprep.subr.mxu0 0.0
        %2765 = vmatpush1.msra.mxu0 0.0
        %2766 = vmatprep.subr.mxu0 0.0
        %2767 = vmatpush1.msra.mxu0 0.0
        %2768 = vmatprep.subr.mxu0 0.0
        %2769 = vmatpush1.msra.mxu0 0.0
        %2770 = vmatprep.subr.mxu0 0.0
        %2771 = vmatpush1.msra.mxu0 0.0
        %2772 = vmatprep.subr.mxu0 0.0
        %2773 = vmatpush1.msra.mxu0 0.0
        %2774 = vmatprep.subr.mxu0 0.0
        %2775 = vmatpush1.msra.mxu0 0.0
        %2776 = vmatprep.subr.mxu0 0.0
        %2777 = vmatpush1.msra.mxu0 0.0
        %2778 = vmatprep.subr.mxu0 0.0
        %2779 = vmatpush1.msra.mxu0 0.0
        %2780 = vmatprep.subr.mxu0 0.0
        %2781 = vmatpush1.msra.mxu0 0.0
        %2782 = vmatprep.subr.mxu0 0.0
        %2783 = vmatpush1.msra.mxu0 0.0
        %2784 = vmatprep.subr.mxu0 0.0
        %2785 = vmatpush1.msra.mxu0 0.0
        %2786 = vmatprep.subr.mxu0 0.0
        %2787 = vmatpush1.msra.mxu0 0.0
        %2788 = vmatprep.subr.mxu0 0.0
        %2789 = vmatpush1.msra.mxu0 0.0
        %2790 = vmatprep.subr.mxu0 0.0
        %2791 = vmatpush1.msra.mxu0 0.0
        %2792 = vmatprep.subr.mxu0 0.0
        %2793 = vmatpush1.msra.mxu0 0.0
        %2794 = vmatprep.subr.mxu0 0.0
        %2795 = vmatpush1.msra.mxu0 0.0
        %2796 = vmatprep.mubr.f32.mxu0 0.0
        %2797 = vmatmul.mubr.f32.gmra.mrb[0].mxu0 %v2730
        %v2798 = vpop.f32.mrb[0].mxu0
        %v2799 = vadd.f32 0.0, %v2798
        %v2800 = vpop.f32.mrb[0].mxu0
        %2801 = vdwg.mxu0
        %2804 = vrot.lane.b32.xlu0 %v2058, 8
        %v2805 = vpop.permute.xlu0 %2804
        %2806 = vrot.lane.b32.xlu0 %v2135, 8
        %v2807 = vpop.permute.xlu0 %2806
        %2812 = vrot.lane.b32.xlu0 %v2391, 16
        %v2813 = vpop.permute.xlu0 %2812
        %2814 = vrot.lane.b32.xlu0 %v2467, 16
        %v2815 = vpop.permute.xlu0 %2814
        %2820 = vrot.lane.b32.xlu0 %v2723, 24
        %v2821 = vpop.permute.xlu0 %2820
        %2822 = vrot.lane.b32.xlu0 %v2799, 24
        %v2823 = vpop.permute.xlu0 %2822
        %v2826 = vsel %vm1482, %v1728, %v2805
        %v2827 = vsel %vm1482, %v1801, %v2807
        %vm2828 = vcmask 130048
        %v2829 = vsel %vm2828, %v2826, %v2813
        %v2830 = vsel %vm2828, %v2827, %v2815
        %vm2831 = vcmask 195584
        %v2832 = vsel %vm2831, %v2829, %v2821
        %v2833 = vsel %vm2831, %v2830, %v2823
        %v2834 = vpack.c.bf16 %v2833, %v2832
        %v2836 = vlaneseq
        %v2837 = vshrl.u32 %v2836, 7
        %v2838 = vsub.s32 0, %v2837
        %v2839 = vrot.slane %v1478, %v2838
        %v2845 = vunpack.c.l.b16 %v1474
        %v2846 = vunpack.c.l.b16 %v1475
        %v2847 = vunpack.c.l.b16 %v1476
        %v2848 = vunpack.c.l.b16 %v1477
        %v2849 = vpack.c.b16 %v2846, %v2845
        %v2850 = vpack.c.b16 %v2848, %v2847
        %v2854 = vsel %vm1361, %v2834, 0
        %2856 = vmatprep.subr.bf16.mxu0 0
        %2857 = vmatpush1.bf16.msra.mxu0 %v2849
        %2858 = vmatprep.subr.bf16.mxu0 0
        %2859 = vmatpush1.bf16.msra.mxu0 %v2850
        %2860 = vmatprep.subr.bf16.mxu0 0
        %2861 = vmatpush1.bf16.msra.mxu0 0
        %2862 = vmatprep.subr.bf16.mxu0 0
        %2863 = vmatpush1.bf16.msra.mxu0 0
        %2864 = vmatprep.subr.bf16.mxu0 0
        %2865 = vmatpush1.bf16.msra.mxu0 0
        %2866 = vmatprep.subr.bf16.mxu0 0
        %2867 = vmatpush1.bf16.msra.mxu0 0
        %2868 = vmatprep.subr.bf16.mxu0 0
        %2869 = vmatpush1.bf16.msra.mxu0 0
        %2870 = vmatprep.subr.bf16.mxu0 0
        %2871 = vmatpush1.bf16.msra.mxu0 0
        %2872 = vmatprep.subr.bf16.mxu0 0
        %2873 = vmatpush1.bf16.msra.mxu0 0
        %2874 = vmatprep.subr.bf16.mxu0 0
        %2875 = vmatpush1.bf16.msra.mxu0 0
        %2876 = vmatprep.subr.bf16.mxu0 0
        %2877 = vmatpush1.bf16.msra.mxu0 0
        %2878 = vmatprep.subr.bf16.mxu0 0
        %2879 = vmatpush1.bf16.msra.mxu0 0
        %2880 = vmatprep.subr.bf16.mxu0 0
        %2881 = vmatpush1.bf16.msra.mxu0 0
        %2882 = vmatprep.subr.bf16.mxu0 0
        %2883 = vmatpush1.bf16.msra.mxu0 0
        %2884 = vmatprep.subr.bf16.mxu0 0
        %2885 = vmatpush1.bf16.msra.mxu0 0
        %2886 = vmatprep.subr.bf16.mxu0 0
        %2887 = vmatpush1.bf16.msra.mxu0 0
        %2888 = vmatprep.mubr.bf16.mxu0 0
        %2889 = vmatmul.mubr.bf16.gmra.mrb[0].mxu0 %v2854
        %v2890 = vpop.f32.mrb[0].mxu0
        %v2891 = vadd.f32 %v2839, %v2890
        %v2892 = vpop.f32.mrb[0].mxu0
        %v2893 = vpop.f32.mrb[0].mxu0
        %v2894 = vadd.f32 %v2839, %v2893
        %v2895 = vpop.f32.mrb[0].mxu0
        %2896 = vdwg.mxu0
        %v2897 = vadd.f32 %v1321, %v2891
        %v2898 = vadd.f32 %v1322, %v2894
        %v2899 = vld [vmem:[%s1249] sm:$0x1]
        %v2900 = vld [vmem:[%s1252] sm:$0x1]
        %v2901 = vsel %vm1361, %v2897, 0.0
        %2902 = vadd.xlane.f32.xlu0 %v2901
        %v2903 = vpop.xlane.xlu0 %2902
        %v2904 = vsel %vm1361, %v2898, 0.0
        %2905 = vadd.xlane.f32.xlu0 %v2904
        %v2906 = vpop.xlane.xlu0 %2905
        %v2907 = vrcp.pop 32.0
        %v2908 = vmul.f32 %v2903, %v2907
        %v2909 = vmul.f32 %v2906, %v2907
        %v2910 = vsub.f32 %v2897, %v2908
        %v2911 = vsub.f32 %v2898, %v2909
        %v2912 = vmul.f32 %v2910, %v2910
        %v2913 = vmul.f32 %v2911, %v2911
        %v2914 = vsel %vm1361, %v2912, 0.0
        %2915 = vadd.xlane.f32.xlu0 %v2914
        %v2916 = vpop.xlane.xlu0 %2915
        %v2917 = vsel %vm1361, %v2913, 0.0
        %2918 = vadd.xlane.f32.xlu0 %v2917
        %v2919 = vpop.xlane.xlu0 %2918
        %v2920 = vmul.f32 %v2916, %v2907
        %v2921 = vmul.f32 %v2919, %v2907
        %v2922 = vadd.f32 %v2920, 1e-05
        %v2923 = vadd.f32 %v2921, 1e-05
        %v2924 = vrsqrt.pop %v2922
        %v2925 = vrsqrt.pop %v2923
        %v2926 = vmul.f32 %v2910, %v2924
        %v2927 = vmul.f32 %v2911, %v2925
        %v2929 = vlaneseq
        %v2930 = vshrl.u32 %v2929, 7
        %v2931 = vsub.s32 0, %v2930
        %v2932 = vrot.slane %v2899, %v2931
        %v2934 = vmul.f32 %v2926, %v2932
        %v2935 = vmul.f32 %v2927, %v2932
        %v2937 = vlaneseq
        %v2938 = vshrl.u32 %v2937, 7
        %v2939 = vsub.s32 0, %v2938
        %v2940 = vrot.slane %v2900, %v2939
        %v2942 = vadd.f32 %v2934, %v2940
        %v2943 = vadd.f32 %v2935, %v2940
        %v2944 = vadd.f32 %v2942, %v1331
        %v2945 = vadd.f32 %v2943, %v1332
        %v2946 = vld [vmem:[%s1257] sm:$0xf]
        %v2947 = vld [vmem:[%s1257 + $0x4] sm:$0xf]
        %v2948 = vld [vmem:[%s1257 + $0x8] sm:$0xf]
        %v2949 = vld [vmem:[%s1257 + $0xc] sm:$0xf]
        %v2950 = vpack.c.bf16 %v2945, %v2944
        %v2951 = vld [vmem:[%s1260] sm:$0x1]
        %v2953 = vlaneseq
        %v2954 = vshrl.u32 %v2953, 7
        %v2955 = vsub.s32 0, %v2954
        %v2956 = vrot.slane %v2951, %v2955
        %v2962 = vunpack.c.l.b16 %v2946
        %v2963 = vunpack.c.l.b16 %v2947
        %v2964 = vunpack.c.l.b16 %v2948
        %v2965 = vunpack.c.l.b16 %v2949
        %v2966 = vpack.c.b16 %v2963, %v2962
        %v2967 = vpack.c.b16 %v2965, %v2964
        %v2971 = vsel %vm1361, %v2950, 0
        %2973 = vmatprep.subr.bf16.mxu0 0
        %2974 = vmatpush1.bf16.msra.mxu0 %v2966
        %2975 = vmatprep.subr.bf16.mxu0 0
        %2976 = vmatpush1.bf16.msra.mxu0 %v2967
        %2977 = vmatprep.subr.bf16.mxu0 0
        %2978 = vmatpush1.bf16.msra.mxu0 0
        %2979 = vmatprep.subr.bf16.mxu0 0
        %2980 = vmatpush1.bf16.msra.mxu0 0
        %2981 = vmatprep.subr.bf16.mxu0 0
        %2982 = vmatpush1.bf16.msra.mxu0 0
        %2983 = vmatprep.subr.bf16.mxu0 0
        %2984 = vmatpush1.bf16.msra.mxu0 0
        %2985 = vmatprep.subr.bf16.mxu0 0
        %2986 = vmatpush1.bf16.msra.mxu0 0
        %2987 = vmatprep.subr.bf16.mxu0 0
        %2988 = vmatpush1.bf16.msra.mxu0 0
        %2989 = vmatprep.subr.bf16.mxu0 0
        %2990 = vmatpush1.bf16.msra.mxu0 0
        %2991 = vmatprep.subr.bf16.mxu0 0
        %2992 = vmatpush1.bf16.msra.mxu0 0
        %2993 = vmatprep.subr.bf16.mxu0 0
        %2994 = vmatpush1.bf16.msra.mxu0 0
        %2995 = vmatprep.subr.bf16.mxu0 0
        %2996 = vmatpush1.bf16.msra.mxu0 0
        %2997 = vmatprep.subr.bf16.mxu0 0
        %2998 = vmatpush1.bf16.msra.mxu0 0
        %2999 = vmatprep.subr.bf16.mxu0 0
        %3000 = vmatpush1.bf16.msra.mxu0 0
        %3001 = vmatprep.subr.bf16.mxu0 0
        %3002 = vmatpush1.bf16.msra.mxu0 0
        %3003 = vmatprep.subr.bf16.mxu0 0
        %3004 = vmatpush1.bf16.msra.mxu0 0
        %3005 = vmatprep.mubr.bf16.mxu0 0
        %3006 = vmatmul.mubr.bf16.gmra.mrb[0].mxu0 %v2971
        %v3007 = vpop.f32.mrb[0].mxu0
        %v3008 = vadd.f32 %v2956, %v3007
        %v3009 = vpop.f32.mrb[0].mxu0
        %v3010 = vpop.f32.mrb[0].mxu0
        %v3011 = vadd.f32 %v2956, %v3010
        %v3012 = vpop.f32.mrb[0].mxu0
        %3013 = vdwg.mxu0
        %v3014 = vadd.f32 %v1323, %v1327
        %v3015 = vadd.f32 %v1324, %v1328
        %v3016 = vadd.f32 %v1325, %v1329
        %v3017 = vadd.f32 %v1326, %v1330
        %v3018 = vld [vmem:[%s1265] sm:$0xf]
        %v3019 = vld [vmem:[%s1265 + $0x4] sm:$0xf]
        %v3020 = vld [vmem:[%s1265 + $0x8] sm:$0xf]
        %v3021 = vld [vmem:[%s1265 + $0xc] sm:$0xf]
        %v3022 = vpack.c.bf16 %v3015, %v3014
        %v3023 = vpack.c.bf16 %v3017, %v3016
        %v3024 = vld [vmem:[%s1268] sm:$0x1]
        %v3026 = vlaneseq
        %v3027 = vshrl.u32 %v3026, 7
        %v3028 = vsub.s32 0, %v3027
        %v3029 = vrot.slane %v3024, %v3028
        %v3035 = vunpack.c.l.b16 %v3018
        %v3036 = vunpack.c.l.b16 %v3019
        %v3037 = vunpack.c.l.b16 %v3020
        %v3038 = vunpack.c.l.b16 %v3021
        %v3039 = vpack.c.b16 %v3036, %v3035
        %v3040 = vpack.c.b16 %v3038, %v3037
        %v3044 = vsel %vm1361, %v3022, 0
        %v3047 = vsel %vm1361, %v3023, 0
        %3049 = vmatprep.subr.bf16.mxu0 0
        %3050 = vmatpush1.bf16.msra.mxu0 %v3039
        %3051 = vmatprep.subr.bf16.mxu0 0
        %3052 = vmatpush1.bf16.msra.mxu0 %v3040
        %3053 = vmatprep.subr.bf16.mxu0 0
        %3054 = vmatpush1.bf16.msra.mxu0 0
        %3055 = vmatprep.subr.bf16.mxu0 0
        %3056 = vmatpush1.bf16.msra.mxu0 0
        %3057 = vmatprep.subr.bf16.mxu0 0
        %3058 = vmatpush1.bf16.msra.mxu0 0
        %3059 = vmatprep.subr.bf16.mxu0 0
        %3060 = vmatpush1.bf16.msra.mxu0 0
        %3061 = vmatprep.subr.bf16.mxu0 0
        %3062 = vmatpush1.bf16.msra.mxu0 0
        %3063 = vmatprep.subr.bf16.mxu0 0
        %3064 = vmatpush1.bf16.msra.mxu0 0
        %3065 = vmatprep.subr.bf16.mxu0 0
        %3066 = vmatpush1.bf16.msra.mxu0 0
        %3067 = vmatprep.subr.bf16.mxu0 0
        %3068 = vmatpush1.bf16.msra.mxu0 0
        %3069 = vmatprep.subr.bf16.mxu0 0
        %3070 = vmatpush1.bf16.msra.mxu0 0
        %3071 = vmatprep.subr.bf16.mxu0 0
        %3072 = vmatpush1.bf16.msra.mxu0 0
        %3073 = vmatprep.subr.bf16.mxu0 0
        %3074 = vmatpush1.bf16.msra.mxu0 0
        %3075 = vmatprep.subr.bf16.mxu0 0
        %3076 = vmatpush1.bf16.msra.mxu0 0
        %3077 = vmatprep.subr.bf16.mxu0 0
        %3078 = vmatpush1.bf16.msra.mxu0 0
        %3079 = vmatprep.subr.bf16.mxu0 0
        %3080 = vmatpush1.bf16.msra.mxu0 0
        %3081 = vmatprep.mubr.bf16.mxu0 0
        %3082 = vmatmul.mubr.bf16.gmra.mrb[0].mxu0 %v3044
        %v3083 = vpop.f32.mrb[0].mxu0
        %v3084 = vadd.f32 %v3029, %v3083
        %v3085 = vpop.f32.mrb[0].mxu0
        %v3086 = vpop.f32.mrb[0].mxu0
        %v3087 = vadd.f32 %v3029, %v3086
        %v3088 = vpop.f32.mrb[0].mxu0
        %3089 = vmatprep.mubr.bf16.mxu0 0
        %3090 = vmatmul.mubr.bf16.gmra.mrb[0].mxu0 %v3047
        %v3091 = vpop.f32.mrb[0].mxu0
        %v3092 = vadd.f32 %v3029, %v3091
        %v3093 = vpop.f32.mrb[0].mxu0
        %v3094 = vpop.f32.mrb[0].mxu0
        %v3095 = vadd.f32 %v3029, %v3094
        %v3096 = vpop.f32.mrb[0].mxu0
        %3097 = vdwg.mxu0
        %v3098 = vld [vmem:[%s1273] sm:$0xf]
        %v3099 = vld [vmem:[%s1273 + $0x4] sm:$0xf]
        %v3100 = vld [vmem:[%s1273 + $0x8] sm:$0xf]
        %v3101 = vld [vmem:[%s1273 + $0xc] sm:$0xf]
        %v3102 = vpack.c.bf16 %v1324, %v1323
        %v3103 = vpack.c.bf16 %v1326, %v1325
        %v3104 = vld [vmem:[%s1276] sm:$0x1]
        %v3106 = vlaneseq
        %v3107 = vshrl.u32 %v3106, 7
        %v3108 = vsub.s32 0, %v3107
        %v3109 = vrot.slane %v3104, %v3108
        %v3115 = vunpack.c.l.b16 %v3098
        %v3116 = vunpack.c.l.b16 %v3099
        %v3117 = vunpack.c.l.b16 %v3100
        %v3118 = vunpack.c.l.b16 %v3101
        %v3119 = vpack.c.b16 %v3116, %v3115
        %v3120 = vpack.c.b16 %v3118, %v3117
        %v3124 = vsel %vm1361, %v3102, 0
        %v3127 = vsel %vm1361, %v3103, 0
        %3129 = vmatprep.subr.bf16.mxu0 0
        %3130 = vmatpush1.bf16.msra.mxu0 %v3119
        %3131 = vmatprep.subr.bf16.mxu0 0
        %3132 = vmatpush1.bf16.msra.mxu0 %v3120
        %3133 = vmatprep.subr.bf16.mxu0 0
        %3134 = vmatpush1.bf16.msra.mxu0 0
        %3135 = vmatprep.subr.bf16.mxu0 0
        %3136 = vmatpush1.bf16.msra.mxu0 0
        %3137 = vmatprep.subr.bf16.mxu0 0
        %3138 = vmatpush1.bf16.msra.mxu0 0
        %3139 = vmatprep.subr.bf16.mxu0 0
        %3140 = vmatpush1.bf16.msra.mxu0 0
        %3141 = vmatprep.subr.bf16.mxu0 0
        %3142 = vmatpush1.bf16.msra.mxu0 0
        %3143 = vmatprep.subr.bf16.mxu0 0
        %3144 = vmatpush1.bf16.msra.mxu0 0
        %3145 = vmatprep.subr.bf16.mxu0 0
        %3146 = vmatpush1.bf16.msra.mxu0 0
        %3147 = vmatprep.subr.bf16.mxu0 0
        %3148 = vmatpush1.bf16.msra.mxu0 0
        %3149 = vmatprep.subr.bf16.mxu0 0
        %3150 = vmatpush1.bf16.msra.mxu0 0
        %3151 = vmatprep.subr.bf16.mxu0 0
        %3152 = vmatpush1.bf16.msra.mxu0 0
        %3153 = vmatprep.subr.bf16.mxu0 0
        %3154 = vmatpush1.bf16.msra.mxu0 0
        %3155 = vmatprep.subr.bf16.mxu0 0
        %3156 = vmatpush1.bf16.msra.mxu0 0
        %3157 = vmatprep.subr.bf16.mxu0 0
        %3158 = vmatpush1.bf16.msra.mxu0 0
        %3159 = vmatprep.subr.bf16.mxu0 0
        %3160 = vmatpush1.bf16.msra.mxu0 0
        %3161 = vmatprep.mubr.bf16.mxu0 0
        %3162 = vmatmul.mubr.bf16.gmra.mrb[0].mxu0 %v3124
        %v3163 = vpop.f32.mrb[0].mxu0
        %v3164 = vadd.f32 %v3109, %v3163
        %v3165 = vpop.f32.mrb[0].mxu0
        %v3166 = vpop.f32.mrb[0].mxu0
        %v3167 = vadd.f32 %v3109, %v3166
        %v3168 = vpop.f32.mrb[0].mxu0
        %3169 = vmatprep.mubr.bf16.mxu0 0
        %3170 = vmatmul.mubr.bf16.gmra.mrb[0].mxu0 %v3127
        %v3171 = vpop.f32.mrb[0].mxu0
        %v3172 = vadd.f32 %v3109, %v3171
        %v3173 = vpop.f32.mrb[0].mxu0
        %v3174 = vpop.f32.mrb[0].mxu0
        %v3175 = vadd.f32 %v3109, %v3174
        %v3176 = vpop.f32.mrb[0].mxu0
        %3177 = vdwg.mxu0
        %v3178 = vld [vmem:[%s1281] sm:$0xf]
        %v3179 = vld [vmem:[%s1281 + $0x4] sm:$0xf]
        %v3180 = vld [vmem:[%s1281 + $0x8] sm:$0xf]
        %v3181 = vld [vmem:[%s1281 + $0xc] sm:$0xf]
        %v3182 = vld [vmem:[%s1284] sm:$0x1]
        %v3184 = vsel %vm1482, %v3008, 0
        %v3187 = vsel %vm1482, %v3084, 0
        %v3190 = vsel %vm1482, %v3087, 0
        %3192 = vmatprep.subr.mxu0 0.0
        %3193 = vmatpush1.xpose.msra.mxu0 %v3187
        %3194 = vmatprep.subr.mxu0 0.0
        %3195 = vmatpush1.xpose.msra.mxu0 %v3190
        %3196 = vmatprep.subr.mxu0 0.0
        %3197 = vmatpush1.xpose.msra.mxu0 0.0
        %3198 = vmatprep.subr.mxu0 0.0
        %3199 = vmatpush1.xpose.msra.mxu0 0.0
        %3200 = vmatprep.subr.mxu0 0.0
        %3201 = vmatpush1.xpose.msra.mxu0 0.0
        %3202 = vmatprep.subr.mxu0 0.0
        %3203 = vmatpush1.xpose.msra.mxu0 0.0
        %3204 = vmatprep.subr.mxu0 0.0
        %3205 = vmatpush1.xpose.msra.mxu0 0.0
        %3206 = vmatprep.subr.mxu0 0.0
        %3207 = vmatpush1.xpose.msra.mxu0 0.0
        %3208 = vmatprep.subr.mxu0 0.0
        %3209 = vmatpush1.xpose.msra.mxu0 0.0
        %3210 = vmatprep.subr.mxu0 0.0
        %3211 = vmatpush1.xpose.msra.mxu0 0.0
        %3212 = vmatprep.subr.mxu0 0.0
        %3213 = vmatpush1.xpose.msra.mxu0 0.0
        %3214 = vmatprep.subr.mxu0 0.0
        %3215 = vmatpush1.xpose.msra.mxu0 0.0
        %3216 = vmatprep.subr.mxu0 0.0
        %3217 = vmatpush1.xpose.msra.mxu0 0.0
        %3218 = vmatprep.subr.mxu0 0.0
        %3219 = vmatpush1.xpose.msra.mxu0 0.0
        %3220 = vmatprep.subr.mxu0 0.0
        %3221 = vmatpush1.xpose.msra.mxu0 0.0
        %3222 = vmatprep.subr.mxu0 0.0
        %3223 = vmatpush1.xpose.msra.mxu0 0.0
        %3224 = vmatprep.subr.mxu0 0.0
        %3225 = vmatpush1.xpose.msra.mxu0 0.0
        %3226 = vmatprep.subr.mxu0 0.0
        %3227 = vmatpush1.xpose.msra.mxu0 0.0
        %3228 = vmatprep.subr.mxu0 0.0
        %3229 = vmatpush1.xpose.msra.mxu0 0.0
        %3230 = vmatprep.subr.mxu0 0.0
        %3231 = vmatpush1.xpose.msra.mxu0 0.0
        %3232 = vmatprep.subr.mxu0 0.0
        %3233 = vmatpush1.xpose.msra.mxu0 0.0
        %3234 = vmatprep.subr.mxu0 0.0
        %3235 = vmatpush1.xpose.msra.mxu0 0.0
        %3236 = vmatprep.subr.mxu0 0.0
        %3237 = vmatpush1.xpose.msra.mxu0 0.0
        %3238 = vmatprep.subr.mxu0 0.0
        %3239 = vmatpush1.xpose.msra.mxu0 0.0
        %3240 = vmatprep.subr.mxu0 0.0
        %3241 = vmatpush1.xpose.msra.mxu0 0.0
        %3242 = vmatprep.subr.mxu0 0.0
        %3243 = vmatpush1.xpose.msra.mxu0 0.0
        %3244 = vmatprep.subr.mxu0 0.0
        %3245 = vmatpush1.xpose.msra.mxu0 0.0
        %3246 = vmatprep.subr.mxu0 0.0
        %3247 = vmatpush1.xpose.msra.mxu0 0.0
        %3248 = vmatprep.subr.mxu0 0.0
        %3249 = vmatpush1.xpose.msra.mxu0 0.0
        %3250 = vmatprep.subr.mxu0 0.0
        %3251 = vmatpush1.xpose.msra.mxu0 0.0
        %3252 = vmatprep.subr.mxu0 0.0
        %3253 = vmatpush1.xpose.msra.mxu0 0.0
        %3254 = vmatprep.subr.mxu0 0.0
        %3255 = vmatpush1.xpose.msra.mxu0 0.0
        %3256 = vmatprep.mubr.f32.mxu0 0.0
        %3257 = vmatmul.mubr.f32.gmra.mrb[0].mxu0 %v3184
        %v3258 = vpop.f32.mrb[0].mxu0
        %v3259 = vadd.f32 0.0, %v3258
        %v3260 = vpop.f32.mrb[0].mxu0
        %3261 = vdwg.mxu0
        %v3263 = vsel %vm1482, %v3011, 0
        %v3266 = vsel %vm1482, %v3092, 0
        %v3269 = vsel %vm1482, %v3095, 0
        %3271 = vmatprep.subr.mxu0 0.0
        %3272 = vmatpush1.xpose.msra.mxu0 %v3266
        %3273 = vmatprep.subr.mxu0 0.0
        %3274 = vmatpush1.xpose.msra.mxu0 %v3269
        %3275 = vmatprep.subr.mxu0 0.0
        %3276 = vmatpush1.xpose.msra.mxu0 0.0
        %3277 = vmatprep.subr.mxu0 0.0
        %3278 = vmatpush1.xpose.msra.mxu0 0.0
        %3279 = vmatprep.subr.mxu0 0.0
        %3280 = vmatpush1.xpose.msra.mxu0 0.0
        %3281 = vmatprep.subr.mxu0 0.0
        %3282 = vmatpush1.xpose.msra.mxu0 0.0
        %3283 = vmatprep.subr.mxu0 0.0
        %3284 = vmatpush1.xpose.msra.mxu0 0.0
        %3285 = vmatprep.subr.mxu0 0.0
        %3286 = vmatpush1.xpose.msra.mxu0 0.0
        %3287 = vmatprep.subr.mxu0 0.0
        %3288 = vmatpush1.xpose.msra.mxu0 0.0
        %3289 = vmatprep.subr.mxu0 0.0
        %3290 = vmatpush1.xpose.msra.mxu0 0.0
        %3291 = vmatprep.subr.mxu0 0.0
        %3292 = vmatpush1.xpose.msra.mxu0 0.0
        %3293 = vmatprep.subr.mxu0 0.0
        %3294 = vmatpush1.xpose.msra.mxu0 0.0
        %3295 = vmatprep.subr.mxu0 0.0
        %3296 = vmatpush1.xpose.msra.mxu0 0.0
        %3297 = vmatprep.subr.mxu0 0.0
        %3298 = vmatpush1.xpose.msra.mxu0 0.0
        %3299 = vmatprep.subr.mxu0 0.0
        %3300 = vmatpush1.xpose.msra.mxu0 0.0
        %3301 = vmatprep.subr.mxu0 0.0
        %3302 = vmatpush1.xpose.msra.mxu0 0.0
        %3303 = vmatprep.subr.mxu0 0.0
        %3304 = vmatpush1.xpose.msra.mxu0 0.0
        %3305 = vmatprep.subr.mxu0 0.0
        %3306 = vmatpush1.xpose.msra.mxu0 0.0
        %3307 = vmatprep.subr.mxu0 0.0
        %3308 = vmatpush1.xpose.msra.mxu0 0.0
        %3309 = vmatprep.subr.mxu0 0.0
        %3310 = vmatpush1.xpose.msra.mxu0 0.0
        %3311 = vmatprep.subr.mxu0 0.0
        %3312 = vmatpush1.xpose.msra.mxu0 0.0
        %3313 = vmatprep.subr.mxu0 0.0
        %3314 = vmatpush1.xpose.msra.mxu0 0.0
        %3315 = vmatprep.subr.mxu0 0.0
        %3316 = vmatpush1.xpose.msra.mxu0 0.0
        %3317 = vmatprep.subr.mxu0 0.0
        %3318 = vmatpush1.xpose.msra.mxu0 0.0
        %3319 = vmatprep.subr.mxu0 0.0
        %3320 = vmatpush1.xpose.msra.mxu0 0.0
        %3321 = vmatprep.subr.mxu0 0.0
        %3322 = vmatpush1.xpose.msra.mxu0 0.0
        %3323 = vmatprep.subr.mxu0 0.0
        %3324 = vmatpush1.xpose.msra.mxu0 0.0
        %3325 = vmatprep.subr.mxu0 0.0
        %3326 = vmatpush1.xpose.msra.mxu0 0.0
        %3327 = vmatprep.subr.mxu0 0.0
        %3328 = vmatpush1.xpose.msra.mxu0 0.0
        %3329 = vmatprep.subr.mxu0 0.0
        %3330 = vmatpush1.xpose.msra.mxu0 0.0
        %3331 = vmatprep.subr.mxu0 0.0
        %3332 = vmatpush1.xpose.msra.mxu0 0.0
        %3333 = vmatprep.subr.mxu0 0.0
        %3334 = vmatpush1.xpose.msra.mxu0 0.0
        %3335 = vmatprep.mubr.f32.mxu0 0.0
        %3336 = vmatmul.mubr.f32.gmra.mrb[0].mxu0 %v3263
        %v3337 = vpop.f32.mrb[0].mxu0
        %v3338 = vadd.f32 0.0, %v3337
        %v3339 = vpop.f32.mrb[0].mxu0
        %3340 = vdwg.mxu0
        %v3341 = vmul.f32 %v3259, 0.35355338
        %v3342 = vmul.f32 %v3338, 0.35355338
        %v3345 = vlaneseq
        %v3346 = vshrl.u32 %v3345, 7
        %v3347 = vsub.s32 0, %v3346
        %v3348 = vrot.slane %v1333, %v3347
        %v3349 = vlaneseq
        %v3350 = vshrl.u32 %v3349, 7
        %v3351 = vsub.s32 0, %v3350
        %v3352 = vrot.slane %v1334, %v3351
        %v3355 = vadd.f32 %v3341, %v3348
        %v3356 = vadd.f32 %v3342, %v3352
        %v3357 = vsel %vm2828, %v3355, -inf
        %3358 = vmax.xlane.f32.xlu0 %v3357
        %v3359 = vpop.xlane.xlu0 %3358
        %v3360 = vsel %vm2828, %v3356, -inf
        %3361 = vmax.xlane.f32.xlu0 %v3360
        %v3362 = vpop.xlane.xlu0 %3361
        %v3363 = vsub.f32 %v3355, %v3359
        %v3364 = vsub.f32 %v3356, %v3362
        %v3365 = vmul.f32 %v3363, 1.442695
        %v3366 = vpow.pop %v3365
        %v3367 = vmul.f32 %v3364, 1.442695
        %v3368 = vpow.pop %v3367
        %v3369 = vsel %vm2828, %v3366, 0.0
        %3370 = vadd.xlane.f32.xlu0 %v3369
        %v3371 = vpop.xlane.xlu0 %3370
        %v3372 = vsel %vm2828, %v3368, 0.0
        %3373 = vadd.xlane.f32.xlu0 %v3372
        %v3374 = vpop.xlane.xlu0 %3373
        %v3375 = vrcp.pop %v3371
        %v3376 = vmul.f32 %v3366, %v3375
        %v3377 = vrcp.pop %v3374
        %v3378 = vmul.f32 %v3368, %v3377
        %v3380 = vsel %vm2828, %v3376, 0
        %3382 = vmatprep.subr.mxu0 0.0
        %3383 = vmatpush1.msra.mxu0 %v3164
        %3384 = vmatprep.subr.mxu0 0.0
        %3385 = vmatpush1.msra.mxu0 %v3167
        %3386 = vmatprep.subr.mxu0 0.0
        %3387 = vmatpush1.msra.mxu0 0.0
        %3388 = vmatprep.subr.mxu0 0.0
        %3389 = vmatpush1.msra.mxu0 0.0
        %3390 = vmatprep.subr.mxu0 0.0
        %3391 = vmatpush1.msra.mxu0 0.0
        %3392 = vmatprep.subr.mxu0 0.0
        %3393 = vmatpush1.msra.mxu0 0.0
        %3394 = vmatprep.subr.mxu0 0.0
        %3395 = vmatpush1.msra.mxu0 0.0
        %3396 = vmatprep.subr.mxu0 0.0
        %3397 = vmatpush1.msra.mxu0 0.0
        %3398 = vmatprep.subr.mxu0 0.0
        %3399 = vmatpush1.msra.mxu0 0.0
        %3400 = vmatprep.subr.mxu0 0.0
        %3401 = vmatpush1.msra.mxu0 0.0
        %3402 = vmatprep.subr.mxu0 0.0
        %3403 = vmatpush1.msra.mxu0 0.0
        %3404 = vmatprep.subr.mxu0 0.0
        %3405 = vmatpush1.msra.mxu0 0.0
        %3406 = vmatprep.subr.mxu0 0.0
        %3407 = vmatpush1.msra.mxu0 0.0
        %3408 = vmatprep.subr.mxu0 0.0
        %3409 = vmatpush1.msra.mxu0 0.0
        %3410 = vmatprep.subr.mxu0 0.0
        %3411 = vmatpush1.msra.mxu0 0.0
        %3412 = vmatprep.subr.mxu0 0.0
        %3413 = vmatpush1.msra.mxu0 0.0
        %3414 = vmatprep.subr.mxu0 0.0
        %3415 = vmatpush1.msra.mxu0 0.0
        %3416 = vmatprep.subr.mxu0 0.0
        %3417 = vmatpush1.msra.mxu0 0.0
        %3418 = vmatprep.subr.mxu0 0.0
        %3419 = vmatpush1.msra.mxu0 0.0
        %3420 = vmatprep.subr.mxu0 0.0
        %3421 = vmatpush1.msra.mxu0 0.0
        %3422 = vmatprep.subr.mxu0 0.0
        %3423 = vmatpush1.msra.mxu0 0.0
        %3424 = vmatprep.subr.mxu0 0.0
        %3425 = vmatpush1.msra.mxu0 0.0
        %3426 = vmatprep.subr.mxu0 0.0
        %3427 = vmatpush1.msra.mxu0 0.0
        %3428 = vmatprep.subr.mxu0 0.0
        %3429 = vmatpush1.msra.mxu0 0.0
        %3430 = vmatprep.subr.mxu0 0.0
        %3431 = vmatpush1.msra.mxu0 0.0
        %3432 = vmatprep.subr.mxu0 0.0
        %3433 = vmatpush1.msra.mxu0 0.0
        %3434 = vmatprep.subr.mxu0 0.0
        %3435 = vmatpush1.msra.mxu0 0.0
        %3436 = vmatprep.subr.mxu0 0.0
        %3437 = vmatpush1.msra.mxu0 0.0
        %3438 = vmatprep.subr.mxu0 0.0
        %3439 = vmatpush1.msra.mxu0 0.0
        %3440 = vmatprep.subr.mxu0 0.0
        %3441 = vmatpush1.msra.mxu0 0.0
        %3442 = vmatprep.subr.mxu0 0.0
        %3443 = vmatpush1.msra.mxu0 0.0
        %3444 = vmatprep.subr.mxu0 0.0
        %3445 = vmatpush1.msra.mxu0 0.0
        %3446 = vmatprep.mubr.f32.mxu0 0.0
        %3447 = vmatmul.mubr.f32.gmra.mrb[0].mxu0 %v3380
        %v3448 = vpop.f32.mrb[0].mxu0
        %v3449 = vadd.f32 0.0, %v3448
        %v3450 = vpop.f32.mrb[0].mxu0
        %3451 = vdwg.mxu0
        %v3453 = vsel %vm2828, %v3378, 0
        %3455 = vmatprep.subr.mxu0 0.0
        %3456 = vmatpush1.msra.mxu0 %v3172
        %3457 = vmatprep.subr.mxu0 0.0
        %3458 = vmatpush1.msra.mxu0 %v3175
        %3459 = vmatprep.subr.mxu0 0.0
        %3460 = vmatpush1.msra.mxu0 0.0
        %3461 = vmatprep.subr.mxu0 0.0
        %3462 = vmatpush1.msra.mxu0 0.0
        %3463 = vmatprep.subr.mxu0 0.0
        %3464 = vmatpush1.msra.mxu0 0.0
        %3465 = vmatprep.subr.mxu0 0.0
        %3466 = vmatpush1.msra.mxu0 0.0
        %3467 = vmatprep.subr.mxu0 0.0
        %3468 = vmatpush1.msra.mxu0 0.0
        %3469 = vmatprep.subr.mxu0 0.0
        %3470 = vmatpush1.msra.mxu0 0.0
        %3471 = vmatprep.subr.mxu0 0.0
        %3472 = vmatpush1.msra.mxu0 0.0
        %3473 = vmatprep.subr.mxu0 0.0
        %3474 = vmatpush1.msra.mxu0 0.0
        %3475 = vmatprep.subr.mxu0 0.0
        %3476 = vmatpush1.msra.mxu0 0.0
        %3477 = vmatprep.subr.mxu0 0.0
        %3478 = vmatpush1.msra.mxu0 0.0
        %3479 = vmatprep.subr.mxu0 0.0
        %3480 = vmatpush1.msra.mxu0 0.0
        %3481 = vmatprep.subr.mxu0 0.0
        %3482 = vmatpush1.msra.mxu0 0.0
        %3483 = vmatprep.subr.mxu0 0.0
        %3484 = vmatpush1.msra.mxu0 0.0
        %3485 = vmatprep.subr.mxu0 0.0
        %3486 = vmatpush1.msra.mxu0 0.0
        %3487 = vmatprep.subr.mxu0 0.0
        %3488 = vmatpush1.msra.mxu0 0.0
        %3489 = vmatprep.subr.mxu0 0.0
        %3490 = vmatpush1.msra.mxu0 0.0
        %3491 = vmatprep.subr.mxu0 0.0
        %3492 = vmatpush1.msra.mxu0 0.0
        %3493 = vmatprep.subr.mxu0 0.0
        %3494 = vmatpush1.msra.mxu0 0.0
        %3495 = vmatprep.subr.mxu0 0.0
        %3496 = vmatpush1.msra.mxu0 0.0
        %3497 = vmatprep.subr.mxu0 0.0
        %3498 = vmatpush1.msra.mxu0 0.0
        %3499 = vmatprep.subr.mxu0 0.0
        %3500 = vmatpush1.msra.mxu0 0.0
        %3501 = vmatprep.subr.mxu0 0.0
        %3502 = vmatpush1.msra.mxu0 0.0
        %3503 = vmatprep.subr.mxu0 0.0
        %3504 = vmatpush1.msra.mxu0 0.0
        %3505 = vmatprep.subr.mxu0 0.0
        %3506 = vmatpush1.msra.mxu0 0.0
        %3507 = vmatprep.subr.mxu0 0.0
        %3508 = vmatpush1.msra.mxu0 0.0
        %3509 = vmatprep.subr.mxu0 0.0
        %3510 = vmatpush1.msra.mxu0 0.0
        %3511 = vmatprep.subr.mxu0 0.0
        %3512 = vmatpush1.msra.mxu0 0.0
        %3513 = vmatprep.subr.mxu0 0.0
        %3514 = vmatpush1.msra.mxu0 0.0
        %3515 = vmatprep.subr.mxu0 0.0
        %3516 = vmatpush1.msra.mxu0 0.0
        %3517 = vmatprep.subr.mxu0 0.0
        %3518 = vmatpush1.msra.mxu0 0.0
        %3519 = vmatprep.mubr.f32.mxu0 0.0
        %3520 = vmatmul.mubr.f32.gmra.mrb[0].mxu0 %v3453
        %v3521 = vpop.f32.mrb[0].mxu0
        %v3522 = vadd.f32 0.0, %v3521
        %v3523 = vpop.f32.mrb[0].mxu0
        %3524 = vdwg.mxu0
        %3525 = vrot.lane.b32.xlu0 %v3008, 120
        %v3526 = vpop.permute.xlu0 %3525
        %3527 = vrot.lane.b32.xlu0 %v3084, 120
        %v3528 = vpop.permute.xlu0 %3527
        %3529 = vrot.lane.b32.xlu0 %v3087, 120
        %v3530 = vpop.permute.xlu0 %3529
        %v3531 = vsel %vm1482, %v3526, 0
        %v3533 = vsel %vm1482, %v3528, 0
        %v3535 = vsel %vm1482, %v3530, 0
        %3537 = vmatprep.subr.mxu0 0.0
        %3538 = vmatpush1.xpose.msra.mxu0 %v3533
        %3539 = vmatprep.subr.mxu0 0.0
        %3540 = vmatpush1.xpose.msra.mxu0 %v3535
        %3541 = vmatprep.subr.mxu0 0.0
        %3542 = vmatpush1.xpose.msra.mxu0 0.0
        %3543 = vmatprep.subr.mxu0 0.0
        %3544 = vmatpush1.xpose.msra.mxu0 0.0
        %3545 = vmatprep.subr.mxu0 0.0
        %3546 = vmatpush1.xpose.msra.mxu0 0.0
        %3547 = vmatprep.subr.mxu0 0.0
        %3548 = vmatpush1.xpose.msra.mxu0 0.0
        %3549 = vmatprep.subr.mxu0 0.0
        %3550 = vmatpush1.xpose.msra.mxu0 0.0
        %3551 = vmatprep.subr.mxu0 0.0
        %3552 = vmatpush1.xpose.msra.mxu0 0.0
        %3553 = vmatprep.subr.mxu0 0.0
        %3554 = vmatpush1.xpose.msra.mxu0 0.0
        %3555 = vmatprep.subr.mxu0 0.0
        %3556 = vmatpush1.xpose.msra.mxu0 0.0
        %3557 = vmatprep.subr.mxu0 0.0
        %3558 = vmatpush1.xpose.msra.mxu0 0.0
        %3559 = vmatprep.subr.mxu0 0.0
        %3560 = vmatpush1.xpose.msra.mxu0 0.0
        %3561 = vmatprep.subr.mxu0 0.0
        %3562 = vmatpush1.xpose.msra.mxu0 0.0
        %3563 = vmatprep.subr.mxu0 0.0
        %3564 = vmatpush1.xpose.msra.mxu0 0.0
        %3565 = vmatprep.subr.mxu0 0.0
        %3566 = vmatpush1.xpose.msra.mxu0 0.0
        %3567 = vmatprep.subr.mxu0 0.0
        %3568 = vmatpush1.xpose.msra.mxu0 0.0
        %3569 = vmatprep.subr.mxu0 0.0
        %3570 = vmatpush1.xpose.msra.mxu0 0.0
        %3571 = vmatprep.subr.mxu0 0.0
        %3572 = vmatpush1.xpose.msra.mxu0 0.0
        %3573 = vmatprep.subr.mxu0 0.0
        %3574 = vmatpush1.xpose.msra.mxu0 0.0
        %3575 = vmatprep.subr.mxu0 0.0
        %3576 = vmatpush1.xpose.msra.mxu0 0.0
        %3577 = vmatprep.subr.mxu0 0.0
        %3578 = vmatpush1.xpose.msra.mxu0 0.0
        %3579 = vmatprep.subr.mxu0 0.0
        %3580 = vmatpush1.xpose.msra.mxu0 0.0
        %3581 = vmatprep.subr.mxu0 0.0
        %3582 = vmatpush1.xpose.msra.mxu0 0.0
        %3583 = vmatprep.subr.mxu0 0.0
        %3584 = vmatpush1.xpose.msra.mxu0 0.0
        %3585 = vmatprep.subr.mxu0 0.0
        %3586 = vmatpush1.xpose.msra.mxu0 0.0
        %3587 = vmatprep.subr.mxu0 0.0
        %3588 = vmatpush1.xpose.msra.mxu0 0.0
        %3589 = vmatprep.subr.mxu0 0.0
        %3590 = vmatpush1.xpose.msra.mxu0 0.0
        %3591 = vmatprep.subr.mxu0 0.0
        %3592 = vmatpush1.xpose.msra.mxu0 0.0
        %3593 = vmatprep.subr.mxu0 0.0
        %3594 = vmatpush1.xpose.msra.mxu0 0.0
        %3595 = vmatprep.subr.mxu0 0.0
        %3596 = vmatpush1.xpose.msra.mxu0 0.0
        %3597 = vmatprep.subr.mxu0 0.0
        %3598 = vmatpush1.xpose.msra.mxu0 0.0
        %3599 = vmatprep.subr.mxu0 0.0
        %3600 = vmatpush1.xpose.msra.mxu0 0.0
        %3601 = vmatprep.mubr.f32.mxu0 0.0
        %3602 = vmatmul.mubr.f32.gmra.mrb[0].mxu0 %v3531
        %v3603 = vpop.f32.mrb[0].mxu0
        %v3604 = vadd.f32 0.0, %v3603
        %v3605 = vpop.f32.mrb[0].mxu0
        %3606 = vdwg.mxu0
        %3607 = vrot.lane.b32.xlu0 %v3011, 120
        %v3608 = vpop.permute.xlu0 %3607
        %3609 = vrot.lane.b32.xlu0 %v3092, 120
        %v3610 = vpop.permute.xlu0 %3609
        %3611 = vrot.lane.b32.xlu0 %v3095, 120
        %v3612 = vpop.permute.xlu0 %3611
        %v3613 = vsel %vm1482, %v3608, 0
        %v3615 = vsel %vm1482, %v3610, 0
        %v3617 = vsel %vm1482, %v3612, 0
        %3619 = vmatprep.subr.mxu0 0.0
        %3620 = vmatpush1.xpose.msra.mxu0 %v3615
        %3621 = vmatprep.subr.mxu0 0.0
        %3622 = vmatpush1.xpose.msra.mxu0 %v3617
        %3623 = vmatprep.subr.mxu0 0.0
        %3624 = vmatpush1.xpose.msra.mxu0 0.0
        %3625 = vmatprep.subr.mxu0 0.0
        %3626 = vmatpush1.xpose.msra.mxu0 0.0
        %3627 = vmatprep.subr.mxu0 0.0
        %3628 = vmatpush1.xpose.msra.mxu0 0.0
        %3629 = vmatprep.subr.mxu0 0.0
        %3630 = vmatpush1.xpose.msra.mxu0 0.0
        %3631 = vmatprep.subr.mxu0 0.0
        %3632 = vmatpush1.xpose.msra.mxu0 0.0
        %3633 = vmatprep.subr.mxu0 0.0
        %3634 = vmatpush1.xpose.msra.mxu0 0.0
        %3635 = vmatprep.subr.mxu0 0.0
        %3636 = vmatpush1.xpose.msra.mxu0 0.0
        %3637 = vmatprep.subr.mxu0 0.0
        %3638 = vmatpush1.xpose.msra.mxu0 0.0
        %3639 = vmatprep.subr.mxu0 0.0
        %3640 = vmatpush1.xpose.msra.mxu0 0.0
        %3641 = vmatprep.subr.mxu0 0.0
        %3642 = vmatpush1.xpose.msra.mxu0 0.0
        %3643 = vmatprep.subr.mxu0 0.0
        %3644 = vmatpush1.xpose.msra.mxu0 0.0
        %3645 = vmatprep.subr.mxu0 0.0
        %3646 = vmatpush1.xpose.msra.mxu0 0.0
        %3647 = vmatprep.subr.mxu0 0.0
        %3648 = vmatpush1.xpose.msra.mxu0 0.0
        %3649 = vmatprep.subr.mxu0 0.0
        %3650 = vmatpush1.xpose.msra.mxu0 0.0
        %3651 = vmatprep.subr.mxu0 0.0
        %3652 = vmatpush1.xpose.msra.mxu0 0.0
        %3653 = vmatprep.subr.mxu0 0.0
        %3654 = vmatpush1.xpose.msra.mxu0 0.0
        %3655 = vmatprep.subr.mxu0 0.0
        %3656 = vmatpush1.xpose.msra.mxu0 0.0
        %3657 = vmatprep.subr.mxu0 0.0
        %3658 = vmatpush1.xpose.msra.mxu0 0.0
        %3659 = vmatprep.subr.mxu0 0.0
        %3660 = vmatpush1.xpose.msra.mxu0 0.0
        %3661 = vmatprep.subr.mxu0 0.0
        %3662 = vmatpush1.xpose.msra.mxu0 0.0
        %3663 = vmatprep.subr.mxu0 0.0
        %3664 = vmatpush1.xpose.msra.mxu0 0.0
        %3665 = vmatprep.subr.mxu0 0.0
        %3666 = vmatpush1.xpose.msra.mxu0 0.0
        %3667 = vmatprep.subr.mxu0 0.0
        %3668 = vmatpush1.xpose.msra.mxu0 0.0
        %3669 = vmatprep.subr.mxu0 0.0
        %3670 = vmatpush1.xpose.msra.mxu0 0.0
        %3671 = vmatprep.subr.mxu0 0.0
        %3672 = vmatpush1.xpose.msra.mxu0 0.0
        %3673 = vmatprep.subr.mxu0 0.0
        %3674 = vmatpush1.xpose.msra.mxu0 0.0
        %3675 = vmatprep.subr.mxu0 0.0
        %3676 = vmatpush1.xpose.msra.mxu0 0.0
        %3677 = vmatprep.subr.mxu0 0.0
        %3678 = vmatpush1.xpose.msra.mxu0 0.0
        %3679 = vmatprep.subr.mxu0 0.0
        %3680 = vmatpush1.xpose.msra.mxu0 0.0
        %3681 = vmatprep.subr.mxu0 0.0
        %3682 = vmatpush1.xpose.msra.mxu0 0.0
        %3683 = vmatprep.mubr.f32.mxu0 0.0
        %3684 = vmatmul.mubr.f32.gmra.mrb[0].mxu0 %v3613
        %v3685 = vpop.f32.mrb[0].mxu0
        %v3686 = vadd.f32 0.0, %v3685
        %v3687 = vpop.f32.mrb[0].mxu0
        %3688 = vdwg.mxu0
        %v3689 = vmul.f32 %v3604, 0.35355338
        %v3690 = vmul.f32 %v3686, 0.35355338
        %v3691 = vadd.f32 %v3689, %v3348
        %v3692 = vadd.f32 %v3690, %v3352
        %v3693 = vsel %vm2828, %v3691, -inf
        %3694 = vmax.xlane.f32.xlu0 %v3693
        %v3695 = vpop.xlane.xlu0 %3694
        %v3696 = vsel %vm2828, %v3692, -inf
        %3697 = vmax.xlane.f32.xlu0 %v3696
        %v3698 = vpop.xlane.xlu0 %3697
        %v3699 = vsub.f32 %v3691, %v3695
        %v3700 = vsub.f32 %v3692, %v3698
        %v3701 = vmul.f32 %v3699, 1.442695
        %v3702 = vpow.pop %v3701
        %v3703 = vmul.f32 %v3700, 1.442695
        %v3704 = vpow.pop %v3703
        %v3705 = vsel %vm2828, %v3702, 0.0
        %3706 = vadd.xlane.f32.xlu0 %v3705
        %v3707 = vpop.xlane.xlu0 %3706
        %v3708 = vsel %vm2828, %v3704, 0.0
        %3709 = vadd.xlane.f32.xlu0 %v3708
        %v3710 = vpop.xlane.xlu0 %3709
        %v3711 = vrcp.pop %v3707
        %v3712 = vmul.f32 %v3702, %v3711
        %v3713 = vrcp.pop %v3710
        %v3714 = vmul.f32 %v3704, %v3713
        %3717 = vrot.lane.b32.xlu0 %v3164, 120
        %v3718 = vpop.permute.xlu0 %3717
        %3719 = vrot.lane.b32.xlu0 %v3167, 120
        %v3720 = vpop.permute.xlu0 %3719
        %v3724 = vsel %vm2828, %v3712, 0
        %3726 = vmatprep.subr.mxu0 0.0
        %3727 = vmatpush1.msra.mxu0 %v3718
        %3728 = vmatprep.subr.mxu0 0.0
        %3729 = vmatpush1.msra.mxu0 %v3720
        %3730 = vmatprep.subr.mxu0 0.0
        %3731 = vmatpush1.msra.mxu0 0.0
        %3732 = vmatprep.subr.mxu0 0.0
        %3733 = vmatpush1.msra.mxu0 0.0
        %3734 = vmatprep.subr.mxu0 0.0
        %3735 = vmatpush1.msra.mxu0 0.0
        %3736 = vmatprep.subr.mxu0 0.0
        %3737 = vmatpush1.msra.mxu0 0.0
        %3738 = vmatprep.subr.mxu0 0.0
        %3739 = vmatpush1.msra.mxu0 0.0
        %3740 = vmatprep.subr.mxu0 0.0
        %3741 = vmatpush1.msra.mxu0 0.0
        %3742 = vmatprep.subr.mxu0 0.0
        %3743 = vmatpush1.msra.mxu0 0.0
        %3744 = vmatprep.subr.mxu0 0.0
        %3745 = vmatpush1.msra.mxu0 0.0
        %3746 = vmatprep.subr.mxu0 0.0
        %3747 = vmatpush1.msra.mxu0 0.0
        %3748 = vmatprep.subr.mxu0 0.0
        %3749 = vmatpush1.msra.mxu0 0.0
        %3750 = vmatprep.subr.mxu0 0.0
        %3751 = vmatpush1.msra.mxu0 0.0
        %3752 = vmatprep.subr.mxu0 0.0
        %3753 = vmatpush1.msra.mxu0 0.0
        %3754 = vmatprep.subr.mxu0 0.0
        %3755 = vmatpush1.msra.mxu0 0.0
        %3756 = vmatprep.subr.mxu0 0.0
        %3757 = vmatpush1.msra.mxu0 0.0
        %3758 = vmatprep.subr.mxu0 0.0
        %3759 = vmatpush1.msra.mxu0 0.0
        %3760 = vmatprep.subr.mxu0 0.0
        %3761 = vmatpush1.msra.mxu0 0.0
        %3762 = vmatprep.subr.mxu0 0.0
        %3763 = vmatpush1.msra.mxu0 0.0
        %3764 = vmatprep.subr.mxu0 0.0
        %3765 = vmatpush1.msra.mxu0 0.0
        %3766 = vmatprep.subr.mxu0 0.0
        %3767 = vmatpush1.msra.mxu0 0.0
        %3768 = vmatprep.subr.mxu0 0.0
        %3769 = vmatpush1.msra.mxu0 0.0
        %3770 = vmatprep.subr.mxu0 0.0
        %3771 = vmatpush1.msra.mxu0 0.0
        %3772 = vmatprep.subr.mxu0 0.0
        %3773 = vmatpush1.msra.mxu0 0.0
        %3774 = vmatprep.subr.mxu0 0.0
        %3775 = vmatpush1.msra.mxu0 0.0
        %3776 = vmatprep.subr.mxu0 0.0
        %3777 = vmatpush1.msra.mxu0 0.0
        %3778 = vmatprep.subr.mxu0 0.0
        %3779 = vmatpush1.msra.mxu0 0.0
        %3780 = vmatprep.subr.mxu0 0.0
        %3781 = vmatpush1.msra.mxu0 0.0
        %3782 = vmatprep.subr.mxu0 0.0
        %3783 = vmatpush1.msra.mxu0 0.0
        %3784 = vmatprep.subr.mxu0 0.0
        %3785 = vmatpush1.msra.mxu0 0.0
        %3786 = vmatprep.subr.mxu0 0.0
        %3787 = vmatpush1.msra.mxu0 0.0
        %3788 = vmatprep.subr.mxu0 0.0
        %3789 = vmatpush1.msra.mxu0 0.0
        %3790 = vmatprep.mubr.f32.mxu0 0.0
        %3791 = vmatmul.mubr.f32.gmra.mrb[0].mxu0 %v3724
        %v3792 = vpop.f32.mrb[0].mxu0
        %v3793 = vadd.f32 0.0, %v3792
        %v3794 = vpop.f32.mrb[0].mxu0
        %3795 = vdwg.mxu0
        %3798 = vrot.lane.b32.xlu0 %v3172, 120
        %v3799 = vpop.permute.xlu0 %3798
        %3800 = vrot.lane.b32.xlu0 %v3175, 120
        %v3801 = vpop.permute.xlu0 %3800
        %v3805 = vsel %vm2828, %v3714, 0
        %3807 = vmatprep.subr.mxu0 0.0
        %3808 = vmatpush1.msra.mxu0 %v3799
        %3809 = vmatprep.subr.mxu0 0.0
        %3810 = vmatpush1.msra.mxu0 %v3801
        %3811 = vmatprep.subr.mxu0 0.0
        %3812 = vmatpush1.msra.mxu0 0.0
        %3813 = vmatprep.subr.mxu0 0.0
        %3814 = vmatpush1.msra.mxu0 0.0
        %3815 = vmatprep.subr.mxu0 0.0
        %3816 = vmatpush1.msra.mxu0 0.0
        %3817 = vmatprep.subr.mxu0 0.0
        %3818 = vmatpush1.msra.mxu0 0.0
        %3819 = vmatprep.subr.mxu0 0.0
        %3820 = vmatpush1.msra.mxu0 0.0
        %3821 = vmatprep.subr.mxu0 0.0
        %3822 = vmatpush1.msra.mxu0 0.0
        %3823 = vmatprep.subr.mxu0 0.0
        %3824 = vmatpush1.msra.mxu0 0.0
        %3825 = vmatprep.subr.mxu0 0.0
        %3826 = vmatpush1.msra.mxu0 0.0
        %3827 = vmatprep.subr.mxu0 0.0
        %3828 = vmatpush1.msra.mxu0 0.0
        %3829 = vmatprep.subr.mxu0 0.0
        %3830 = vmatpush1.msra.mxu0 0.0
        %3831 = vmatprep.subr.mxu0 0.0
        %3832 = vmatpush1.msra.mxu0 0.0
        %3833 = vmatprep.subr.mxu0 0.0
        %3834 = vmatpush1.msra.mxu0 0.0
        %3835 = vmatprep.subr.mxu0 0.0
        %3836 = vmatpush1.msra.mxu0 0.0
        %3837 = vmatprep.subr.mxu0 0.0
        %3838 = vmatpush1.msra.mxu0 0.0
        %3839 = vmatprep.subr.mxu0 0.0
        %3840 = vmatpush1.msra.mxu0 0.0
        %3841 = vmatprep.subr.mxu0 0.0
        %3842 = vmatpush1.msra.mxu0 0.0
        %3843 = vmatprep.subr.mxu0 0.0
        %3844 = vmatpush1.msra.mxu0 0.0
        %3845 = vmatprep.subr.mxu0 0.0
        %3846 = vmatpush1.msra.mxu0 0.0
        %3847 = vmatprep.subr.mxu0 0.0
        %3848 = vmatpush1.msra.mxu0 0.0
        %3849 = vmatprep.subr.mxu0 0.0
        %3850 = vmatpush1.msra.mxu0 0.0
        %3851 = vmatprep.subr.mxu0 0.0
        %3852 = vmatpush1.msra.mxu0 0.0
        %3853 = vmatprep.subr.mxu0 0.0
        %3854 = vmatpush1.msra.mxu0 0.0
        %3855 = vmatprep.subr.mxu0 0.0
        %3856 = vmatpush1.msra.mxu0 0.0
        %3857 = vmatprep.subr.mxu0 0.0
        %3858 = vmatpush1.msra.mxu0 0.0
        %3859 = vmatprep.subr.mxu0 0.0
        %3860 = vmatpush1.msra.mxu0 0.0
        %3861 = vmatprep.subr.mxu0 0.0
        %3862 = vmatpush1.msra.mxu0 0.0
        %3863 = vmatprep.subr.mxu0 0.0
        %3864 = vmatpush1.msra.mxu0 0.0
        %3865 = vmatprep.subr.mxu0 0.0
        %3866 = vmatpush1.msra.mxu0 0.0
        %3867 = vmatprep.subr.mxu0 0.0
        %3868 = vmatpush1.msra.mxu0 0.0
        %3869 = vmatprep.subr.mxu0 0.0
        %3870 = vmatpush1.msra.mxu0 0.0
        %3871 = vmatprep.mubr.f32.mxu0 0.0
        %3872 = vmatmul.mubr.f32.gmra.mrb[0].mxu0 %v3805
        %v3873 = vpop.f32.mrb[0].mxu0
        %v3874 = vadd.f32 0.0, %v3873
        %v3875 = vpop.f32.mrb[0].mxu0
        %3876 = vdwg.mxu0
        %3877 = vrot.lane.b32.xlu0 %v3008, 112
        %v3878 = vpop.permute.xlu0 %3877
        %3879 = vrot.lane.b32.xlu0 %v3084, 112
        %v3880 = vpop.permute.xlu0 %3879
        %3881 = vrot.lane.b32.xlu0 %v3087, 112
        %v3882 = vpop.permute.xlu0 %3881
        %v3883 = vsel %vm1482, %v3878, 0
        %v3885 = vsel %vm1482, %v3880, 0
        %v3887 = vsel %vm1482, %v3882, 0
        %3889 = vmatprep.subr.mxu0 0.0
        %3890 = vmatpush1.xpose.msra.mxu0 %v3885
        %3891 = vmatprep.subr.mxu0 0.0
        %3892 = vmatpush1.xpose.msra.mxu0 %v3887
        %3893 = vmatprep.subr.mxu0 0.0
        %3894 = vmatpush1.xpose.msra.mxu0 0.0
        %3895 = vmatprep.subr.mxu0 0.0
        %3896 = vmatpush1.xpose.msra.mxu0 0.0
        %3897 = vmatprep.subr.mxu0 0.0
        %3898 = vmatpush1.xpose.msra.mxu0 0.0
        %3899 = vmatprep.subr.mxu0 0.0
        %3900 = vmatpush1.xpose.msra.mxu0 0.0
        %3901 = vmatprep.subr.mxu0 0.0
        %3902 = vmatpush1.xpose.msra.mxu0 0.0
        %3903 = vmatprep.subr.mxu0 0.0
        %3904 = vmatpush1.xpose.msra.mxu0 0.0
        %3905 = vmatprep.subr.mxu0 0.0
        %3906 = vmatpush1.xpose.msra.mxu0 0.0
        %3907 = vmatprep.subr.mxu0 0.0
        %3908 = vmatpush1.xpose.msra.mxu0 0.0
        %3909 = vmatprep.subr.mxu0 0.0
        %3910 = vmatpush1.xpose.msra.mxu0 0.0
        %3911 = vmatprep.subr.mxu0 0.0
        %3912 = vmatpush1.xpose.msra.mxu0 0.0
        %3913 = vmatprep.subr.mxu0 0.0
        %3914 = vmatpush1.xpose.msra.mxu0 0.0
        %3915 = vmatprep.subr.mxu0 0.0
        %3916 = vmatpush1.xpose.msra.mxu0 0.0
        %3917 = vmatprep.subr.mxu0 0.0
        %3918 = vmatpush1.xpose.msra.mxu0 0.0
        %3919 = vmatprep.subr.mxu0 0.0
        %3920 = vmatpush1.xpose.msra.mxu0 0.0
        %3921 = vmatprep.subr.mxu0 0.0
        %3922 = vmatpush1.xpose.msra.mxu0 0.0
        %3923 = vmatprep.subr.mxu0 0.0
        %3924 = vmatpush1.xpose.msra.mxu0 0.0
        %3925 = vmatprep.subr.mxu0 0.0
        %3926 = vmatpush1.xpose.msra.mxu0 0.0
        %3927 = vmatprep.subr.mxu0 0.0
        %3928 = vmatpush1.xpose.msra.mxu0 0.0
        %3929 = vmatprep.subr.mxu0 0.0
        %3930 = vmatpush1.xpose.msra.mxu0 0.0
        %3931 = vmatprep.subr.mxu0 0.0
        %3932 = vmatpush1.xpose.msra.mxu0 0.0
        %3933 = vmatprep.subr.mxu0 0.0
        %3934 = vmatpush1.xpose.msra.mxu0 0.0
        %3935 = vmatprep.subr.mxu0 0.0
        %3936 = vmatpush1.xpose.msra.mxu0 0.0
        %3937 = vmatprep.subr.mxu0 0.0
        %3938 = vmatpush1.xpose.msra.mxu0 0.0
        %3939 = vmatprep.subr.mxu0 0.0
        %3940 = vmatpush1.xpose.msra.mxu0 0.0
        %3941 = vmatprep.subr.mxu0 0.0
        %3942 = vmatpush1.xpose.msra.mxu0 0.0
        %3943 = vmatprep.subr.mxu0 0.0
        %3944 = vmatpush1.xpose.msra.mxu0 0.0
        %3945 = vmatprep.subr.mxu0 0.0
        %3946 = vmatpush1.xpose.msra.mxu0 0.0
        %3947 = vmatprep.subr.mxu0 0.0
        %3948 = vmatpush1.xpose.msra.mxu0 0.0
        %3949 = vmatprep.subr.mxu0 0.0
        %3950 = vmatpush1.xpose.msra.mxu0 0.0
        %3951 = vmatprep.subr.mxu0 0.0
        %3952 = vmatpush1.xpose.msra.mxu0 0.0
        %3953 = vmatprep.mubr.f32.mxu0 0.0
        %3954 = vmatmul.mubr.f32.gmra.mrb[0].mxu0 %v3883
        %v3955 = vpop.f32.mrb[0].mxu0
        %v3956 = vadd.f32 0.0, %v3955
        %v3957 = vpop.f32.mrb[0].mxu0
        %3958 = vdwg.mxu0
        %3959 = vrot.lane.b32.xlu0 %v3011, 112
        %v3960 = vpop.permute.xlu0 %3959
        %3961 = vrot.lane.b32.xlu0 %v3092, 112
        %v3962 = vpop.permute.xlu0 %3961
        %3963 = vrot.lane.b32.xlu0 %v3095, 112
        %v3964 = vpop.permute.xlu0 %3963
        %v3965 = vsel %vm1482, %v3960, 0
        %v3967 = vsel %vm1482, %v3962, 0
        %v3969 = vsel %vm1482, %v3964, 0
        %3971 = vmatprep.subr.mxu0 0.0
        %3972 = vmatpush1.xpose.msra.mxu0 %v3967
        %3973 = vmatprep.subr.mxu0 0.0
        %3974 = vmatpush1.xpose.msra.mxu0 %v3969
        %3975 = vmatprep.subr.mxu0 0.0
        %3976 = vmatpush1.xpose.msra.mxu0 0.0
        %3977 = vmatprep.subr.mxu0 0.0
        %3978 = vmatpush1.xpose.msra.mxu0 0.0
        %3979 = vmatprep.subr.mxu0 0.0
        %3980 = vmatpush1.xpose.msra.mxu0 0.0
        %3981 = vmatprep.subr.mxu0 0.0
        %3982 = vmatpush1.xpose.msra.mxu0 0.0
        %3983 = vmatprep.subr.mxu0 0.0
        %3984 = vmatpush1.xpose.msra.mxu0 0.0
        %3985 = vmatprep.subr.mxu0 0.0
        %3986 = vmatpush1.xpose.msra.mxu0 0.0
        %3987 = vmatprep.subr.mxu0 0.0
        %3988 = vmatpush1.xpose.msra.mxu0 0.0
        %3989 = vmatprep.subr.mxu0 0.0
        %3990 = vmatpush1.xpose.msra.mxu0 0.0
        %3991 = vmatprep.subr.mxu0 0.0
        %3992 = vmatpush1.xpose.msra.mxu0 0.0
        %3993 = vmatprep.subr.mxu0 0.0
        %3994 = vmatpush1.xpose.msra.mxu0 0.0
        %3995 = vmatprep.subr.mxu0 0.0
        %3996 = vmatpush1.xpose.msra.mxu0 0.0
        %3997 = vmatprep.subr.mxu0 0.0
        %3998 = vmatpush1.xpose.msra.mxu0 0.0
        %3999 = vmatprep.subr.mxu0 0.0
        %4000 = vmatpush1.xpose.msra.mxu0 0.0
        %4001 = vmatprep.subr.mxu0 0.0
        %4002 = vmatpush1.xpose.msra.mxu0 0.0
        %4003 = vmatprep.subr.mxu0 0.0
        %4004 = vmatpush1.xpose.msra.mxu0 0.0
        %4005 = vmatprep.subr.mxu0 0.0
        %4006 = vmatpush1.xpose.msra.mxu0 0.0
        %4007 = vmatprep.subr.mxu0 0.0
        %4008 = vmatpush1.xpose.msra.mxu0 0.0
        %4009 = vmatprep.subr.mxu0 0.0
        %4010 = vmatpush1.xpose.msra.mxu0 0.0
        %4011 = vmatprep.subr.mxu0 0.0
        %4012 = vmatpush1.xpose.msra.mxu0 0.0
        %4013 = vmatprep.subr.mxu0 0.0
        %4014 = vmatpush1.xpose.msra.mxu0 0.0
        %4015 = vmatprep.subr.mxu0 0.0
        %4016 = vmatpush1.xpose.msra.mxu0 0.0
        %4017 = vmatprep.subr.mxu0 0.0
        %4018 = vmatpush1.xpose.msra.mxu0 0.0
        %4019 = vmatprep.subr.mxu0 0.0
        %4020 = vmatpush1.xpose.msra.mxu0 0.0
        %4021 = vmatprep.subr.mxu0 0.0
        %4022 = vmatpush1.xpose.msra.mxu0 0.0
        %4023 = vmatprep.subr.mxu0 0.0
        %4024 = vmatpush1.xpose.msra.mxu0 0.0
        %4025 = vmatprep.subr.mxu0 0.0
        %4026 = vmatpush1.xpose.msra.mxu0 0.0
        %4027 = vmatprep.subr.mxu0 0.0
        %4028 = vmatpush1.xpose.msra.mxu0 0.0
        %4029 = vmatprep.subr.mxu0 0.0
        %4030 = vmatpush1.xpose.msra.mxu0 0.0
        %4031 = vmatprep.subr.mxu0 0.0
        %4032 = vmatpush1.xpose.msra.mxu0 0.0
        %4033 = vmatprep.subr.mxu0 0.0
        %4034 = vmatpush1.xpose.msra.mxu0 0.0
        %4035 = vmatprep.mubr.f32.mxu0 0.0
        %4036 = vmatmul.mubr.f32.gmra.mrb[0].mxu0 %v3965
        %v4037 = vpop.f32.mrb[0].mxu0
        %v4038 = vadd.f32 0.0, %v4037
        %v4039 = vpop.f32.mrb[0].mxu0
        %4040 = vdwg.mxu0
        %v4041 = vmul.f32 %v3956, 0.35355338
        %v4042 = vmul.f32 %v4038, 0.35355338
        %v4043 = vadd.f32 %v4041, %v3348
        %v4044 = vadd.f32 %v4042, %v3352
        %v4045 = vsel %vm2828, %v4043, -inf
        %4046 = vmax.xlane.f32.xlu0 %v4045
        %v4047 = vpop.xlane.xlu0 %4046
        %v4048 = vsel %vm2828, %v4044, -inf
        %4049 = vmax.xlane.f32.xlu0 %v4048
        %v4050 = vpop.xlane.xlu0 %4049
        %v4051 = vsub.f32 %v4043, %v4047
        %v4052 = vsub.f32 %v4044, %v4050
        %v4053 = vmul.f32 %v4051, 1.442695
        %v4054 = vpow.pop %v4053
        %v4055 = vmul.f32 %v4052, 1.442695
        %v4056 = vpow.pop %v4055
        %v4057 = vsel %vm2828, %v4054, 0.0
        %4058 = vadd.xlane.f32.xlu0 %v4057
        %v4059 = vpop.xlane.xlu0 %4058
        %v4060 = vsel %vm2828, %v4056, 0.0
        %4061 = vadd.xlane.f32.xlu0 %v4060
        %v4062 = vpop.xlane.xlu0 %4061
        %v4063 = vrcp.pop %v4059
        %v4064 = vmul.f32 %v4054, %v4063
        %v4065 = vrcp.pop %v4062
        %v4066 = vmul.f32 %v4056, %v4065
        %4067 = vrot.lane.b32.xlu0 %v3164, 112
        %v4068 = vpop.permute.xlu0 %4067
        %4069 = vrot.lane.b32.xlu0 %v3167, 112
        %v4070 = vpop.permute.xlu0 %4069
        %v4074 = vsel %vm2828, %v4064, 0
        %4076 = vmatprep.subr.mxu0 0.0
        %4077 = vmatpush1.msra.mxu0 %v4068
        %4078 = vmatprep.subr.mxu0 0.0
        %4079 = vmatpush1.msra.mxu0 %v4070
        %4080 = vmatprep.subr.mxu0 0.0
        %4081 = vmatpush1.msra.mxu0 0.0
        %4082 = vmatprep.subr.mxu0 0.0
        %4083 = vmatpush1.msra.mxu0 0.0
        %4084 = vmatprep.subr.mxu0 0.0
        %4085 = vmatpush1.msra.mxu0 0.0
        %4086 = vmatprep.subr.mxu0 0.0
        %4087 = vmatpush1.msra.mxu0 0.0
        %4088 = vmatprep.subr.mxu0 0.0
        %4089 = vmatpush1.msra.mxu0 0.0
        %4090 = vmatprep.subr.mxu0 0.0
        %4091 = vmatpush1.msra.mxu0 0.0
        %4092 = vmatprep.subr.mxu0 0.0
        %4093 = vmatpush1.msra.mxu0 0.0
        %4094 = vmatprep.subr.mxu0 0.0
        %4095 = vmatpush1.msra.mxu0 0.0
        %4096 = vmatprep.subr.mxu0 0.0
        %4097 = vmatpush1.msra.mxu0 0.0
        %4098 = vmatprep.subr.mxu0 0.0
        %4099 = vmatpush1.msra.mxu0 0.0
        %4100 = vmatprep.subr.mxu0 0.0
        %4101 = vmatpush1.msra.mxu0 0.0
        %4102 = vmatprep.subr.mxu0 0.0
        %4103 = vmatpush1.msra.mxu0 0.0
        %4104 = vmatprep.subr.mxu0 0.0
        %4105 = vmatpush1.msra.mxu0 0.0
        %4106 = vmatprep.subr.mxu0 0.0
        %4107 = vmatpush1.msra.mxu0 0.0
        %4108 = vmatprep.subr.mxu0 0.0
        %4109 = vmatpush1.msra.mxu0 0.0
        %4110 = vmatprep.subr.mxu0 0.0
        %4111 = vmatpush1.msra.mxu0 0.0
        %4112 = vmatprep.subr.mxu0 0.0
        %4113 = vmatpush1.msra.mxu0 0.0
        %4114 = vmatprep.subr.mxu0 0.0
        %4115 = vmatpush1.msra.mxu0 0.0
        %4116 = vmatprep.subr.mxu0 0.0
        %4117 = vmatpush1.msra.mxu0 0.0
        %4118 = vmatprep.subr.mxu0 0.0
        %4119 = vmatpush1.msra.mxu0 0.0
        %4120 = vmatprep.subr.mxu0 0.0
        %4121 = vmatpush1.msra.mxu0 0.0
        %4122 = vmatprep.subr.mxu0 0.0
        %4123 = vmatpush1.msra.mxu0 0.0
        %4124 = vmatprep.subr.mxu0 0.0
        %4125 = vmatpush1.msra.mxu0 0.0
        %4126 = vmatprep.subr.mxu0 0.0
        %4127 = vmatpush1.msra.mxu0 0.0
        %4128 = vmatprep.subr.mxu0 0.0
        %4129 = vmatpush1.msra.mxu0 0.0
        %4130 = vmatprep.subr.mxu0 0.0
        %4131 = vmatpush1.msra.mxu0 0.0
        %4132 = vmatprep.subr.mxu0 0.0
        %4133 = vmatpush1.msra.mxu0 0.0
        %4134 = vmatprep.subr.mxu0 0.0
        %4135 = vmatpush1.msra.mxu0 0.0
        %4136 = vmatprep.subr.mxu0 0.0
        %4137 = vmatpush1.msra.mxu0 0.0
        %4138 = vmatprep.subr.mxu0 0.0
        %4139 = vmatpush1.msra.mxu0 0.0
        %4140 = vmatprep.mubr.f32.mxu0 0.0
        %4141 = vmatmul.mubr.f32.gmra.mrb[0].mxu0 %v4074
        %v4142 = vpop.f32.mrb[0].mxu0
        %v4143 = vadd.f32 0.0, %v4142
        %v4144 = vpop.f32.mrb[0].mxu0
        %4145 = vdwg.mxu0
        %4146 = vrot.lane.b32.xlu0 %v3172, 112
        %v4147 = vpop.permute.xlu0 %4146
        %4148 = vrot.lane.b32.xlu0 %v3175, 112
        %v4149 = vpop.permute.xlu0 %4148
        %v4153 = vsel %vm2828, %v4066, 0
        %4155 = vmatprep.subr.mxu0 0.0
        %4156 = vmatpush1.msra.mxu0 %v4147
        %4157 = vmatprep.subr.mxu0 0.0
        %4158 = vmatpush1.msra.mxu0 %v4149
        %4159 = vmatprep.subr.mxu0 0.0
        %4160 = vmatpush1.msra.mxu0 0.0
        %4161 = vmatprep.subr.mxu0 0.0
        %4162 = vmatpush1.msra.mxu0 0.0
        %4163 = vmatprep.subr.mxu0 0.0
        %4164 = vmatpush1.msra.mxu0 0.0
        %4165 = vmatprep.subr.mxu0 0.0
        %4166 = vmatpush1.msra.mxu0 0.0
        %4167 = vmatprep.subr.mxu0 0.0
        %4168 = vmatpush1.msra.mxu0 0.0
        %4169 = vmatprep.subr.mxu0 0.0
        %4170 = vmatpush1.msra.mxu0 0.0
        %4171 = vmatprep.subr.mxu0 0.0
        %4172 = vmatpush1.msra.mxu0 0.0
        %4173 = vmatprep.subr.mxu0 0.0
        %4174 = vmatpush1.msra.mxu0 0.0
        %4175 = vmatprep.subr.mxu0 0.0
        %4176 = vmatpush1.msra.mxu0 0.0
        %4177 = vmatprep.subr.mxu0 0.0
        %4178 = vmatpush1.msra.mxu0 0.0
        %4179 = vmatprep.subr.mxu0 0.0
        %4180 = vmatpush1.msra.mxu0 0.0
        %4181 = vmatprep.subr.mxu0 0.0
        %4182 = vmatpush1.msra.mxu0 0.0
        %4183 = vmatprep.subr.mxu0 0.0
        %4184 = vmatpush1.msra.mxu0 0.0
        %4185 = vmatprep.subr.mxu0 0.0
        %4186 = vmatpush1.msra.mxu0 0.0
        %4187 = vmatprep.subr.mxu0 0.0
        %4188 = vmatpush1.msra.mxu0 0.0
        %4189 = vmatprep.subr.mxu0 0.0
        %4190 = vmatpush1.msra.mxu0 0.0
        %4191 = vmatprep.subr.mxu0 0.0
        %4192 = vmatpush1.msra.mxu0 0.0
        %4193 = vmatprep.subr.mxu0 0.0
        %4194 = vmatpush1.msra.mxu0 0.0
        %4195 = vmatprep.subr.mxu0 0.0
        %4196 = vmatpush1.msra.mxu0 0.0
        %4197 = vmatprep.subr.mxu0 0.0
        %4198 = vmatpush1.msra.mxu0 0.0
        %4199 = vmatprep.subr.mxu0 0.0
        %4200 = vmatpush1.msra.mxu0 0.0
        %4201 = vmatprep.subr.mxu0 0.0
        %4202 = vmatpush1.msra.mxu0 0.0
        %4203 = vmatprep.subr.mxu0 0.0
        %4204 = vmatpush1.msra.mxu0 0.0
        %4205 = vmatprep.subr.mxu0 0.0
        %4206 = vmatpush1.msra.mxu0 0.0
        %4207 = vmatprep.subr.mxu0 0.0
        %4208 = vmatpush1.msra.mxu0 0.0
        %4209 = vmatprep.subr.mxu0 0.0
        %4210 = vmatpush1.msra.mxu0 0.0
        %4211 = vmatprep.subr.mxu0 0.0
        %4212 = vmatpush1.msra.mxu0 0.0
        %4213 = vmatprep.subr.mxu0 0.0
        %4214 = vmatpush1.msra.mxu0 0.0
        %4215 = vmatprep.subr.mxu0 0.0
        %4216 = vmatpush1.msra.mxu0 0.0
        %4217 = vmatprep.subr.mxu0 0.0
        %4218 = vmatpush1.msra.mxu0 0.0
        %4219 = vmatprep.mubr.f32.mxu0 0.0
        %4220 = vmatmul.mubr.f32.gmra.mrb[0].mxu0 %v4153
        %v4221 = vpop.f32.mrb[0].mxu0
        %v4222 = vadd.f32 0.0, %v4221
        %v4223 = vpop.f32.mrb[0].mxu0
        %4224 = vdwg.mxu0
        %4225 = vrot.lane.b32.xlu0 %v3008, 104
        %v4226 = vpop.permute.xlu0 %4225
        %4227 = vrot.lane.b32.xlu0 %v3084, 104
        %v4228 = vpop.permute.xlu0 %4227
        %4229 = vrot.lane.b32.xlu0 %v3087, 104
        %v4230 = vpop.permute.xlu0 %4229
        %v4231 = vsel %vm1482, %v4226, 0
        %v4233 = vsel %vm1482, %v4228, 0
        %v4235 = vsel %vm1482, %v4230, 0
        %4237 = vmatprep.subr.mxu0 0.0
        %4238 = vmatpush1.xpose.msra.mxu0 %v4233
        %4239 = vmatprep.subr.mxu0 0.0
        %4240 = vmatpush1.xpose.msra.mxu0 %v4235
        %4241 = vmatprep.subr.mxu0 0.0
        %4242 = vmatpush1.xpose.msra.mxu0 0.0
        %4243 = vmatprep.subr.mxu0 0.0
        %4244 = vmatpush1.xpose.msra.mxu0 0.0
        %4245 = vmatprep.subr.mxu0 0.0
        %4246 = vmatpush1.xpose.msra.mxu0 0.0
        %4247 = vmatprep.subr.mxu0 0.0
        %4248 = vmatpush1.xpose.msra.mxu0 0.0
        %4249 = vmatprep.subr.mxu0 0.0
        %4250 = vmatpush1.xpose.msra.mxu0 0.0
        %4251 = vmatprep.subr.mxu0 0.0
        %4252 = vmatpush1.xpose.msra.mxu0 0.0
        %4253 = vmatprep.subr.mxu0 0.0
        %4254 = vmatpush1.xpose.msra.mxu0 0.0
        %4255 = vmatprep.subr.mxu0 0.0
        %4256 = vmatpush1.xpose.msra.mxu0 0.0
        %4257 = vmatprep.subr.mxu0 0.0
        %4258 = vmatpush1.xpose.msra.mxu0 0.0
        %4259 = vmatprep.subr.mxu0 0.0
        %4260 = vmatpush1.xpose.msra.mxu0 0.0
        %4261 = vmatprep.subr.mxu0 0.0
        %4262 = vmatpush1.xpose.msra.mxu0 0.0
        %4263 = vmatprep.subr.mxu0 0.0
        %4264 = vmatpush1.xpose.msra.mxu0 0.0
        %4265 = vmatprep.subr.mxu0 0.0
        %4266 = vmatpush1.xpose.msra.mxu0 0.0
        %4267 = vmatprep.subr.mxu0 0.0
        %4268 = vmatpush1.xpose.msra.mxu0 0.0
        %4269 = vmatprep.subr.mxu0 0.0
        %4270 = vmatpush1.xpose.msra.mxu0 0.0
        %4271 = vmatprep.subr.mxu0 0.0
        %4272 = vmatpush1.xpose.msra.mxu0 0.0
        %4273 = vmatprep.subr.mxu0 0.0
        %4274 = vmatpush1.xpose.msra.mxu0 0.0
        %4275 = vmatprep.subr.mxu0 0.0
        %4276 = vmatpush1.xpose.msra.mxu0 0.0
        %4277 = vmatprep.subr.mxu0 0.0
        %4278 = vmatpush1.xpose.msra.mxu0 0.0
        %4279 = vmatprep.subr.mxu0 0.0
        %4280 = vmatpush1.xpose.msra.mxu0 0.0
        %4281 = vmatprep.subr.mxu0 0.0
        %4282 = vmatpush1.xpose.msra.mxu0 0.0
        %4283 = vmatprep.subr.mxu0 0.0
        %4284 = vmatpush1.xpose.msra.mxu0 0.0
        %4285 = vmatprep.subr.mxu0 0.0
        %4286 = vmatpush1.xpose.msra.mxu0 0.0
        %4287 = vmatprep.subr.mxu0 0.0
        %4288 = vmatpush1.xpose.msra.mxu0 0.0
        %4289 = vmatprep.subr.mxu0 0.0
        %4290 = vmatpush1.xpose.msra.mxu0 0.0
        %4291 = vmatprep.subr.mxu0 0.0
        %4292 = vmatpush1.xpose.msra.mxu0 0.0
        %4293 = vmatprep.subr.mxu0 0.0
        %4294 = vmatpush1.xpose.msra.mxu0 0.0
        %4295 = vmatprep.subr.mxu0 0.0
        %4296 = vmatpush1.xpose.msra.mxu0 0.0
        %4297 = vmatprep.subr.mxu0 0.0
        %4298 = vmatpush1.xpose.msra.mxu0 0.0
        %4299 = vmatprep.subr.mxu0 0.0
        %4300 = vmatpush1.xpose.msra.mxu0 0.0
        %4301 = vmatprep.mubr.f32.mxu0 0.0
        %4302 = vmatmul.mubr.f32.gmra.mrb[0].mxu0 %v4231
        %v4303 = vpop.f32.mrb[0].mxu0
        %v4304 = vadd.f32 0.0, %v4303
        %v4305 = vpop.f32.mrb[0].mxu0
        %4306 = vdwg.mxu0
        %4307 = vrot.lane.b32.xlu0 %v3011, 104
        %v4308 = vpop.permute.xlu0 %4307
        %4309 = vrot.lane.b32.xlu0 %v3092, 104
        %v4310 = vpop.permute.xlu0 %4309
        %4311 = vrot.lane.b32.xlu0 %v3095, 104
        %v4312 = vpop.permute.xlu0 %4311
        %v4313 = vsel %vm1482, %v4308, 0
        %v4315 = vsel %vm1482, %v4310, 0
        %v4317 = vsel %vm1482, %v4312, 0
        %4319 = vmatprep.subr.mxu0 0.0
        %4320 = vmatpush1.xpose.msra.mxu0 %v4315
        %4321 = vmatprep.subr.mxu0 0.0
        %4322 = vmatpush1.xpose.msra.mxu0 %v4317
        %4323 = vmatprep.subr.mxu0 0.0
        %4324 = vmatpush1.xpose.msra.mxu0 0.0
        %4325 = vmatprep.subr.mxu0 0.0
        %4326 = vmatpush1.xpose.msra.mxu0 0.0
        %4327 = vmatprep.subr.mxu0 0.0
        %4328 = vmatpush1.xpose.msra.mxu0 0.0
        %4329 = vmatprep.subr.mxu0 0.0
        %4330 = vmatpush1.xpose.msra.mxu0 0.0
        %4331 = vmatprep.subr.mxu0 0.0
        %4332 = vmatpush1.xpose.msra.mxu0 0.0
        %4333 = vmatprep.subr.mxu0 0.0
        %4334 = vmatpush1.xpose.msra.mxu0 0.0
        %4335 = vmatprep.subr.mxu0 0.0
        %4336 = vmatpush1.xpose.msra.mxu0 0.0
        %4337 = vmatprep.subr.mxu0 0.0
        %4338 = vmatpush1.xpose.msra.mxu0 0.0
        %4339 = vmatprep.subr.mxu0 0.0
        %4340 = vmatpush1.xpose.msra.mxu0 0.0
        %4341 = vmatprep.subr.mxu0 0.0
        %4342 = vmatpush1.xpose.msra.mxu0 0.0
        %4343 = vmatprep.subr.mxu0 0.0
        %4344 = vmatpush1.xpose.msra.mxu0 0.0
        %4345 = vmatprep.subr.mxu0 0.0
        %4346 = vmatpush1.xpose.msra.mxu0 0.0
        %4347 = vmatprep.subr.mxu0 0.0
        %4348 = vmatpush1.xpose.msra.mxu0 0.0
        %4349 = vmatprep.subr.mxu0 0.0
        %4350 = vmatpush1.xpose.msra.mxu0 0.0
        %4351 = vmatprep.subr.mxu0 0.0
        %4352 = vmatpush1.xpose.msra.mxu0 0.0
        %4353 = vmatprep.subr.mxu0 0.0
        %4354 = vmatpush1.xpose.msra.mxu0 0.0
        %4355 = vmatprep.subr.mxu0 0.0
        %4356 = vmatpush1.xpose.msra.mxu0 0.0
        %4357 = vmatprep.subr.mxu0 0.0
        %4358 = vmatpush1.xpose.msra.mxu0 0.0
        %4359 = vmatprep.subr.mxu0 0.0
        %4360 = vmatpush1.xpose.msra.mxu0 0.0
        %4361 = vmatprep.subr.mxu0 0.0
        %4362 = vmatpush1.xpose.msra.mxu0 0.0
        %4363 = vmatprep.subr.mxu0 0.0
        %4364 = vmatpush1.xpose.msra.mxu0 0.0
        %4365 = vmatprep.subr.mxu0 0.0
        %4366 = vmatpush1.xpose.msra.mxu0 0.0
        %4367 = vmatprep.subr.mxu0 0.0
        %4368 = vmatpush1.xpose.msra.mxu0 0.0
        %4369 = vmatprep.subr.mxu0 0.0
        %4370 = vmatpush1.xpose.msra.mxu0 0.0
        %4371 = vmatprep.subr.mxu0 0.0
        %4372 = vmatpush1.xpose.msra.mxu0 0.0
        %4373 = vmatprep.subr.mxu0 0.0
        %4374 = vmatpush1.xpose.msra.mxu0 0.0
        %4375 = vmatprep.subr.mxu0 0.0
        %4376 = vmatpush1.xpose.msra.mxu0 0.0
        %4377 = vmatprep.subr.mxu0 0.0
        %4378 = vmatpush1.xpose.msra.mxu0 0.0
        %4379 = vmatprep.subr.mxu0 0.0
        %4380 = vmatpush1.xpose.msra.mxu0 0.0
        %4381 = vmatprep.subr.mxu0 0.0
        %4382 = vmatpush1.xpose.msra.mxu0 0.0
        %4383 = vmatprep.mubr.f32.mxu0 0.0
        %4384 = vmatmul.mubr.f32.gmra.mrb[0].mxu0 %v4313
        %v4385 = vpop.f32.mrb[0].mxu0
        %v4386 = vadd.f32 0.0, %v4385
        %v4387 = vpop.f32.mrb[0].mxu0
        %4388 = vdwg.mxu0
        %v4389 = vmul.f32 %v4304, 0.35355338
        %v4390 = vmul.f32 %v4386, 0.35355338
        %v4391 = vadd.f32 %v4389, %v3348
        %v4392 = vadd.f32 %v4390, %v3352
        %v4393 = vsel %vm2828, %v4391, -inf
        %4394 = vmax.xlane.f32.xlu0 %v4393
        %v4395 = vpop.xlane.xlu0 %4394
        %v4396 = vsel %vm2828, %v4392, -inf
        %4397 = vmax.xlane.f32.xlu0 %v4396
        %v4398 = vpop.xlane.xlu0 %4397
        %v4399 = vsub.f32 %v4391, %v4395
        %v4400 = vsub.f32 %v4392, %v4398
        %v4401 = vmul.f32 %v4399, 1.442695
        %v4402 = vpow.pop %v4401
        %v4403 = vmul.f32 %v4400, 1.442695
        %v4404 = vpow.pop %v4403
        %v4405 = vsel %vm2828, %v4402, 0.0
        %4406 = vadd.xlane.f32.xlu0 %v4405
        %v4407 = vpop.xlane.xlu0 %4406
        %v4408 = vsel %vm2828, %v4404, 0.0
        %4409 = vadd.xlane.f32.xlu0 %v4408
        %v4410 = vpop.xlane.xlu0 %4409
        %v4411 = vrcp.pop %v4407
        %v4412 = vmul.f32 %v4402, %v4411
        %v4413 = vrcp.pop %v4410
        %v4414 = vmul.f32 %v4404, %v4413
        %4415 = vrot.lane.b32.xlu0 %v3164, 104
        %v4416 = vpop.permute.xlu0 %4415
        %4417 = vrot.lane.b32.xlu0 %v3167, 104
        %v4418 = vpop.permute.xlu0 %4417
        %v4422 = vsel %vm2828, %v4412, 0
        %4424 = vmatprep.subr.mxu0 0.0
        %4425 = vmatpush1.msra.mxu0 %v4416
        %4426 = vmatprep.subr.mxu0 0.0
        %4427 = vmatpush1.msra.mxu0 %v4418
        %4428 = vmatprep.subr.mxu0 0.0
        %4429 = vmatpush1.msra.mxu0 0.0
        %4430 = vmatprep.subr.mxu0 0.0
        %4431 = vmatpush1.msra.mxu0 0.0
        %4432 = vmatprep.subr.mxu0 0.0
        %4433 = vmatpush1.msra.mxu0 0.0
        %4434 = vmatprep.subr.mxu0 0.0
        %4435 = vmatpush1.msra.mxu0 0.0
        %4436 = vmatprep.subr.mxu0 0.0
        %4437 = vmatpush1.msra.mxu0 0.0
        %4438 = vmatprep.subr.mxu0 0.0
        %4439 = vmatpush1.msra.mxu0 0.0
        %4440 = vmatprep.subr.mxu0 0.0
        %4441 = vmatpush1.msra.mxu0 0.0
        %4442 = vmatprep.subr.mxu0 0.0
        %4443 = vmatpush1.msra.mxu0 0.0
        %4444 = vmatprep.subr.mxu0 0.0
        %4445 = vmatpush1.msra.mxu0 0.0
        %4446 = vmatprep.subr.mxu0 0.0
        %4447 = vmatpush1.msra.mxu0 0.0
        %4448 = vmatprep.subr.mxu0 0.0
        %4449 = vmatpush1.msra.mxu0 0.0
        %4450 = vmatprep.subr.mxu0 0.0
        %4451 = vmatpush1.msra.mxu0 0.0
        %4452 = vmatprep.subr.mxu0 0.0
        %4453 = vmatpush1.msra.mxu0 0.0
        %4454 = vmatprep.subr.mxu0 0.0
        %4455 = vmatpush1.msra.mxu0 0.0
        %4456 = vmatprep.subr.mxu0 0.0
        %4457 = vmatpush1.msra.mxu0 0.0
        %4458 = vmatprep.subr.mxu0 0.0
        %4459 = vmatpush1.msra.mxu0 0.0
        %4460 = vmatprep.subr.mxu0 0.0
        %4461 = vmatpush1.msra.mxu0 0.0
        %4462 = vmatprep.subr.mxu0 0.0
        %4463 = vmatpush1.msra.mxu0 0.0
        %4464 = vmatprep.subr.mxu0 0.0
        %4465 = vmatpush1.msra.mxu0 0.0
        %4466 = vmatprep.subr.mxu0 0.0
        %4467 = vmatpush1.msra.mxu0 0.0
        %4468 = vmatprep.subr.mxu0 0.0
        %4469 = vmatpush1.msra.mxu0 0.0
        %4470 = vmatprep.subr.mxu0 0.0
        %4471 = vmatpush1.msra.mxu0 0.0
        %4472 = vmatprep.subr.mxu0 0.0
        %4473 = vmatpush1.msra.mxu0 0.0
        %4474 = vmatprep.subr.mxu0 0.0
        %4475 = vmatpush1.msra.mxu0 0.0
        %4476 = vmatprep.subr.mxu0 0.0
        %4477 = vmatpush1.msra.mxu0 0.0
        %4478 = vmatprep.subr.mxu0 0.0
        %4479 = vmatpush1.msra.mxu0 0.0
        %4480 = vmatprep.subr.mxu0 0.0
        %4481 = vmatpush1.msra.mxu0 0.0
        %4482 = vmatprep.subr.mxu0 0.0
        %4483 = vmatpush1.msra.mxu0 0.0
        %4484 = vmatprep.subr.mxu0 0.0
        %4485 = vmatpush1.msra.mxu0 0.0
        %4486 = vmatprep.subr.mxu0 0.0
        %4487 = vmatpush1.msra.mxu0 0.0
        %4488 = vmatprep.mubr.f32.mxu0 0.0
        %4489 = vmatmul.mubr.f32.gmra.mrb[0].mxu0 %v4422
        %v4490 = vpop.f32.mrb[0].mxu0
        %v4491 = vadd.f32 0.0, %v4490
        %v4492 = vpop.f32.mrb[0].mxu0
        %4493 = vdwg.mxu0
        %4494 = vrot.lane.b32.xlu0 %v3172, 104
        %v4495 = vpop.permute.xlu0 %4494
        %4496 = vrot.lane.b32.xlu0 %v3175, 104
        %v4497 = vpop.permute.xlu0 %4496
        %v4501 = vsel %vm2828, %v4414, 0
        %4503 = vmatprep.subr.mxu0 0.0
        %4504 = vmatpush1.msra.mxu0 %v4495
        %4505 = vmatprep.subr.mxu0 0.0
        %4506 = vmatpush1.msra.mxu0 %v4497
        %4507 = vmatprep.subr.mxu0 0.0
        %4508 = vmatpush1.msra.mxu0 0.0
        %4509 = vmatprep.subr.mxu0 0.0
        %4510 = vmatpush1.msra.mxu0 0.0
        %4511 = vmatprep.subr.mxu0 0.0
        %4512 = vmatpush1.msra.mxu0 0.0
        %4513 = vmatprep.subr.mxu0 0.0
        %4514 = vmatpush1.msra.mxu0 0.0
        %4515 = vmatprep.subr.mxu0 0.0
        %4516 = vmatpush1.msra.mxu0 0.0
        %4517 = vmatprep.subr.mxu0 0.0
        %4518 = vmatpush1.msra.mxu0 0.0
        %4519 = vmatprep.subr.mxu0 0.0
        %4520 = vmatpush1.msra.mxu0 0.0
        %4521 = vmatprep.subr.mxu0 0.0
        %4522 = vmatpush1.msra.mxu0 0.0
        %4523 = vmatprep.subr.mxu0 0.0
        %4524 = vmatpush1.msra.mxu0 0.0
        %4525 = vmatprep.subr.mxu0 0.0
        %4526 = vmatpush1.msra.mxu0 0.0
        %4527 = vmatprep.subr.mxu0 0.0
        %4528 = vmatpush1.msra.mxu0 0.0
        %4529 = vmatprep.subr.mxu0 0.0
        %4530 = vmatpush1.msra.mxu0 0.0
        %4531 = vmatprep.subr.mxu0 0.0
        %4532 = vmatpush1.msra.mxu0 0.0
        %4533 = vmatprep.subr.mxu0 0.0
        %4534 = vmatpush1.msra.mxu0 0.0
        %4535 = vmatprep.subr.mxu0 0.0
        %4536 = vmatpush1.msra.mxu0 0.0
        %4537 = vmatprep.subr.mxu0 0.0
        %4538 = vmatpush1.msra.mxu0 0.0
        %4539 = vmatprep.subr.mxu0 0.0
        %4540 = vmatpush1.msra.mxu0 0.0
        %4541 = vmatprep.subr.mxu0 0.0
        %4542 = vmatpush1.msra.mxu0 0.0
        %4543 = vmatprep.subr.mxu0 0.0
        %4544 = vmatpush1.msra.mxu0 0.0
        %4545 = vmatprep.subr.mxu0 0.0
        %4546 = vmatpush1.msra.mxu0 0.0
        %4547 = vmatprep.subr.mxu0 0.0
        %4548 = vmatpush1.msra.mxu0 0.0
        %4549 = vmatprep.subr.mxu0 0.0
        %4550 = vmatpush1.msra.mxu0 0.0
        %4551 = vmatprep.subr.mxu0 0.0
        %4552 = vmatpush1.msra.mxu0 0.0
        %4553 = vmatprep.subr.mxu0 0.0
        %4554 = vmatpush1.msra.mxu0 0.0
        %4555 = vmatprep.subr.mxu0 0.0
        %4556 = vmatpush1.msra.mxu0 0.0
        %4557 = vmatprep.subr.mxu0 0.0
        %4558 = vmatpush1.msra.mxu0 0.0
        %4559 = vmatprep.subr.mxu0 0.0
        %4560 = vmatpush1.msra.mxu0 0.0
        %4561 = vmatprep.subr.mxu0 0.0
        %4562 = vmatpush1.msra.mxu0 0.0
        %4563 = vmatprep.subr.mxu0 0.0
        %4564 = vmatpush1.msra.mxu0 0.0
        %4565 = vmatprep.subr.mxu0 0.0
        %4566 = vmatpush1.msra.mxu0 0.0
        %4567 = vmatprep.mubr.f32.mxu0 0.0
        %4568 = vmatmul.mubr.f32.gmra.mrb[0].mxu0 %v4501
        %v4569 = vpop.f32.mrb[0].mxu0
        %v4570 = vadd.f32 0.0, %v4569
        %v4571 = vpop.f32.mrb[0].mxu0
        %4572 = vdwg.mxu0
        %4575 = vrot.lane.b32.xlu0 %v3793, 8
        %v4576 = vpop.permute.xlu0 %4575
        %4577 = vrot.lane.b32.xlu0 %v3874, 8
        %v4578 = vpop.permute.xlu0 %4577
        %4583 = vrot.lane.b32.xlu0 %v4143, 16
        %v4584 = vpop.permute.xlu0 %4583
        %4585 = vrot.lane.b32.xlu0 %v4222, 16
        %v4586 = vpop.permute.xlu0 %4585
        %4591 = vrot.lane.b32.xlu0 %v4491, 24
        %v4592 = vpop.permute.xlu0 %4591
        %4593 = vrot.lane.b32.xlu0 %v4570, 24
        %v4594 = vpop.permute.xlu0 %4593
        %v4597 = vsel %vm1482, %v3449, %v4576
        %v4598 = vsel %vm1482, %v3522, %v4578
        %v4599 = vsel %vm2828, %v4597, %v4584
        %v4600 = vsel %vm2828, %v4598, %v4586
        %v4601 = vsel %vm2831, %v4599, %v4592
        %v4602 = vsel %vm2831, %v4600, %v4594
        %v4603 = vpack.c.bf16 %v4602, %v4601
        %v4605 = vlaneseq
        %v4606 = vshrl.u32 %v4605, 7
        %v4607 = vsub.s32 0, %v4606
        %v4608 = vrot.slane %v3182, %v4607
        %v4614 = vunpack.c.l.b16 %v3178
        %v4615 = vunpack.c.l.b16 %v3179
        %v4616 = vunpack.c.l.b16 %v3180
        %v4617 = vunpack.c.l.b16 %v3181
        %v4618 = vpack.c.b16 %v4615, %v4614
        %v4619 = vpack.c.b16 %v4617, %v4616
        %v4623 = vsel %vm1361, %v4603, 0
        %4625 = vmatprep.subr.bf16.mxu0 0
        %4626 = vmatpush1.bf16.msra.mxu0 %v4618
        %4627 = vmatprep.subr.bf16.mxu0 0
        %4628 = vmatpush1.bf16.msra.mxu0 %v4619
        %4629 = vmatprep.subr.bf16.mxu0 0
        %4630 = vmatpush1.bf16.msra.mxu0 0
        %4631 = vmatprep.subr.bf16.mxu0 0
        %4632 = vmatpush1.bf16.msra.mxu0 0
        %4633 = vmatprep.subr.bf16.mxu0 0
        %4634 = vmatpush1.bf16.msra.mxu0 0
        %4635 = vmatprep.subr.bf16.mxu0 0
        %4636 = vmatpush1.bf16.msra.mxu0 0
        %4637 = vmatprep.subr.bf16.mxu0 0
        %4638 = vmatpush1.bf16.msra.mxu0 0
        %4639 = vmatprep.subr.bf16.mxu0 0
        %4640 = vmatpush1.bf16.msra.mxu0 0
        %4641 = vmatprep.subr.bf16.mxu0 0
        %4642 = vmatpush1.bf16.msra.mxu0 0
        %4643 = vmatprep.subr.bf16.mxu0 0
        %4644 = vmatpush1.bf16.msra.mxu0 0
        %4645 = vmatprep.subr.bf16.mxu0 0
        %4646 = vmatpush1.bf16.msra.mxu0 0
        %4647 = vmatprep.subr.bf16.mxu0 0
        %4648 = vmatpush1.bf16.msra.mxu0 0
        %4649 = vmatprep.subr.bf16.mxu0 0
        %4650 = vmatpush1.bf16.msra.mxu0 0
        %4651 = vmatprep.subr.bf16.mxu0 0
        %4652 = vmatpush1.bf16.msra.mxu0 0
        %4653 = vmatprep.subr.bf16.mxu0 0
        %4654 = vmatpush1.bf16.msra.mxu0 0
        %4655 = vmatprep.subr.bf16.mxu0 0
        %4656 = vmatpush1.bf16.msra.mxu0 0
        %4657 = vmatprep.mubr.bf16.mxu0 0
        %4658 = vmatmul.mubr.bf16.gmra.mrb[0].mxu0 %v4623
        %v4659 = vpop.f32.mrb[0].mxu0
        %v4660 = vadd.f32 %v4608, %v4659
        %v4661 = vpop.f32.mrb[0].mxu0
        %v4662 = vpop.f32.mrb[0].mxu0
        %v4663 = vadd.f32 %v4608, %v4662
        %v4664 = vpop.f32.mrb[0].mxu0
        %4665 = vdwg.mxu0
        %v4666 = vadd.f32 %v2942, %v4660
        %v4667 = vadd.f32 %v2943, %v4663
        %v4668 = vld [vmem:[%s1287] sm:$0x1]
        %v4669 = vld [vmem:[%s1290] sm:$0x1]
        %v4670 = vsel %vm1361, %v4666, 0.0
        %4671 = vadd.xlane.f32.xlu0 %v4670
        %v4672 = vpop.xlane.xlu0 %4671
        %v4673 = vsel %vm1361, %v4667, 0.0
        %4674 = vadd.xlane.f32.xlu0 %v4673
        %v4675 = vpop.xlane.xlu0 %4674
        %v4676 = vmul.f32 %v4672, %v2907
        %v4677 = vmul.f32 %v4675, %v2907
        %v4678 = vsub.f32 %v4666, %v4676
        %v4679 = vsub.f32 %v4667, %v4677
        %v4680 = vmul.f32 %v4678, %v4678
        %v4681 = vmul.f32 %v4679, %v4679
        %v4682 = vsel %vm1361, %v4680, 0.0
        %4683 = vadd.xlane.f32.xlu0 %v4682
        %v4684 = vpop.xlane.xlu0 %4683
        %v4685 = vsel %vm1361, %v4681, 0.0
        %4686 = vadd.xlane.f32.xlu0 %v4685
        %v4687 = vpop.xlane.xlu0 %4686
        %v4688 = vmul.f32 %v4684, %v2907
        %v4689 = vmul.f32 %v4687, %v2907
        %v4690 = vadd.f32 %v4688, 1e-05
        %v4691 = vadd.f32 %v4689, 1e-05
        %v4692 = vrsqrt.pop %v4690
        %v4693 = vrsqrt.pop %v4691
        %v4694 = vmul.f32 %v4678, %v4692
        %v4695 = vmul.f32 %v4679, %v4693
        %v4697 = vlaneseq
        %v4698 = vshrl.u32 %v4697, 7
        %v4699 = vsub.s32 0, %v4698
        %v4700 = vrot.slane %v4668, %v4699
        %v4702 = vmul.f32 %v4694, %v4700
        %v4703 = vmul.f32 %v4695, %v4700
        %v4705 = vlaneseq
        %v4706 = vshrl.u32 %v4705, 7
        %v4707 = vsub.s32 0, %v4706
        %v4708 = vrot.slane %v4669, %v4707
        %v4710 = vadd.f32 %v4702, %v4708
        %v4711 = vadd.f32 %v4703, %v4708
        %v4712 = vld [vmem:[%s1295] sm:$0xf]
        %v4713 = vld [vmem:[%s1295 + $0x4] sm:$0xf]
        %v4714 = vld [vmem:[%s1295 + $0x8] sm:$0xf]
        %v4715 = vld [vmem:[%s1295 + $0xc] sm:$0xf]
        %v4716 = vpack.c.bf16 %v4711, %v4710
        %v4717 = vld [vmem:[%s1298] sm:$0x1]
        %v4719 = vlaneseq
        %v4720 = vshrl.u32 %v4719, 7
        %v4721 = vsub.s32 0, %v4720
        %v4722 = vrot.slane %v4717, %v4721
        %v4728 = vunpack.c.l.b16 %v4712
        %v4729 = vunpack.c.l.b16 %v4713
        %v4730 = vunpack.c.l.b16 %v4714
        %v4731 = vunpack.c.l.b16 %v4715
        %v4732 = vpack.c.b16 %v4729, %v4728
        %v4733 = vpack.c.b16 %v4731, %v4730
        %v4737 = vsel %vm1361, %v4716, 0
        %4739 = vmatprep.subr.bf16.mxu0 0
        %4740 = vmatpush1.bf16.msra.mxu0 %v4732
        %4741 = vmatprep.subr.bf16.mxu0 0
        %4742 = vmatpush1.bf16.msra.mxu0 %v4733
        %4743 = vmatprep.subr.bf16.mxu0 0
        %4744 = vmatpush1.bf16.msra.mxu0 0
        %4745 = vmatprep.subr.bf16.mxu0 0
        %4746 = vmatpush1.bf16.msra.mxu0 0
        %4747 = vmatprep.subr.bf16.mxu0 0
        %4748 = vmatpush1.bf16.msra.mxu0 0
        %4749 = vmatprep.subr.bf16.mxu0 0
        %4750 = vmatpush1.bf16.msra.mxu0 0
        %4751 = vmatprep.subr.bf16.mxu0 0
        %4752 = vmatpush1.bf16.msra.mxu0 0
        %4753 = vmatprep.subr.bf16.mxu0 0
        %4754 = vmatpush1.bf16.msra.mxu0 0
        %4755 = vmatprep.subr.bf16.mxu0 0
        %4756 = vmatpush1.bf16.msra.mxu0 0
        %4757 = vmatprep.subr.bf16.mxu0 0
        %4758 = vmatpush1.bf16.msra.mxu0 0
        %4759 = vmatprep.subr.bf16.mxu0 0
        %4760 = vmatpush1.bf16.msra.mxu0 0
        %4761 = vmatprep.subr.bf16.mxu0 0
        %4762 = vmatpush1.bf16.msra.mxu0 0
        %4763 = vmatprep.subr.bf16.mxu0 0
        %4764 = vmatpush1.bf16.msra.mxu0 0
        %4765 = vmatprep.subr.bf16.mxu0 0
        %4766 = vmatpush1.bf16.msra.mxu0 0
        %4767 = vmatprep.subr.bf16.mxu0 0
        %4768 = vmatpush1.bf16.msra.mxu0 0
        %4769 = vmatprep.subr.bf16.mxu0 0
        %4770 = vmatpush1.bf16.msra.mxu0 0
        %4771 = vmatprep.mubr.bf16.mxu0 0
        %4772 = vmatmul.mubr.bf16.gmra.mrb[0].mxu0 %v4737
        %v4773 = vpop.f32.mrb[0].mxu0
        %v4774 = vadd.f32 %v4722, %v4773
        %v4775 = vpop.f32.mrb[0].mxu0
        %v4776 = vpop.f32.mrb[0].mxu0
        %v4777 = vadd.f32 %v4722, %v4776
        %v4778 = vpop.f32.mrb[0].mxu0
        %4779 = vdwg.mxu0
        %v4780 = vmax.f32 %v4774, 0.0
        %v4781 = vmax.f32 %v4777, 0.0
        %v4782 = vld [vmem:[%s1303] sm:$0xf]
        %v4783 = vld [vmem:[%s1303 + $0x4] sm:$0xf]
        %v4784 = vld [vmem:[%s1303 + $0x8] sm:$0xf]
        %v4785 = vld [vmem:[%s1303 + $0xc] sm:$0xf]
        %v4786 = vld [vmem:[%s1303 + $0x10] sm:$0xf]
        %v4787 = vld [vmem:[%s1303 + $0x14] sm:$0xf]
        %v4788 = vld [vmem:[%s1303 + $0x18] sm:$0xf]
        %v4789 = vld [vmem:[%s1303 + $0x1c] sm:$0xf]
        %v4790 = vpack.c.bf16 %v4781, %v4780
        %v4791 = vld [vmem:[%s1306] sm:$0x1]
        %v4793 = vlaneseq
        %v4794 = vshrl.u32 %v4793, 7
        %v4795 = vsub.s32 0, %v4794
        %v4796 = vrot.slane %v4791, %v4795
        %v4806 = vunpack.c.l.b16 %v4782
        %v4807 = vunpack.c.l.b16 %v4783
        %v4808 = vunpack.c.l.b16 %v4784
        %v4809 = vunpack.c.l.b16 %v4785
        %v4810 = vunpack.c.l.b16 %v4786
        %v4811 = vunpack.c.l.b16 %v4787
        %v4812 = vunpack.c.l.b16 %v4788
        %v4813 = vunpack.c.l.b16 %v4789
        %v4814 = vpack.c.b16 %v4807, %v4806
        %v4815 = vpack.c.b16 %v4809, %v4808
        %v4816 = vpack.c.b16 %v4811, %v4810
        %v4817 = vpack.c.b16 %v4813, %v4812
        %vm4822 = vcmask 523264
        %v4824 = vsel %vm4822, %v4790, 0
        %4826 = vmatprep.subr.bf16.mxu0 0
        %4827 = vmatpush1.bf16.msra.mxu0 %v4814
        %4828 = vmatprep.subr.bf16.mxu0 0
        %4829 = vmatpush1.bf16.msra.mxu0 %v4815
        %4830 = vmatprep.subr.bf16.mxu0 0
        %4831 = vmatpush1.bf16.msra.mxu0 %v4816
        %4832 = vmatprep.subr.bf16.mxu0 0
        %4833 = vmatpush1.bf16.msra.mxu0 %v4817
        %4834 = vmatprep.subr.bf16.mxu0 0
        %4835 = vmatpush1.bf16.msra.mxu0 0
        %4836 = vmatprep.subr.bf16.mxu0 0
        %4837 = vmatpush1.bf16.msra.mxu0 0
        %4838 = vmatprep.subr.bf16.mxu0 0
        %4839 = vmatpush1.bf16.msra.mxu0 0
        %4840 = vmatprep.subr.bf16.mxu0 0
        %4841 = vmatpush1.bf16.msra.mxu0 0
        %4842 = vmatprep.subr.bf16.mxu0 0
        %4843 = vmatpush1.bf16.msra.mxu0 0
        %4844 = vmatprep.subr.bf16.mxu0 0
        %4845 = vmatpush1.bf16.msra.mxu0 0
        %4846 = vmatprep.subr.bf16.mxu0 0
        %4847 = vmatpush1.bf16.msra.mxu0 0
        %4848 = vmatprep.subr.bf16.mxu0 0
        %4849 = vmatpush1.bf16.msra.mxu0 0
        %4850 = vmatprep.subr.bf16.mxu0 0
        %4851 = vmatpush1.bf16.msra.mxu0 0
        %4852 = vmatprep.subr.bf16.mxu0 0
        %4853 = vmatpush1.bf16.msra.mxu0 0
        %4854 = vmatprep.subr.bf16.mxu0 0
        %4855 = vmatpush1.bf16.msra.mxu0 0
        %4856 = vmatprep.subr.bf16.mxu0 0
        %4857 = vmatpush1.bf16.msra.mxu0 0
        %4858 = vmatprep.mubr.bf16.mxu0 0
        %4859 = vmatmul.mubr.bf16.gmra.mrb[0].mxu0 %v4824
        %v4860 = vpop.f32.mrb[0].mxu0
        %v4861 = vadd.f32 %v4796, %v4860
        %v4862 = vpop.f32.mrb[0].mxu0
        %v4863 = vpop.f32.mrb[0].mxu0
        %v4864 = vadd.f32 %v4796, %v4863
        %v4865 = vpop.f32.mrb[0].mxu0
        %4866 = vdwg.mxu0
        %v4867 = vadd.f32 %v4710, %v4861
        %v4868 = vadd.f32 %v4711, %v4864
        %v4869 = vld [vmem:[%s1309] sm:$0x1]
        %v4870 = vld [vmem:[%s1312] sm:$0x1]
        %v4871 = vsel %vm1361, %v4867, 0.0
        %4872 = vadd.xlane.f32.xlu0 %v4871
        %v4873 = vpop.xlane.xlu0 %4872
        %v4874 = vsel %vm1361, %v4868, 0.0
        %4875 = vadd.xlane.f32.xlu0 %v4874
        %v4876 = vpop.xlane.xlu0 %4875
        %v4877 = vmul.f32 %v4873, %v2907
        %v4878 = vmul.f32 %v4876, %v2907
        %v4879 = vsub.f32 %v4867, %v4877
        %v4880 = vsub.f32 %v4868, %v4878
        %v4881 = vmul.f32 %v4879, %v4879
        %v4882 = vmul.f32 %v4880, %v4880
        %v4883 = vsel %vm1361, %v4881, 0.0
        %4884 = vadd.xlane.f32.xlu0 %v4883
        %v4885 = vpop.xlane.xlu0 %4884
        %v4886 = vsel %vm1361, %v4882, 0.0
        %4887 = vadd.xlane.f32.xlu0 %v4886
        %v4888 = vpop.xlane.xlu0 %4887
        %v4889 = vmul.f32 %v4885, %v2907
        %v4890 = vmul.f32 %v4888, %v2907
        %v4891 = vadd.f32 %v4889, 1e-05
        %v4892 = vadd.f32 %v4890, 1e-05
        %v4893 = vrsqrt.pop %v4891
        %v4894 = vrsqrt.pop %v4892
        %v4895 = vmul.f32 %v4879, %v4893
        %v4896 = vmul.f32 %v4880, %v4894
        %v4898 = vlaneseq
        %v4899 = vshrl.u32 %v4898, 7
        %v4900 = vsub.s32 0, %v4899
        %v4901 = vrot.slane %v4869, %v4900
        %v4903 = vmul.f32 %v4895, %v4901
        %v4904 = vmul.f32 %v4896, %v4901
        %v4906 = vlaneseq
        %v4907 = vshrl.u32 %v4906, 7
        %v4908 = vsub.s32 0, %v4907
        %v4909 = vrot.slane %v4870, %v4908
        %v4911 = vadd.f32 %v4903, %v4909
        %v4912 = vadd.f32 %v4904, %v4909
        %p4913 = scmp.lt.s32.totalorder %s75, 1
        // Predicated region
        $region153: #{transformer_forward.3} parent=139 // pred_check
          %p4914 = pneg %p4913
        $region154: #{transformer_forward.3} parent=139 // pred_check_branch
          %4916 = sbr.rel (%p4914) target = $region156
        $region155: #{transformer_forward.3} parent=139 // pred_region
          %4917 = vst.msk [vmem:[#allocation7] sm:$0xff] %vm1361, %v4911
          %4918 = vst.msk [vmem:[#allocation7 + $0x8] sm:$0xff] %vm1361, %v4912
        $region156: #{transformer_forward.3} parent=139 // pred_fallthru
          _
        %p4919 = scmp.eq.s32.totalorder %s75, 1
        // Predicated region
        $region157: #{transformer_forward.3} parent=139 // pred_check
          %p4920 = pneg %p4919
        $region158: #{transformer_forward.3} parent=139 // pred_check_branch
          %4922 = sbr.rel (%p4920) target = $region160
        $region159: #{transformer_forward.3} parent=139 // pred_region
          %v4923 = vld [vmem:[#allocation2] sm:$0x1]
          %v4924 = vld [vmem:[#allocation5] sm:$0x1]
          %v4925 = vsel %vm1361, %v4911, 0.0
          %4926 = vadd.xlane.f32.xlu0 %v4925
          %v4927 = vpop.xlane.xlu0 %4926
          %v4928 = vsel %vm1361, %v4912, 0.0
          %4929 = vadd.xlane.f32.xlu0 %v4928
          %v4930 = vpop.xlane.xlu0 %4929
          %v4931 = vmul.f32 %v4927, %v2907
          %v4932 = vmul.f32 %v4930, %v2907
          %v4933 = vsub.f32 %v4911, %v4931
          %v4934 = vsub.f32 %v4912, %v4932
          %v4935 = vmul.f32 %v4933, %v4933
          %v4936 = vmul.f32 %v4934, %v4934
          %v4937 = vsel %vm1361, %v4935, 0.0
          %4938 = vadd.xlane.f32.xlu0 %v4937
          %v4939 = vpop.xlane.xlu0 %4938
          %v4940 = vsel %vm1361, %v4936, 0.0
          %4941 = vadd.xlane.f32.xlu0 %v4940
          %v4942 = vpop.xlane.xlu0 %4941
          %v4943 = vmul.f32 %v4939, %v2907
          %v4944 = vmul.f32 %v4942, %v2907
          %v4945 = vadd.f32 %v4943, 1e-05
          %v4946 = vadd.f32 %v4944, 1e-05
          %v4947 = vrsqrt.pop %v4945
          %v4948 = vrsqrt.pop %v4946
          %v4949 = vmul.f32 %v4933, %v4947
          %v4950 = vmul.f32 %v4934, %v4948
          %v4952 = vlaneseq
          %v4953 = vshrl.u32 %v4952, 7
          %v4954 = vsub.s32 0, %v4953
          %v4955 = vrot.slane %v4923, %v4954
          %v4957 = vmul.f32 %v4949, %v4955
          %v4958 = vmul.f32 %v4950, %v4955
          %v4960 = vlaneseq
          %v4961 = vshrl.u32 %v4960, 7
          %v4962 = vsub.s32 0, %v4961
          %v4963 = vrot.slane %v4924, %v4962
          %v4965 = vadd.f32 %v4957, %v4963
          %v4966 = vadd.f32 %v4958, %v4963
          %4967 = vst.msk [vmem:[#allocation7] sm:$0xff] %vm1361, %v4965
          %4968 = vst.msk [vmem:[#allocation7 + $0x8] sm:$0xff] %vm1361, %v4966
        $region160: #{transformer_forward.3} parent=139 // pred_fallthru
          _
        // Predicated region
        $region161: #{transformer_forward.3} parent=139 // pred_check
          %p4969 = pneg %p838
        $region162: #{transformer_forward.3} parent=139 // pred_check_branch
          %4971 = sbr.rel (%p4969) target = $region164
        $region163: #{transformer_forward.3} parent=139 // pred_region
          %s4973 = ssub.s32 256, 256
          %4974 = vsyncadd [#allocation4], %s4973
          %s4975 = sshll.u32 [#allocation7], 4
          %s4976 = int_to_ptr.vmem [resolvable:$true] %s4975
          %4981 = dma.vmem_to_hbm [thread:$0]  %s4976, 256, %s61, [#allocation4], 128, 128, 8
        $region164: #{transformer_forward.3} parent=139 // pred_fallthru
          _
        // Predicated region
        $region165: #{transformer_forward.3} parent=139 // pred_check
          %p4982 = pneg %p838
        $region166: #{transformer_forward.3} parent=139 // pred_check_branch
          %4984 = sbr.rel (%p4982) target = $region168
        $region167: #{transformer_forward.3} parent=139 // pred_region
          %4985 = dma.done [#allocation4], 256
        $region168: #{transformer_forward.3} parent=139 // pred_fallthru
          _
      $region140: #{transformer_forward.3} parent=5 // pred_fallthru
        _
      %p4986 = scmp.le.s32.totalorder 2, %s70
      // Predicated region
      $region169: #{transformer_forward.3} parent=5 // pred_check
        %p4987 = pneg %p4986
      $region170: #{transformer_forward.3} parent=5 // pred_check_branch
        %4989 = sbr.rel (%p4987) target = $region172
      $region171: #{transformer_forward.3} parent=5 // pred_region
        %s4990 = ssub.s32 %s70, 2
      $region172: #{transformer_forward.3} parent=5 // pred_fallthru
        _
    $region6: #{transformer_forward.3} parent=1 // loop_footer
      %s74 = sadd.s32 1, %s70
    $region7: #{transformer_forward.3} parent=1 // loop_footer_branch
      %69 = sbr.rel target = $region3
    $region8: #{transformer_forward.3} parent=1 // loop_exit
      _
    %4991 = vsyncpa [#allocation3], 1
    %s4992 = scalar_lea.sflag [#allocation3], 1
    %4993 = vsyncpa %s4992, 1
    %4994 = vsyncpa [#allocation6], 1
    %4995 = vsyncpa [#allocation4], 1
    %s4996 = scalar_lea.sflag [#allocation4], 1
    %4997 = vsyncpa %s4996, 1

</llo_original>
